<compile_context>
chip_gen: v6e
topology: v6e:2x2x1
jax: 0.10.0
libtpu: 0.0.40
codegen_flags: <defaults>
</compile_context>

<pallas_src>
import functools

import jax
import jax.numpy as jnp
from jax import lax
from jax.experimental import pallas as pl
from jax.experimental.pallas import tpu as pltpu


# --------------------------------------------------------------------------------------
# Fully fused encoder kernel: all layers + avg-pool + L2-normalize in one invocation.
# --------------------------------------------------------------------------------------
def _encoder_kernel(*refs, T, H, Bb, num_layers):
    H2, H3 = 2 * H, 3 * H
    f32 = jnp.float32

    idx = 0
    len_ref = refs[idx]; idx += 1                       # (Bb, 1) int32
    x_ref = refs[idx]; idx += 1                         # (T, Bb, E)
    layer_refs = []
    for _ in range(num_layers):                         # per layer: wih, whh_blk, bx, bh
        layer_refs.append(refs[idx:idx + 4]); idx += 4
    out_ref = refs[idx]; idx += 1                       # (Bb, 2H) f32
    xp_ref = refs[idx]; idx += 1                        # (T*Bb, 6H) f32 scratch
    if num_layers > 1:
        buf_f_ref = refs[idx]; buf_b_ref = refs[idx + 1]; idx += 2   # (T*Bb, H) each
    else:
        buf_f_ref = buf_b_ref = None

    lens = len_ref[...]                                 # (Bb, 1) int32
    zero_h = jnp.zeros((Bb, H), f32)
    unroll = True if T <= 16 else 8

    def sigmoid_via_tanh(v):
        # sigmoid(v) = 0.5*(1 + tanh(0.5*v)): one EUP pass instead of exp + reciprocal
        return 0.5 * (jnp.tanh(0.5 * v) + 1.0)

    def run_layer(wih_ref, whh_ref, bx_ref, bh_ref, src2d, is_last):
        # ---- hoisted input projection: ONE MXU-filling matmul for all T steps and both
        #      directions (lane-concatenated fwd|bwd weights), off the serial path ----
        xp_ref[...] = (jnp.dot(src2d, wih_ref[...], preferred_element_type=f32)
                       + bx_ref[...])                   # (T*Bb, 6H) f32

        whh = whh_ref[...]                              # (2H, 6H) block-diag [Wf,0;0,Wb]
        bh = bh_ref[...]                                # (1, 6H)  [0 0 bhn_f | 0 0 bhn_b]

        def cell(xp_t, g_d, h):
            rz = sigmoid_via_tanh(xp_t[:, :H2] + g_d[:, :H2])
            r = rz[:, :H]
            z = rz[:, H:]
            n = jnp.tanh(xp_t[:, H2:] + r * g_d[:, H2:])
            return (1.0 - z) * n + z * h

        def step(i, carry):
            if is_last:
                h_f, h_b, s_f, s_b = carry
            else:
                h_f, h_b = carry
            t_f = i
            t_b = T - 1 - i
            row_f = pl.multiple_of(t_f * Bb, Bb)
            row_b = pl.multiple_of(t_b * Bb, Bb)
            xp_row_f = xp_ref[pl.ds(row_f, Bb), :]      # (Bb, 6H)
            xp_row_b = xp_ref[pl.ds(row_b, Bb), :]

            # one block-diagonal recurrent matmul covers both directions per step
            h_cat = jnp.concatenate([h_f, h_b], axis=-1).astype(whh.dtype)   # (Bb, 2H)
            g = jnp.dot(h_cat, whh, preferred_element_type=f32) + bh          # (Bb, 6H)

            hf_new = cell(xp_row_f[:, :H3], g[:, :H3], h_f)
            hb_new = cell(xp_row_b[:, H3:], g[:, H3:], h_b)

            mask_f = lens > t_f                         # valid-timestep masking replaces
            mask_b = lens > t_b                         # pack_padded_sequence sorting
            h_f = jnp.where(mask_f, hf_new, h_f)
            h_b = jnp.where(mask_b, hb_new, h_b)
            o_f = jnp.where(mask_f, h_f, 0.0)           # padding_value = 0.0
            o_b = jnp.where(mask_b, h_b, 0.0)

            if is_last:
                return (h_f, h_b, s_f + o_f, s_b + o_b)  # fused avg-pool accumulation
            buf_f_ref[pl.ds(row_f, Bb), :] = o_f.astype(buf_f_ref.dtype)
            buf_b_ref[pl.ds(row_b, Bb), :] = o_b.astype(buf_b_ref.dtype)
            return (h_f, h_b)

        init = (zero_h, zero_h, zero_h, zero_h) if is_last else (zero_h, zero_h)
        return lax.fori_loop(0, T, step, init, unroll=unroll)

    # layer 0 consumes the pipelined input block; later layers consume VMEM-resident bufs
    src = x_ref[...].reshape(T * Bb, x_ref.shape[-1])
    carry = None
    for li in range(num_layers):
        wih_ref, whh_ref, bx_ref, bh_ref = layer_refs[li]
        is_last = li == num_layers - 1
        carry = run_layer(wih_ref, whh_ref, bx_ref, bh_ref, src, is_last)
        if not is_last:
            # next layer input = [out_fwd | out_bwd] -> single K=2H MXU contraction
            src = jnp.concatenate([buf_f_ref[...], buf_b_ref[...]], axis=-1)

    # ---- fused avg-pool + L2-normalize epilogue (all f32) ----
    _, _, s_f, s_b = carry
    len_f = jnp.maximum(lens.astype(f32), 1.0)
    inv_len = pl.reciprocal(len_f, approx=True)          # cancels exactly under L2 norm
    avg_f = s_f * inv_len
    avg_b = s_b * inv_len
    nsq = (jnp.sum(avg_f * avg_f, axis=-1, keepdims=True)
           + jnp.sum(avg_b * avg_b, axis=-1, keepdims=True))
    inv_nrm = lax.rsqrt(jnp.maximum(nsq, 1e-24))         # == 1 / max(||avg||, 1e-12)
    out_ref[...] = jnp.concatenate([avg_f, avg_b], axis=-1) * inv_nrm


# --------------------------------------------------------------------------------------
# Parameter init: PyTorch-style U(-1/sqrt(H), 1/sqrt(H)).
# Per layer & direction: wih (In, 3H) = [W_ir|W_iz|W_in], whh (H, 3H) = [W_hr|W_hz|W_hn],
# bx (1, 3H) = [b_ir+b_hr | b_iz+b_hz | b_in] (pre-folded), bh (1, 3H) = [0 | 0 | b_hn].
# --------------------------------------------------------------------------------------
def init_params(key, embedding_dims, hidden_size, num_layers):
    H = hidden_size
    bound = 1.0 / (H ** 0.5)

    def u(k, shape):
        return jax.random.uniform(k, shape, jnp.float32, -bound, bound)

    params = []
    for layer in range(num_layers):
        in_size = embedding_dims if layer == 0 else 2 * H
        dirs = []
        for _ in range(2):                               # forward, backward
            key, k1, k2, k3, k4 = jax.random.split(key, 5)
            wih = u(k1, (in_size, 3 * H))
            whh = u(k2, (H, 3 * H))
            b_ih = u(k3, (1, 3 * H))
            b_hh = u(k4, (1, 3 * H))
            bx = b_ih.at[:, :2 * H].add(b_hh[:, :2 * H])
            bh = jnp.concatenate([jnp.zeros((1, 2 * H), jnp.float32), b_hh[:, 2 * H:]], axis=1)
            dirs.append((wih, whh, bx, bh))
        params.append(tuple(dirs))
    return params


def _pack_params(params, compute_dtype):
    """Fuse fwd/bwd per layer: lane-concat W_ih, block-diag W_hh, concat biases."""
    packed = []
    for (fwd, bwd) in params:
        wih_f, whh_f, bx_f, bh_f = fwd
        wih_b, whh_b, bx_b, bh_b = bwd
        H = whh_f.shape[0]
        wih = jnp.concatenate([wih_f, wih_b], axis=1).astype(compute_dtype)       # (In, 6H)
        whh = jnp.zeros((2 * H, 6 * H), jnp.float32)
        whh = whh.at[:H, :3 * H].set(whh_f).at[H:, 3 * H:].set(whh_b)
        whh = whh.astype(compute_dtype)                                            # (2H, 6H)
        bx = jnp.concatenate([bx_f, bx_b], axis=1)                                 # (1, 6H) f32
        bh = jnp.concatenate([bh_f, bh_b], axis=1)                                 # (1, 6H) f32
        packed.append((wih, whh, bx, bh))
    return packed


def _choose_batch_block(Bpad, T, E, H, L, x_bytes, budget=32 << 20):
    """Largest Bb that fits the VMEM budget, with >= 2 grid steps when batch allows
    (pipelining overlap + 2-TC sharding on v7x). v7x's smaller VMEM is covered by the
    conservative budget + bf16 activation storage."""
    per_row = (T * 6 * H * 4                         # xp scratch (f32)
               + (2 * T * H * x_bytes if L > 1 else 0)   # fwd/bwd inter-layer bufs
               + (T * 2 * H * x_bytes if L > 1 else 0)   # concatenated operand temp
               + 2 * T * E * x_bytes                 # double-buffered input block
               + 2 * 2 * H * 4                       # double-buffered output block
               + 8)
    bb = max(8, min(Bpad, (budget // per_row) // 8 * 8))
    if Bpad >= 16:
        bb = min(bb, max(8, (Bpad // 2) // 8 * 8))
    while Bpad % bb:
        bb -= 8
    return bb


# --------------------------------------------------------------------------------------
# Full NickNameEncoder forward (pool_type='avg_pool')
# --------------------------------------------------------------------------------------
def nickname_encoder_forward(params, x_bte, lengths, *, compute_dtype=jnp.bfloat16,
                             batch_block=None):
    # TODO(synk): only the default 'avg_pool' branch is implemented ('max_pool'/'last_status' omitted).
    B, T, E = x_bte.shape
    H = params[0][0][1].shape[0]
    L = len(params)

    # pad batch to a sublane multiple so in-kernel (T, Bb, F) <-> (T*Bb, F) reshapes are free
    Bpad = ((B + 7) // 8) * 8
    x = jnp.transpose(x_bte, (1, 0, 2)).astype(compute_dtype)        # (T, B, E) time-major
    lens_i = lengths.astype(jnp.int32)
    if Bpad != B:
        x = jnp.pad(x, ((0, 0), (0, Bpad - B), (0, 0)))
        lens_i = jnp.pad(lens_i, (0, Bpad - B), constant_values=1)
    len_i32 = lens_i.reshape(Bpad, 1)

    packed = _pack_params(params, compute_dtype)
    x_bytes = jnp.dtype(compute_dtype).itemsize

    Bb = batch_block if batch_block is not None else _choose_batch_block(
        Bpad, T, E, H, L, x_bytes)
    assert Bb % 8 == 0 and Bpad % Bb == 0
    grid = (Bpad // Bb,)

    len_spec = pl.BlockSpec((Bb, 1), lambda j: (j, 0))
    x_spec = pl.BlockSpec((T, Bb, E), lambda j: (0, j, 0))

    def full_spec(a):
        nd = a.ndim
        return pl.BlockSpec(a.shape, lambda j, _nd=nd: (0,) * _nd)

    w_specs, flat_w, w_bytes = [], [], 0
    for layer_p in packed:
        for a in layer_p:
            w_specs.append(full_spec(a))
            flat_w.append(a)
            w_bytes += a.size * a.dtype.itemsize

    out_spec = pl.BlockSpec((Bb, 2 * H), lambda j: (j, 0))
    out_shape = jax.ShapeDtypeStruct((Bpad, 2 * H), jnp.float32)

    scratch = [pltpu.VMEM((T * Bb, 6 * H), jnp.float32)]             # xp (f32 pre-acts)
    if L > 1:
        scratch += [pltpu.VMEM((T * Bb, H), compute_dtype),          # inter-layer fwd
                    pltpu.VMEM((T * Bb, H), compute_dtype)]          # inter-layer bwd

    # VMEM limit from actual footprint (scratch + double-buffered blocks + weights)
    need = (T * Bb * 6 * H * 4
            + (2 * T * Bb * H * x_bytes if L > 1 else 0)
            + (T * Bb * 2 * H * x_bytes if L > 1 else 0)
            + 2 * T * Bb * E * x_bytes
            + 2 * Bb * 2 * H * 4
            + 2 * Bb * 4
            + 2 * w_bytes)
    vmem_limit = int(min(max(need * 3 // 2 + (2 << 20), 32 << 20), 56 << 20))

    kernel = functools.partial(_encoder_kernel, T=T, H=H, Bb=Bb, num_layers=L)
    out = pl.pallas_call(
        kernel,
        out_shape=out_shape,
        grid_spec=pltpu.PrefetchScalarGridSpec(
            num_scalar_prefetch=0,
            grid=grid,
            in_specs=[len_spec, x_spec] + w_specs,
            out_specs=out_spec,
            scratch_shapes=scratch,
        ),
        compiler_params=pltpu.CompilerParams(
            dimension_semantics=("parallel",),
            vmem_limit_bytes=vmem_limit),
    )(len_i32, x, *flat_w)
    return out[:B]


# --------------------------------------------------------------------------------------
# Pure-JAX f32 reference (same math as the PyTorch module) for numerical sanity checks
# --------------------------------------------------------------------------------------
def _reference_forward(params, x_bte, lengths):
    B, T, _ = x_bte.shape
    H = params[0][0][1].shape[0]
    x = jnp.transpose(x_bte.astype(jnp.float32), (1, 0, 2))
    lens = lengths.astype(jnp.int32).reshape(B, 1)

    def run_dir(x_in, p, reverse):
        wih, whh, bx, bh = p
        xp = jnp.einsum('tbf,fg->tbg', x_in, wih) + bx
        tidx = jnp.arange(T - 1, -1, -1) if reverse else jnp.arange(T)
        xp_seq = xp[::-1] if reverse else xp

        def step(h, inp):
            xp_t, t = inp
            g = h @ whh + bh
            r = jax.nn.sigmoid(xp_t[:, :H] + g[:, :H])
            z = jax.nn.sigmoid(xp_t[:, H:2 * H] + g[:, H:2 * H])
            n = jnp.tanh(xp_t[:, 2 * H:] + r * g[:, 2 * H:])
            h_new = (1.0 - z) * n + z * h
            mask = lens > t
            h = jnp.where(mask, h_new, h)
            return h, jnp.where(mask, h, 0.0)

        _, outs = lax.scan(step, jnp.zeros((B, H), jnp.float32), (xp_seq, tidx))
        return outs[::-1] if reverse else outs

    inp = x
    for (fwd, bwd) in params:
        of = run_dir(inp, fwd, reverse=False)
        ob = run_dir(inp, bwd, reverse=True)
        inp = jnp.concatenate([of, ob], axis=-1)
    s = jnp.sum(inp, axis=0)
    avg = s / jnp.maximum(lengths.astype(jnp.float32).reshape(B, 1), 1.0)
    nrm = jnp.sqrt(jnp.sum(avg * avg, axis=-1, keepdims=True))
    return avg / jnp.maximum(nrm, 1e-12)


if __name__ == "__main__":
    B, T, E, H, L = 30, 10, 16, 32, 2
    key = jax.random.PRNGKey(0)
    kx, kl, kp = jax.random.split(key, 3)

    x = jax.random.normal(kx, (B, T, E), dtype=jnp.float32)          # padded nickname embeddings
    lengths = jax.random.randint(kl, (B,), 1, T + 1).astype(jnp.int32)
    params = init_params(kp, E, H, L)

    ref = _reference_forward(params, x, lengths)

    # strict structural check: f32 compute path vs f32 reference
    f32_fn = jax.jit(functools.partial(nickname_encoder_forward, compute_dtype=jnp.float32))
    out32 = jax.block_until_ready(f32_fn(params, x, lengths))
    assert out32.shape == (B, 2 * H), out32.shape
    assert bool(jnp.all(jnp.isfinite(out32)))
    err32 = float(jnp.max(jnp.abs(out32 - ref)))
    assert err32 < 2e-3, err32

    # production path: bf16 matmul operands / activations, f32 state + epilogue
    bf16_fn = jax.jit(nickname_encoder_forward)
    out = jax.block_until_ready(bf16_fn(params, x, lengths))
    assert out.shape == (B, 2 * H), out.shape
    assert bool(jnp.all(jnp.isfinite(out)))
    row_norms = jnp.sqrt(jnp.sum(out * out, axis=-1))
    assert bool(jnp.allclose(row_norms, 1.0, atol=1e-4)), row_norms
    err_bf16 = float(jnp.max(jnp.abs(out - ref)))
    assert err_bf16 < 8e-2, err_bf16

    print("KERNEL_OK")
</pallas_src>

<mosaic_0001>
module attributes {stable_mosaic.version = 11 : i64} {
  func.func @_encoder_kernel(%arg0: i32, %arg1: memref<16x1xi32, #tpu.memory_space<vmem>>, %arg2: memref<10x16x16xf32, #tpu.memory_space<vmem>>, %arg3: memref<16x192xf32, #tpu.memory_space<vmem>>, %arg4: memref<64x192xf32, #tpu.memory_space<vmem>>, %arg5: memref<1x192xf32, #tpu.memory_space<vmem>>, %arg6: memref<1x192xf32, #tpu.memory_space<vmem>>, %arg7: memref<64x192xf32, #tpu.memory_space<vmem>>, %arg8: memref<64x192xf32, #tpu.memory_space<vmem>>, %arg9: memref<1x192xf32, #tpu.memory_space<vmem>>, %arg10: memref<1x192xf32, #tpu.memory_space<vmem>>, %arg11: memref<16x64xf32, #tpu.memory_space<vmem>>, %arg12: memref<160x192xf32, #tpu.memory_space<vmem>>, %arg13: memref<160x32xf32, #tpu.memory_space<vmem>>, %arg14: memref<160x32xf32, #tpu.memory_space<vmem>>) attributes {dimension_semantics = [#tpu.dimension_semantics<parallel>], iteration_bounds = array<i64: 2>, scalar_prefetch = 0 : i64, scratch_operands = 3 : i64, tpu.core_type = #tpu.core_type<tc>, window_params = [{transform_indices = @transform_0, window_bounds = array<i64: 16, 1>}, {transform_indices = @transform_1, window_bounds = array<i64: 10, 16, 16>}, {pipeline_mode = #tpu.pipeline_mode<synchronous>, transform_indices = @transform_2, window_bounds = array<i64: 16, 192>}, {pipeline_mode = #tpu.pipeline_mode<synchronous>, transform_indices = @transform_3, window_bounds = array<i64: 64, 192>}, {pipeline_mode = #tpu.pipeline_mode<synchronous>, transform_indices = @transform_4, window_bounds = array<i64: 1, 192>}, {pipeline_mode = #tpu.pipeline_mode<synchronous>, transform_indices = @transform_5, window_bounds = array<i64: 1, 192>}, {pipeline_mode = #tpu.pipeline_mode<synchronous>, transform_indices = @transform_6, window_bounds = array<i64: 64, 192>}, {pipeline_mode = #tpu.pipeline_mode<synchronous>, transform_indices = @transform_7, window_bounds = array<i64: 64, 192>}, {pipeline_mode = #tpu.pipeline_mode<synchronous>, transform_indices = @transform_8, window_bounds = array<i64: 1, 192>}, {pipeline_mode = #tpu.pipeline_mode<synchronous>, transform_indices = @transform_9, window_bounds = array<i64: 1, 192>}, {transform_indices = @transform_10, window_bounds = array<i64: 16, 64>}]} {
    %c0 = arith.constant 0 : index
    %c0_0 = arith.constant 0 : index
    %0 = vector.load %arg1[%c0, %c0_0] : memref<16x1xi32, #tpu.memory_space<vmem>>, vector<16x1xi32>
    %cst = arith.constant 0.000000e+00 : f32
    %1 = vector.broadcast %cst : f32 to vector<16x32xf32>
    %c0_1 = arith.constant 0 : index
    %c0_2 = arith.constant 0 : index
    %c0_3 = arith.constant 0 : index
    %2 = vector.load %arg2[%c0_1, %c0_2, %c0_3] : memref<10x16x16xf32, #tpu.memory_space<vmem>>, vector<10x16x16xf32>
    %3 = vector.shape_cast %2 : vector<10x16x16xf32> to vector<160x16xf32>
    %c0_4 = arith.constant 0 : index
    %c0_5 = arith.constant 0 : index
    %4 = vector.load %arg3[%c0_4, %c0_5] : memref<16x192xf32, #tpu.memory_space<vmem>>, vector<16x192xf32>
    %cst_6 = arith.constant dense<0.000000e+00> : vector<160x192xf32>
    %5 = tpu.matmul %3, %4, %cst_6 {dimension_numbers = #tpu.dot_dimension_numbers<[1], [0], [0], [1], [0, 0, 1, 1], [], []>} : vector<160x16xf32>, vector<16x192xf32>, vector<160x192xf32> -> vector<160x192xf32>
    %c0_7 = arith.constant 0 : index
    %c0_8 = arith.constant 0 : index
    %6 = vector.load %arg5[%c0_7, %c0_8] : memref<1x192xf32, #tpu.memory_space<vmem>>, vector<1x192xf32>
    %7 = vector.broadcast %6 : vector<1x192xf32> to vector<160x192xf32>
    %8 = arith.addf %5, %7 : vector<160x192xf32>
    %c0_9 = arith.constant 0 : index
    %c0_10 = arith.constant 0 : index
    %9 = vector.load %arg12[%c0_9, %c0_10] : memref<160x192xf32, #tpu.memory_space<vmem>>, vector<160x192xf32>
    tpu.vector_store %arg12[%c0_9, %c0_10], %8 {strides = array<i32>} : memref<160x192xf32, #tpu.memory_space<vmem>>, vector<160x192xf32>,
    %c0_11 = arith.constant 0 : index
    %c0_12 = arith.constant 0 : index
    %10 = vector.load %arg4[%c0_11, %c0_12] : memref<64x192xf32, #tpu.memory_space<vmem>>, vector<64x192xf32>
    %c0_13 = arith.constant 0 : index
    %c0_14 = arith.constant 0 : index
    %11 = vector.load %arg6[%c0_13, %c0_14] : memref<1x192xf32, #tpu.memory_space<vmem>>, vector<1x192xf32>
    %c0_i32 = arith.constant 0 : i32
    %c9_i32 = arith.constant 9 : i32
    %12 = arith.subi %c9_i32, %c0_i32 : i32
    %c16_i32 = arith.constant 16 : i32
    %13 = arith.muli %c0_i32, %c16_i32 : i32
    %14 = tpu.assume_multiple %13, 16 : i32
    %c16_i32_15 = arith.constant 16 : i32
    %15 = arith.muli %12, %c16_i32_15 : i32
    %16 = tpu.assume_multiple %15, 16 : i32
    %17 = arith.index_cast %14 : i32 to index
    %c0_16 = arith.constant 0 : index
    %18 = vector.load %arg12[%17, %c0_16] : memref<160x192xf32, #tpu.memory_space<vmem>>, vector<16x192xf32>
    %19 = arith.index_cast %16 : i32 to index
    %c0_17 = arith.constant 0 : index
    %20 = vector.load %arg12[%19, %c0_17] : memref<160x192xf32, #tpu.memory_space<vmem>>, vector<16x192xf32>
    %21 = tpu.concatenate %1, %1 in 1 : vector<16x32xf32>, vector<16x32xf32> -> vector<16x64xf32>
    %cst_18 = arith.constant dense<0.000000e+00> : vector<16x192xf32>
    %22 = tpu.matmul %21, %10, %cst_18 {dimension_numbers = #tpu.dot_dimension_numbers<[1], [0], [0], [1], [0, 0, 1, 1], [], []>} : vector<16x64xf32>, vector<64x192xf32>, vector<16x192xf32> -> vector<16x192xf32>
    %23 = vector.broadcast %11 : vector<1x192xf32> to vector<16x192xf32>
    %24 = arith.addf %22, %23 : vector<16x192xf32>
    %25 = vector.extract_strided_slice %18 {offsets = [0, 0], sizes = [16, 96], strides = [1, 1]} : vector<16x192xf32> to vector<16x96xf32>
    %26 = vector.extract_strided_slice %24 {offsets = [0, 0], sizes = [16, 96], strides = [1, 1]} : vector<16x192xf32> to vector<16x96xf32>
    %27 = vector.extract_strided_slice %25 {offsets = [0, 0], sizes = [16, 64], strides = [1, 1]} : vector<16x96xf32> to vector<16x64xf32>
    %28 = vector.extract_strided_slice %26 {offsets = [0, 0], sizes = [16, 64], strides = [1, 1]} : vector<16x96xf32> to vector<16x64xf32>
    %29 = arith.addf %27, %28 : vector<16x64xf32>
    %cst_19 = arith.constant 5.000000e-01 : f32
    %30 = vector.broadcast %cst_19 : f32 to vector<16x64xf32>
    %31 = arith.mulf %30, %29 : vector<16x64xf32>
    %32 = math.tanh %31 : vector<16x64xf32>
    %cst_20 = arith.constant 1.000000e+00 : f32
    %33 = vector.broadcast %cst_20 : f32 to vector<16x64xf32>
    %34 = arith.addf %32, %33 : vector<16x64xf32>
    %cst_21 = arith.constant 5.000000e-01 : f32
    %35 = vector.broadcast %cst_21 : f32 to vector<16x64xf32>
    %36 = arith.mulf %35, %34 : vector<16x64xf32>
    %37 = vector.extract_strided_slice %36 {offsets = [0, 0], sizes = [16, 32], strides = [1, 1]} : vector<16x64xf32> to vector<16x32xf32>
    %38 = vector.extract_strided_slice %36 {offsets = [0, 32], sizes = [16, 32], strides = [1, 1]} : vector<16x64xf32> to vector<16x32xf32>
    %39 = vector.extract_strided_slice %25 {offsets = [0, 64], sizes = [16, 32], strides = [1, 1]} : vector<16x96xf32> to vector<16x32xf32>
    %40 = vector.extract_strided_slice %26 {offsets = [0, 64], sizes = [16, 32], strides = [1, 1]} : vector<16x96xf32> to vector<16x32xf32>
    %41 = arith.mulf %37, %40 : vector<16x32xf32>
    %42 = arith.addf %39, %41 : vector<16x32xf32>
    %43 = math.tanh %42 : vector<16x32xf32>
    %cst_22 = arith.constant 1.000000e+00 : f32
    %44 = vector.broadcast %cst_22 : f32 to vector<16x32xf32>
    %45 = arith.subf %44, %38 : vector<16x32xf32>
    %46 = arith.mulf %45, %43 : vector<16x32xf32>
    %47 = arith.mulf %38, %1 : vector<16x32xf32>
    %48 = arith.addf %46, %47 : vector<16x32xf32>
    %49 = vector.extract_strided_slice %20 {offsets = [0, 96], sizes = [16, 96], strides = [1, 1]} : vector<16x192xf32> to vector<16x96xf32>
    %50 = vector.extract_strided_slice %24 {offsets = [0, 96], sizes = [16, 96], strides = [1, 1]} : vector<16x192xf32> to vector<16x96xf32>
    %51 = vector.extract_strided_slice %49 {offsets = [0, 0], sizes = [16, 64], strides = [1, 1]} : vector<16x96xf32> to vector<16x64xf32>
    %52 = vector.extract_strided_slice %50 {offsets = [0, 0], sizes = [16, 64], strides = [1, 1]} : vector<16x96xf32> to vector<16x64xf32>
    %53 = arith.addf %51, %52 : vector<16x64xf32>
    %cst_23 = arith.constant 5.000000e-01 : f32
    %54 = vector.broadcast %cst_23 : f32 to vector<16x64xf32>
    %55 = arith.mulf %54, %53 : vector<16x64xf32>
    %56 = math.tanh %55 : vector<16x64xf32>
    %cst_24 = arith.constant 1.000000e+00 : f32
    %57 = vector.broadcast %cst_24 : f32 to vector<16x64xf32>
    %58 = arith.addf %56, %57 : vector<16x64xf32>
    %cst_25 = arith.constant 5.000000e-01 : f32
    %59 = vector.broadcast %cst_25 : f32 to vector<16x64xf32>
    %60 = arith.mulf %59, %58 : vector<16x64xf32>
    %61 = vector.extract_strided_slice %60 {offsets = [0, 0], sizes = [16, 32], strides = [1, 1]} : vector<16x64xf32> to vector<16x32xf32>
    %62 = vector.extract_strided_slice %60 {offsets = [0, 32], sizes = [16, 32], strides = [1, 1]} : vector<16x64xf32> to vector<16x32xf32>
    %63 = vector.extract_strided_slice %49 {offsets = [0, 64], sizes = [16, 32], strides = [1, 1]} : vector<16x96xf32> to vector<16x32xf32>
    %64 = vector.extract_strided_slice %50 {offsets = [0, 64], sizes = [16, 32], strides = [1, 1]} : vector<16x96xf32> to vector<16x32xf32>
    %65 = arith.mulf %61, %64 : vector<16x32xf32>
    %66 = arith.addf %63, %65 : vector<16x32xf32>
    %67 = math.tanh %66 : vector<16x32xf32>
    %cst_26 = arith.constant 1.000000e+00 : f32
    %68 = vector.broadcast %cst_26 : f32 to vector<16x32xf32>
    %69 = arith.subf %68, %62 : vector<16x32xf32>
    %70 = arith.mulf %69, %67 : vector<16x32xf32>
    %71 = arith.mulf %62, %1 : vector<16x32xf32>
    %72 = arith.addf %70, %71 : vector<16x32xf32>
    %73 = vector.broadcast %c0_i32 : i32 to vector<16x1xi32>
    %74 = arith.cmpi sgt, %0, %73 : vector<16x1xi32>
    %75 = vector.broadcast %12 : i32 to vector<16x1xi32>
    %76 = arith.cmpi sgt, %0, %75 : vector<16x1xi32>
    %77 = vector.shape_cast %74 : vector<16x1xi1> to vector<16x1xi1>
    %78 = vector.broadcast %77 : vector<16x1xi1> to vector<16x32xi1>
    %79 = arith.select %78, %48, %1 : vector<16x32xi1>, vector<16x32xf32>
    %80 = vector.shape_cast %76 : vector<16x1xi1> to vector<16x1xi1>
    %81 = vector.broadcast %80 : vector<16x1xi1> to vector<16x32xi1>
    %82 = arith.select %81, %72, %1 : vector<16x32xi1>, vector<16x32xf32>
    %cst_27 = arith.constant 0.000000e+00 : f32
    %83 = vector.shape_cast %74 : vector<16x1xi1> to vector<16x1xi1>
    %84 = vector.broadcast %83 : vector<16x1xi1> to vector<16x32xi1>
    %85 = vector.broadcast %cst_27 : f32 to vector<16x32xf32>
    %86 = arith.select %84, %79, %85 : vector<16x32xi1>, vector<16x32xf32>
    %cst_28 = arith.constant 0.000000e+00 : f32
    %87 = vector.shape_cast %76 : vector<16x1xi1> to vector<16x1xi1>
    %88 = vector.broadcast %87 : vector<16x1xi1> to vector<16x32xi1>
    %89 = vector.broadcast %cst_28 : f32 to vector<16x32xf32>
    %90 = arith.select %88, %82, %89 : vector<16x32xi1>, vector<16x32xf32>
    %91 = arith.index_cast %14 : i32 to index
    %c0_29 = arith.constant 0 : index
    %92 = vector.load %arg13[%91, %c0_29] : memref<160x32xf32, #tpu.memory_space<vmem>>, vector<16x32xf32>
    tpu.vector_store %arg13[%91, %c0_29], %86 {strides = array<i32>} : memref<160x32xf32, #tpu.memory_space<vmem>>, vector<16x32xf32>,
    %93 = arith.index_cast %16 : i32 to index
    %c0_30 = arith.constant 0 : index
    %94 = vector.load %arg14[%93, %c0_30] : memref<160x32xf32, #tpu.memory_space<vmem>>, vector<16x32xf32>
    tpu.vector_store %arg14[%93, %c0_30], %90 {strides = array<i32>} : memref<160x32xf32, #tpu.memory_space<vmem>>, vector<16x32xf32>,
    %c1_i32 = arith.constant 1 : i32
    %c9_i32_31 = arith.constant 9 : i32
    %95 = arith.subi %c9_i32_31, %c1_i32 : i32
    %c16_i32_32 = arith.constant 16 : i32
    %96 = arith.muli %c1_i32, %c16_i32_32 : i32
    %97 = tpu.assume_multiple %96, 16 : i32
    %c16_i32_33 = arith.constant 16 : i32
    %98 = arith.muli %95, %c16_i32_33 : i32
    %99 = tpu.assume_multiple %98, 16 : i32
    %100 = arith.index_cast %97 : i32 to index
    %c0_34 = arith.constant 0 : index
    %101 = vector.load %arg12[%100, %c0_34] : memref<160x192xf32, #tpu.memory_space<vmem>>, vector<16x192xf32>
    %102 = arith.index_cast %99 : i32 to index
    %c0_35 = arith.constant 0 : index
    %103 = vector.load %arg12[%102, %c0_35] : memref<160x192xf32, #tpu.memory_space<vmem>>, vector<16x192xf32>
    %104 = tpu.concatenate %79, %82 in 1 : vector<16x32xf32>, vector<16x32xf32> -> vector<16x64xf32>
    %cst_36 = arith.constant dense<0.000000e+00> : vector<16x192xf32>
    %105 = tpu.matmul %104, %10, %cst_36 {dimension_numbers = #tpu.dot_dimension_numbers<[1], [0], [0], [1], [0, 0, 1, 1], [], []>} : vector<16x64xf32>, vector<64x192xf32>, vector<16x192xf32> -> vector<16x192xf32>
    %106 = vector.broadcast %11 : vector<1x192xf32> to vector<16x192xf32>
    %107 = arith.addf %105, %106 : vector<16x192xf32>
    %108 = vector.extract_strided_slice %101 {offsets = [0, 0], sizes = [16, 96], strides = [1, 1]} : vector<16x192xf32> to vector<16x96xf32>
    %109 = vector.extract_strided_slice %107 {offsets = [0, 0], sizes = [16, 96], strides = [1, 1]} : vector<16x192xf32> to vector<16x96xf32>
    %110 = vector.extract_strided_slice %108 {offsets = [0, 0], sizes = [16, 64], strides = [1, 1]} : vector<16x96xf32> to vector<16x64xf32>
    %111 = vector.extract_strided_slice %109 {offsets = [0, 0], sizes = [16, 64], strides = [1, 1]} : vector<16x96xf32> to vector<16x64xf32>
    %112 = arith.addf %110, %111 : vector<16x64xf32>
    %cst_37 = arith.constant 5.000000e-01 : f32
    %113 = vector.broadcast %cst_37 : f32 to vector<16x64xf32>
    %114 = arith.mulf %113, %112 : vector<16x64xf32>
    %115 = math.tanh %114 : vector<16x64xf32>
    %cst_38 = arith.constant 1.000000e+00 : f32
    %116 = vector.broadcast %cst_38 : f32 to vector<16x64xf32>
    %117 = arith.addf %115, %116 : vector<16x64xf32>
    %cst_39 = arith.constant 5.000000e-01 : f32
    %118 = vector.broadcast %cst_39 : f32 to vector<16x64xf32>
    %119 = arith.mulf %118, %117 : vector<16x64xf32>
    %120 = vector.extract_strided_slice %119 {offsets = [0, 0], sizes = [16, 32], strides = [1, 1]} : vector<16x64xf32> to vector<16x32xf32>
    %121 = vector.extract_strided_slice %119 {offsets = [0, 32], sizes = [16, 32], strides = [1, 1]} : vector<16x64xf32> to vector<16x32xf32>
    %122 = vector.extract_strided_slice %108 {offsets = [0, 64], sizes = [16, 32], strides = [1, 1]} : vector<16x96xf32> to vector<16x32xf32>
    %123 = vector.extract_strided_slice %109 {offsets = [0, 64], sizes = [16, 32], strides = [1, 1]} : vector<16x96xf32> to vector<16x32xf32>
    %124 = arith.mulf %120, %123 : vector<16x32xf32>
    %125 = arith.addf %122, %124 : vector<16x32xf32>
    %126 = math.tanh %125 : vector<16x32xf32>
    %cst_40 = arith.constant 1.000000e+00 : f32
    %127 = vector.broadcast %cst_40 : f32 to vector<16x32xf32>
    %128 = arith.subf %127, %121 : vector<16x32xf32>
    %129 = arith.mulf %128, %126 : vector<16x32xf32>
    %130 = arith.mulf %121, %79 : vector<16x32xf32>
    %131 = arith.addf %129, %130 : vector<16x32xf32>
    %132 = vector.extract_strided_slice %103 {offsets = [0, 96], sizes = [16, 96], strides = [1, 1]} : vector<16x192xf32> to vector<16x96xf32>
    %133 = vector.extract_strided_slice %107 {offsets = [0, 96], sizes = [16, 96], strides = [1, 1]} : vector<16x192xf32> to vector<16x96xf32>
    %134 = vector.extract_strided_slice %132 {offsets = [0, 0], sizes = [16, 64], strides = [1, 1]} : vector<16x96xf32> to vector<16x64xf32>
    %135 = vector.extract_strided_slice %133 {offsets = [0, 0], sizes = [16, 64], strides = [1, 1]} : vector<16x96xf32> to vector<16x64xf32>
    %136 = arith.addf %134, %135 : vector<16x64xf32>
    %cst_41 = arith.constant 5.000000e-01 : f32
    %137 = vector.broadcast %cst_41 : f32 to vector<16x64xf32>
    %138 = arith.mulf %137, %136 : vector<16x64xf32>
    %139 = math.tanh %138 : vector<16x64xf32>
    %cst_42 = arith.constant 1.000000e+00 : f32
    %140 = vector.broadcast %cst_42 : f32 to vector<16x64xf32>
    %141 = arith.addf %139, %140 : vector<16x64xf32>
    %cst_43 = arith.constant 5.000000e-01 : f32
    %142 = vector.broadcast %cst_43 : f32 to vector<16x64xf32>
    %143 = arith.mulf %142, %141 : vector<16x64xf32>
    %144 = vector.extract_strided_slice %143 {offsets = [0, 0], sizes = [16, 32], strides = [1, 1]} : vector<16x64xf32> to vector<16x32xf32>
    %145 = vector.extract_strided_slice %143 {offsets = [0, 32], sizes = [16, 32], strides = [1, 1]} : vector<16x64xf32> to vector<16x32xf32>
    %146 = vector.extract_strided_slice %132 {offsets = [0, 64], sizes = [16, 32], strides = [1, 1]} : vector<16x96xf32> to vector<16x32xf32>
    %147 = vector.extract_strided_slice %133 {offsets = [0, 64], sizes = [16, 32], strides = [1, 1]} : vector<16x96xf32> to vector<16x32xf32>
    %148 = arith.mulf %144, %147 : vector<16x32xf32>
    %149 = arith.addf %146, %148 : vector<16x32xf32>
    %150 = math.tanh %149 : vector<16x32xf32>
    %cst_44 = arith.constant 1.000000e+00 : f32
    %151 = vector.broadcast %cst_44 : f32 to vector<16x32xf32>
    %152 = arith.subf %151, %145 : vector<16x32xf32>
    %153 = arith.mulf %152, %150 : vector<16x32xf32>
    %154 = arith.mulf %145, %82 : vector<16x32xf32>
    %155 = arith.addf %153, %154 : vector<16x32xf32>
    %156 = vector.broadcast %c1_i32 : i32 to vector<16x1xi32>
    %157 = arith.cmpi sgt, %0, %156 : vector<16x1xi32>
    %158 = vector.broadcast %95 : i32 to vector<16x1xi32>
    %159 = arith.cmpi sgt, %0, %158 : vector<16x1xi32>
    %160 = vector.shape_cast %157 : vector<16x1xi1> to vector<16x1xi1>
    %161 = vector.broadcast %160 : vector<16x1xi1> to vector<16x32xi1>
    %162 = arith.select %161, %131, %79 : vector<16x32xi1>, vector<16x32xf32>
    %163 = vector.shape_cast %159 : vector<16x1xi1> to vector<16x1xi1>
    %164 = vector.broadcast %163 : vector<16x1xi1> to vector<16x32xi1>
    %165 = arith.select %164, %155, %82 : vector<16x32xi1>, vector<16x32xf32>
    %cst_45 = arith.constant 0.000000e+00 : f32
    %166 = vector.shape_cast %157 : vector<16x1xi1> to vector<16x1xi1>
    %167 = vector.broadcast %166 : vector<16x1xi1> to vector<16x32xi1>
    %168 = vector.broadcast %cst_45 : f32 to vector<16x32xf32>
    %169 = arith.select %167, %162, %168 : vector<16x32xi1>, vector<16x32xf32>
    %cst_46 = arith.constant 0.000000e+00 : f32
    %170 = vector.shape_cast %159 : vector<16x1xi1> to vector<16x1xi1>
    %171 = vector.broadcast %170 : vector<16x1xi1> to vector<16x32xi1>
    %172 = vector.broadcast %cst_46 : f32 to vector<16x32xf32>
    %173 = arith.select %171, %165, %172 : vector<16x32xi1>, vector<16x32xf32>
    %174 = arith.index_cast %97 : i32 to index
    %c0_47 = arith.constant 0 : index
    %175 = vector.load %arg13[%174, %c0_47] : memref<160x32xf32, #tpu.memory_space<vmem>>, vector<16x32xf32>
    tpu.vector_store %arg13[%174, %c0_47], %169 {strides = array<i32>} : memref<160x32xf32, #tpu.memory_space<vmem>>, vector<16x32xf32>,
    %176 = arith.index_cast %99 : i32 to index
    %c0_48 = arith.constant 0 : index
    %177 = vector.load %arg14[%176, %c0_48] : memref<160x32xf32, #tpu.memory_space<vmem>>, vector<16x32xf32>
    tpu.vector_store %arg14[%176, %c0_48], %173 {strides = array<i32>} : memref<160x32xf32, #tpu.memory_space<vmem>>, vector<16x32xf32>,
    %c2_i32 = arith.constant 2 : i32
    %c9_i32_49 = arith.constant 9 : i32
    %178 = arith.subi %c9_i32_49, %c2_i32 : i32
    %c16_i32_50 = arith.constant 16 : i32
    %179 = arith.muli %c2_i32, %c16_i32_50 : i32
    %180 = tpu.assume_multiple %179, 16 : i32
    %c16_i32_51 = arith.constant 16 : i32
    %181 = arith.muli %178, %c16_i32_51 : i32
    %182 = tpu.assume_multiple %181, 16 : i32
    %183 = arith.index_cast %180 : i32 to index
    %c0_52 = arith.constant 0 : index
    %184 = vector.load %arg12[%183, %c0_52] : memref<160x192xf32, #tpu.memory_space<vmem>>, vector<16x192xf32>
    %185 = arith.index_cast %182 : i32 to index
    %c0_53 = arith.constant 0 : index
    %186 = vector.load %arg12[%185, %c0_53] : memref<160x192xf32, #tpu.memory_space<vmem>>, vector<16x192xf32>
    %187 = tpu.concatenate %162, %165 in 1 : vector<16x32xf32>, vector<16x32xf32> -> vector<16x64xf32>
    %cst_54 = arith.constant dense<0.000000e+00> : vector<16x192xf32>
    %188 = tpu.matmul %187, %10, %cst_54 {dimension_numbers = #tpu.dot_dimension_numbers<[1], [0], [0], [1], [0, 0, 1, 1], [], []>} : vector<16x64xf32>, vector<64x192xf32>, vector<16x192xf32> -> vector<16x192xf32>
    %189 = vector.broadcast %11 : vector<1x192xf32> to vector<16x192xf32>
    %190 = arith.addf %188, %189 : vector<16x192xf32>
    %191 = vector.extract_strided_slice %184 {offsets = [0, 0], sizes = [16, 96], strides = [1, 1]} : vector<16x192xf32> to vector<16x96xf32>
    %192 = vector.extract_strided_slice %190 {offsets = [0, 0], sizes = [16, 96], strides = [1, 1]} : vector<16x192xf32> to vector<16x96xf32>
    %193 = vector.extract_strided_slice %191 {offsets = [0, 0], sizes = [16, 64], strides = [1, 1]} : vector<16x96xf32> to vector<16x64xf32>
    %194 = vector.extract_strided_slice %192 {offsets = [0, 0], sizes = [16, 64], strides = [1, 1]} : vector<16x96xf32> to vector<16x64xf32>
    %195 = arith.addf %193, %194 : vector<16x64xf32>
    %cst_55 = arith.constant 5.000000e-01 : f32
    %196 = vector.broadcast %cst_55 : f32 to vector<16x64xf32>
    %197 = arith.mulf %196, %195 : vector<16x64xf32>
    %198 = math.tanh %197 : vector<16x64xf32>
    %cst_56 = arith.constant 1.000000e+00 : f32
    %199 = vector.broadcast %cst_56 : f32 to vector<16x64xf32>
    %200 = arith.addf %198, %199 : vector<16x64xf32>
    %cst_57 = arith.constant 5.000000e-01 : f32
    %201 = vector.broadcast %cst_57 : f32 to vector<16x64xf32>
    %202 = arith.mulf %201, %200 : vector<16x64xf32>
    %203 = vector.extract_strided_slice %202 {offsets = [0, 0], sizes = [16, 32], strides = [1, 1]} : vector<16x64xf32> to vector<16x32xf32>
    %204 = vector.extract_strided_slice %202 {offsets = [0, 32], sizes = [16, 32], strides = [1, 1]} : vector<16x64xf32> to vector<16x32xf32>
    %205 = vector.extract_strided_slice %191 {offsets = [0, 64], sizes = [16, 32], strides = [1, 1]} : vector<16x96xf32> to vector<16x32xf32>
    %206 = vector.extract_strided_slice %192 {offsets = [0, 64], sizes = [16, 32], strides = [1, 1]} : vector<16x96xf32> to vector<16x32xf32>
    %207 = arith.mulf %203, %206 : vector<16x32xf32>
    %208 = arith.addf %205, %207 : vector<16x32xf32>
    %209 = math.tanh %208 : vector<16x32xf32>
    %cst_58 = arith.constant 1.000000e+00 : f32
    %210 = vector.broadcast %cst_58 : f32 to vector<16x32xf32>
    %211 = arith.subf %210, %204 : vector<16x32xf32>
    %212 = arith.mulf %211, %209 : vector<16x32xf32>
    %213 = arith.mulf %204, %162 : vector<16x32xf32>
    %214 = arith.addf %212, %213 : vector<16x32xf32>
    %215 = vector.extract_strided_slice %186 {offsets = [0, 96], sizes = [16, 96], strides = [1, 1]} : vector<16x192xf32> to vector<16x96xf32>
    %216 = vector.extract_strided_slice %190 {offsets = [0, 96], sizes = [16, 96], strides = [1, 1]} : vector<16x192xf32> to vector<16x96xf32>
    %217 = vector.extract_strided_slice %215 {offsets = [0, 0], sizes = [16, 64], strides = [1, 1]} : vector<16x96xf32> to vector<16x64xf32>
    %218 = vector.extract_strided_slice %216 {offsets = [0, 0], sizes = [16, 64], strides = [1, 1]} : vector<16x96xf32> to vector<16x64xf32>
    %219 = arith.addf %217, %218 : vector<16x64xf32>
    %cst_59 = arith.constant 5.000000e-01 : f32
    %220 = vector.broadcast %cst_59 : f32 to vector<16x64xf32>
    %221 = arith.mulf %220, %219 : vector<16x64xf32>
    %222 = math.tanh %221 : vector<16x64xf32>
    %cst_60 = arith.constant 1.000000e+00 : f32
    %223 = vector.broadcast %cst_60 : f32 to vector<16x64xf32>
    %224 = arith.addf %222, %223 : vector<16x64xf32>
    %cst_61 = arith.constant 5.000000e-01 : f32
    %225 = vector.broadcast %cst_61 : f32 to vector<16x64xf32>
    %226 = arith.mulf %225, %224 : vector<16x64xf32>
    %227 = vector.extract_strided_slice %226 {offsets = [0, 0], sizes = [16, 32], strides = [1, 1]} : vector<16x64xf32> to vector<16x32xf32>
    %228 = vector.extract_strided_slice %226 {offsets = [0, 32], sizes = [16, 32], strides = [1, 1]} : vector<16x64xf32> to vector<16x32xf32>
    %229 = vector.extract_strided_slice %215 {offsets = [0, 64], sizes = [16, 32], strides = [1, 1]} : vector<16x96xf32> to vector<16x32xf32>
    %230 = vector.extract_strided_slice %216 {offsets = [0, 64], sizes = [16, 32], strides = [1, 1]} : vector<16x96xf32> to vector<16x32xf32>
    %231 = arith.mulf %227, %230 : vector<16x32xf32>
    %232 = arith.addf %229, %231 : vector<16x32xf32>
    %233 = math.tanh %232 : vector<16x32xf32>
    %cst_62 = arith.constant 1.000000e+00 : f32
    %234 = vector.broadcast %cst_62 : f32 to vector<16x32xf32>
    %235 = arith.subf %234, %228 : vector<16x32xf32>
    %236 = arith.mulf %235, %233 : vector<16x32xf32>
    %237 = arith.mulf %228, %165 : vector<16x32xf32>
    %238 = arith.addf %236, %237 : vector<16x32xf32>
    %239 = vector.broadcast %c2_i32 : i32 to vector<16x1xi32>
    %240 = arith.cmpi sgt, %0, %239 : vector<16x1xi32>
    %241 = vector.broadcast %178 : i32 to vector<16x1xi32>
    %242 = arith.cmpi sgt, %0, %241 : vector<16x1xi32>
    %243 = vector.shape_cast %240 : vector<16x1xi1> to vector<16x1xi1>
    %244 = vector.broadcast %243 : vector<16x1xi1> to vector<16x32xi1>
    %245 = arith.select %244, %214, %162 : vector<16x32xi1>, vector<16x32xf32>
    %246 = vector.shape_cast %242 : vector<16x1xi1> to vector<16x1xi1>
    %247 = vector.broadcast %246 : vector<16x1xi1> to vector<16x32xi1>
    %248 = arith.select %247, %238, %165 : vector<16x32xi1>, vector<16x32xf32>
    %cst_63 = arith.constant 0.000000e+00 : f32
    %249 = vector.shape_cast %240 : vector<16x1xi1> to vector<16x1xi1>
    %250 = vector.broadcast %249 : vector<16x1xi1> to vector<16x32xi1>
    %251 = vector.broadcast %cst_63 : f32 to vector<16x32xf32>
    %252 = arith.select %250, %245, %251 : vector<16x32xi1>, vector<16x32xf32>
    %cst_64 = arith.constant 0.000000e+00 : f32
    %253 = vector.shape_cast %242 : vector<16x1xi1> to vector<16x1xi1>
    %254 = vector.broadcast %253 : vector<16x1xi1> to vector<16x32xi1>
    %255 = vector.broadcast %cst_64 : f32 to vector<16x32xf32>
    %256 = arith.select %254, %248, %255 : vector<16x32xi1>, vector<16x32xf32>
    %257 = arith.index_cast %180 : i32 to index
    %c0_65 = arith.constant 0 : index
    %258 = vector.load %arg13[%257, %c0_65] : memref<160x32xf32, #tpu.memory_space<vmem>>, vector<16x32xf32>
    tpu.vector_store %arg13[%257, %c0_65], %252 {strides = array<i32>} : memref<160x32xf32, #tpu.memory_space<vmem>>, vector<16x32xf32>,
    %259 = arith.index_cast %182 : i32 to index
    %c0_66 = arith.constant 0 : index
    %260 = vector.load %arg14[%259, %c0_66] : memref<160x32xf32, #tpu.memory_space<vmem>>, vector<16x32xf32>
    tpu.vector_store %arg14[%259, %c0_66], %256 {strides = array<i32>} : memref<160x32xf32, #tpu.memory_space<vmem>>, vector<16x32xf32>,
    %c3_i32 = arith.constant 3 : i32
    %c9_i32_67 = arith.constant 9 : i32
    %261 = arith.subi %c9_i32_67, %c3_i32 : i32
    %c16_i32_68 = arith.constant 16 : i32
    %262 = arith.muli %c3_i32, %c16_i32_68 : i32
    %263 = tpu.assume_multiple %262, 16 : i32
    %c16_i32_69 = arith.constant 16 : i32
    %264 = arith.muli %261, %c16_i32_69 : i32
    %265 = tpu.assume_multiple %264, 16 : i32
    %266 = arith.index_cast %263 : i32 to index
    %c0_70 = arith.constant 0 : index
    %267 = vector.load %arg12[%266, %c0_70] : memref<160x192xf32, #tpu.memory_space<vmem>>, vector<16x192xf32>
    %268 = arith.index_cast %265 : i32 to index
    %c0_71 = arith.constant 0 : index
    %269 = vector.load %arg12[%268, %c0_71] : memref<160x192xf32, #tpu.memory_space<vmem>>, vector<16x192xf32>
    %270 = tpu.concatenate %245, %248 in 1 : vector<16x32xf32>, vector<16x32xf32> -> vector<16x64xf32>
    %cst_72 = arith.constant dense<0.000000e+00> : vector<16x192xf32>
    %271 = tpu.matmul %270, %10, %cst_72 {dimension_numbers = #tpu.dot_dimension_numbers<[1], [0], [0], [1], [0, 0, 1, 1], [], []>} : vector<16x64xf32>, vector<64x192xf32>, vector<16x192xf32> -> vector<16x192xf32>
    %272 = vector.broadcast %11 : vector<1x192xf32> to vector<16x192xf32>
    %273 = arith.addf %271, %272 : vector<16x192xf32>
    %274 = vector.extract_strided_slice %267 {offsets = [0, 0], sizes = [16, 96], strides = [1, 1]} : vector<16x192xf32> to vector<16x96xf32>
    %275 = vector.extract_strided_slice %273 {offsets = [0, 0], sizes = [16, 96], strides = [1, 1]} : vector<16x192xf32> to vector<16x96xf32>
    %276 = vector.extract_strided_slice %274 {offsets = [0, 0], sizes = [16, 64], strides = [1, 1]} : vector<16x96xf32> to vector<16x64xf32>
    %277 = vector.extract_strided_slice %275 {offsets = [0, 0], sizes = [16, 64], strides = [1, 1]} : vector<16x96xf32> to vector<16x64xf32>
    %278 = arith.addf %276, %277 : vector<16x64xf32>
    %cst_73 = arith.constant 5.000000e-01 : f32
    %279 = vector.broadcast %cst_73 : f32 to vector<16x64xf32>
    %280 = arith.mulf %279, %278 : vector<16x64xf32>
    %281 = math.tanh %280 : vector<16x64xf32>
    %cst_74 = arith.constant 1.000000e+00 : f32
    %282 = vector.broadcast %cst_74 : f32 to vector<16x64xf32>
    %283 = arith.addf %281, %282 : vector<16x64xf32>
    %cst_75 = arith.constant 5.000000e-01 : f32
    %284 = vector.broadcast %cst_75 : f32 to vector<16x64xf32>
    %285 = arith.mulf %284, %283 : vector<16x64xf32>
    %286 = vector.extract_strided_slice %285 {offsets = [0, 0], sizes = [16, 32], strides = [1, 1]} : vector<16x64xf32> to vector<16x32xf32>
    %287 = vector.extract_strided_slice %285 {offsets = [0, 32], sizes = [16, 32], strides = [1, 1]} : vector<16x64xf32> to vector<16x32xf32>
    %288 = vector.extract_strided_slice %274 {offsets = [0, 64], sizes = [16, 32], strides = [1, 1]} : vector<16x96xf32> to vector<16x32xf32>
    %289 = vector.extract_strided_slice %275 {offsets = [0, 64], sizes = [16, 32], strides = [1, 1]} : vector<16x96xf32> to vector<16x32xf32>
    %290 = arith.mulf %286, %289 : vector<16x32xf32>
    %291 = arith.addf %288, %290 : vector<16x32xf32>
    %292 = math.tanh %291 : vector<16x32xf32>
    %cst_76 = arith.constant 1.000000e+00 : f32
    %293 = vector.broadcast %cst_76 : f32 to vector<16x32xf32>
    %294 = arith.subf %293, %287 : vector<16x32xf32>
    %295 = arith.mulf %294, %292 : vector<16x32xf32>
    %296 = arith.mulf %287, %245 : vector<16x32xf32>
    %297 = arith.addf %295, %296 : vector<16x32xf32>
    %298 = vector.extract_strided_slice %269 {offsets = [0, 96], sizes = [16, 96], strides = [1, 1]} : vector<16x192xf32> to vector<16x96xf32>
    %299 = vector.extract_strided_slice %273 {offsets = [0, 96], sizes = [16, 96], strides = [1, 1]} : vector<16x192xf32> to vector<16x96xf32>
    %300 = vector.extract_strided_slice %298 {offsets = [0, 0], sizes = [16, 64], strides = [1, 1]} : vector<16x96xf32> to vector<16x64xf32>
    %301 = vector.extract_strided_slice %299 {offsets = [0, 0], sizes = [16, 64], strides = [1, 1]} : vector<16x96xf32> to vector<16x64xf32>
    %302 = arith.addf %300, %301 : vector<16x64xf32>
    %cst_77 = arith.constant 5.000000e-01 : f32
    %303 = vector.broadcast %cst_77 : f32 to vector<16x64xf32>
    %304 = arith.mulf %303, %302 : vector<16x64xf32>
    %305 = math.tanh %304 : vector<16x64xf32>
    %cst_78 = arith.constant 1.000000e+00 : f32
    %306 = vector.broadcast %cst_78 : f32 to vector<16x64xf32>
    %307 = arith.addf %305, %306 : vector<16x64xf32>
    %cst_79 = arith.constant 5.000000e-01 : f32
    %308 = vector.broadcast %cst_79 : f32 to vector<16x64xf32>
    %309 = arith.mulf %308, %307 : vector<16x64xf32>
    %310 = vector.extract_strided_slice %309 {offsets = [0, 0], sizes = [16, 32], strides = [1, 1]} : vector<16x64xf32> to vector<16x32xf32>
    %311 = vector.extract_strided_slice %309 {offsets = [0, 32], sizes = [16, 32], strides = [1, 1]} : vector<16x64xf32> to vector<16x32xf32>
    %312 = vector.extract_strided_slice %298 {offsets = [0, 64], sizes = [16, 32], strides = [1, 1]} : vector<16x96xf32> to vector<16x32xf32>
    %313 = vector.extract_strided_slice %299 {offsets = [0, 64], sizes = [16, 32], strides = [1, 1]} : vector<16x96xf32> to vector<16x32xf32>
    %314 = arith.mulf %310, %313 : vector<16x32xf32>
    %315 = arith.addf %312, %314 : vector<16x32xf32>
    %316 = math.tanh %315 : vector<16x32xf32>
    %cst_80 = arith.constant 1.000000e+00 : f32
    %317 = vector.broadcast %cst_80 : f32 to vector<16x32xf32>
    %318 = arith.subf %317, %311 : vector<16x32xf32>
    %319 = arith.mulf %318, %316 : vector<16x32xf32>
    %320 = arith.mulf %311, %248 : vector<16x32xf32>
    %321 = arith.addf %319, %320 : vector<16x32xf32>
    %322 = vector.broadcast %c3_i32 : i32 to vector<16x1xi32>
    %323 = arith.cmpi sgt, %0, %322 : vector<16x1xi32>
    %324 = vector.broadcast %261 : i32 to vector<16x1xi32>
    %325 = arith.cmpi sgt, %0, %324 : vector<16x1xi32>
    %326 = vector.shape_cast %323 : vector<16x1xi1> to vector<16x1xi1>
    %327 = vector.broadcast %326 : vector<16x1xi1> to vector<16x32xi1>
    %328 = arith.select %327, %297, %245 : vector<16x32xi1>, vector<16x32xf32>
    %329 = vector.shape_cast %325 : vector<16x1xi1> to vector<16x1xi1>
    %330 = vector.broadcast %329 : vector<16x1xi1> to vector<16x32xi1>
    %331 = arith.select %330, %321, %248 : vector<16x32xi1>, vector<16x32xf32>
    %cst_81 = arith.constant 0.000000e+00 : f32
    %332 = vector.shape_cast %323 : vector<16x1xi1> to vector<16x1xi1>
    %333 = vector.broadcast %332 : vector<16x1xi1> to vector<16x32xi1>
    %334 = vector.broadcast %cst_81 : f32 to vector<16x32xf32>
    %335 = arith.select %333, %328, %334 : vector<16x32xi1>, vector<16x32xf32>
    %cst_82 = arith.constant 0.000000e+00 : f32
    %336 = vector.shape_cast %325 : vector<16x1xi1> to vector<16x1xi1>
    %337 = vector.broadcast %336 : vector<16x1xi1> to vector<16x32xi1>
    %338 = vector.broadcast %cst_82 : f32 to vector<16x32xf32>
    %339 = arith.select %337, %331, %338 : vector<16x32xi1>, vector<16x32xf32>
    %340 = arith.index_cast %263 : i32 to index
    %c0_83 = arith.constant 0 : index
    %341 = vector.load %arg13[%340, %c0_83] : memref<160x32xf32, #tpu.memory_space<vmem>>, vector<16x32xf32>
    tpu.vector_store %arg13[%340, %c0_83], %335 {strides = array<i32>} : memref<160x32xf32, #tpu.memory_space<vmem>>, vector<16x32xf32>,
    %342 = arith.index_cast %265 : i32 to index
    %c0_84 = arith.constant 0 : index
    %343 = vector.load %arg14[%342, %c0_84] : memref<160x32xf32, #tpu.memory_space<vmem>>, vector<16x32xf32>
    tpu.vector_store %arg14[%342, %c0_84], %339 {strides = array<i32>} : memref<160x32xf32, #tpu.memory_space<vmem>>, vector<16x32xf32>,
    %c4_i32 = arith.constant 4 : i32
    %c9_i32_85 = arith.constant 9 : i32
    %344 = arith.subi %c9_i32_85, %c4_i32 : i32
    %c16_i32_86 = arith.constant 16 : i32
    %345 = arith.muli %c4_i32, %c16_i32_86 : i32
    %346 = tpu.assume_multiple %345, 16 : i32
    %c16_i32_87 = arith.constant 16 : i32
    %347 = arith.muli %344, %c16_i32_87 : i32
    %348 = tpu.assume_multiple %347, 16 : i32
    %349 = arith.index_cast %346 : i32 to index
    %c0_88 = arith.constant 0 : index
    %350 = vector.load %arg12[%349, %c0_88] : memref<160x192xf32, #tpu.memory_space<vmem>>, vector<16x192xf32>
    %351 = arith.index_cast %348 : i32 to index
    %c0_89 = arith.constant 0 : index
    %352 = vector.load %arg12[%351, %c0_89] : memref<160x192xf32, #tpu.memory_space<vmem>>, vector<16x192xf32>
    %353 = tpu.concatenate %328, %331 in 1 : vector<16x32xf32>, vector<16x32xf32> -> vector<16x64xf32>
    %cst_90 = arith.constant dense<0.000000e+00> : vector<16x192xf32>
    %354 = tpu.matmul %353, %10, %cst_90 {dimension_numbers = #tpu.dot_dimension_numbers<[1], [0], [0], [1], [0, 0, 1, 1], [], []>} : vector<16x64xf32>, vector<64x192xf32>, vector<16x192xf32> -> vector<16x192xf32>
    %355 = vector.broadcast %11 : vector<1x192xf32> to vector<16x192xf32>
    %356 = arith.addf %354, %355 : vector<16x192xf32>
    %357 = vector.extract_strided_slice %350 {offsets = [0, 0], sizes = [16, 96], strides = [1, 1]} : vector<16x192xf32> to vector<16x96xf32>
    %358 = vector.extract_strided_slice %356 {offsets = [0, 0], sizes = [16, 96], strides = [1, 1]} : vector<16x192xf32> to vector<16x96xf32>
    %359 = vector.extract_strided_slice %357 {offsets = [0, 0], sizes = [16, 64], strides = [1, 1]} : vector<16x96xf32> to vector<16x64xf32>
    %360 = vector.extract_strided_slice %358 {offsets = [0, 0], sizes = [16, 64], strides = [1, 1]} : vector<16x96xf32> to vector<16x64xf32>
    %361 = arith.addf %359, %360 : vector<16x64xf32>
    %cst_91 = arith.constant 5.000000e-01 : f32
    %362 = vector.broadcast %cst_91 : f32 to vector<16x64xf32>
    %363 = arith.mulf %362, %361 : vector<16x64xf32>
    %364 = math.tanh %363 : vector<16x64xf32>
    %cst_92 = arith.constant 1.000000e+00 : f32
    %365 = vector.broadcast %cst_92 : f32 to vector<16x64xf32>
    %366 = arith.addf %364, %365 : vector<16x64xf32>
    %cst_93 = arith.constant 5.000000e-01 : f32
    %367 = vector.broadcast %cst_93 : f32 to vector<16x64xf32>
    %368 = arith.mulf %367, %366 : vector<16x64xf32>
    %369 = vector.extract_strided_slice %368 {offsets = [0, 0], sizes = [16, 32], strides = [1, 1]} : vector<16x64xf32> to vector<16x32xf32>
    %370 = vector.extract_strided_slice %368 {offsets = [0, 32], sizes = [16, 32], strides = [1, 1]} : vector<16x64xf32> to vector<16x32xf32>
    %371 = vector.extract_strided_slice %357 {offsets = [0, 64], sizes = [16, 32], strides = [1, 1]} : vector<16x96xf32> to vector<16x32xf32>
    %372 = vector.extract_strided_slice %358 {offsets = [0, 64], sizes = [16, 32], strides = [1, 1]} : vector<16x96xf32> to vector<16x32xf32>
    %373 = arith.mulf %369, %372 : vector<16x32xf32>
    %374 = arith.addf %371, %373 : vector<16x32xf32>
    %375 = math.tanh %374 : vector<16x32xf32>
    %cst_94 = arith.constant 1.000000e+00 : f32
    %376 = vector.broadcast %cst_94 : f32 to vector<16x32xf32>
    %377 = arith.subf %376, %370 : vector<16x32xf32>
    %378 = arith.mulf %377, %375 : vector<16x32xf32>
    %379 = arith.mulf %370, %328 : vector<16x32xf32>
    %380 = arith.addf %378, %379 : vector<16x32xf32>
    %381 = vector.extract_strided_slice %352 {offsets = [0, 96], sizes = [16, 96], strides = [1, 1]} : vector<16x192xf32> to vector<16x96xf32>
    %382 = vector.extract_strided_slice %356 {offsets = [0, 96], sizes = [16, 96], strides = [1, 1]} : vector<16x192xf32> to vector<16x96xf32>
    %383 = vector.extract_strided_slice %381 {offsets = [0, 0], sizes = [16, 64], strides = [1, 1]} : vector<16x96xf32> to vector<16x64xf32>
    %384 = vector.extract_strided_slice %382 {offsets = [0, 0], sizes = [16, 64], strides = [1, 1]} : vector<16x96xf32> to vector<16x64xf32>
    %385 = arith.addf %383, %384 : vector<16x64xf32>
    %cst_95 = arith.constant 5.000000e-01 : f32
    %386 = vector.broadcast %cst_95 : f32 to vector<16x64xf32>
    %387 = arith.mulf %386, %385 : vector<16x64xf32>
    %388 = math.tanh %387 : vector<16x64xf32>
    %cst_96 = arith.constant 1.000000e+00 : f32
    %389 = vector.broadcast %cst_96 : f32 to vector<16x64xf32>
    %390 = arith.addf %388, %389 : vector<16x64xf32>
    %cst_97 = arith.constant 5.000000e-01 : f32
    %391 = vector.broadcast %cst_97 : f32 to vector<16x64xf32>
    %392 = arith.mulf %391, %390 : vector<16x64xf32>
    %393 = vector.extract_strided_slice %392 {offsets = [0, 0], sizes = [16, 32], strides = [1, 1]} : vector<16x64xf32> to vector<16x32xf32>
    %394 = vector.extract_strided_slice %392 {offsets = [0, 32], sizes = [16, 32], strides = [1, 1]} : vector<16x64xf32> to vector<16x32xf32>
    %395 = vector.extract_strided_slice %381 {offsets = [0, 64], sizes = [16, 32], strides = [1, 1]} : vector<16x96xf32> to vector<16x32xf32>
    %396 = vector.extract_strided_slice %382 {offsets = [0, 64], sizes = [16, 32], strides = [1, 1]} : vector<16x96xf32> to vector<16x32xf32>
    %397 = arith.mulf %393, %396 : vector<16x32xf32>
    %398 = arith.addf %395, %397 : vector<16x32xf32>
    %399 = math.tanh %398 : vector<16x32xf32>
    %cst_98 = arith.constant 1.000000e+00 : f32
    %400 = vector.broadcast %cst_98 : f32 to vector<16x32xf32>
    %401 = arith.subf %400, %394 : vector<16x32xf32>
    %402 = arith.mulf %401, %399 : vector<16x32xf32>
    %403 = arith.mulf %394, %331 : vector<16x32xf32>
    %404 = arith.addf %402, %403 : vector<16x32xf32>
    %405 = vector.broadcast %c4_i32 : i32 to vector<16x1xi32>
    %406 = arith.cmpi sgt, %0, %405 : vector<16x1xi32>
    %407 = vector.broadcast %344 : i32 to vector<16x1xi32>
    %408 = arith.cmpi sgt, %0, %407 : vector<16x1xi32>
    %409 = vector.shape_cast %406 : vector<16x1xi1> to vector<16x1xi1>
    %410 = vector.broadcast %409 : vector<16x1xi1> to vector<16x32xi1>
    %411 = arith.select %410, %380, %328 : vector<16x32xi1>, vector<16x32xf32>
    %412 = vector.shape_cast %408 : vector<16x1xi1> to vector<16x1xi1>
    %413 = vector.broadcast %412 : vector<16x1xi1> to vector<16x32xi1>
    %414 = arith.select %413, %404, %331 : vector<16x32xi1>, vector<16x32xf32>
    %cst_99 = arith.constant 0.000000e+00 : f32
    %415 = vector.shape_cast %406 : vector<16x1xi1> to vector<16x1xi1>
    %416 = vector.broadcast %415 : vector<16x1xi1> to vector<16x32xi1>
    %417 = vector.broadcast %cst_99 : f32 to vector<16x32xf32>
    %418 = arith.select %416, %411, %417 : vector<16x32xi1>, vector<16x32xf32>
    %cst_100 = arith.constant 0.000000e+00 : f32
    %419 = vector.shape_cast %408 : vector<16x1xi1> to vector<16x1xi1>
    %420 = vector.broadcast %419 : vector<16x1xi1> to vector<16x32xi1>
    %421 = vector.broadcast %cst_100 : f32 to vector<16x32xf32>
    %422 = arith.select %420, %414, %421 : vector<16x32xi1>, vector<16x32xf32>
    %423 = arith.index_cast %346 : i32 to index
    %c0_101 = arith.constant 0 : index
    %424 = vector.load %arg13[%423, %c0_101] : memref<160x32xf32, #tpu.memory_space<vmem>>, vector<16x32xf32>
    tpu.vector_store %arg13[%423, %c0_101], %418 {strides = array<i32>} : memref<160x32xf32, #tpu.memory_space<vmem>>, vector<16x32xf32>,
    %425 = arith.index_cast %348 : i32 to index
    %c0_102 = arith.constant 0 : index
    %426 = vector.load %arg14[%425, %c0_102] : memref<160x32xf32, #tpu.memory_space<vmem>>, vector<16x32xf32>
    tpu.vector_store %arg14[%425, %c0_102], %422 {strides = array<i32>} : memref<160x32xf32, #tpu.memory_space<vmem>>, vector<16x32xf32>,
    %c5_i32 = arith.constant 5 : i32
    %c9_i32_103 = arith.constant 9 : i32
    %427 = arith.subi %c9_i32_103, %c5_i32 : i32
    %c16_i32_104 = arith.constant 16 : i32
    %428 = arith.muli %c5_i32, %c16_i32_104 : i32
    %429 = tpu.assume_multiple %428, 16 : i32
    %c16_i32_105 = arith.constant 16 : i32
    %430 = arith.muli %427, %c16_i32_105 : i32
    %431 = tpu.assume_multiple %430, 16 : i32
    %432 = arith.index_cast %429 : i32 to index
    %c0_106 = arith.constant 0 : index
    %433 = vector.load %arg12[%432, %c0_106] : memref<160x192xf32, #tpu.memory_space<vmem>>, vector<16x192xf32>
    %434 = arith.index_cast %431 : i32 to index
    %c0_107 = arith.constant 0 : index
    %435 = vector.load %arg12[%434, %c0_107] : memref<160x192xf32, #tpu.memory_space<vmem>>, vector<16x192xf32>
    %436 = tpu.concatenate %411, %414 in 1 : vector<16x32xf32>, vector<16x32xf32> -> vector<16x64xf32>
    %cst_108 = arith.constant dense<0.000000e+00> : vector<16x192xf32>
    %437 = tpu.matmul %436, %10, %cst_108 {dimension_numbers = #tpu.dot_dimension_numbers<[1], [0], [0], [1], [0, 0, 1, 1], [], []>} : vector<16x64xf32>, vector<64x192xf32>, vector<16x192xf32> -> vector<16x192xf32>
    %438 = vector.broadcast %11 : vector<1x192xf32> to vector<16x192xf32>
    %439 = arith.addf %437, %438 : vector<16x192xf32>
    %440 = vector.extract_strided_slice %433 {offsets = [0, 0], sizes = [16, 96], strides = [1, 1]} : vector<16x192xf32> to vector<16x96xf32>
    %441 = vector.extract_strided_slice %439 {offsets = [0, 0], sizes = [16, 96], strides = [1, 1]} : vector<16x192xf32> to vector<16x96xf32>
    %442 = vector.extract_strided_slice %440 {offsets = [0, 0], sizes = [16, 64], strides = [1, 1]} : vector<16x96xf32> to vector<16x64xf32>
    %443 = vector.extract_strided_slice %441 {offsets = [0, 0], sizes = [16, 64], strides = [1, 1]} : vector<16x96xf32> to vector<16x64xf32>
    %444 = arith.addf %442, %443 : vector<16x64xf32>
    %cst_109 = arith.constant 5.000000e-01 : f32
    %445 = vector.broadcast %cst_109 : f32 to vector<16x64xf32>
    %446 = arith.mulf %445, %444 : vector<16x64xf32>
    %447 = math.tanh %446 : vector<16x64xf32>
    %cst_110 = arith.constant 1.000000e+00 : f32
    %448 = vector.broadcast %cst_110 : f32 to vector<16x64xf32>
    %449 = arith.addf %447, %448 : vector<16x64xf32>
    %cst_111 = arith.constant 5.000000e-01 : f32
    %450 = vector.broadcast %cst_111 : f32 to vector<16x64xf32>
    %451 = arith.mulf %450, %449 : vector<16x64xf32>
    %452 = vector.extract_strided_slice %451 {offsets = [0, 0], sizes = [16, 32], strides = [1, 1]} : vector<16x64xf32> to vector<16x32xf32>
    %453 = vector.extract_strided_slice %451 {offsets = [0, 32], sizes = [16, 32], strides = [1, 1]} : vector<16x64xf32> to vector<16x32xf32>
    %454 = vector.extract_strided_slice %440 {offsets = [0, 64], sizes = [16, 32], strides = [1, 1]} : vector<16x96xf32> to vector<16x32xf32>
    %455 = vector.extract_strided_slice %441 {offsets = [0, 64], sizes = [16, 32], strides = [1, 1]} : vector<16x96xf32> to vector<16x32xf32>
    %456 = arith.mulf %452, %455 : vector<16x32xf32>
    %457 = arith.addf %454, %456 : vector<16x32xf32>
    %458 = math.tanh %457 : vector<16x32xf32>
    %cst_112 = arith.constant 1.000000e+00 : f32
    %459 = vector.broadcast %cst_112 : f32 to vector<16x32xf32>
    %460 = arith.subf %459, %453 : vector<16x32xf32>
    %461 = arith.mulf %460, %458 : vector<16x32xf32>
    %462 = arith.mulf %453, %411 : vector<16x32xf32>
    %463 = arith.addf %461, %462 : vector<16x32xf32>
    %464 = vector.extract_strided_slice %435 {offsets = [0, 96], sizes = [16, 96], strides = [1, 1]} : vector<16x192xf32> to vector<16x96xf32>
    %465 = vector.extract_strided_slice %439 {offsets = [0, 96], sizes = [16, 96], strides = [1, 1]} : vector<16x192xf32> to vector<16x96xf32>
    %466 = vector.extract_strided_slice %464 {offsets = [0, 0], sizes = [16, 64], strides = [1, 1]} : vector<16x96xf32> to vector<16x64xf32>
    %467 = vector.extract_strided_slice %465 {offsets = [0, 0], sizes = [16, 64], strides = [1, 1]} : vector<16x96xf32> to vector<16x64xf32>
    %468 = arith.addf %466, %467 : vector<16x64xf32>
    %cst_113 = arith.constant 5.000000e-01 : f32
    %469 = vector.broadcast %cst_113 : f32 to vector<16x64xf32>
    %470 = arith.mulf %469, %468 : vector<16x64xf32>
    %471 = math.tanh %470 : vector<16x64xf32>
    %cst_114 = arith.constant 1.000000e+00 : f32
    %472 = vector.broadcast %cst_114 : f32 to vector<16x64xf32>
    %473 = arith.addf %471, %472 : vector<16x64xf32>
    %cst_115 = arith.constant 5.000000e-01 : f32
    %474 = vector.broadcast %cst_115 : f32 to vector<16x64xf32>
    %475 = arith.mulf %474, %473 : vector<16x64xf32>
    %476 = vector.extract_strided_slice %475 {offsets = [0, 0], sizes = [16, 32], strides = [1, 1]} : vector<16x64xf32> to vector<16x32xf32>
    %477 = vector.extract_strided_slice %475 {offsets = [0, 32], sizes = [16, 32], strides = [1, 1]} : vector<16x64xf32> to vector<16x32xf32>
    %478 = vector.extract_strided_slice %464 {offsets = [0, 64], sizes = [16, 32], strides = [1, 1]} : vector<16x96xf32> to vector<16x32xf32>
    %479 = vector.extract_strided_slice %465 {offsets = [0, 64], sizes = [16, 32], strides = [1, 1]} : vector<16x96xf32> to vector<16x32xf32>
    %480 = arith.mulf %476, %479 : vector<16x32xf32>
    %481 = arith.addf %478, %480 : vector<16x32xf32>
    %482 = math.tanh %481 : vector<16x32xf32>
    %cst_116 = arith.constant 1.000000e+00 : f32
    %483 = vector.broadcast %cst_116 : f32 to vector<16x32xf32>
    %484 = arith.subf %483, %477 : vector<16x32xf32>
    %485 = arith.mulf %484, %482 : vector<16x32xf32>
    %486 = arith.mulf %477, %414 : vector<16x32xf32>
    %487 = arith.addf %485, %486 : vector<16x32xf32>
    %488 = vector.broadcast %c5_i32 : i32 to vector<16x1xi32>
    %489 = arith.cmpi sgt, %0, %488 : vector<16x1xi32>
    %490 = vector.broadcast %427 : i32 to vector<16x1xi32>
    %491 = arith.cmpi sgt, %0, %490 : vector<16x1xi32>
    %492 = vector.shape_cast %489 : vector<16x1xi1> to vector<16x1xi1>
    %493 = vector.broadcast %492 : vector<16x1xi1> to vector<16x32xi1>
    %494 = arith.select %493, %463, %411 : vector<16x32xi1>, vector<16x32xf32>
    %495 = vector.shape_cast %491 : vector<16x1xi1> to vector<16x1xi1>
    %496 = vector.broadcast %495 : vector<16x1xi1> to vector<16x32xi1>
    %497 = arith.select %496, %487, %414 : vector<16x32xi1>, vector<16x32xf32>
    %cst_117 = arith.constant 0.000000e+00 : f32
    %498 = vector.shape_cast %489 : vector<16x1xi1> to vector<16x1xi1>
    %499 = vector.broadcast %498 : vector<16x1xi1> to vector<16x32xi1>
    %500 = vector.broadcast %cst_117 : f32 to vector<16x32xf32>
    %501 = arith.select %499, %494, %500 : vector<16x32xi1>, vector<16x32xf32>
    %cst_118 = arith.constant 0.000000e+00 : f32
    %502 = vector.shape_cast %491 : vector<16x1xi1> to vector<16x1xi1>
    %503 = vector.broadcast %502 : vector<16x1xi1> to vector<16x32xi1>
    %504 = vector.broadcast %cst_118 : f32 to vector<16x32xf32>
    %505 = arith.select %503, %497, %504 : vector<16x32xi1>, vector<16x32xf32>
    %506 = arith.index_cast %429 : i32 to index
    %c0_119 = arith.constant 0 : index
    %507 = vector.load %arg13[%506, %c0_119] : memref<160x32xf32, #tpu.memory_space<vmem>>, vector<16x32xf32>
    tpu.vector_store %arg13[%506, %c0_119], %501 {strides = array<i32>} : memref<160x32xf32, #tpu.memory_space<vmem>>, vector<16x32xf32>,
    %508 = arith.index_cast %431 : i32 to index
    %c0_120 = arith.constant 0 : index
    %509 = vector.load %arg14[%508, %c0_120] : memref<160x32xf32, #tpu.memory_space<vmem>>, vector<16x32xf32>
    tpu.vector_store %arg14[%508, %c0_120], %505 {strides = array<i32>} : memref<160x32xf32, #tpu.memory_space<vmem>>, vector<16x32xf32>,
    %c6_i32 = arith.constant 6 : i32
    %c9_i32_121 = arith.constant 9 : i32
    %510 = arith.subi %c9_i32_121, %c6_i32 : i32
    %c16_i32_122 = arith.constant 16 : i32
    %511 = arith.muli %c6_i32, %c16_i32_122 : i32
    %512 = tpu.assume_multiple %511, 16 : i32
    %c16_i32_123 = arith.constant 16 : i32
    %513 = arith.muli %510, %c16_i32_123 : i32
    %514 = tpu.assume_multiple %513, 16 : i32
    %515 = arith.index_cast %512 : i32 to index
    %c0_124 = arith.constant 0 : index
    %516 = vector.load %arg12[%515, %c0_124] : memref<160x192xf32, #tpu.memory_space<vmem>>, vector<16x192xf32>
    %517 = arith.index_cast %514 : i32 to index
    %c0_125 = arith.constant 0 : index
    %518 = vector.load %arg12[%517, %c0_125] : memref<160x192xf32, #tpu.memory_space<vmem>>, vector<16x192xf32>
    %519 = tpu.concatenate %494, %497 in 1 : vector<16x32xf32>, vector<16x32xf32> -> vector<16x64xf32>
    %cst_126 = arith.constant dense<0.000000e+00> : vector<16x192xf32>
    %520 = tpu.matmul %519, %10, %cst_126 {dimension_numbers = #tpu.dot_dimension_numbers<[1], [0], [0], [1], [0, 0, 1, 1], [], []>} : vector<16x64xf32>, vector<64x192xf32>, vector<16x192xf32> -> vector<16x192xf32>
    %521 = vector.broadcast %11 : vector<1x192xf32> to vector<16x192xf32>
    %522 = arith.addf %520, %521 : vector<16x192xf32>
    %523 = vector.extract_strided_slice %516 {offsets = [0, 0], sizes = [16, 96], strides = [1, 1]} : vector<16x192xf32> to vector<16x96xf32>
    %524 = vector.extract_strided_slice %522 {offsets = [0, 0], sizes = [16, 96], strides = [1, 1]} : vector<16x192xf32> to vector<16x96xf32>
    %525 = vector.extract_strided_slice %523 {offsets = [0, 0], sizes = [16, 64], strides = [1, 1]} : vector<16x96xf32> to vector<16x64xf32>
    %526 = vector.extract_strided_slice %524 {offsets = [0, 0], sizes = [16, 64], strides = [1, 1]} : vector<16x96xf32> to vector<16x64xf32>
    %527 = arith.addf %525, %526 : vector<16x64xf32>
    %cst_127 = arith.constant 5.000000e-01 : f32
    %528 = vector.broadcast %cst_127 : f32 to vector<16x64xf32>
    %529 = arith.mulf %528, %527 : vector<16x64xf32>
    %530 = math.tanh %529 : vector<16x64xf32>
    %cst_128 = arith.constant 1.000000e+00 : f32
    %531 = vector.broadcast %cst_128 : f32 to vector<16x64xf32>
    %532 = arith.addf %530, %531 : vector<16x64xf32>
    %cst_129 = arith.constant 5.000000e-01 : f32
    %533 = vector.broadcast %cst_129 : f32 to vector<16x64xf32>
    %534 = arith.mulf %533, %532 : vector<16x64xf32>
    %535 = vector.extract_strided_slice %534 {offsets = [0, 0], sizes = [16, 32], strides = [1, 1]} : vector<16x64xf32> to vector<16x32xf32>
    %536 = vector.extract_strided_slice %534 {offsets = [0, 32], sizes = [16, 32], strides = [1, 1]} : vector<16x64xf32> to vector<16x32xf32>
    %537 = vector.extract_strided_slice %523 {offsets = [0, 64], sizes = [16, 32], strides = [1, 1]} : vector<16x96xf32> to vector<16x32xf32>
    %538 = vector.extract_strided_slice %524 {offsets = [0, 64], sizes = [16, 32], strides = [1, 1]} : vector<16x96xf32> to vector<16x32xf32>
    %539 = arith.mulf %535, %538 : vector<16x32xf32>
    %540 = arith.addf %537, %539 : vector<16x32xf32>
    %541 = math.tanh %540 : vector<16x32xf32>
    %cst_130 = arith.constant 1.000000e+00 : f32
    %542 = vector.broadcast %cst_130 : f32 to vector<16x32xf32>
    %543 = arith.subf %542, %536 : vector<16x32xf32>
    %544 = arith.mulf %543, %541 : vector<16x32xf32>
    %545 = arith.mulf %536, %494 : vector<16x32xf32>
    %546 = arith.addf %544, %545 : vector<16x32xf32>
    %547 = vector.extract_strided_slice %518 {offsets = [0, 96], sizes = [16, 96], strides = [1, 1]} : vector<16x192xf32> to vector<16x96xf32>
    %548 = vector.extract_strided_slice %522 {offsets = [0, 96], sizes = [16, 96], strides = [1, 1]} : vector<16x192xf32> to vector<16x96xf32>
    %549 = vector.extract_strided_slice %547 {offsets = [0, 0], sizes = [16, 64], strides = [1, 1]} : vector<16x96xf32> to vector<16x64xf32>
    %550 = vector.extract_strided_slice %548 {offsets = [0, 0], sizes = [16, 64], strides = [1, 1]} : vector<16x96xf32> to vector<16x64xf32>
    %551 = arith.addf %549, %550 : vector<16x64xf32>
    %cst_131 = arith.constant 5.000000e-01 : f32
    %552 = vector.broadcast %cst_131 : f32 to vector<16x64xf32>
    %553 = arith.mulf %552, %551 : vector<16x64xf32>
    %554 = math.tanh %553 : vector<16x64xf32>
    %cst_132 = arith.constant 1.000000e+00 : f32
    %555 = vector.broadcast %cst_132 : f32 to vector<16x64xf32>
    %556 = arith.addf %554, %555 : vector<16x64xf32>
    %cst_133 = arith.constant 5.000000e-01 : f32
    %557 = vector.broadcast %cst_133 : f32 to vector<16x64xf32>
    %558 = arith.mulf %557, %556 : vector<16x64xf32>
    %559 = vector.extract_strided_slice %558 {offsets = [0, 0], sizes = [16, 32], strides = [1, 1]} : vector<16x64xf32> to vector<16x32xf32>
    %560 = vector.extract_strided_slice %558 {offsets = [0, 32], sizes = [16, 32], strides = [1, 1]} : vector<16x64xf32> to vector<16x32xf32>
    %561 = vector.extract_strided_slice %547 {offsets = [0, 64], sizes = [16, 32], strides = [1, 1]} : vector<16x96xf32> to vector<16x32xf32>
    %562 = vector.extract_strided_slice %548 {offsets = [0, 64], sizes = [16, 32], strides = [1, 1]} : vector<16x96xf32> to vector<16x32xf32>
    %563 = arith.mulf %559, %562 : vector<16x32xf32>
    %564 = arith.addf %561, %563 : vector<16x32xf32>
    %565 = math.tanh %564 : vector<16x32xf32>
    %cst_134 = arith.constant 1.000000e+00 : f32
    %566 = vector.broadcast %cst_134 : f32 to vector<16x32xf32>
    %567 = arith.subf %566, %560 : vector<16x32xf32>
    %568 = arith.mulf %567, %565 : vector<16x32xf32>
    %569 = arith.mulf %560, %497 : vector<16x32xf32>
    %570 = arith.addf %568, %569 : vector<16x32xf32>
    %571 = vector.broadcast %c6_i32 : i32 to vector<16x1xi32>
    %572 = arith.cmpi sgt, %0, %571 : vector<16x1xi32>
    %573 = vector.broadcast %510 : i32 to vector<16x1xi32>
    %574 = arith.cmpi sgt, %0, %573 : vector<16x1xi32>
    %575 = vector.shape_cast %572 : vector<16x1xi1> to vector<16x1xi1>
    %576 = vector.broadcast %575 : vector<16x1xi1> to vector<16x32xi1>
    %577 = arith.select %576, %546, %494 : vector<16x32xi1>, vector<16x32xf32>
    %578 = vector.shape_cast %574 : vector<16x1xi1> to vector<16x1xi1>
    %579 = vector.broadcast %578 : vector<16x1xi1> to vector<16x32xi1>
    %580 = arith.select %579, %570, %497 : vector<16x32xi1>, vector<16x32xf32>
    %cst_135 = arith.constant 0.000000e+00 : f32
    %581 = vector.shape_cast %572 : vector<16x1xi1> to vector<16x1xi1>
    %582 = vector.broadcast %581 : vector<16x1xi1> to vector<16x32xi1>
    %583 = vector.broadcast %cst_135 : f32 to vector<16x32xf32>
    %584 = arith.select %582, %577, %583 : vector<16x32xi1>, vector<16x32xf32>
    %cst_136 = arith.constant 0.000000e+00 : f32
    %585 = vector.shape_cast %574 : vector<16x1xi1> to vector<16x1xi1>
    %586 = vector.broadcast %585 : vector<16x1xi1> to vector<16x32xi1>
    %587 = vector.broadcast %cst_136 : f32 to vector<16x32xf32>
    %588 = arith.select %586, %580, %587 : vector<16x32xi1>, vector<16x32xf32>
    %589 = arith.index_cast %512 : i32 to index
    %c0_137 = arith.constant 0 : index
    %590 = vector.load %arg13[%589, %c0_137] : memref<160x32xf32, #tpu.memory_space<vmem>>, vector<16x32xf32>
    tpu.vector_store %arg13[%589, %c0_137], %584 {strides = array<i32>} : memref<160x32xf32, #tpu.memory_space<vmem>>, vector<16x32xf32>,
    %591 = arith.index_cast %514 : i32 to index
    %c0_138 = arith.constant 0 : index
    %592 = vector.load %arg14[%591, %c0_138] : memref<160x32xf32, #tpu.memory_space<vmem>>, vector<16x32xf32>
    tpu.vector_store %arg14[%591, %c0_138], %588 {strides = array<i32>} : memref<160x32xf32, #tpu.memory_space<vmem>>, vector<16x32xf32>,
    %c7_i32 = arith.constant 7 : i32
    %c9_i32_139 = arith.constant 9 : i32
    %593 = arith.subi %c9_i32_139, %c7_i32 : i32
    %c16_i32_140 = arith.constant 16 : i32
    %594 = arith.muli %c7_i32, %c16_i32_140 : i32
    %595 = tpu.assume_multiple %594, 16 : i32
    %c16_i32_141 = arith.constant 16 : i32
    %596 = arith.muli %593, %c16_i32_141 : i32
    %597 = tpu.assume_multiple %596, 16 : i32
    %598 = arith.index_cast %595 : i32 to index
    %c0_142 = arith.constant 0 : index
    %599 = vector.load %arg12[%598, %c0_142] : memref<160x192xf32, #tpu.memory_space<vmem>>, vector<16x192xf32>
    %600 = arith.index_cast %597 : i32 to index
    %c0_143 = arith.constant 0 : index
    %601 = vector.load %arg12[%600, %c0_143] : memref<160x192xf32, #tpu.memory_space<vmem>>, vector<16x192xf32>
    %602 = tpu.concatenate %577, %580 in 1 : vector<16x32xf32>, vector<16x32xf32> -> vector<16x64xf32>
    %cst_144 = arith.constant dense<0.000000e+00> : vector<16x192xf32>
    %603 = tpu.matmul %602, %10, %cst_144 {dimension_numbers = #tpu.dot_dimension_numbers<[1], [0], [0], [1], [0, 0, 1, 1], [], []>} : vector<16x64xf32>, vector<64x192xf32>, vector<16x192xf32> -> vector<16x192xf32>
    %604 = vector.broadcast %11 : vector<1x192xf32> to vector<16x192xf32>
    %605 = arith.addf %603, %604 : vector<16x192xf32>
    %606 = vector.extract_strided_slice %599 {offsets = [0, 0], sizes = [16, 96], strides = [1, 1]} : vector<16x192xf32> to vector<16x96xf32>
    %607 = vector.extract_strided_slice %605 {offsets = [0, 0], sizes = [16, 96], strides = [1, 1]} : vector<16x192xf32> to vector<16x96xf32>
    %608 = vector.extract_strided_slice %606 {offsets = [0, 0], sizes = [16, 64], strides = [1, 1]} : vector<16x96xf32> to vector<16x64xf32>
    %609 = vector.extract_strided_slice %607 {offsets = [0, 0], sizes = [16, 64], strides = [1, 1]} : vector<16x96xf32> to vector<16x64xf32>
    %610 = arith.addf %608, %609 : vector<16x64xf32>
    %cst_145 = arith.constant 5.000000e-01 : f32
    %611 = vector.broadcast %cst_145 : f32 to vector<16x64xf32>
    %612 = arith.mulf %611, %610 : vector<16x64xf32>
    %613 = math.tanh %612 : vector<16x64xf32>
    %cst_146 = arith.constant 1.000000e+00 : f32
    %614 = vector.broadcast %cst_146 : f32 to vector<16x64xf32>
    %615 = arith.addf %613, %614 : vector<16x64xf32>
    %cst_147 = arith.constant 5.000000e-01 : f32
    %616 = vector.broadcast %cst_147 : f32 to vector<16x64xf32>
    %617 = arith.mulf %616, %615 : vector<16x64xf32>
    %618 = vector.extract_strided_slice %617 {offsets = [0, 0], sizes = [16, 32], strides = [1, 1]} : vector<16x64xf32> to vector<16x32xf32>
    %619 = vector.extract_strided_slice %617 {offsets = [0, 32], sizes = [16, 32], strides = [1, 1]} : vector<16x64xf32> to vector<16x32xf32>
    %620 = vector.extract_strided_slice %606 {offsets = [0, 64], sizes = [16, 32], strides = [1, 1]} : vector<16x96xf32> to vector<16x32xf32>
    %621 = vector.extract_strided_slice %607 {offsets = [0, 64], sizes = [16, 32], strides = [1, 1]} : vector<16x96xf32> to vector<16x32xf32>
    %622 = arith.mulf %618, %621 : vector<16x32xf32>
    %623 = arith.addf %620, %622 : vector<16x32xf32>
    %624 = math.tanh %623 : vector<16x32xf32>
    %cst_148 = arith.constant 1.000000e+00 : f32
    %625 = vector.broadcast %cst_148 : f32 to vector<16x32xf32>
    %626 = arith.subf %625, %619 : vector<16x32xf32>
    %627 = arith.mulf %626, %624 : vector<16x32xf32>
    %628 = arith.mulf %619, %577 : vector<16x32xf32>
    %629 = arith.addf %627, %628 : vector<16x32xf32>
    %630 = vector.extract_strided_slice %601 {offsets = [0, 96], sizes = [16, 96], strides = [1, 1]} : vector<16x192xf32> to vector<16x96xf32>
    %631 = vector.extract_strided_slice %605 {offsets = [0, 96], sizes = [16, 96], strides = [1, 1]} : vector<16x192xf32> to vector<16x96xf32>
    %632 = vector.extract_strided_slice %630 {offsets = [0, 0], sizes = [16, 64], strides = [1, 1]} : vector<16x96xf32> to vector<16x64xf32>
    %633 = vector.extract_strided_slice %631 {offsets = [0, 0], sizes = [16, 64], strides = [1, 1]} : vector<16x96xf32> to vector<16x64xf32>
    %634 = arith.addf %632, %633 : vector<16x64xf32>
    %cst_149 = arith.constant 5.000000e-01 : f32
    %635 = vector.broadcast %cst_149 : f32 to vector<16x64xf32>
    %636 = arith.mulf %635, %634 : vector<16x64xf32>
    %637 = math.tanh %636 : vector<16x64xf32>
    %cst_150 = arith.constant 1.000000e+00 : f32
    %638 = vector.broadcast %cst_150 : f32 to vector<16x64xf32>
    %639 = arith.addf %637, %638 : vector<16x64xf32>
    %cst_151 = arith.constant 5.000000e-01 : f32
    %640 = vector.broadcast %cst_151 : f32 to vector<16x64xf32>
    %641 = arith.mulf %640, %639 : vector<16x64xf32>
    %642 = vector.extract_strided_slice %641 {offsets = [0, 0], sizes = [16, 32], strides = [1, 1]} : vector<16x64xf32> to vector<16x32xf32>
    %643 = vector.extract_strided_slice %641 {offsets = [0, 32], sizes = [16, 32], strides = [1, 1]} : vector<16x64xf32> to vector<16x32xf32>
    %644 = vector.extract_strided_slice %630 {offsets = [0, 64], sizes = [16, 32], strides = [1, 1]} : vector<16x96xf32> to vector<16x32xf32>
    %645 = vector.extract_strided_slice %631 {offsets = [0, 64], sizes = [16, 32], strides = [1, 1]} : vector<16x96xf32> to vector<16x32xf32>
    %646 = arith.mulf %642, %645 : vector<16x32xf32>
    %647 = arith.addf %644, %646 : vector<16x32xf32>
    %648 = math.tanh %647 : vector<16x32xf32>
    %cst_152 = arith.constant 1.000000e+00 : f32
    %649 = vector.broadcast %cst_152 : f32 to vector<16x32xf32>
    %650 = arith.subf %649, %643 : vector<16x32xf32>
    %651 = arith.mulf %650, %648 : vector<16x32xf32>
    %652 = arith.mulf %643, %580 : vector<16x32xf32>
    %653 = arith.addf %651, %652 : vector<16x32xf32>
    %654 = vector.broadcast %c7_i32 : i32 to vector<16x1xi32>
    %655 = arith.cmpi sgt, %0, %654 : vector<16x1xi32>
    %656 = vector.broadcast %593 : i32 to vector<16x1xi32>
    %657 = arith.cmpi sgt, %0, %656 : vector<16x1xi32>
    %658 = vector.shape_cast %655 : vector<16x1xi1> to vector<16x1xi1>
    %659 = vector.broadcast %658 : vector<16x1xi1> to vector<16x32xi1>
    %660 = arith.select %659, %629, %577 : vector<16x32xi1>, vector<16x32xf32>
    %661 = vector.shape_cast %657 : vector<16x1xi1> to vector<16x1xi1>
    %662 = vector.broadcast %661 : vector<16x1xi1> to vector<16x32xi1>
    %663 = arith.select %662, %653, %580 : vector<16x32xi1>, vector<16x32xf32>
    %cst_153 = arith.constant 0.000000e+00 : f32
    %664 = vector.shape_cast %655 : vector<16x1xi1> to vector<16x1xi1>
    %665 = vector.broadcast %664 : vector<16x1xi1> to vector<16x32xi1>
    %666 = vector.broadcast %cst_153 : f32 to vector<16x32xf32>
    %667 = arith.select %665, %660, %666 : vector<16x32xi1>, vector<16x32xf32>
    %cst_154 = arith.constant 0.000000e+00 : f32
    %668 = vector.shape_cast %657 : vector<16x1xi1> to vector<16x1xi1>
    %669 = vector.broadcast %668 : vector<16x1xi1> to vector<16x32xi1>
    %670 = vector.broadcast %cst_154 : f32 to vector<16x32xf32>
    %671 = arith.select %669, %663, %670 : vector<16x32xi1>, vector<16x32xf32>
    %672 = arith.index_cast %595 : i32 to index
    %c0_155 = arith.constant 0 : index
    %673 = vector.load %arg13[%672, %c0_155] : memref<160x32xf32, #tpu.memory_space<vmem>>, vector<16x32xf32>
    tpu.vector_store %arg13[%672, %c0_155], %667 {strides = array<i32>} : memref<160x32xf32, #tpu.memory_space<vmem>>, vector<16x32xf32>,
    %674 = arith.index_cast %597 : i32 to index
    %c0_156 = arith.constant 0 : index
    %675 = vector.load %arg14[%674, %c0_156] : memref<160x32xf32, #tpu.memory_space<vmem>>, vector<16x32xf32>
    tpu.vector_store %arg14[%674, %c0_156], %671 {strides = array<i32>} : memref<160x32xf32, #tpu.memory_space<vmem>>, vector<16x32xf32>,
    %c8_i32 = arith.constant 8 : i32
    %c9_i32_157 = arith.constant 9 : i32
    %676 = arith.subi %c9_i32_157, %c8_i32 : i32
    %c16_i32_158 = arith.constant 16 : i32
    %677 = arith.muli %c8_i32, %c16_i32_158 : i32
    %678 = tpu.assume_multiple %677, 16 : i32
    %c16_i32_159 = arith.constant 16 : i32
    %679 = arith.muli %676, %c16_i32_159 : i32
    %680 = tpu.assume_multiple %679, 16 : i32
    %681 = arith.index_cast %678 : i32 to index
    %c0_160 = arith.constant 0 : index
    %682 = vector.load %arg12[%681, %c0_160] : memref<160x192xf32, #tpu.memory_space<vmem>>, vector<16x192xf32>
    %683 = arith.index_cast %680 : i32 to index
    %c0_161 = arith.constant 0 : index
    %684 = vector.load %arg12[%683, %c0_161] : memref<160x192xf32, #tpu.memory_space<vmem>>, vector<16x192xf32>
    %685 = tpu.concatenate %660, %663 in 1 : vector<16x32xf32>, vector<16x32xf32> -> vector<16x64xf32>
    %cst_162 = arith.constant dense<0.000000e+00> : vector<16x192xf32>
    %686 = tpu.matmul %685, %10, %cst_162 {dimension_numbers = #tpu.dot_dimension_numbers<[1], [0], [0], [1], [0, 0, 1, 1], [], []>} : vector<16x64xf32>, vector<64x192xf32>, vector<16x192xf32> -> vector<16x192xf32>
    %687 = vector.broadcast %11 : vector<1x192xf32> to vector<16x192xf32>
    %688 = arith.addf %686, %687 : vector<16x192xf32>
    %689 = vector.extract_strided_slice %682 {offsets = [0, 0], sizes = [16, 96], strides = [1, 1]} : vector<16x192xf32> to vector<16x96xf32>
    %690 = vector.extract_strided_slice %688 {offsets = [0, 0], sizes = [16, 96], strides = [1, 1]} : vector<16x192xf32> to vector<16x96xf32>
    %691 = vector.extract_strided_slice %689 {offsets = [0, 0], sizes = [16, 64], strides = [1, 1]} : vector<16x96xf32> to vector<16x64xf32>
    %692 = vector.extract_strided_slice %690 {offsets = [0, 0], sizes = [16, 64], strides = [1, 1]} : vector<16x96xf32> to vector<16x64xf32>
    %693 = arith.addf %691, %692 : vector<16x64xf32>
    %cst_163 = arith.constant 5.000000e-01 : f32
    %694 = vector.broadcast %cst_163 : f32 to vector<16x64xf32>
    %695 = arith.mulf %694, %693 : vector<16x64xf32>
    %696 = math.tanh %695 : vector<16x64xf32>
    %cst_164 = arith.constant 1.000000e+00 : f32
    %697 = vector.broadcast %cst_164 : f32 to vector<16x64xf32>
    %698 = arith.addf %696, %697 : vector<16x64xf32>
    %cst_165 = arith.constant 5.000000e-01 : f32
    %699 = vector.broadcast %cst_165 : f32 to vector<16x64xf32>
    %700 = arith.mulf %699, %698 : vector<16x64xf32>
    %701 = vector.extract_strided_slice %700 {offsets = [0, 0], sizes = [16, 32], strides = [1, 1]} : vector<16x64xf32> to vector<16x32xf32>
    %702 = vector.extract_strided_slice %700 {offsets = [0, 32], sizes = [16, 32], strides = [1, 1]} : vector<16x64xf32> to vector<16x32xf32>
    %703 = vector.extract_strided_slice %689 {offsets = [0, 64], sizes = [16, 32], strides = [1, 1]} : vector<16x96xf32> to vector<16x32xf32>
    %704 = vector.extract_strided_slice %690 {offsets = [0, 64], sizes = [16, 32], strides = [1, 1]} : vector<16x96xf32> to vector<16x32xf32>
    %705 = arith.mulf %701, %704 : vector<16x32xf32>
    %706 = arith.addf %703, %705 : vector<16x32xf32>
    %707 = math.tanh %706 : vector<16x32xf32>
    %cst_166 = arith.constant 1.000000e+00 : f32
    %708 = vector.broadcast %cst_166 : f32 to vector<16x32xf32>
    %709 = arith.subf %708, %702 : vector<16x32xf32>
    %710 = arith.mulf %709, %707 : vector<16x32xf32>
    %711 = arith.mulf %702, %660 : vector<16x32xf32>
    %712 = arith.addf %710, %711 : vector<16x32xf32>
    %713 = vector.extract_strided_slice %684 {offsets = [0, 96], sizes = [16, 96], strides = [1, 1]} : vector<16x192xf32> to vector<16x96xf32>
    %714 = vector.extract_strided_slice %688 {offsets = [0, 96], sizes = [16, 96], strides = [1, 1]} : vector<16x192xf32> to vector<16x96xf32>
    %715 = vector.extract_strided_slice %713 {offsets = [0, 0], sizes = [16, 64], strides = [1, 1]} : vector<16x96xf32> to vector<16x64xf32>
    %716 = vector.extract_strided_slice %714 {offsets = [0, 0], sizes = [16, 64], strides = [1, 1]} : vector<16x96xf32> to vector<16x64xf32>
    %717 = arith.addf %715, %716 : vector<16x64xf32>
    %cst_167 = arith.constant 5.000000e-01 : f32
    %718 = vector.broadcast %cst_167 : f32 to vector<16x64xf32>
    %719 = arith.mulf %718, %717 : vector<16x64xf32>
    %720 = math.tanh %719 : vector<16x64xf32>
    %cst_168 = arith.constant 1.000000e+00 : f32
    %721 = vector.broadcast %cst_168 : f32 to vector<16x64xf32>
    %722 = arith.addf %720, %721 : vector<16x64xf32>
    %cst_169 = arith.constant 5.000000e-01 : f32
    %723 = vector.broadcast %cst_169 : f32 to vector<16x64xf32>
    %724 = arith.mulf %723, %722 : vector<16x64xf32>
    %725 = vector.extract_strided_slice %724 {offsets = [0, 0], sizes = [16, 32], strides = [1, 1]} : vector<16x64xf32> to vector<16x32xf32>
    %726 = vector.extract_strided_slice %724 {offsets = [0, 32], sizes = [16, 32], strides = [1, 1]} : vector<16x64xf32> to vector<16x32xf32>
    %727 = vector.extract_strided_slice %713 {offsets = [0, 64], sizes = [16, 32], strides = [1, 1]} : vector<16x96xf32> to vector<16x32xf32>
    %728 = vector.extract_strided_slice %714 {offsets = [0, 64], sizes = [16, 32], strides = [1, 1]} : vector<16x96xf32> to vector<16x32xf32>
    %729 = arith.mulf %725, %728 : vector<16x32xf32>
    %730 = arith.addf %727, %729 : vector<16x32xf32>
    %731 = math.tanh %730 : vector<16x32xf32>
    %cst_170 = arith.constant 1.000000e+00 : f32
    %732 = vector.broadcast %cst_170 : f32 to vector<16x32xf32>
    %733 = arith.subf %732, %726 : vector<16x32xf32>
    %734 = arith.mulf %733, %731 : vector<16x32xf32>
    %735 = arith.mulf %726, %663 : vector<16x32xf32>
    %736 = arith.addf %734, %735 : vector<16x32xf32>
    %737 = vector.broadcast %c8_i32 : i32 to vector<16x1xi32>
    %738 = arith.cmpi sgt, %0, %737 : vector<16x1xi32>
    %739 = vector.broadcast %676 : i32 to vector<16x1xi32>
    %740 = arith.cmpi sgt, %0, %739 : vector<16x1xi32>
    %741 = vector.shape_cast %738 : vector<16x1xi1> to vector<16x1xi1>
    %742 = vector.broadcast %741 : vector<16x1xi1> to vector<16x32xi1>
    %743 = arith.select %742, %712, %660 : vector<16x32xi1>, vector<16x32xf32>
    %744 = vector.shape_cast %740 : vector<16x1xi1> to vector<16x1xi1>
    %745 = vector.broadcast %744 : vector<16x1xi1> to vector<16x32xi1>
    %746 = arith.select %745, %736, %663 : vector<16x32xi1>, vector<16x32xf32>
    %cst_171 = arith.constant 0.000000e+00 : f32
    %747 = vector.shape_cast %738 : vector<16x1xi1> to vector<16x1xi1>
    %748 = vector.broadcast %747 : vector<16x1xi1> to vector<16x32xi1>
    %749 = vector.broadcast %cst_171 : f32 to vector<16x32xf32>
    %750 = arith.select %748, %743, %749 : vector<16x32xi1>, vector<16x32xf32>
    %cst_172 = arith.constant 0.000000e+00 : f32
    %751 = vector.shape_cast %740 : vector<16x1xi1> to vector<16x1xi1>
    %752 = vector.broadcast %751 : vector<16x1xi1> to vector<16x32xi1>
    %753 = vector.broadcast %cst_172 : f32 to vector<16x32xf32>
    %754 = arith.select %752, %746, %753 : vector<16x32xi1>, vector<16x32xf32>
    %755 = arith.index_cast %678 : i32 to index
    %c0_173 = arith.constant 0 : index
    %756 = vector.load %arg13[%755, %c0_173] : memref<160x32xf32, #tpu.memory_space<vmem>>, vector<16x32xf32>
    tpu.vector_store %arg13[%755, %c0_173], %750 {strides = array<i32>} : memref<160x32xf32, #tpu.memory_space<vmem>>, vector<16x32xf32>,
    %757 = arith.index_cast %680 : i32 to index
    %c0_174 = arith.constant 0 : index
    %758 = vector.load %arg14[%757, %c0_174] : memref<160x32xf32, #tpu.memory_space<vmem>>, vector<16x32xf32>
    tpu.vector_store %arg14[%757, %c0_174], %754 {strides = array<i32>} : memref<160x32xf32, #tpu.memory_space<vmem>>, vector<16x32xf32>,
    %c9_i32_175 = arith.constant 9 : i32
    %c9_i32_176 = arith.constant 9 : i32
    %759 = arith.subi %c9_i32_176, %c9_i32_175 : i32
    %c16_i32_177 = arith.constant 16 : i32
    %760 = arith.muli %c9_i32_175, %c16_i32_177 : i32
    %761 = tpu.assume_multiple %760, 16 : i32
    %c16_i32_178 = arith.constant 16 : i32
    %762 = arith.muli %759, %c16_i32_178 : i32
    %763 = tpu.assume_multiple %762, 16 : i32
    %764 = arith.index_cast %761 : i32 to index
    %c0_179 = arith.constant 0 : index
    %765 = vector.load %arg12[%764, %c0_179] : memref<160x192xf32, #tpu.memory_space<vmem>>, vector<16x192xf32>
    %766 = arith.index_cast %763 : i32 to index
    %c0_180 = arith.constant 0 : index
    %767 = vector.load %arg12[%766, %c0_180] : memref<160x192xf32, #tpu.memory_space<vmem>>, vector<16x192xf32>
    %768 = tpu.concatenate %743, %746 in 1 : vector<16x32xf32>, vector<16x32xf32> -> vector<16x64xf32>
    %cst_181 = arith.constant dense<0.000000e+00> : vector<16x192xf32>
    %769 = tpu.matmul %768, %10, %cst_181 {dimension_numbers = #tpu.dot_dimension_numbers<[1], [0], [0], [1], [0, 0, 1, 1], [], []>} : vector<16x64xf32>, vector<64x192xf32>, vector<16x192xf32> -> vector<16x192xf32>
    %770 = vector.broadcast %11 : vector<1x192xf32> to vector<16x192xf32>
    %771 = arith.addf %769, %770 : vector<16x192xf32>
    %772 = vector.extract_strided_slice %765 {offsets = [0, 0], sizes = [16, 96], strides = [1, 1]} : vector<16x192xf32> to vector<16x96xf32>
    %773 = vector.extract_strided_slice %771 {offsets = [0, 0], sizes = [16, 96], strides = [1, 1]} : vector<16x192xf32> to vector<16x96xf32>
    %774 = vector.extract_strided_slice %772 {offsets = [0, 0], sizes = [16, 64], strides = [1, 1]} : vector<16x96xf32> to vector<16x64xf32>
    %775 = vector.extract_strided_slice %773 {offsets = [0, 0], sizes = [16, 64], strides = [1, 1]} : vector<16x96xf32> to vector<16x64xf32>
    %776 = arith.addf %774, %775 : vector<16x64xf32>
    %cst_182 = arith.constant 5.000000e-01 : f32
    %777 = vector.broadcast %cst_182 : f32 to vector<16x64xf32>
    %778 = arith.mulf %777, %776 : vector<16x64xf32>
    %779 = math.tanh %778 : vector<16x64xf32>
    %cst_183 = arith.constant 1.000000e+00 : f32
    %780 = vector.broadcast %cst_183 : f32 to vector<16x64xf32>
    %781 = arith.addf %779, %780 : vector<16x64xf32>
    %cst_184 = arith.constant 5.000000e-01 : f32
    %782 = vector.broadcast %cst_184 : f32 to vector<16x64xf32>
    %783 = arith.mulf %782, %781 : vector<16x64xf32>
    %784 = vector.extract_strided_slice %783 {offsets = [0, 0], sizes = [16, 32], strides = [1, 1]} : vector<16x64xf32> to vector<16x32xf32>
    %785 = vector.extract_strided_slice %783 {offsets = [0, 32], sizes = [16, 32], strides = [1, 1]} : vector<16x64xf32> to vector<16x32xf32>
    %786 = vector.extract_strided_slice %772 {offsets = [0, 64], sizes = [16, 32], strides = [1, 1]} : vector<16x96xf32> to vector<16x32xf32>
    %787 = vector.extract_strided_slice %773 {offsets = [0, 64], sizes = [16, 32], strides = [1, 1]} : vector<16x96xf32> to vector<16x32xf32>
    %788 = arith.mulf %784, %787 : vector<16x32xf32>
    %789 = arith.addf %786, %788 : vector<16x32xf32>
    %790 = math.tanh %789 : vector<16x32xf32>
    %cst_185 = arith.constant 1.000000e+00 : f32
    %791 = vector.broadcast %cst_185 : f32 to vector<16x32xf32>
    %792 = arith.subf %791, %785 : vector<16x32xf32>
    %793 = arith.mulf %792, %790 : vector<16x32xf32>
    %794 = arith.mulf %785, %743 : vector<16x32xf32>
    %795 = arith.addf %793, %794 : vector<16x32xf32>
    %796 = vector.extract_strided_slice %767 {offsets = [0, 96], sizes = [16, 96], strides = [1, 1]} : vector<16x192xf32> to vector<16x96xf32>
    %797 = vector.extract_strided_slice %771 {offsets = [0, 96], sizes = [16, 96], strides = [1, 1]} : vector<16x192xf32> to vector<16x96xf32>
    %798 = vector.extract_strided_slice %796 {offsets = [0, 0], sizes = [16, 64], strides = [1, 1]} : vector<16x96xf32> to vector<16x64xf32>
    %799 = vector.extract_strided_slice %797 {offsets = [0, 0], sizes = [16, 64], strides = [1, 1]} : vector<16x96xf32> to vector<16x64xf32>
    %800 = arith.addf %798, %799 : vector<16x64xf32>
    %cst_186 = arith.constant 5.000000e-01 : f32
    %801 = vector.broadcast %cst_186 : f32 to vector<16x64xf32>
    %802 = arith.mulf %801, %800 : vector<16x64xf32>
    %803 = math.tanh %802 : vector<16x64xf32>
    %cst_187 = arith.constant 1.000000e+00 : f32
    %804 = vector.broadcast %cst_187 : f32 to vector<16x64xf32>
    %805 = arith.addf %803, %804 : vector<16x64xf32>
    %cst_188 = arith.constant 5.000000e-01 : f32
    %806 = vector.broadcast %cst_188 : f32 to vector<16x64xf32>
    %807 = arith.mulf %806, %805 : vector<16x64xf32>
    %808 = vector.extract_strided_slice %807 {offsets = [0, 0], sizes = [16, 32], strides = [1, 1]} : vector<16x64xf32> to vector<16x32xf32>
    %809 = vector.extract_strided_slice %807 {offsets = [0, 32], sizes = [16, 32], strides = [1, 1]} : vector<16x64xf32> to vector<16x32xf32>
    %810 = vector.extract_strided_slice %796 {offsets = [0, 64], sizes = [16, 32], strides = [1, 1]} : vector<16x96xf32> to vector<16x32xf32>
    %811 = vector.extract_strided_slice %797 {offsets = [0, 64], sizes = [16, 32], strides = [1, 1]} : vector<16x96xf32> to vector<16x32xf32>
    %812 = arith.mulf %808, %811 : vector<16x32xf32>
    %813 = arith.addf %810, %812 : vector<16x32xf32>
    %814 = math.tanh %813 : vector<16x32xf32>
    %cst_189 = arith.constant 1.000000e+00 : f32
    %815 = vector.broadcast %cst_189 : f32 to vector<16x32xf32>
    %816 = arith.subf %815, %809 : vector<16x32xf32>
    %817 = arith.mulf %816, %814 : vector<16x32xf32>
    %818 = arith.mulf %809, %746 : vector<16x32xf32>
    %819 = arith.addf %817, %818 : vector<16x32xf32>
    %820 = vector.broadcast %c9_i32_175 : i32 to vector<16x1xi32>
    %821 = arith.cmpi sgt, %0, %820 : vector<16x1xi32>
    %822 = vector.broadcast %759 : i32 to vector<16x1xi32>
    %823 = arith.cmpi sgt, %0, %822 : vector<16x1xi32>
    %824 = vector.shape_cast %821 : vector<16x1xi1> to vector<16x1xi1>
    %825 = vector.broadcast %824 : vector<16x1xi1> to vector<16x32xi1>
    %826 = arith.select %825, %795, %743 : vector<16x32xi1>, vector<16x32xf32>
    %827 = vector.shape_cast %823 : vector<16x1xi1> to vector<16x1xi1>
    %828 = vector.broadcast %827 : vector<16x1xi1> to vector<16x32xi1>
    %829 = arith.select %828, %819, %746 : vector<16x32xi1>, vector<16x32xf32>
    %cst_190 = arith.constant 0.000000e+00 : f32
    %830 = vector.shape_cast %821 : vector<16x1xi1> to vector<16x1xi1>
    %831 = vector.broadcast %830 : vector<16x1xi1> to vector<16x32xi1>
    %832 = vector.broadcast %cst_190 : f32 to vector<16x32xf32>
    %833 = arith.select %831, %826, %832 : vector<16x32xi1>, vector<16x32xf32>
    %cst_191 = arith.constant 0.000000e+00 : f32
    %834 = vector.shape_cast %823 : vector<16x1xi1> to vector<16x1xi1>
    %835 = vector.broadcast %834 : vector<16x1xi1> to vector<16x32xi1>
    %836 = vector.broadcast %cst_191 : f32 to vector<16x32xf32>
    %837 = arith.select %835, %829, %836 : vector<16x32xi1>, vector<16x32xf32>
    %838 = arith.index_cast %761 : i32 to index
    %c0_192 = arith.constant 0 : index
    %839 = vector.load %arg13[%838, %c0_192] : memref<160x32xf32, #tpu.memory_space<vmem>>, vector<16x32xf32>
    tpu.vector_store %arg13[%838, %c0_192], %833 {strides = array<i32>} : memref<160x32xf32, #tpu.memory_space<vmem>>, vector<16x32xf32>,
    %840 = arith.index_cast %763 : i32 to index
    %c0_193 = arith.constant 0 : index
    %841 = vector.load %arg14[%840, %c0_193] : memref<160x32xf32, #tpu.memory_space<vmem>>, vector<16x32xf32>
    tpu.vector_store %arg14[%840, %c0_193], %837 {strides = array<i32>} : memref<160x32xf32, #tpu.memory_space<vmem>>, vector<16x32xf32>,
    %c10_i32 = arith.constant 10 : i32
    %c0_194 = arith.constant 0 : index
    %c0_195 = arith.constant 0 : index
    %842 = vector.load %arg13[%c0_194, %c0_195] : memref<160x32xf32, #tpu.memory_space<vmem>>, vector<160x32xf32>
    %c0_196 = arith.constant 0 : index
    %c0_197 = arith.constant 0 : index
    %843 = vector.load %arg14[%c0_196, %c0_197] : memref<160x32xf32, #tpu.memory_space<vmem>>, vector<160x32xf32>
    %844 = tpu.concatenate %842, %843 in 1 : vector<160x32xf32>, vector<160x32xf32> -> vector<160x64xf32>
    %c0_198 = arith.constant 0 : index
    %c0_199 = arith.constant 0 : index
    %845 = vector.load %arg7[%c0_198, %c0_199] : memref<64x192xf32, #tpu.memory_space<vmem>>, vector<64x192xf32>
    %cst_200 = arith.constant dense<0.000000e+00> : vector<160x192xf32>
    %846 = tpu.matmul %844, %845, %cst_200 {dimension_numbers = #tpu.dot_dimension_numbers<[1], [0], [0], [1], [0, 0, 1, 1], [], []>} : vector<160x64xf32>, vector<64x192xf32>, vector<160x192xf32> -> vector<160x192xf32>
    %c0_201 = arith.constant 0 : index
    %c0_202 = arith.constant 0 : index
    %847 = vector.load %arg9[%c0_201, %c0_202] : memref<1x192xf32, #tpu.memory_space<vmem>>, vector<1x192xf32>
    %848 = vector.broadcast %847 : vector<1x192xf32> to vector<160x192xf32>
    %849 = arith.addf %846, %848 : vector<160x192xf32>
    %c0_203 = arith.constant 0 : index
    %c0_204 = arith.constant 0 : index
    %850 = vector.load %arg12[%c0_203, %c0_204] : memref<160x192xf32, #tpu.memory_space<vmem>>, vector<160x192xf32>
    tpu.vector_store %arg12[%c0_203, %c0_204], %849 {strides = array<i32>} : memref<160x192xf32, #tpu.memory_space<vmem>>, vector<160x192xf32>,
    %c0_205 = arith.constant 0 : index
    %c0_206 = arith.constant 0 : index
    %851 = vector.load %arg8[%c0_205, %c0_206] : memref<64x192xf32, #tpu.memory_space<vmem>>, vector<64x192xf32>
    %c0_207 = arith.constant 0 : index
    %c0_208 = arith.constant 0 : index
    %852 = vector.load %arg10[%c0_207, %c0_208] : memref<1x192xf32, #tpu.memory_space<vmem>>, vector<1x192xf32>
    %c0_i32_209 = arith.constant 0 : i32
    %c9_i32_210 = arith.constant 9 : i32
    %853 = arith.subi %c9_i32_210, %c0_i32_209 : i32
    %c16_i32_211 = arith.constant 16 : i32
    %854 = arith.muli %c0_i32_209, %c16_i32_211 : i32
    %855 = tpu.assume_multiple %854, 16 : i32
    %c16_i32_212 = arith.constant 16 : i32
    %856 = arith.muli %853, %c16_i32_212 : i32
    %857 = tpu.assume_multiple %856, 16 : i32
    %858 = arith.index_cast %855 : i32 to index
    %c0_213 = arith.constant 0 : index
    %859 = vector.load %arg12[%858, %c0_213] : memref<160x192xf32, #tpu.memory_space<vmem>>, vector<16x192xf32>
    %860 = arith.index_cast %857 : i32 to index
    %c0_214 = arith.constant 0 : index
    %861 = vector.load %arg12[%860, %c0_214] : memref<160x192xf32, #tpu.memory_space<vmem>>, vector<16x192xf32>
    %862 = tpu.concatenate %1, %1 in 1 : vector<16x32xf32>, vector<16x32xf32> -> vector<16x64xf32>
    %cst_215 = arith.constant dense<0.000000e+00> : vector<16x192xf32>
    %863 = tpu.matmul %862, %851, %cst_215 {dimension_numbers = #tpu.dot_dimension_numbers<[1], [0], [0], [1], [0, 0, 1, 1], [], []>} : vector<16x64xf32>, vector<64x192xf32>, vector<16x192xf32> -> vector<16x192xf32>
    %864 = vector.broadcast %852 : vector<1x192xf32> to vector<16x192xf32>
    %865 = arith.addf %863, %864 : vector<16x192xf32>
    %866 = vector.extract_strided_slice %859 {offsets = [0, 0], sizes = [16, 96], strides = [1, 1]} : vector<16x192xf32> to vector<16x96xf32>
    %867 = vector.extract_strided_slice %865 {offsets = [0, 0], sizes = [16, 96], strides = [1, 1]} : vector<16x192xf32> to vector<16x96xf32>
    %868 = vector.extract_strided_slice %866 {offsets = [0, 0], sizes = [16, 64], strides = [1, 1]} : vector<16x96xf32> to vector<16x64xf32>
    %869 = vector.extract_strided_slice %867 {offsets = [0, 0], sizes = [16, 64], strides = [1, 1]} : vector<16x96xf32> to vector<16x64xf32>
    %870 = arith.addf %868, %869 : vector<16x64xf32>
    %cst_216 = arith.constant 5.000000e-01 : f32
    %871 = vector.broadcast %cst_216 : f32 to vector<16x64xf32>
    %872 = arith.mulf %871, %870 : vector<16x64xf32>
    %873 = math.tanh %872 : vector<16x64xf32>
    %cst_217 = arith.constant 1.000000e+00 : f32
    %874 = vector.broadcast %cst_217 : f32 to vector<16x64xf32>
    %875 = arith.addf %873, %874 : vector<16x64xf32>
    %cst_218 = arith.constant 5.000000e-01 : f32
    %876 = vector.broadcast %cst_218 : f32 to vector<16x64xf32>
    %877 = arith.mulf %876, %875 : vector<16x64xf32>
    %878 = vector.extract_strided_slice %877 {offsets = [0, 0], sizes = [16, 32], strides = [1, 1]} : vector<16x64xf32> to vector<16x32xf32>
    %879 = vector.extract_strided_slice %877 {offsets = [0, 32], sizes = [16, 32], strides = [1, 1]} : vector<16x64xf32> to vector<16x32xf32>
    %880 = vector.extract_strided_slice %866 {offsets = [0, 64], sizes = [16, 32], strides = [1, 1]} : vector<16x96xf32> to vector<16x32xf32>
    %881 = vector.extract_strided_slice %867 {offsets = [0, 64], sizes = [16, 32], strides = [1, 1]} : vector<16x96xf32> to vector<16x32xf32>
    %882 = arith.mulf %878, %881 : vector<16x32xf32>
    %883 = arith.addf %880, %882 : vector<16x32xf32>
    %884 = math.tanh %883 : vector<16x32xf32>
    %cst_219 = arith.constant 1.000000e+00 : f32
    %885 = vector.broadcast %cst_219 : f32 to vector<16x32xf32>
    %886 = arith.subf %885, %879 : vector<16x32xf32>
    %887 = arith.mulf %886, %884 : vector<16x32xf32>
    %888 = arith.mulf %879, %1 : vector<16x32xf32>
    %889 = arith.addf %887, %888 : vector<16x32xf32>
    %890 = vector.extract_strided_slice %861 {offsets = [0, 96], sizes = [16, 96], strides = [1, 1]} : vector<16x192xf32> to vector<16x96xf32>
    %891 = vector.extract_strided_slice %865 {offsets = [0, 96], sizes = [16, 96], strides = [1, 1]} : vector<16x192xf32> to vector<16x96xf32>
    %892 = vector.extract_strided_slice %890 {offsets = [0, 0], sizes = [16, 64], strides = [1, 1]} : vector<16x96xf32> to vector<16x64xf32>
    %893 = vector.extract_strided_slice %891 {offsets = [0, 0], sizes = [16, 64], strides = [1, 1]} : vector<16x96xf32> to vector<16x64xf32>
    %894 = arith.addf %892, %893 : vector<16x64xf32>
    %cst_220 = arith.constant 5.000000e-01 : f32
    %895 = vector.broadcast %cst_220 : f32 to vector<16x64xf32>
    %896 = arith.mulf %895, %894 : vector<16x64xf32>
    %897 = math.tanh %896 : vector<16x64xf32>
    %cst_221 = arith.constant 1.000000e+00 : f32
    %898 = vector.broadcast %cst_221 : f32 to vector<16x64xf32>
    %899 = arith.addf %897, %898 : vector<16x64xf32>
    %cst_222 = arith.constant 5.000000e-01 : f32
    %900 = vector.broadcast %cst_222 : f32 to vector<16x64xf32>
    %901 = arith.mulf %900, %899 : vector<16x64xf32>
    %902 = vector.extract_strided_slice %901 {offsets = [0, 0], sizes = [16, 32], strides = [1, 1]} : vector<16x64xf32> to vector<16x32xf32>
    %903 = vector.extract_strided_slice %901 {offsets = [0, 32], sizes = [16, 32], strides = [1, 1]} : vector<16x64xf32> to vector<16x32xf32>
    %904 = vector.extract_strided_slice %890 {offsets = [0, 64], sizes = [16, 32], strides = [1, 1]} : vector<16x96xf32> to vector<16x32xf32>
    %905 = vector.extract_strided_slice %891 {offsets = [0, 64], sizes = [16, 32], strides = [1, 1]} : vector<16x96xf32> to vector<16x32xf32>
    %906 = arith.mulf %902, %905 : vector<16x32xf32>
    %907 = arith.addf %904, %906 : vector<16x32xf32>
    %908 = math.tanh %907 : vector<16x32xf32>
    %cst_223 = arith.constant 1.000000e+00 : f32
    %909 = vector.broadcast %cst_223 : f32 to vector<16x32xf32>
    %910 = arith.subf %909, %903 : vector<16x32xf32>
    %911 = arith.mulf %910, %908 : vector<16x32xf32>
    %912 = arith.mulf %903, %1 : vector<16x32xf32>
    %913 = arith.addf %911, %912 : vector<16x32xf32>
    %914 = vector.broadcast %c0_i32_209 : i32 to vector<16x1xi32>
    %915 = arith.cmpi sgt, %0, %914 : vector<16x1xi32>
    %916 = vector.broadcast %853 : i32 to vector<16x1xi32>
    %917 = arith.cmpi sgt, %0, %916 : vector<16x1xi32>
    %918 = vector.shape_cast %915 : vector<16x1xi1> to vector<16x1xi1>
    %919 = vector.broadcast %918 : vector<16x1xi1> to vector<16x32xi1>
    %920 = arith.select %919, %889, %1 : vector<16x32xi1>, vector<16x32xf32>
    %921 = vector.shape_cast %917 : vector<16x1xi1> to vector<16x1xi1>
    %922 = vector.broadcast %921 : vector<16x1xi1> to vector<16x32xi1>
    %923 = arith.select %922, %913, %1 : vector<16x32xi1>, vector<16x32xf32>
    %cst_224 = arith.constant 0.000000e+00 : f32
    %924 = vector.shape_cast %915 : vector<16x1xi1> to vector<16x1xi1>
    %925 = vector.broadcast %924 : vector<16x1xi1> to vector<16x32xi1>
    %926 = vector.broadcast %cst_224 : f32 to vector<16x32xf32>
    %927 = arith.select %925, %920, %926 : vector<16x32xi1>, vector<16x32xf32>
    %cst_225 = arith.constant 0.000000e+00 : f32
    %928 = vector.shape_cast %917 : vector<16x1xi1> to vector<16x1xi1>
    %929 = vector.broadcast %928 : vector<16x1xi1> to vector<16x32xi1>
    %930 = vector.broadcast %cst_225 : f32 to vector<16x32xf32>
    %931 = arith.select %929, %923, %930 : vector<16x32xi1>, vector<16x32xf32>
    %932 = arith.addf %1, %927 : vector<16x32xf32>
    %933 = arith.addf %1, %931 : vector<16x32xf32>
    %c1_i32_226 = arith.constant 1 : i32
    %c9_i32_227 = arith.constant 9 : i32
    %934 = arith.subi %c9_i32_227, %c1_i32_226 : i32
    %c16_i32_228 = arith.constant 16 : i32
    %935 = arith.muli %c1_i32_226, %c16_i32_228 : i32
    %936 = tpu.assume_multiple %935, 16 : i32
    %c16_i32_229 = arith.constant 16 : i32
    %937 = arith.muli %934, %c16_i32_229 : i32
    %938 = tpu.assume_multiple %937, 16 : i32
    %939 = arith.index_cast %936 : i32 to index
    %c0_230 = arith.constant 0 : index
    %940 = vector.load %arg12[%939, %c0_230] : memref<160x192xf32, #tpu.memory_space<vmem>>, vector<16x192xf32>
    %941 = arith.index_cast %938 : i32 to index
    %c0_231 = arith.constant 0 : index
    %942 = vector.load %arg12[%941, %c0_231] : memref<160x192xf32, #tpu.memory_space<vmem>>, vector<16x192xf32>
    %943 = tpu.concatenate %920, %923 in 1 : vector<16x32xf32>, vector<16x32xf32> -> vector<16x64xf32>
    %cst_232 = arith.constant dense<0.000000e+00> : vector<16x192xf32>
    %944 = tpu.matmul %943, %851, %cst_232 {dimension_numbers = #tpu.dot_dimension_numbers<[1], [0], [0], [1], [0, 0, 1, 1], [], []>} : vector<16x64xf32>, vector<64x192xf32>, vector<16x192xf32> -> vector<16x192xf32>
    %945 = vector.broadcast %852 : vector<1x192xf32> to vector<16x192xf32>
    %946 = arith.addf %944, %945 : vector<16x192xf32>
    %947 = vector.extract_strided_slice %940 {offsets = [0, 0], sizes = [16, 96], strides = [1, 1]} : vector<16x192xf32> to vector<16x96xf32>
    %948 = vector.extract_strided_slice %946 {offsets = [0, 0], sizes = [16, 96], strides = [1, 1]} : vector<16x192xf32> to vector<16x96xf32>
    %949 = vector.extract_strided_slice %947 {offsets = [0, 0], sizes = [16, 64], strides = [1, 1]} : vector<16x96xf32> to vector<16x64xf32>
    %950 = vector.extract_strided_slice %948 {offsets = [0, 0], sizes = [16, 64], strides = [1, 1]} : vector<16x96xf32> to vector<16x64xf32>
    %951 = arith.addf %949, %950 : vector<16x64xf32>
    %cst_233 = arith.constant 5.000000e-01 : f32
    %952 = vector.broadcast %cst_233 : f32 to vector<16x64xf32>
    %953 = arith.mulf %952, %951 : vector<16x64xf32>
    %954 = math.tanh %953 : vector<16x64xf32>
    %cst_234 = arith.constant 1.000000e+00 : f32
    %955 = vector.broadcast %cst_234 : f32 to vector<16x64xf32>
    %956 = arith.addf %954, %955 : vector<16x64xf32>
    %cst_235 = arith.constant 5.000000e-01 : f32
    %957 = vector.broadcast %cst_235 : f32 to vector<16x64xf32>
    %958 = arith.mulf %957, %956 : vector<16x64xf32>
    %959 = vector.extract_strided_slice %958 {offsets = [0, 0], sizes = [16, 32], strides = [1, 1]} : vector<16x64xf32> to vector<16x32xf32>
    %960 = vector.extract_strided_slice %958 {offsets = [0, 32], sizes = [16, 32], strides = [1, 1]} : vector<16x64xf32> to vector<16x32xf32>
    %961 = vector.extract_strided_slice %947 {offsets = [0, 64], sizes = [16, 32], strides = [1, 1]} : vector<16x96xf32> to vector<16x32xf32>
    %962 = vector.extract_strided_slice %948 {offsets = [0, 64], sizes = [16, 32], strides = [1, 1]} : vector<16x96xf32> to vector<16x32xf32>
    %963 = arith.mulf %959, %962 : vector<16x32xf32>
    %964 = arith.addf %961, %963 : vector<16x32xf32>
    %965 = math.tanh %964 : vector<16x32xf32>
    %cst_236 = arith.constant 1.000000e+00 : f32
    %966 = vector.broadcast %cst_236 : f32 to vector<16x32xf32>
    %967 = arith.subf %966, %960 : vector<16x32xf32>
    %968 = arith.mulf %967, %965 : vector<16x32xf32>
    %969 = arith.mulf %960, %920 : vector<16x32xf32>
    %970 = arith.addf %968, %969 : vector<16x32xf32>
    %971 = vector.extract_strided_slice %942 {offsets = [0, 96], sizes = [16, 96], strides = [1, 1]} : vector<16x192xf32> to vector<16x96xf32>
    %972 = vector.extract_strided_slice %946 {offsets = [0, 96], sizes = [16, 96], strides = [1, 1]} : vector<16x192xf32> to vector<16x96xf32>
    %973 = vector.extract_strided_slice %971 {offsets = [0, 0], sizes = [16, 64], strides = [1, 1]} : vector<16x96xf32> to vector<16x64xf32>
    %974 = vector.extract_strided_slice %972 {offsets = [0, 0], sizes = [16, 64], strides = [1, 1]} : vector<16x96xf32> to vector<16x64xf32>
    %975 = arith.addf %973, %974 : vector<16x64xf32>
    %cst_237 = arith.constant 5.000000e-01 : f32
    %976 = vector.broadcast %cst_237 : f32 to vector<16x64xf32>
    %977 = arith.mulf %976, %975 : vector<16x64xf32>
    %978 = math.tanh %977 : vector<16x64xf32>
    %cst_238 = arith.constant 1.000000e+00 : f32
    %979 = vector.broadcast %cst_238 : f32 to vector<16x64xf32>
    %980 = arith.addf %978, %979 : vector<16x64xf32>
    %cst_239 = arith.constant 5.000000e-01 : f32
    %981 = vector.broadcast %cst_239 : f32 to vector<16x64xf32>
    %982 = arith.mulf %981, %980 : vector<16x64xf32>
    %983 = vector.extract_strided_slice %982 {offsets = [0, 0], sizes = [16, 32], strides = [1, 1]} : vector<16x64xf32> to vector<16x32xf32>
    %984 = vector.extract_strided_slice %982 {offsets = [0, 32], sizes = [16, 32], strides = [1, 1]} : vector<16x64xf32> to vector<16x32xf32>
    %985 = vector.extract_strided_slice %971 {offsets = [0, 64], sizes = [16, 32], strides = [1, 1]} : vector<16x96xf32> to vector<16x32xf32>
    %986 = vector.extract_strided_slice %972 {offsets = [0, 64], sizes = [16, 32], strides = [1, 1]} : vector<16x96xf32> to vector<16x32xf32>
    %987 = arith.mulf %983, %986 : vector<16x32xf32>
    %988 = arith.addf %985, %987 : vector<16x32xf32>
    %989 = math.tanh %988 : vector<16x32xf32>
    %cst_240 = arith.constant 1.000000e+00 : f32
    %990 = vector.broadcast %cst_240 : f32 to vector<16x32xf32>
    %991 = arith.subf %990, %984 : vector<16x32xf32>
    %992 = arith.mulf %991, %989 : vector<16x32xf32>
    %993 = arith.mulf %984, %923 : vector<16x32xf32>
    %994 = arith.addf %992, %993 : vector<16x32xf32>
    %995 = vector.broadcast %c1_i32_226 : i32 to vector<16x1xi32>
    %996 = arith.cmpi sgt, %0, %995 : vector<16x1xi32>
    %997 = vector.broadcast %934 : i32 to vector<16x1xi32>
    %998 = arith.cmpi sgt, %0, %997 : vector<16x1xi32>
    %999 = vector.shape_cast %996 : vector<16x1xi1> to vector<16x1xi1>
    %1000 = vector.broadcast %999 : vector<16x1xi1> to vector<16x32xi1>
    %1001 = arith.select %1000, %970, %920 : vector<16x32xi1>, vector<16x32xf32>
    %1002 = vector.shape_cast %998 : vector<16x1xi1> to vector<16x1xi1>
    %1003 = vector.broadcast %1002 : vector<16x1xi1> to vector<16x32xi1>
    %1004 = arith.select %1003, %994, %923 : vector<16x32xi1>, vector<16x32xf32>
    %cst_241 = arith.constant 0.000000e+00 : f32
    %1005 = vector.shape_cast %996 : vector<16x1xi1> to vector<16x1xi1>
    %1006 = vector.broadcast %1005 : vector<16x1xi1> to vector<16x32xi1>
    %1007 = vector.broadcast %cst_241 : f32 to vector<16x32xf32>
    %1008 = arith.select %1006, %1001, %1007 : vector<16x32xi1>, vector<16x32xf32>
    %cst_242 = arith.constant 0.000000e+00 : f32
    %1009 = vector.shape_cast %998 : vector<16x1xi1> to vector<16x1xi1>
    %1010 = vector.broadcast %1009 : vector<16x1xi1> to vector<16x32xi1>
    %1011 = vector.broadcast %cst_242 : f32 to vector<16x32xf32>
    %1012 = arith.select %1010, %1004, %1011 : vector<16x32xi1>, vector<16x32xf32>
    %1013 = arith.addf %932, %1008 : vector<16x32xf32>
    %1014 = arith.addf %933, %1012 : vector<16x32xf32>
    %c2_i32_243 = arith.constant 2 : i32
    %c9_i32_244 = arith.constant 9 : i32
    %1015 = arith.subi %c9_i32_244, %c2_i32_243 : i32
    %c16_i32_245 = arith.constant 16 : i32
    %1016 = arith.muli %c2_i32_243, %c16_i32_245 : i32
    %1017 = tpu.assume_multiple %1016, 16 : i32
    %c16_i32_246 = arith.constant 16 : i32
    %1018 = arith.muli %1015, %c16_i32_246 : i32
    %1019 = tpu.assume_multiple %1018, 16 : i32
    %1020 = arith.index_cast %1017 : i32 to index
    %c0_247 = arith.constant 0 : index
    %1021 = vector.load %arg12[%1020, %c0_247] : memref<160x192xf32, #tpu.memory_space<vmem>>, vector<16x192xf32>
    %1022 = arith.index_cast %1019 : i32 to index
    %c0_248 = arith.constant 0 : index
    %1023 = vector.load %arg12[%1022, %c0_248] : memref<160x192xf32, #tpu.memory_space<vmem>>, vector<16x192xf32>
    %1024 = tpu.concatenate %1001, %1004 in 1 : vector<16x32xf32>, vector<16x32xf32> -> vector<16x64xf32>
    %cst_249 = arith.constant dense<0.000000e+00> : vector<16x192xf32>
    %1025 = tpu.matmul %1024, %851, %cst_249 {dimension_numbers = #tpu.dot_dimension_numbers<[1], [0], [0], [1], [0, 0, 1, 1], [], []>} : vector<16x64xf32>, vector<64x192xf32>, vector<16x192xf32> -> vector<16x192xf32>
    %1026 = vector.broadcast %852 : vector<1x192xf32> to vector<16x192xf32>
    %1027 = arith.addf %1025, %1026 : vector<16x192xf32>
    %1028 = vector.extract_strided_slice %1021 {offsets = [0, 0], sizes = [16, 96], strides = [1, 1]} : vector<16x192xf32> to vector<16x96xf32>
    %1029 = vector.extract_strided_slice %1027 {offsets = [0, 0], sizes = [16, 96], strides = [1, 1]} : vector<16x192xf32> to vector<16x96xf32>
    %1030 = vector.extract_strided_slice %1028 {offsets = [0, 0], sizes = [16, 64], strides = [1, 1]} : vector<16x96xf32> to vector<16x64xf32>
    %1031 = vector.extract_strided_slice %1029 {offsets = [0, 0], sizes = [16, 64], strides = [1, 1]} : vector<16x96xf32> to vector<16x64xf32>
    %1032 = arith.addf %1030, %1031 : vector<16x64xf32>
    %cst_250 = arith.constant 5.000000e-01 : f32
    %1033 = vector.broadcast %cst_250 : f32 to vector<16x64xf32>
    %1034 = arith.mulf %1033, %1032 : vector<16x64xf32>
    %1035 = math.tanh %1034 : vector<16x64xf32>
    %cst_251 = arith.constant 1.000000e+00 : f32
    %1036 = vector.broadcast %cst_251 : f32 to vector<16x64xf32>
    %1037 = arith.addf %1035, %1036 : vector<16x64xf32>
    %cst_252 = arith.constant 5.000000e-01 : f32
    %1038 = vector.broadcast %cst_252 : f32 to vector<16x64xf32>
    %1039 = arith.mulf %1038, %1037 : vector<16x64xf32>
    %1040 = vector.extract_strided_slice %1039 {offsets = [0, 0], sizes = [16, 32], strides = [1, 1]} : vector<16x64xf32> to vector<16x32xf32>
    %1041 = vector.extract_strided_slice %1039 {offsets = [0, 32], sizes = [16, 32], strides = [1, 1]} : vector<16x64xf32> to vector<16x32xf32>
    %1042 = vector.extract_strided_slice %1028 {offsets = [0, 64], sizes = [16, 32], strides = [1, 1]} : vector<16x96xf32> to vector<16x32xf32>
    %1043 = vector.extract_strided_slice %1029 {offsets = [0, 64], sizes = [16, 32], strides = [1, 1]} : vector<16x96xf32> to vector<16x32xf32>
    %1044 = arith.mulf %1040, %1043 : vector<16x32xf32>
    %1045 = arith.addf %1042, %1044 : vector<16x32xf32>
    %1046 = math.tanh %1045 : vector<16x32xf32>
    %cst_253 = arith.constant 1.000000e+00 : f32
    %1047 = vector.broadcast %cst_253 : f32 to vector<16x32xf32>
    %1048 = arith.subf %1047, %1041 : vector<16x32xf32>
    %1049 = arith.mulf %1048, %1046 : vector<16x32xf32>
    %1050 = arith.mulf %1041, %1001 : vector<16x32xf32>
    %1051 = arith.addf %1049, %1050 : vector<16x32xf32>
    %1052 = vector.extract_strided_slice %1023 {offsets = [0, 96], sizes = [16, 96], strides = [1, 1]} : vector<16x192xf32> to vector<16x96xf32>
    %1053 = vector.extract_strided_slice %1027 {offsets = [0, 96], sizes = [16, 96], strides = [1, 1]} : vector<16x192xf32> to vector<16x96xf32>
    %1054 = vector.extract_strided_slice %1052 {offsets = [0, 0], sizes = [16, 64], strides = [1, 1]} : vector<16x96xf32> to vector<16x64xf32>
    %1055 = vector.extract_strided_slice %1053 {offsets = [0, 0], sizes = [16, 64], strides = [1, 1]} : vector<16x96xf32> to vector<16x64xf32>
    %1056 = arith.addf %1054, %1055 : vector<16x64xf32>
    %cst_254 = arith.constant 5.000000e-01 : f32
    %1057 = vector.broadcast %cst_254 : f32 to vector<16x64xf32>
    %1058 = arith.mulf %1057, %1056 : vector<16x64xf32>
    %1059 = math.tanh %1058 : vector<16x64xf32>
    %cst_255 = arith.constant 1.000000e+00 : f32
    %1060 = vector.broadcast %cst_255 : f32 to vector<16x64xf32>
    %1061 = arith.addf %1059, %1060 : vector<16x64xf32>
    %cst_256 = arith.constant 5.000000e-01 : f32
    %1062 = vector.broadcast %cst_256 : f32 to vector<16x64xf32>
    %1063 = arith.mulf %1062, %1061 : vector<16x64xf32>
    %1064 = vector.extract_strided_slice %1063 {offsets = [0, 0], sizes = [16, 32], strides = [1, 1]} : vector<16x64xf32> to vector<16x32xf32>
    %1065 = vector.extract_strided_slice %1063 {offsets = [0, 32], sizes = [16, 32], strides = [1, 1]} : vector<16x64xf32> to vector<16x32xf32>
    %1066 = vector.extract_strided_slice %1052 {offsets = [0, 64], sizes = [16, 32], strides = [1, 1]} : vector<16x96xf32> to vector<16x32xf32>
    %1067 = vector.extract_strided_slice %1053 {offsets = [0, 64], sizes = [16, 32], strides = [1, 1]} : vector<16x96xf32> to vector<16x32xf32>
    %1068 = arith.mulf %1064, %1067 : vector<16x32xf32>
    %1069 = arith.addf %1066, %1068 : vector<16x32xf32>
    %1070 = math.tanh %1069 : vector<16x32xf32>
    %cst_257 = arith.constant 1.000000e+00 : f32
    %1071 = vector.broadcast %cst_257 : f32 to vector<16x32xf32>
    %1072 = arith.subf %1071, %1065 : vector<16x32xf32>
    %1073 = arith.mulf %1072, %1070 : vector<16x32xf32>
    %1074 = arith.mulf %1065, %1004 : vector<16x32xf32>
    %1075 = arith.addf %1073, %1074 : vector<16x32xf32>
    %1076 = vector.broadcast %c2_i32_243 : i32 to vector<16x1xi32>
    %1077 = arith.cmpi sgt, %0, %1076 : vector<16x1xi32>
    %1078 = vector.broadcast %1015 : i32 to vector<16x1xi32>
    %1079 = arith.cmpi sgt, %0, %1078 : vector<16x1xi32>
    %1080 = vector.shape_cast %1077 : vector<16x1xi1> to vector<16x1xi1>
    %1081 = vector.broadcast %1080 : vector<16x1xi1> to vector<16x32xi1>
    %1082 = arith.select %1081, %1051, %1001 : vector<16x32xi1>, vector<16x32xf32>
    %1083 = vector.shape_cast %1079 : vector<16x1xi1> to vector<16x1xi1>
    %1084 = vector.broadcast %1083 : vector<16x1xi1> to vector<16x32xi1>
    %1085 = arith.select %1084, %1075, %1004 : vector<16x32xi1>, vector<16x32xf32>
    %cst_258 = arith.constant 0.000000e+00 : f32
    %1086 = vector.shape_cast %1077 : vector<16x1xi1> to vector<16x1xi1>
    %1087 = vector.broadcast %1086 : vector<16x1xi1> to vector<16x32xi1>
    %1088 = vector.broadcast %cst_258 : f32 to vector<16x32xf32>
    %1089 = arith.select %1087, %1082, %1088 : vector<16x32xi1>, vector<16x32xf32>
    %cst_259 = arith.constant 0.000000e+00 : f32
    %1090 = vector.shape_cast %1079 : vector<16x1xi1> to vector<16x1xi1>
    %1091 = vector.broadcast %1090 : vector<16x1xi1> to vector<16x32xi1>
    %1092 = vector.broadcast %cst_259 : f32 to vector<16x32xf32>
    %1093 = arith.select %1091, %1085, %1092 : vector<16x32xi1>, vector<16x32xf32>
    %1094 = arith.addf %1013, %1089 : vector<16x32xf32>
    %1095 = arith.addf %1014, %1093 : vector<16x32xf32>
    %c3_i32_260 = arith.constant 3 : i32
    %c9_i32_261 = arith.constant 9 : i32
    %1096 = arith.subi %c9_i32_261, %c3_i32_260 : i32
    %c16_i32_262 = arith.constant 16 : i32
    %1097 = arith.muli %c3_i32_260, %c16_i32_262 : i32
    %1098 = tpu.assume_multiple %1097, 16 : i32
    %c16_i32_263 = arith.constant 16 : i32
    %1099 = arith.muli %1096, %c16_i32_263 : i32
    %1100 = tpu.assume_multiple %1099, 16 : i32
    %1101 = arith.index_cast %1098 : i32 to index
    %c0_264 = arith.constant 0 : index
    %1102 = vector.load %arg12[%1101, %c0_264] : memref<160x192xf32, #tpu.memory_space<vmem>>, vector<16x192xf32>
    %1103 = arith.index_cast %1100 : i32 to index
    %c0_265 = arith.constant 0 : index
    %1104 = vector.load %arg12[%1103, %c0_265] : memref<160x192xf32, #tpu.memory_space<vmem>>, vector<16x192xf32>
    %1105 = tpu.concatenate %1082, %1085 in 1 : vector<16x32xf32>, vector<16x32xf32> -> vector<16x64xf32>
    %cst_266 = arith.constant dense<0.000000e+00> : vector<16x192xf32>
    %1106 = tpu.matmul %1105, %851, %cst_266 {dimension_numbers = #tpu.dot_dimension_numbers<[1], [0], [0], [1], [0, 0, 1, 1], [], []>} : vector<16x64xf32>, vector<64x192xf32>, vector<16x192xf32> -> vector<16x192xf32>
    %1107 = vector.broadcast %852 : vector<1x192xf32> to vector<16x192xf32>
    %1108 = arith.addf %1106, %1107 : vector<16x192xf32>
    %1109 = vector.extract_strided_slice %1102 {offsets = [0, 0], sizes = [16, 96], strides = [1, 1]} : vector<16x192xf32> to vector<16x96xf32>
    %1110 = vector.extract_strided_slice %1108 {offsets = [0, 0], sizes = [16, 96], strides = [1, 1]} : vector<16x192xf32> to vector<16x96xf32>
    %1111 = vector.extract_strided_slice %1109 {offsets = [0, 0], sizes = [16, 64], strides = [1, 1]} : vector<16x96xf32> to vector<16x64xf32>
    %1112 = vector.extract_strided_slice %1110 {offsets = [0, 0], sizes = [16, 64], strides = [1, 1]} : vector<16x96xf32> to vector<16x64xf32>
    %1113 = arith.addf %1111, %1112 : vector<16x64xf32>
    %cst_267 = arith.constant 5.000000e-01 : f32
    %1114 = vector.broadcast %cst_267 : f32 to vector<16x64xf32>
    %1115 = arith.mulf %1114, %1113 : vector<16x64xf32>
    %1116 = math.tanh %1115 : vector<16x64xf32>
    %cst_268 = arith.constant 1.000000e+00 : f32
    %1117 = vector.broadcast %cst_268 : f32 to vector<16x64xf32>
    %1118 = arith.addf %1116, %1117 : vector<16x64xf32>
    %cst_269 = arith.constant 5.000000e-01 : f32
    %1119 = vector.broadcast %cst_269 : f32 to vector<16x64xf32>
    %1120 = arith.mulf %1119, %1118 : vector<16x64xf32>
    %1121 = vector.extract_strided_slice %1120 {offsets = [0, 0], sizes = [16, 32], strides = [1, 1]} : vector<16x64xf32> to vector<16x32xf32>
    %1122 = vector.extract_strided_slice %1120 {offsets = [0, 32], sizes = [16, 32], strides = [1, 1]} : vector<16x64xf32> to vector<16x32xf32>
    %1123 = vector.extract_strided_slice %1109 {offsets = [0, 64], sizes = [16, 32], strides = [1, 1]} : vector<16x96xf32> to vector<16x32xf32>
    %1124 = vector.extract_strided_slice %1110 {offsets = [0, 64], sizes = [16, 32], strides = [1, 1]} : vector<16x96xf32> to vector<16x32xf32>
    %1125 = arith.mulf %1121, %1124 : vector<16x32xf32>
    %1126 = arith.addf %1123, %1125 : vector<16x32xf32>
    %1127 = math.tanh %1126 : vector<16x32xf32>
    %cst_270 = arith.constant 1.000000e+00 : f32
    %1128 = vector.broadcast %cst_270 : f32 to vector<16x32xf32>
    %1129 = arith.subf %1128, %1122 : vector<16x32xf32>
    %1130 = arith.mulf %1129, %1127 : vector<16x32xf32>
    %1131 = arith.mulf %1122, %1082 : vector<16x32xf32>
    %1132 = arith.addf %1130, %1131 : vector<16x32xf32>
    %1133 = vector.extract_strided_slice %1104 {offsets = [0, 96], sizes = [16, 96], strides = [1, 1]} : vector<16x192xf32> to vector<16x96xf32>
    %1134 = vector.extract_strided_slice %1108 {offsets = [0, 96], sizes = [16, 96], strides = [1, 1]} : vector<16x192xf32> to vector<16x96xf32>
    %1135 = vector.extract_strided_slice %1133 {offsets = [0, 0], sizes = [16, 64], strides = [1, 1]} : vector<16x96xf32> to vector<16x64xf32>
    %1136 = vector.extract_strided_slice %1134 {offsets = [0, 0], sizes = [16, 64], strides = [1, 1]} : vector<16x96xf32> to vector<16x64xf32>
    %1137 = arith.addf %1135, %1136 : vector<16x64xf32>
    %cst_271 = arith.constant 5.000000e-01 : f32
    %1138 = vector.broadcast %cst_271 : f32 to vector<16x64xf32>
    %1139 = arith.mulf %1138, %1137 : vector<16x64xf32>
    %1140 = math.tanh %1139 : vector<16x64xf32>
    %cst_272 = arith.constant 1.000000e+00 : f32
    %1141 = vector.broadcast %cst_272 : f32 to vector<16x64xf32>
    %1142 = arith.addf %1140, %1141 : vector<16x64xf32>
    %cst_273 = arith.constant 5.000000e-01 : f32
    %1143 = vector.broadcast %cst_273 : f32 to vector<16x64xf32>
    %1144 = arith.mulf %1143, %1142 : vector<16x64xf32>
    %1145 = vector.extract_strided_slice %1144 {offsets = [0, 0], sizes = [16, 32], strides = [1, 1]} : vector<16x64xf32> to vector<16x32xf32>
    %1146 = vector.extract_strided_slice %1144 {offsets = [0, 32], sizes = [16, 32], strides = [1, 1]} : vector<16x64xf32> to vector<16x32xf32>
    %1147 = vector.extract_strided_slice %1133 {offsets = [0, 64], sizes = [16, 32], strides = [1, 1]} : vector<16x96xf32> to vector<16x32xf32>
    %1148 = vector.extract_strided_slice %1134 {offsets = [0, 64], sizes = [16, 32], strides = [1, 1]} : vector<16x96xf32> to vector<16x32xf32>
    %1149 = arith.mulf %1145, %1148 : vector<16x32xf32>
    %1150 = arith.addf %1147, %1149 : vector<16x32xf32>
    %1151 = math.tanh %1150 : vector<16x32xf32>
    %cst_274 = arith.constant 1.000000e+00 : f32
    %1152 = vector.broadcast %cst_274 : f32 to vector<16x32xf32>
    %1153 = arith.subf %1152, %1146 : vector<16x32xf32>
    %1154 = arith.mulf %1153, %1151 : vector<16x32xf32>
    %1155 = arith.mulf %1146, %1085 : vector<16x32xf32>
    %1156 = arith.addf %1154, %1155 : vector<16x32xf32>
    %1157 = vector.broadcast %c3_i32_260 : i32 to vector<16x1xi32>
    %1158 = arith.cmpi sgt, %0, %1157 : vector<16x1xi32>
    %1159 = vector.broadcast %1096 : i32 to vector<16x1xi32>
    %1160 = arith.cmpi sgt, %0, %1159 : vector<16x1xi32>
    %1161 = vector.shape_cast %1158 : vector<16x1xi1> to vector<16x1xi1>
    %1162 = vector.broadcast %1161 : vector<16x1xi1> to vector<16x32xi1>
    %1163 = arith.select %1162, %1132, %1082 : vector<16x32xi1>, vector<16x32xf32>
    %1164 = vector.shape_cast %1160 : vector<16x1xi1> to vector<16x1xi1>
    %1165 = vector.broadcast %1164 : vector<16x1xi1> to vector<16x32xi1>
    %1166 = arith.select %1165, %1156, %1085 : vector<16x32xi1>, vector<16x32xf32>
    %cst_275 = arith.constant 0.000000e+00 : f32
    %1167 = vector.shape_cast %1158 : vector<16x1xi1> to vector<16x1xi1>
    %1168 = vector.broadcast %1167 : vector<16x1xi1> to vector<16x32xi1>
    %1169 = vector.broadcast %cst_275 : f32 to vector<16x32xf32>
    %1170 = arith.select %1168, %1163, %1169 : vector<16x32xi1>, vector<16x32xf32>
    %cst_276 = arith.constant 0.000000e+00 : f32
    %1171 = vector.shape_cast %1160 : vector<16x1xi1> to vector<16x1xi1>
    %1172 = vector.broadcast %1171 : vector<16x1xi1> to vector<16x32xi1>
    %1173 = vector.broadcast %cst_276 : f32 to vector<16x32xf32>
    %1174 = arith.select %1172, %1166, %1173 : vector<16x32xi1>, vector<16x32xf32>
    %1175 = arith.addf %1094, %1170 : vector<16x32xf32>
    %1176 = arith.addf %1095, %1174 : vector<16x32xf32>
    %c4_i32_277 = arith.constant 4 : i32
    %c9_i32_278 = arith.constant 9 : i32
    %1177 = arith.subi %c9_i32_278, %c4_i32_277 : i32
    %c16_i32_279 = arith.constant 16 : i32
    %1178 = arith.muli %c4_i32_277, %c16_i32_279 : i32
    %1179 = tpu.assume_multiple %1178, 16 : i32
    %c16_i32_280 = arith.constant 16 : i32
    %1180 = arith.muli %1177, %c16_i32_280 : i32
    %1181 = tpu.assume_multiple %1180, 16 : i32
    %1182 = arith.index_cast %1179 : i32 to index
    %c0_281 = arith.constant 0 : index
    %1183 = vector.load %arg12[%1182, %c0_281] : memref<160x192xf32, #tpu.memory_space<vmem>>, vector<16x192xf32>
    %1184 = arith.index_cast %1181 : i32 to index
    %c0_282 = arith.constant 0 : index
    %1185 = vector.load %arg12[%1184, %c0_282] : memref<160x192xf32, #tpu.memory_space<vmem>>, vector<16x192xf32>
    %1186 = tpu.concatenate %1163, %1166 in 1 : vector<16x32xf32>, vector<16x32xf32> -> vector<16x64xf32>
    %cst_283 = arith.constant dense<0.000000e+00> : vector<16x192xf32>
    %1187 = tpu.matmul %1186, %851, %cst_283 {dimension_numbers = #tpu.dot_dimension_numbers<[1], [0], [0], [1], [0, 0, 1, 1], [], []>} : vector<16x64xf32>, vector<64x192xf32>, vector<16x192xf32> -> vector<16x192xf32>
    %1188 = vector.broadcast %852 : vector<1x192xf32> to vector<16x192xf32>
    %1189 = arith.addf %1187, %1188 : vector<16x192xf32>
    %1190 = vector.extract_strided_slice %1183 {offsets = [0, 0], sizes = [16, 96], strides = [1, 1]} : vector<16x192xf32> to vector<16x96xf32>
    %1191 = vector.extract_strided_slice %1189 {offsets = [0, 0], sizes = [16, 96], strides = [1, 1]} : vector<16x192xf32> to vector<16x96xf32>
    %1192 = vector.extract_strided_slice %1190 {offsets = [0, 0], sizes = [16, 64], strides = [1, 1]} : vector<16x96xf32> to vector<16x64xf32>
    %1193 = vector.extract_strided_slice %1191 {offsets = [0, 0], sizes = [16, 64], strides = [1, 1]} : vector<16x96xf32> to vector<16x64xf32>
    %1194 = arith.addf %1192, %1193 : vector<16x64xf32>
    %cst_284 = arith.constant 5.000000e-01 : f32
    %1195 = vector.broadcast %cst_284 : f32 to vector<16x64xf32>
    %1196 = arith.mulf %1195, %1194 : vector<16x64xf32>
    %1197 = math.tanh %1196 : vector<16x64xf32>
    %cst_285 = arith.constant 1.000000e+00 : f32
    %1198 = vector.broadcast %cst_285 : f32 to vector<16x64xf32>
    %1199 = arith.addf %1197, %1198 : vector<16x64xf32>
    %cst_286 = arith.constant 5.000000e-01 : f32
    %1200 = vector.broadcast %cst_286 : f32 to vector<16x64xf32>
    %1201 = arith.mulf %1200, %1199 : vector<16x64xf32>
    %1202 = vector.extract_strided_slice %1201 {offsets = [0, 0], sizes = [16, 32], strides = [1, 1]} : vector<16x64xf32> to vector<16x32xf32>
    %1203 = vector.extract_strided_slice %1201 {offsets = [0, 32], sizes = [16, 32], strides = [1, 1]} : vector<16x64xf32> to vector<16x32xf32>
    %1204 = vector.extract_strided_slice %1190 {offsets = [0, 64], sizes = [16, 32], strides = [1, 1]} : vector<16x96xf32> to vector<16x32xf32>
    %1205 = vector.extract_strided_slice %1191 {offsets = [0, 64], sizes = [16, 32], strides = [1, 1]} : vector<16x96xf32> to vector<16x32xf32>
    %1206 = arith.mulf %1202, %1205 : vector<16x32xf32>
    %1207 = arith.addf %1204, %1206 : vector<16x32xf32>
    %1208 = math.tanh %1207 : vector<16x32xf32>
    %cst_287 = arith.constant 1.000000e+00 : f32
    %1209 = vector.broadcast %cst_287 : f32 to vector<16x32xf32>
    %1210 = arith.subf %1209, %1203 : vector<16x32xf32>
    %1211 = arith.mulf %1210, %1208 : vector<16x32xf32>
    %1212 = arith.mulf %1203, %1163 : vector<16x32xf32>
    %1213 = arith.addf %1211, %1212 : vector<16x32xf32>
    %1214 = vector.extract_strided_slice %1185 {offsets = [0, 96], sizes = [16, 96], strides = [1, 1]} : vector<16x192xf32> to vector<16x96xf32>
    %1215 = vector.extract_strided_slice %1189 {offsets = [0, 96], sizes = [16, 96], strides = [1, 1]} : vector<16x192xf32> to vector<16x96xf32>
    %1216 = vector.extract_strided_slice %1214 {offsets = [0, 0], sizes = [16, 64], strides = [1, 1]} : vector<16x96xf32> to vector<16x64xf32>
    %1217 = vector.extract_strided_slice %1215 {offsets = [0, 0], sizes = [16, 64], strides = [1, 1]} : vector<16x96xf32> to vector<16x64xf32>
    %1218 = arith.addf %1216, %1217 : vector<16x64xf32>
    %cst_288 = arith.constant 5.000000e-01 : f32
    %1219 = vector.broadcast %cst_288 : f32 to vector<16x64xf32>
    %1220 = arith.mulf %1219, %1218 : vector<16x64xf32>
    %1221 = math.tanh %1220 : vector<16x64xf32>
    %cst_289 = arith.constant 1.000000e+00 : f32
    %1222 = vector.broadcast %cst_289 : f32 to vector<16x64xf32>
    %1223 = arith.addf %1221, %1222 : vector<16x64xf32>
    %cst_290 = arith.constant 5.000000e-01 : f32
    %1224 = vector.broadcast %cst_290 : f32 to vector<16x64xf32>
    %1225 = arith.mulf %1224, %1223 : vector<16x64xf32>
    %1226 = vector.extract_strided_slice %1225 {offsets = [0, 0], sizes = [16, 32], strides = [1, 1]} : vector<16x64xf32> to vector<16x32xf32>
    %1227 = vector.extract_strided_slice %1225 {offsets = [0, 32], sizes = [16, 32], strides = [1, 1]} : vector<16x64xf32> to vector<16x32xf32>
    %1228 = vector.extract_strided_slice %1214 {offsets = [0, 64], sizes = [16, 32], strides = [1, 1]} : vector<16x96xf32> to vector<16x32xf32>
    %1229 = vector.extract_strided_slice %1215 {offsets = [0, 64], sizes = [16, 32], strides = [1, 1]} : vector<16x96xf32> to vector<16x32xf32>
    %1230 = arith.mulf %1226, %1229 : vector<16x32xf32>
    %1231 = arith.addf %1228, %1230 : vector<16x32xf32>
    %1232 = math.tanh %1231 : vector<16x32xf32>
    %cst_291 = arith.constant 1.000000e+00 : f32
    %1233 = vector.broadcast %cst_291 : f32 to vector<16x32xf32>
    %1234 = arith.subf %1233, %1227 : vector<16x32xf32>
    %1235 = arith.mulf %1234, %1232 : vector<16x32xf32>
    %1236 = arith.mulf %1227, %1166 : vector<16x32xf32>
    %1237 = arith.addf %1235, %1236 : vector<16x32xf32>
    %1238 = vector.broadcast %c4_i32_277 : i32 to vector<16x1xi32>
    %1239 = arith.cmpi sgt, %0, %1238 : vector<16x1xi32>
    %1240 = vector.broadcast %1177 : i32 to vector<16x1xi32>
    %1241 = arith.cmpi sgt, %0, %1240 : vector<16x1xi32>
    %1242 = vector.shape_cast %1239 : vector<16x1xi1> to vector<16x1xi1>
    %1243 = vector.broadcast %1242 : vector<16x1xi1> to vector<16x32xi1>
    %1244 = arith.select %1243, %1213, %1163 : vector<16x32xi1>, vector<16x32xf32>
    %1245 = vector.shape_cast %1241 : vector<16x1xi1> to vector<16x1xi1>
    %1246 = vector.broadcast %1245 : vector<16x1xi1> to vector<16x32xi1>
    %1247 = arith.select %1246, %1237, %1166 : vector<16x32xi1>, vector<16x32xf32>
    %cst_292 = arith.constant 0.000000e+00 : f32
    %1248 = vector.shape_cast %1239 : vector<16x1xi1> to vector<16x1xi1>
    %1249 = vector.broadcast %1248 : vector<16x1xi1> to vector<16x32xi1>
    %1250 = vector.broadcast %cst_292 : f32 to vector<16x32xf32>
    %1251 = arith.select %1249, %1244, %1250 : vector<16x32xi1>, vector<16x32xf32>
    %cst_293 = arith.constant 0.000000e+00 : f32
    %1252 = vector.shape_cast %1241 : vector<16x1xi1> to vector<16x1xi1>
    %1253 = vector.broadcast %1252 : vector<16x1xi1> to vector<16x32xi1>
    %1254 = vector.broadcast %cst_293 : f32 to vector<16x32xf32>
    %1255 = arith.select %1253, %1247, %1254 : vector<16x32xi1>, vector<16x32xf32>
    %1256 = arith.addf %1175, %1251 : vector<16x32xf32>
    %1257 = arith.addf %1176, %1255 : vector<16x32xf32>
    %c5_i32_294 = arith.constant 5 : i32
    %c9_i32_295 = arith.constant 9 : i32
    %1258 = arith.subi %c9_i32_295, %c5_i32_294 : i32
    %c16_i32_296 = arith.constant 16 : i32
    %1259 = arith.muli %c5_i32_294, %c16_i32_296 : i32
    %1260 = tpu.assume_multiple %1259, 16 : i32
    %c16_i32_297 = arith.constant 16 : i32
    %1261 = arith.muli %1258, %c16_i32_297 : i32
    %1262 = tpu.assume_multiple %1261, 16 : i32
    %1263 = arith.index_cast %1260 : i32 to index
    %c0_298 = arith.constant 0 : index
    %1264 = vector.load %arg12[%1263, %c0_298] : memref<160x192xf32, #tpu.memory_space<vmem>>, vector<16x192xf32>
    %1265 = arith.index_cast %1262 : i32 to index
    %c0_299 = arith.constant 0 : index
    %1266 = vector.load %arg12[%1265, %c0_299] : memref<160x192xf32, #tpu.memory_space<vmem>>, vector<16x192xf32>
    %1267 = tpu.concatenate %1244, %1247 in 1 : vector<16x32xf32>, vector<16x32xf32> -> vector<16x64xf32>
    %cst_300 = arith.constant dense<0.000000e+00> : vector<16x192xf32>
    %1268 = tpu.matmul %1267, %851, %cst_300 {dimension_numbers = #tpu.dot_dimension_numbers<[1], [0], [0], [1], [0, 0, 1, 1], [], []>} : vector<16x64xf32>, vector<64x192xf32>, vector<16x192xf32> -> vector<16x192xf32>
    %1269 = vector.broadcast %852 : vector<1x192xf32> to vector<16x192xf32>
    %1270 = arith.addf %1268, %1269 : vector<16x192xf32>
    %1271 = vector.extract_strided_slice %1264 {offsets = [0, 0], sizes = [16, 96], strides = [1, 1]} : vector<16x192xf32> to vector<16x96xf32>
    %1272 = vector.extract_strided_slice %1270 {offsets = [0, 0], sizes = [16, 96], strides = [1, 1]} : vector<16x192xf32> to vector<16x96xf32>
    %1273 = vector.extract_strided_slice %1271 {offsets = [0, 0], sizes = [16, 64], strides = [1, 1]} : vector<16x96xf32> to vector<16x64xf32>
    %1274 = vector.extract_strided_slice %1272 {offsets = [0, 0], sizes = [16, 64], strides = [1, 1]} : vector<16x96xf32> to vector<16x64xf32>
    %1275 = arith.addf %1273, %1274 : vector<16x64xf32>
    %cst_301 = arith.constant 5.000000e-01 : f32
    %1276 = vector.broadcast %cst_301 : f32 to vector<16x64xf32>
    %1277 = arith.mulf %1276, %1275 : vector<16x64xf32>
    %1278 = math.tanh %1277 : vector<16x64xf32>
    %cst_302 = arith.constant 1.000000e+00 : f32
    %1279 = vector.broadcast %cst_302 : f32 to vector<16x64xf32>
    %1280 = arith.addf %1278, %1279 : vector<16x64xf32>
    %cst_303 = arith.constant 5.000000e-01 : f32
    %1281 = vector.broadcast %cst_303 : f32 to vector<16x64xf32>
    %1282 = arith.mulf %1281, %1280 : vector<16x64xf32>
    %1283 = vector.extract_strided_slice %1282 {offsets = [0, 0], sizes = [16, 32], strides = [1, 1]} : vector<16x64xf32> to vector<16x32xf32>
    %1284 = vector.extract_strided_slice %1282 {offsets = [0, 32], sizes = [16, 32], strides = [1, 1]} : vector<16x64xf32> to vector<16x32xf32>
    %1285 = vector.extract_strided_slice %1271 {offsets = [0, 64], sizes = [16, 32], strides = [1, 1]} : vector<16x96xf32> to vector<16x32xf32>
    %1286 = vector.extract_strided_slice %1272 {offsets = [0, 64], sizes = [16, 32], strides = [1, 1]} : vector<16x96xf32> to vector<16x32xf32>
    %1287 = arith.mulf %1283, %1286 : vector<16x32xf32>
    %1288 = arith.addf %1285, %1287 : vector<16x32xf32>
    %1289 = math.tanh %1288 : vector<16x32xf32>
    %cst_304 = arith.constant 1.000000e+00 : f32
    %1290 = vector.broadcast %cst_304 : f32 to vector<16x32xf32>
    %1291 = arith.subf %1290, %1284 : vector<16x32xf32>
    %1292 = arith.mulf %1291, %1289 : vector<16x32xf32>
    %1293 = arith.mulf %1284, %1244 : vector<16x32xf32>
    %1294 = arith.addf %1292, %1293 : vector<16x32xf32>
    %1295 = vector.extract_strided_slice %1266 {offsets = [0, 96], sizes = [16, 96], strides = [1, 1]} : vector<16x192xf32> to vector<16x96xf32>
    %1296 = vector.extract_strided_slice %1270 {offsets = [0, 96], sizes = [16, 96], strides = [1, 1]} : vector<16x192xf32> to vector<16x96xf32>
    %1297 = vector.extract_strided_slice %1295 {offsets = [0, 0], sizes = [16, 64], strides = [1, 1]} : vector<16x96xf32> to vector<16x64xf32>
    %1298 = vector.extract_strided_slice %1296 {offsets = [0, 0], sizes = [16, 64], strides = [1, 1]} : vector<16x96xf32> to vector<16x64xf32>
    %1299 = arith.addf %1297, %1298 : vector<16x64xf32>
    %cst_305 = arith.constant 5.000000e-01 : f32
    %1300 = vector.broadcast %cst_305 : f32 to vector<16x64xf32>
    %1301 = arith.mulf %1300, %1299 : vector<16x64xf32>
    %1302 = math.tanh %1301 : vector<16x64xf32>
    %cst_306 = arith.constant 1.000000e+00 : f32
    %1303 = vector.broadcast %cst_306 : f32 to vector<16x64xf32>
    %1304 = arith.addf %1302, %1303 : vector<16x64xf32>
    %cst_307 = arith.constant 5.000000e-01 : f32
    %1305 = vector.broadcast %cst_307 : f32 to vector<16x64xf32>
    %1306 = arith.mulf %1305, %1304 : vector<16x64xf32>
    %1307 = vector.extract_strided_slice %1306 {offsets = [0, 0], sizes = [16, 32], strides = [1, 1]} : vector<16x64xf32> to vector<16x32xf32>
    %1308 = vector.extract_strided_slice %1306 {offsets = [0, 32], sizes = [16, 32], strides = [1, 1]} : vector<16x64xf32> to vector<16x32xf32>
    %1309 = vector.extract_strided_slice %1295 {offsets = [0, 64], sizes = [16, 32], strides = [1, 1]} : vector<16x96xf32> to vector<16x32xf32>
    %1310 = vector.extract_strided_slice %1296 {offsets = [0, 64], sizes = [16, 32], strides = [1, 1]} : vector<16x96xf32> to vector<16x32xf32>
    %1311 = arith.mulf %1307, %1310 : vector<16x32xf32>
    %1312 = arith.addf %1309, %1311 : vector<16x32xf32>
    %1313 = math.tanh %1312 : vector<16x32xf32>
    %cst_308 = arith.constant 1.000000e+00 : f32
    %1314 = vector.broadcast %cst_308 : f32 to vector<16x32xf32>
    %1315 = arith.subf %1314, %1308 : vector<16x32xf32>
    %1316 = arith.mulf %1315, %1313 : vector<16x32xf32>
    %1317 = arith.mulf %1308, %1247 : vector<16x32xf32>
    %1318 = arith.addf %1316, %1317 : vector<16x32xf32>
    %1319 = vector.broadcast %c5_i32_294 : i32 to vector<16x1xi32>
    %1320 = arith.cmpi sgt, %0, %1319 : vector<16x1xi32>
    %1321 = vector.broadcast %1258 : i32 to vector<16x1xi32>
    %1322 = arith.cmpi sgt, %0, %1321 : vector<16x1xi32>
    %1323 = vector.shape_cast %1320 : vector<16x1xi1> to vector<16x1xi1>
    %1324 = vector.broadcast %1323 : vector<16x1xi1> to vector<16x32xi1>
    %1325 = arith.select %1324, %1294, %1244 : vector<16x32xi1>, vector<16x32xf32>
    %1326 = vector.shape_cast %1322 : vector<16x1xi1> to vector<16x1xi1>
    %1327 = vector.broadcast %1326 : vector<16x1xi1> to vector<16x32xi1>
    %1328 = arith.select %1327, %1318, %1247 : vector<16x32xi1>, vector<16x32xf32>
    %cst_309 = arith.constant 0.000000e+00 : f32
    %1329 = vector.shape_cast %1320 : vector<16x1xi1> to vector<16x1xi1>
    %1330 = vector.broadcast %1329 : vector<16x1xi1> to vector<16x32xi1>
    %1331 = vector.broadcast %cst_309 : f32 to vector<16x32xf32>
    %1332 = arith.select %1330, %1325, %1331 : vector<16x32xi1>, vector<16x32xf32>
    %cst_310 = arith.constant 0.000000e+00 : f32
    %1333 = vector.shape_cast %1322 : vector<16x1xi1> to vector<16x1xi1>
    %1334 = vector.broadcast %1333 : vector<16x1xi1> to vector<16x32xi1>
    %1335 = vector.broadcast %cst_310 : f32 to vector<16x32xf32>
    %1336 = arith.select %1334, %1328, %1335 : vector<16x32xi1>, vector<16x32xf32>
    %1337 = arith.addf %1256, %1332 : vector<16x32xf32>
    %1338 = arith.addf %1257, %1336 : vector<16x32xf32>
    %c6_i32_311 = arith.constant 6 : i32
    %c9_i32_312 = arith.constant 9 : i32
    %1339 = arith.subi %c9_i32_312, %c6_i32_311 : i32
    %c16_i32_313 = arith.constant 16 : i32
    %1340 = arith.muli %c6_i32_311, %c16_i32_313 : i32
    %1341 = tpu.assume_multiple %1340, 16 : i32
    %c16_i32_314 = arith.constant 16 : i32
    %1342 = arith.muli %1339, %c16_i32_314 : i32
    %1343 = tpu.assume_multiple %1342, 16 : i32
    %1344 = arith.index_cast %1341 : i32 to index
    %c0_315 = arith.constant 0 : index
    %1345 = vector.load %arg12[%1344, %c0_315] : memref<160x192xf32, #tpu.memory_space<vmem>>, vector<16x192xf32>
    %1346 = arith.index_cast %1343 : i32 to index
    %c0_316 = arith.constant 0 : index
    %1347 = vector.load %arg12[%1346, %c0_316] : memref<160x192xf32, #tpu.memory_space<vmem>>, vector<16x192xf32>
    %1348 = tpu.concatenate %1325, %1328 in 1 : vector<16x32xf32>, vector<16x32xf32> -> vector<16x64xf32>
    %cst_317 = arith.constant dense<0.000000e+00> : vector<16x192xf32>
    %1349 = tpu.matmul %1348, %851, %cst_317 {dimension_numbers = #tpu.dot_dimension_numbers<[1], [0], [0], [1], [0, 0, 1, 1], [], []>} : vector<16x64xf32>, vector<64x192xf32>, vector<16x192xf32> -> vector<16x192xf32>
    %1350 = vector.broadcast %852 : vector<1x192xf32> to vector<16x192xf32>
    %1351 = arith.addf %1349, %1350 : vector<16x192xf32>
    %1352 = vector.extract_strided_slice %1345 {offsets = [0, 0], sizes = [16, 96], strides = [1, 1]} : vector<16x192xf32> to vector<16x96xf32>
    %1353 = vector.extract_strided_slice %1351 {offsets = [0, 0], sizes = [16, 96], strides = [1, 1]} : vector<16x192xf32> to vector<16x96xf32>
    %1354 = vector.extract_strided_slice %1352 {offsets = [0, 0], sizes = [16, 64], strides = [1, 1]} : vector<16x96xf32> to vector<16x64xf32>
    %1355 = vector.extract_strided_slice %1353 {offsets = [0, 0], sizes = [16, 64], strides = [1, 1]} : vector<16x96xf32> to vector<16x64xf32>
    %1356 = arith.addf %1354, %1355 : vector<16x64xf32>
    %cst_318 = arith.constant 5.000000e-01 : f32
    %1357 = vector.broadcast %cst_318 : f32 to vector<16x64xf32>
    %1358 = arith.mulf %1357, %1356 : vector<16x64xf32>
    %1359 = math.tanh %1358 : vector<16x64xf32>
    %cst_319 = arith.constant 1.000000e+00 : f32
    %1360 = vector.broadcast %cst_319 : f32 to vector<16x64xf32>
    %1361 = arith.addf %1359, %1360 : vector<16x64xf32>
    %cst_320 = arith.constant 5.000000e-01 : f32
    %1362 = vector.broadcast %cst_320 : f32 to vector<16x64xf32>
    %1363 = arith.mulf %1362, %1361 : vector<16x64xf32>
    %1364 = vector.extract_strided_slice %1363 {offsets = [0, 0], sizes = [16, 32], strides = [1, 1]} : vector<16x64xf32> to vector<16x32xf32>
    %1365 = vector.extract_strided_slice %1363 {offsets = [0, 32], sizes = [16, 32], strides = [1, 1]} : vector<16x64xf32> to vector<16x32xf32>
    %1366 = vector.extract_strided_slice %1352 {offsets = [0, 64], sizes = [16, 32], strides = [1, 1]} : vector<16x96xf32> to vector<16x32xf32>
    %1367 = vector.extract_strided_slice %1353 {offsets = [0, 64], sizes = [16, 32], strides = [1, 1]} : vector<16x96xf32> to vector<16x32xf32>
    %1368 = arith.mulf %1364, %1367 : vector<16x32xf32>
    %1369 = arith.addf %1366, %1368 : vector<16x32xf32>
    %1370 = math.tanh %1369 : vector<16x32xf32>
    %cst_321 = arith.constant 1.000000e+00 : f32
    %1371 = vector.broadcast %cst_321 : f32 to vector<16x32xf32>
    %1372 = arith.subf %1371, %1365 : vector<16x32xf32>
    %1373 = arith.mulf %1372, %1370 : vector<16x32xf32>
    %1374 = arith.mulf %1365, %1325 : vector<16x32xf32>
    %1375 = arith.addf %1373, %1374 : vector<16x32xf32>
    %1376 = vector.extract_strided_slice %1347 {offsets = [0, 96], sizes = [16, 96], strides = [1, 1]} : vector<16x192xf32> to vector<16x96xf32>
    %1377 = vector.extract_strided_slice %1351 {offsets = [0, 96], sizes = [16, 96], strides = [1, 1]} : vector<16x192xf32> to vector<16x96xf32>
    %1378 = vector.extract_strided_slice %1376 {offsets = [0, 0], sizes = [16, 64], strides = [1, 1]} : vector<16x96xf32> to vector<16x64xf32>
    %1379 = vector.extract_strided_slice %1377 {offsets = [0, 0], sizes = [16, 64], strides = [1, 1]} : vector<16x96xf32> to vector<16x64xf32>
    %1380 = arith.addf %1378, %1379 : vector<16x64xf32>
    %cst_322 = arith.constant 5.000000e-01 : f32
    %1381 = vector.broadcast %cst_322 : f32 to vector<16x64xf32>
    %1382 = arith.mulf %1381, %1380 : vector<16x64xf32>
    %1383 = math.tanh %1382 : vector<16x64xf32>
    %cst_323 = arith.constant 1.000000e+00 : f32
    %1384 = vector.broadcast %cst_323 : f32 to vector<16x64xf32>
    %1385 = arith.addf %1383, %1384 : vector<16x64xf32>
    %cst_324 = arith.constant 5.000000e-01 : f32
    %1386 = vector.broadcast %cst_324 : f32 to vector<16x64xf32>
    %1387 = arith.mulf %1386, %1385 : vector<16x64xf32>
    %1388 = vector.extract_strided_slice %1387 {offsets = [0, 0], sizes = [16, 32], strides = [1, 1]} : vector<16x64xf32> to vector<16x32xf32>
    %1389 = vector.extract_strided_slice %1387 {offsets = [0, 32], sizes = [16, 32], strides = [1, 1]} : vector<16x64xf32> to vector<16x32xf32>
    %1390 = vector.extract_strided_slice %1376 {offsets = [0, 64], sizes = [16, 32], strides = [1, 1]} : vector<16x96xf32> to vector<16x32xf32>
    %1391 = vector.extract_strided_slice %1377 {offsets = [0, 64], sizes = [16, 32], strides = [1, 1]} : vector<16x96xf32> to vector<16x32xf32>
    %1392 = arith.mulf %1388, %1391 : vector<16x32xf32>
    %1393 = arith.addf %1390, %1392 : vector<16x32xf32>
    %1394 = math.tanh %1393 : vector<16x32xf32>
    %cst_325 = arith.constant 1.000000e+00 : f32
    %1395 = vector.broadcast %cst_325 : f32 to vector<16x32xf32>
    %1396 = arith.subf %1395, %1389 : vector<16x32xf32>
    %1397 = arith.mulf %1396, %1394 : vector<16x32xf32>
    %1398 = arith.mulf %1389, %1328 : vector<16x32xf32>
    %1399 = arith.addf %1397, %1398 : vector<16x32xf32>
    %1400 = vector.broadcast %c6_i32_311 : i32 to vector<16x1xi32>
    %1401 = arith.cmpi sgt, %0, %1400 : vector<16x1xi32>
    %1402 = vector.broadcast %1339 : i32 to vector<16x1xi32>
    %1403 = arith.cmpi sgt, %0, %1402 : vector<16x1xi32>
    %1404 = vector.shape_cast %1401 : vector<16x1xi1> to vector<16x1xi1>
    %1405 = vector.broadcast %1404 : vector<16x1xi1> to vector<16x32xi1>
    %1406 = arith.select %1405, %1375, %1325 : vector<16x32xi1>, vector<16x32xf32>
    %1407 = vector.shape_cast %1403 : vector<16x1xi1> to vector<16x1xi1>
    %1408 = vector.broadcast %1407 : vector<16x1xi1> to vector<16x32xi1>
    %1409 = arith.select %1408, %1399, %1328 : vector<16x32xi1>, vector<16x32xf32>
    %cst_326 = arith.constant 0.000000e+00 : f32
    %1410 = vector.shape_cast %1401 : vector<16x1xi1> to vector<16x1xi1>
    %1411 = vector.broadcast %1410 : vector<16x1xi1> to vector<16x32xi1>
    %1412 = vector.broadcast %cst_326 : f32 to vector<16x32xf32>
    %1413 = arith.select %1411, %1406, %1412 : vector<16x32xi1>, vector<16x32xf32>
    %cst_327 = arith.constant 0.000000e+00 : f32
    %1414 = vector.shape_cast %1403 : vector<16x1xi1> to vector<16x1xi1>
    %1415 = vector.broadcast %1414 : vector<16x1xi1> to vector<16x32xi1>
    %1416 = vector.broadcast %cst_327 : f32 to vector<16x32xf32>
    %1417 = arith.select %1415, %1409, %1416 : vector<16x32xi1>, vector<16x32xf32>
    %1418 = arith.addf %1337, %1413 : vector<16x32xf32>
    %1419 = arith.addf %1338, %1417 : vector<16x32xf32>
    %c7_i32_328 = arith.constant 7 : i32
    %c9_i32_329 = arith.constant 9 : i32
    %1420 = arith.subi %c9_i32_329, %c7_i32_328 : i32
    %c16_i32_330 = arith.constant 16 : i32
    %1421 = arith.muli %c7_i32_328, %c16_i32_330 : i32
    %1422 = tpu.assume_multiple %1421, 16 : i32
    %c16_i32_331 = arith.constant 16 : i32
    %1423 = arith.muli %1420, %c16_i32_331 : i32
    %1424 = tpu.assume_multiple %1423, 16 : i32
    %1425 = arith.index_cast %1422 : i32 to index
    %c0_332 = arith.constant 0 : index
    %1426 = vector.load %arg12[%1425, %c0_332] : memref<160x192xf32, #tpu.memory_space<vmem>>, vector<16x192xf32>
    %1427 = arith.index_cast %1424 : i32 to index
    %c0_333 = arith.constant 0 : index
    %1428 = vector.load %arg12[%1427, %c0_333] : memref<160x192xf32, #tpu.memory_space<vmem>>, vector<16x192xf32>
    %1429 = tpu.concatenate %1406, %1409 in 1 : vector<16x32xf32>, vector<16x32xf32> -> vector<16x64xf32>
    %cst_334 = arith.constant dense<0.000000e+00> : vector<16x192xf32>
    %1430 = tpu.matmul %1429, %851, %cst_334 {dimension_numbers = #tpu.dot_dimension_numbers<[1], [0], [0], [1], [0, 0, 1, 1], [], []>} : vector<16x64xf32>, vector<64x192xf32>, vector<16x192xf32> -> vector<16x192xf32>
    %1431 = vector.broadcast %852 : vector<1x192xf32> to vector<16x192xf32>
    %1432 = arith.addf %1430, %1431 : vector<16x192xf32>
    %1433 = vector.extract_strided_slice %1426 {offsets = [0, 0], sizes = [16, 96], strides = [1, 1]} : vector<16x192xf32> to vector<16x96xf32>
    %1434 = vector.extract_strided_slice %1432 {offsets = [0, 0], sizes = [16, 96], strides = [1, 1]} : vector<16x192xf32> to vector<16x96xf32>
    %1435 = vector.extract_strided_slice %1433 {offsets = [0, 0], sizes = [16, 64], strides = [1, 1]} : vector<16x96xf32> to vector<16x64xf32>
    %1436 = vector.extract_strided_slice %1434 {offsets = [0, 0], sizes = [16, 64], strides = [1, 1]} : vector<16x96xf32> to vector<16x64xf32>
    %1437 = arith.addf %1435, %1436 : vector<16x64xf32>
    %cst_335 = arith.constant 5.000000e-01 : f32
    %1438 = vector.broadcast %cst_335 : f32 to vector<16x64xf32>
    %1439 = arith.mulf %1438, %1437 : vector<16x64xf32>
    %1440 = math.tanh %1439 : vector<16x64xf32>
    %cst_336 = arith.constant 1.000000e+00 : f32
    %1441 = vector.broadcast %cst_336 : f32 to vector<16x64xf32>
    %1442 = arith.addf %1440, %1441 : vector<16x64xf32>
    %cst_337 = arith.constant 5.000000e-01 : f32
    %1443 = vector.broadcast %cst_337 : f32 to vector<16x64xf32>
    %1444 = arith.mulf %1443, %1442 : vector<16x64xf32>
    %1445 = vector.extract_strided_slice %1444 {offsets = [0, 0], sizes = [16, 32], strides = [1, 1]} : vector<16x64xf32> to vector<16x32xf32>
    %1446 = vector.extract_strided_slice %1444 {offsets = [0, 32], sizes = [16, 32], strides = [1, 1]} : vector<16x64xf32> to vector<16x32xf32>
    %1447 = vector.extract_strided_slice %1433 {offsets = [0, 64], sizes = [16, 32], strides = [1, 1]} : vector<16x96xf32> to vector<16x32xf32>
    %1448 = vector.extract_strided_slice %1434 {offsets = [0, 64], sizes = [16, 32], strides = [1, 1]} : vector<16x96xf32> to vector<16x32xf32>
    %1449 = arith.mulf %1445, %1448 : vector<16x32xf32>
    %1450 = arith.addf %1447, %1449 : vector<16x32xf32>
    %1451 = math.tanh %1450 : vector<16x32xf32>
    %cst_338 = arith.constant 1.000000e+00 : f32
    %1452 = vector.broadcast %cst_338 : f32 to vector<16x32xf32>
    %1453 = arith.subf %1452, %1446 : vector<16x32xf32>
    %1454 = arith.mulf %1453, %1451 : vector<16x32xf32>
    %1455 = arith.mulf %1446, %1406 : vector<16x32xf32>
    %1456 = arith.addf %1454, %1455 : vector<16x32xf32>
    %1457 = vector.extract_strided_slice %1428 {offsets = [0, 96], sizes = [16, 96], strides = [1, 1]} : vector<16x192xf32> to vector<16x96xf32>
    %1458 = vector.extract_strided_slice %1432 {offsets = [0, 96], sizes = [16, 96], strides = [1, 1]} : vector<16x192xf32> to vector<16x96xf32>
    %1459 = vector.extract_strided_slice %1457 {offsets = [0, 0], sizes = [16, 64], strides = [1, 1]} : vector<16x96xf32> to vector<16x64xf32>
    %1460 = vector.extract_strided_slice %1458 {offsets = [0, 0], sizes = [16, 64], strides = [1, 1]} : vector<16x96xf32> to vector<16x64xf32>
    %1461 = arith.addf %1459, %1460 : vector<16x64xf32>
    %cst_339 = arith.constant 5.000000e-01 : f32
    %1462 = vector.broadcast %cst_339 : f32 to vector<16x64xf32>
    %1463 = arith.mulf %1462, %1461 : vector<16x64xf32>
    %1464 = math.tanh %1463 : vector<16x64xf32>
    %cst_340 = arith.constant 1.000000e+00 : f32
    %1465 = vector.broadcast %cst_340 : f32 to vector<16x64xf32>
    %1466 = arith.addf %1464, %1465 : vector<16x64xf32>
    %cst_341 = arith.constant 5.000000e-01 : f32
    %1467 = vector.broadcast %cst_341 : f32 to vector<16x64xf32>
    %1468 = arith.mulf %1467, %1466 : vector<16x64xf32>
    %1469 = vector.extract_strided_slice %1468 {offsets = [0, 0], sizes = [16, 32], strides = [1, 1]} : vector<16x64xf32> to vector<16x32xf32>
    %1470 = vector.extract_strided_slice %1468 {offsets = [0, 32], sizes = [16, 32], strides = [1, 1]} : vector<16x64xf32> to vector<16x32xf32>
    %1471 = vector.extract_strided_slice %1457 {offsets = [0, 64], sizes = [16, 32], strides = [1, 1]} : vector<16x96xf32> to vector<16x32xf32>
    %1472 = vector.extract_strided_slice %1458 {offsets = [0, 64], sizes = [16, 32], strides = [1, 1]} : vector<16x96xf32> to vector<16x32xf32>
    %1473 = arith.mulf %1469, %1472 : vector<16x32xf32>
    %1474 = arith.addf %1471, %1473 : vector<16x32xf32>
    %1475 = math.tanh %1474 : vector<16x32xf32>
    %cst_342 = arith.constant 1.000000e+00 : f32
    %1476 = vector.broadcast %cst_342 : f32 to vector<16x32xf32>
    %1477 = arith.subf %1476, %1470 : vector<16x32xf32>
    %1478 = arith.mulf %1477, %1475 : vector<16x32xf32>
    %1479 = arith.mulf %1470, %1409 : vector<16x32xf32>
    %1480 = arith.addf %1478, %1479 : vector<16x32xf32>
    %1481 = vector.broadcast %c7_i32_328 : i32 to vector<16x1xi32>
    %1482 = arith.cmpi sgt, %0, %1481 : vector<16x1xi32>
    %1483 = vector.broadcast %1420 : i32 to vector<16x1xi32>
    %1484 = arith.cmpi sgt, %0, %1483 : vector<16x1xi32>
    %1485 = vector.shape_cast %1482 : vector<16x1xi1> to vector<16x1xi1>
    %1486 = vector.broadcast %1485 : vector<16x1xi1> to vector<16x32xi1>
    %1487 = arith.select %1486, %1456, %1406 : vector<16x32xi1>, vector<16x32xf32>
    %1488 = vector.shape_cast %1484 : vector<16x1xi1> to vector<16x1xi1>
    %1489 = vector.broadcast %1488 : vector<16x1xi1> to vector<16x32xi1>
    %1490 = arith.select %1489, %1480, %1409 : vector<16x32xi1>, vector<16x32xf32>
    %cst_343 = arith.constant 0.000000e+00 : f32
    %1491 = vector.shape_cast %1482 : vector<16x1xi1> to vector<16x1xi1>
    %1492 = vector.broadcast %1491 : vector<16x1xi1> to vector<16x32xi1>
    %1493 = vector.broadcast %cst_343 : f32 to vector<16x32xf32>
    %1494 = arith.select %1492, %1487, %1493 : vector<16x32xi1>, vector<16x32xf32>
    %cst_344 = arith.constant 0.000000e+00 : f32
    %1495 = vector.shape_cast %1484 : vector<16x1xi1> to vector<16x1xi1>
    %1496 = vector.broadcast %1495 : vector<16x1xi1> to vector<16x32xi1>
    %1497 = vector.broadcast %cst_344 : f32 to vector<16x32xf32>
    %1498 = arith.select %1496, %1490, %1497 : vector<16x32xi1>, vector<16x32xf32>
    %1499 = arith.addf %1418, %1494 : vector<16x32xf32>
    %1500 = arith.addf %1419, %1498 : vector<16x32xf32>
    %c8_i32_345 = arith.constant 8 : i32
    %c9_i32_346 = arith.constant 9 : i32
    %1501 = arith.subi %c9_i32_346, %c8_i32_345 : i32
    %c16_i32_347 = arith.constant 16 : i32
    %1502 = arith.muli %c8_i32_345, %c16_i32_347 : i32
    %1503 = tpu.assume_multiple %1502, 16 : i32
    %c16_i32_348 = arith.constant 16 : i32
    %1504 = arith.muli %1501, %c16_i32_348 : i32
    %1505 = tpu.assume_multiple %1504, 16 : i32
    %1506 = arith.index_cast %1503 : i32 to index
    %c0_349 = arith.constant 0 : index
    %1507 = vector.load %arg12[%1506, %c0_349] : memref<160x192xf32, #tpu.memory_space<vmem>>, vector<16x192xf32>
    %1508 = arith.index_cast %1505 : i32 to index
    %c0_350 = arith.constant 0 : index
    %1509 = vector.load %arg12[%1508, %c0_350] : memref<160x192xf32, #tpu.memory_space<vmem>>, vector<16x192xf32>
    %1510 = tpu.concatenate %1487, %1490 in 1 : vector<16x32xf32>, vector<16x32xf32> -> vector<16x64xf32>
    %cst_351 = arith.constant dense<0.000000e+00> : vector<16x192xf32>
    %1511 = tpu.matmul %1510, %851, %cst_351 {dimension_numbers = #tpu.dot_dimension_numbers<[1], [0], [0], [1], [0, 0, 1, 1], [], []>} : vector<16x64xf32>, vector<64x192xf32>, vector<16x192xf32> -> vector<16x192xf32>
    %1512 = vector.broadcast %852 : vector<1x192xf32> to vector<16x192xf32>
    %1513 = arith.addf %1511, %1512 : vector<16x192xf32>
    %1514 = vector.extract_strided_slice %1507 {offsets = [0, 0], sizes = [16, 96], strides = [1, 1]} : vector<16x192xf32> to vector<16x96xf32>
    %1515 = vector.extract_strided_slice %1513 {offsets = [0, 0], sizes = [16, 96], strides = [1, 1]} : vector<16x192xf32> to vector<16x96xf32>
    %1516 = vector.extract_strided_slice %1514 {offsets = [0, 0], sizes = [16, 64], strides = [1, 1]} : vector<16x96xf32> to vector<16x64xf32>
    %1517 = vector.extract_strided_slice %1515 {offsets = [0, 0], sizes = [16, 64], strides = [1, 1]} : vector<16x96xf32> to vector<16x64xf32>
    %1518 = arith.addf %1516, %1517 : vector<16x64xf32>
    %cst_352 = arith.constant 5.000000e-01 : f32
    %1519 = vector.broadcast %cst_352 : f32 to vector<16x64xf32>
    %1520 = arith.mulf %1519, %1518 : vector<16x64xf32>
    %1521 = math.tanh %1520 : vector<16x64xf32>
    %cst_353 = arith.constant 1.000000e+00 : f32
    %1522 = vector.broadcast %cst_353 : f32 to vector<16x64xf32>
    %1523 = arith.addf %1521, %1522 : vector<16x64xf32>
    %cst_354 = arith.constant 5.000000e-01 : f32
    %1524 = vector.broadcast %cst_354 : f32 to vector<16x64xf32>
    %1525 = arith.mulf %1524, %1523 : vector<16x64xf32>
    %1526 = vector.extract_strided_slice %1525 {offsets = [0, 0], sizes = [16, 32], strides = [1, 1]} : vector<16x64xf32> to vector<16x32xf32>
    %1527 = vector.extract_strided_slice %1525 {offsets = [0, 32], sizes = [16, 32], strides = [1, 1]} : vector<16x64xf32> to vector<16x32xf32>
    %1528 = vector.extract_strided_slice %1514 {offsets = [0, 64], sizes = [16, 32], strides = [1, 1]} : vector<16x96xf32> to vector<16x32xf32>
    %1529 = vector.extract_strided_slice %1515 {offsets = [0, 64], sizes = [16, 32], strides = [1, 1]} : vector<16x96xf32> to vector<16x32xf32>
    %1530 = arith.mulf %1526, %1529 : vector<16x32xf32>
    %1531 = arith.addf %1528, %1530 : vector<16x32xf32>
    %1532 = math.tanh %1531 : vector<16x32xf32>
    %cst_355 = arith.constant 1.000000e+00 : f32
    %1533 = vector.broadcast %cst_355 : f32 to vector<16x32xf32>
    %1534 = arith.subf %1533, %1527 : vector<16x32xf32>
    %1535 = arith.mulf %1534, %1532 : vector<16x32xf32>
    %1536 = arith.mulf %1527, %1487 : vector<16x32xf32>
    %1537 = arith.addf %1535, %1536 : vector<16x32xf32>
    %1538 = vector.extract_strided_slice %1509 {offsets = [0, 96], sizes = [16, 96], strides = [1, 1]} : vector<16x192xf32> to vector<16x96xf32>
    %1539 = vector.extract_strided_slice %1513 {offsets = [0, 96], sizes = [16, 96], strides = [1, 1]} : vector<16x192xf32> to vector<16x96xf32>
    %1540 = vector.extract_strided_slice %1538 {offsets = [0, 0], sizes = [16, 64], strides = [1, 1]} : vector<16x96xf32> to vector<16x64xf32>
    %1541 = vector.extract_strided_slice %1539 {offsets = [0, 0], sizes = [16, 64], strides = [1, 1]} : vector<16x96xf32> to vector<16x64xf32>
    %1542 = arith.addf %1540, %1541 : vector<16x64xf32>
    %cst_356 = arith.constant 5.000000e-01 : f32
    %1543 = vector.broadcast %cst_356 : f32 to vector<16x64xf32>
    %1544 = arith.mulf %1543, %1542 : vector<16x64xf32>
    %1545 = math.tanh %1544 : vector<16x64xf32>
    %cst_357 = arith.constant 1.000000e+00 : f32
    %1546 = vector.broadcast %cst_357 : f32 to vector<16x64xf32>
    %1547 = arith.addf %1545, %1546 : vector<16x64xf32>
    %cst_358 = arith.constant 5.000000e-01 : f32
    %1548 = vector.broadcast %cst_358 : f32 to vector<16x64xf32>
    %1549 = arith.mulf %1548, %1547 : vector<16x64xf32>
    %1550 = vector.extract_strided_slice %1549 {offsets = [0, 0], sizes = [16, 32], strides = [1, 1]} : vector<16x64xf32> to vector<16x32xf32>
    %1551 = vector.extract_strided_slice %1549 {offsets = [0, 32], sizes = [16, 32], strides = [1, 1]} : vector<16x64xf32> to vector<16x32xf32>
    %1552 = vector.extract_strided_slice %1538 {offsets = [0, 64], sizes = [16, 32], strides = [1, 1]} : vector<16x96xf32> to vector<16x32xf32>
    %1553 = vector.extract_strided_slice %1539 {offsets = [0, 64], sizes = [16, 32], strides = [1, 1]} : vector<16x96xf32> to vector<16x32xf32>
    %1554 = arith.mulf %1550, %1553 : vector<16x32xf32>
    %1555 = arith.addf %1552, %1554 : vector<16x32xf32>
    %1556 = math.tanh %1555 : vector<16x32xf32>
    %cst_359 = arith.constant 1.000000e+00 : f32
    %1557 = vector.broadcast %cst_359 : f32 to vector<16x32xf32>
    %1558 = arith.subf %1557, %1551 : vector<16x32xf32>
    %1559 = arith.mulf %1558, %1556 : vector<16x32xf32>
    %1560 = arith.mulf %1551, %1490 : vector<16x32xf32>
    %1561 = arith.addf %1559, %1560 : vector<16x32xf32>
    %1562 = vector.broadcast %c8_i32_345 : i32 to vector<16x1xi32>
    %1563 = arith.cmpi sgt, %0, %1562 : vector<16x1xi32>
    %1564 = vector.broadcast %1501 : i32 to vector<16x1xi32>
    %1565 = arith.cmpi sgt, %0, %1564 : vector<16x1xi32>
    %1566 = vector.shape_cast %1563 : vector<16x1xi1> to vector<16x1xi1>
    %1567 = vector.broadcast %1566 : vector<16x1xi1> to vector<16x32xi1>
    %1568 = arith.select %1567, %1537, %1487 : vector<16x32xi1>, vector<16x32xf32>
    %1569 = vector.shape_cast %1565 : vector<16x1xi1> to vector<16x1xi1>
    %1570 = vector.broadcast %1569 : vector<16x1xi1> to vector<16x32xi1>
    %1571 = arith.select %1570, %1561, %1490 : vector<16x32xi1>, vector<16x32xf32>
    %cst_360 = arith.constant 0.000000e+00 : f32
    %1572 = vector.shape_cast %1563 : vector<16x1xi1> to vector<16x1xi1>
    %1573 = vector.broadcast %1572 : vector<16x1xi1> to vector<16x32xi1>
    %1574 = vector.broadcast %cst_360 : f32 to vector<16x32xf32>
    %1575 = arith.select %1573, %1568, %1574 : vector<16x32xi1>, vector<16x32xf32>
    %cst_361 = arith.constant 0.000000e+00 : f32
    %1576 = vector.shape_cast %1565 : vector<16x1xi1> to vector<16x1xi1>
    %1577 = vector.broadcast %1576 : vector<16x1xi1> to vector<16x32xi1>
    %1578 = vector.broadcast %cst_361 : f32 to vector<16x32xf32>
    %1579 = arith.select %1577, %1571, %1578 : vector<16x32xi1>, vector<16x32xf32>
    %1580 = arith.addf %1499, %1575 : vector<16x32xf32>
    %1581 = arith.addf %1500, %1579 : vector<16x32xf32>
    %c9_i32_362 = arith.constant 9 : i32
    %c9_i32_363 = arith.constant 9 : i32
    %1582 = arith.subi %c9_i32_363, %c9_i32_362 : i32
    %c16_i32_364 = arith.constant 16 : i32
    %1583 = arith.muli %c9_i32_362, %c16_i32_364 : i32
    %1584 = tpu.assume_multiple %1583, 16 : i32
    %c16_i32_365 = arith.constant 16 : i32
    %1585 = arith.muli %1582, %c16_i32_365 : i32
    %1586 = tpu.assume_multiple %1585, 16 : i32
    %1587 = arith.index_cast %1584 : i32 to index
    %c0_366 = arith.constant 0 : index
    %1588 = vector.load %arg12[%1587, %c0_366] : memref<160x192xf32, #tpu.memory_space<vmem>>, vector<16x192xf32>
    %1589 = arith.index_cast %1586 : i32 to index
    %c0_367 = arith.constant 0 : index
    %1590 = vector.load %arg12[%1589, %c0_367] : memref<160x192xf32, #tpu.memory_space<vmem>>, vector<16x192xf32>
    %1591 = tpu.concatenate %1568, %1571 in 1 : vector<16x32xf32>, vector<16x32xf32> -> vector<16x64xf32>
    %cst_368 = arith.constant dense<0.000000e+00> : vector<16x192xf32>
    %1592 = tpu.matmul %1591, %851, %cst_368 {dimension_numbers = #tpu.dot_dimension_numbers<[1], [0], [0], [1], [0, 0, 1, 1], [], []>} : vector<16x64xf32>, vector<64x192xf32>, vector<16x192xf32> -> vector<16x192xf32>
    %1593 = vector.broadcast %852 : vector<1x192xf32> to vector<16x192xf32>
    %1594 = arith.addf %1592, %1593 : vector<16x192xf32>
    %1595 = vector.extract_strided_slice %1588 {offsets = [0, 0], sizes = [16, 96], strides = [1, 1]} : vector<16x192xf32> to vector<16x96xf32>
    %1596 = vector.extract_strided_slice %1594 {offsets = [0, 0], sizes = [16, 96], strides = [1, 1]} : vector<16x192xf32> to vector<16x96xf32>
    %1597 = vector.extract_strided_slice %1595 {offsets = [0, 0], sizes = [16, 64], strides = [1, 1]} : vector<16x96xf32> to vector<16x64xf32>
    %1598 = vector.extract_strided_slice %1596 {offsets = [0, 0], sizes = [16, 64], strides = [1, 1]} : vector<16x96xf32> to vector<16x64xf32>
    %1599 = arith.addf %1597, %1598 : vector<16x64xf32>
    %cst_369 = arith.constant 5.000000e-01 : f32
    %1600 = vector.broadcast %cst_369 : f32 to vector<16x64xf32>
    %1601 = arith.mulf %1600, %1599 : vector<16x64xf32>
    %1602 = math.tanh %1601 : vector<16x64xf32>
    %cst_370 = arith.constant 1.000000e+00 : f32
    %1603 = vector.broadcast %cst_370 : f32 to vector<16x64xf32>
    %1604 = arith.addf %1602, %1603 : vector<16x64xf32>
    %cst_371 = arith.constant 5.000000e-01 : f32
    %1605 = vector.broadcast %cst_371 : f32 to vector<16x64xf32>
    %1606 = arith.mulf %1605, %1604 : vector<16x64xf32>
    %1607 = vector.extract_strided_slice %1606 {offsets = [0, 0], sizes = [16, 32], strides = [1, 1]} : vector<16x64xf32> to vector<16x32xf32>
    %1608 = vector.extract_strided_slice %1606 {offsets = [0, 32], sizes = [16, 32], strides = [1, 1]} : vector<16x64xf32> to vector<16x32xf32>
    %1609 = vector.extract_strided_slice %1595 {offsets = [0, 64], sizes = [16, 32], strides = [1, 1]} : vector<16x96xf32> to vector<16x32xf32>
    %1610 = vector.extract_strided_slice %1596 {offsets = [0, 64], sizes = [16, 32], strides = [1, 1]} : vector<16x96xf32> to vector<16x32xf32>
    %1611 = arith.mulf %1607, %1610 : vector<16x32xf32>
    %1612 = arith.addf %1609, %1611 : vector<16x32xf32>
    %1613 = math.tanh %1612 : vector<16x32xf32>
    %cst_372 = arith.constant 1.000000e+00 : f32
    %1614 = vector.broadcast %cst_372 : f32 to vector<16x32xf32>
    %1615 = arith.subf %1614, %1608 : vector<16x32xf32>
    %1616 = arith.mulf %1615, %1613 : vector<16x32xf32>
    %1617 = arith.mulf %1608, %1568 : vector<16x32xf32>
    %1618 = arith.addf %1616, %1617 : vector<16x32xf32>
    %1619 = vector.extract_strided_slice %1590 {offsets = [0, 96], sizes = [16, 96], strides = [1, 1]} : vector<16x192xf32> to vector<16x96xf32>
    %1620 = vector.extract_strided_slice %1594 {offsets = [0, 96], sizes = [16, 96], strides = [1, 1]} : vector<16x192xf32> to vector<16x96xf32>
    %1621 = vector.extract_strided_slice %1619 {offsets = [0, 0], sizes = [16, 64], strides = [1, 1]} : vector<16x96xf32> to vector<16x64xf32>
    %1622 = vector.extract_strided_slice %1620 {offsets = [0, 0], sizes = [16, 64], strides = [1, 1]} : vector<16x96xf32> to vector<16x64xf32>
    %1623 = arith.addf %1621, %1622 : vector<16x64xf32>
    %cst_373 = arith.constant 5.000000e-01 : f32
    %1624 = vector.broadcast %cst_373 : f32 to vector<16x64xf32>
    %1625 = arith.mulf %1624, %1623 : vector<16x64xf32>
    %1626 = math.tanh %1625 : vector<16x64xf32>
    %cst_374 = arith.constant 1.000000e+00 : f32
    %1627 = vector.broadcast %cst_374 : f32 to vector<16x64xf32>
    %1628 = arith.addf %1626, %1627 : vector<16x64xf32>
    %cst_375 = arith.constant 5.000000e-01 : f32
    %1629 = vector.broadcast %cst_375 : f32 to vector<16x64xf32>
    %1630 = arith.mulf %1629, %1628 : vector<16x64xf32>
    %1631 = vector.extract_strided_slice %1630 {offsets = [0, 0], sizes = [16, 32], strides = [1, 1]} : vector<16x64xf32> to vector<16x32xf32>
    %1632 = vector.extract_strided_slice %1630 {offsets = [0, 32], sizes = [16, 32], strides = [1, 1]} : vector<16x64xf32> to vector<16x32xf32>
    %1633 = vector.extract_strided_slice %1619 {offsets = [0, 64], sizes = [16, 32], strides = [1, 1]} : vector<16x96xf32> to vector<16x32xf32>
    %1634 = vector.extract_strided_slice %1620 {offsets = [0, 64], sizes = [16, 32], strides = [1, 1]} : vector<16x96xf32> to vector<16x32xf32>
    %1635 = arith.mulf %1631, %1634 : vector<16x32xf32>
    %1636 = arith.addf %1633, %1635 : vector<16x32xf32>
    %1637 = math.tanh %1636 : vector<16x32xf32>
    %cst_376 = arith.constant 1.000000e+00 : f32
    %1638 = vector.broadcast %cst_376 : f32 to vector<16x32xf32>
    %1639 = arith.subf %1638, %1632 : vector<16x32xf32>
    %1640 = arith.mulf %1639, %1637 : vector<16x32xf32>
    %1641 = arith.mulf %1632, %1571 : vector<16x32xf32>
    %1642 = arith.addf %1640, %1641 : vector<16x32xf32>
    %1643 = vector.broadcast %c9_i32_362 : i32 to vector<16x1xi32>
    %1644 = arith.cmpi sgt, %0, %1643 : vector<16x1xi32>
    %1645 = vector.broadcast %1582 : i32 to vector<16x1xi32>
    %1646 = arith.cmpi sgt, %0, %1645 : vector<16x1xi32>
    %1647 = vector.shape_cast %1644 : vector<16x1xi1> to vector<16x1xi1>
    %1648 = vector.broadcast %1647 : vector<16x1xi1> to vector<16x32xi1>
    %1649 = arith.select %1648, %1618, %1568 : vector<16x32xi1>, vector<16x32xf32>
    %1650 = vector.shape_cast %1646 : vector<16x1xi1> to vector<16x1xi1>
    %1651 = vector.broadcast %1650 : vector<16x1xi1> to vector<16x32xi1>
    %1652 = arith.select %1651, %1642, %1571 : vector<16x32xi1>, vector<16x32xf32>
    %cst_377 = arith.constant 0.000000e+00 : f32
    %1653 = vector.shape_cast %1644 : vector<16x1xi1> to vector<16x1xi1>
    %1654 = vector.broadcast %1653 : vector<16x1xi1> to vector<16x32xi1>
    %1655 = vector.broadcast %cst_377 : f32 to vector<16x32xf32>
    %1656 = arith.select %1654, %1649, %1655 : vector<16x32xi1>, vector<16x32xf32>
    %cst_378 = arith.constant 0.000000e+00 : f32
    %1657 = vector.shape_cast %1646 : vector<16x1xi1> to vector<16x1xi1>
    %1658 = vector.broadcast %1657 : vector<16x1xi1> to vector<16x32xi1>
    %1659 = vector.broadcast %cst_378 : f32 to vector<16x32xf32>
    %1660 = arith.select %1658, %1652, %1659 : vector<16x32xi1>, vector<16x32xf32>
    %1661 = arith.addf %1580, %1656 : vector<16x32xf32>
    %1662 = arith.addf %1581, %1660 : vector<16x32xf32>
    %c10_i32_379 = arith.constant 10 : i32
    %1663 = arith.sitofp %0 : vector<16x1xi32> to vector<16x1xf32>
    %cst_380 = arith.constant 1.000000e+00 : f32
    %1664 = vector.broadcast %cst_380 : f32 to vector<16x1xf32>
    %1665 = arith.maximumf %1663, %1664 : vector<16x1xf32>
    %1666 = tpu.reciprocal %1665 {approx = true} : vector<16x1xf32> -> vector<16x1xf32>
    %1667 = vector.broadcast %1666 : vector<16x1xf32> to vector<16x32xf32>
    %1668 = arith.mulf %1661, %1667 : vector<16x32xf32>
    %1669 = vector.broadcast %1666 : vector<16x1xf32> to vector<16x32xf32>
    %1670 = arith.mulf %1662, %1669 : vector<16x32xf32>
    %1671 = arith.mulf %1668, %1668 : vector<16x32xf32>
    %cst_381 = arith.constant dense<0.000000e+00> : vector<16xf32>
    %1672 = vector.multi_reduction <add>, %1671, %cst_381 [1] : vector<16x32xf32> to vector<16xf32>
    %1673 = vector.shape_cast %1672 : vector<16xf32> to vector<16x1xf32>
    %1674 = arith.mulf %1670, %1670 : vector<16x32xf32>
    %cst_382 = arith.constant dense<0.000000e+00> : vector<16xf32>
    %1675 = vector.multi_reduction <add>, %1674, %cst_382 [1] : vector<16x32xf32> to vector<16xf32>
    %1676 = vector.shape_cast %1675 : vector<16xf32> to vector<16x1xf32>
    %1677 = arith.addf %1673, %1676 : vector<16x1xf32>
    %cst_383 = arith.constant 1.000000e-24 : f32
    %1678 = vector.broadcast %cst_383 : f32 to vector<16x1xf32>
    %1679 = arith.maximumf %1677, %1678 : vector<16x1xf32>
    %1680 = math.rsqrt %1679 : vector<16x1xf32>
    %1681 = tpu.concatenate %1668, %1670 in 1 : vector<16x32xf32>, vector<16x32xf32> -> vector<16x64xf32>
    %1682 = vector.broadcast %1680 : vector<16x1xf32> to vector<16x64xf32>
    %1683 = arith.mulf %1681, %1682 : vector<16x64xf32>
    %c0_384 = arith.constant 0 : index
    %c0_385 = arith.constant 0 : index
    %1684 = vector.load %arg11[%c0_384, %c0_385] : memref<16x64xf32, #tpu.memory_space<vmem>>, vector<16x64xf32>
    tpu.vector_store %arg11[%c0_384, %c0_385], %1683 {strides = array<i32>} : memref<16x64xf32, #tpu.memory_space<vmem>>, vector<16x64xf32>,
    return
  }
  func.func @transform_0(%arg0: i32) -> (i32, i32) {
    %c0_i32 = arith.constant 0 : i32
    %c0_i32_0 = arith.constant 0 : i32
    return %arg0, %c0_i32 : i32, i32
  }
  func.func @transform_1(%arg0: i32) -> (i32, i32, i32) {
    %c0_i32 = arith.constant 0 : i32
    %c0_i32_0 = arith.constant 0 : i32
    %c0_i32_1 = arith.constant 0 : i32
    return %c0_i32, %arg0, %c0_i32_0 : i32, i32, i32
  }
  func.func @transform_2(%arg0: i32) -> (i32, i32) {
    %c0_i32 = arith.constant 0 : i32
    %c0_i32_0 = arith.constant 0 : i32
    %c0_i32_1 = arith.constant 0 : i32
    return %c0_i32, %c0_i32_0 : i32, i32
  }
  func.func @transform_3(%arg0: i32) -> (i32, i32) {
    %c0_i32 = arith.constant 0 : i32
    %c0_i32_0 = arith.constant 0 : i32
    %c0_i32_1 = arith.constant 0 : i32
    return %c0_i32, %c0_i32_0 : i32, i32
  }
  func.func @transform_4(%arg0: i32) -> (i32, i32) {
    %c0_i32 = arith.constant 0 : i32
    %c0_i32_0 = arith.constant 0 : i32
    %c0_i32_1 = arith.constant 0 : i32
    return %c0_i32, %c0_i32_0 : i32, i32
  }
  func.func @transform_5(%arg0: i32) -> (i32, i32) {
    %c0_i32 = arith.constant 0 : i32
    %c0_i32_0 = arith.constant 0 : i32
    %c0_i32_1 = arith.constant 0 : i32
    return %c0_i32, %c0_i32_0 : i32, i32
  }
  func.func @transform_6(%arg0: i32) -> (i32, i32) {
    %c0_i32 = arith.constant 0 : i32
    %c0_i32_0 = arith.constant 0 : i32
    %c0_i32_1 = arith.constant 0 : i32
    return %c0_i32, %c0_i32_0 : i32, i32
  }
  func.func @transform_7(%arg0: i32) -> (i32, i32) {
    %c0_i32 = arith.constant 0 : i32
    %c0_i32_0 = arith.constant 0 : i32
    %c0_i32_1 = arith.constant 0 : i32
    return %c0_i32, %c0_i32_0 : i32, i32
  }
  func.func @transform_8(%arg0: i32) -> (i32, i32) {
    %c0_i32 = arith.constant 0 : i32
    %c0_i32_0 = arith.constant 0 : i32
    %c0_i32_1 = arith.constant 0 : i32
    return %c0_i32, %c0_i32_0 : i32, i32
  }
  func.func @transform_9(%arg0: i32) -> (i32, i32) {
    %c0_i32 = arith.constant 0 : i32
    %c0_i32_0 = arith.constant 0 : i32
    %c0_i32_1 = arith.constant 0 : i32
    return %c0_i32, %c0_i32_0 : i32, i32
  }
  func.func @transform_10(%arg0: i32) -> (i32, i32) {
    %c0_i32 = arith.constant 0 : i32
    %c0_i32_0 = arith.constant 0 : i32
    return %arg0, %c0_i32 : i32, i32
  }
}

</mosaic_0001>

<llo_original>
// kernel: nickname_encoder_forward.1
$region0: #{nickname_encoder_forward.1}
  #allocation0 [shape = 'u32[]', space=smem, size = 0x4, offset = 0x4, fixed_abs, tag = 'smem constant byte address 0x4 - core index']
  #allocation1 [shape = 'u32[144,128]{1,0:T(1,128)}', space=vmem, size = 0x12000, scoped, tag = 'internal scratch']
  #allocation2 [shape = 'f32[160,192]{1,0:T(8,128)}', space=vmem, size = 0x28000, scoped, tag = 'scratch operand']
  #allocation3 [shape = 'f32[160,32]{1,0:T(8,128)}', space=vmem, size = 0x14000, scoped, tag = 'scratch operand']
  #allocation4 [shape = 'f32[160,32]{1,0:T(8,128)}', space=vmem, size = 0x14000, scoped, tag = 'scratch operand']
  %s0 = inlined_call_operand.vmem [shape: s32[32,1], index: 0, kind: input, shape index: {}]
  %s1 = inlined_call_operand.vmem [shape: f32[10,32,16], index: 1, kind: input, shape index: {}]
  %s2 = inlined_call_operand.vmem [shape: f32[16,192], index: 2, kind: input, shape index: {}]
  %s3 = inlined_call_operand.vmem [shape: f32[64,192], index: 3, kind: input, shape index: {}]
  %s4 = inlined_call_operand.vmem [shape: f32[1,192], index: 4, kind: input, shape index: {}]
  %s5 = inlined_call_operand.vmem [shape: f32[1,192], index: 5, kind: input, shape index: {}]
  %s6 = inlined_call_operand.vmem [shape: f32[64,192], index: 6, kind: input, shape index: {}]
  %s7 = inlined_call_operand.vmem [shape: f32[64,192], index: 7, kind: input, shape index: {}]
  %s8 = inlined_call_operand.vmem [shape: f32[1,192], index: 8, kind: input, shape index: {}]
  %s9 = inlined_call_operand.vmem [shape: f32[1,192], index: 9, kind: input, shape index: {}]
  %s10 = inlined_call_operand.hbm [shape: f32[32,64], index: 10, kind: output, shape index: {}]
  %s11 = sld [smem:[#allocation0]]
  $region111: #{nickname_encoder_forward.1} parent=0
    _
  %s13 = ssub.s32 1, %s11
  %s14 = scalar_select 0, %s13, %s11
  $region1: #{nickname_encoder_forward.1} parent=0
    #allocation5 [shape = 'u8[163840]{0}', space=vmem, size = 0x28000, scoped, tag = 'input window, operand 1']
    #allocation6 [shape = 'u8[16384]{0}', space=vmem, size = 0x4000, scoped, tag = 'output window, operand 0']
    #allocation7 [shape = 's32[2]{0}', space=sflag, size = 0x8, scoped, tag = 'scoped memory for nickname_encoder_forward.1']
    %15 = vsyncpa [#allocation7], 0
    %s16 = scalar_lea.sflag [#allocation7], 1
    %17 = vsyncpa %s16, 0
    loop: start=0, step=1, limit=4
    $region2: #{nickname_encoder_forward.1} parent=1 // loop_pre_header
      _
    $region3: #{nickname_encoder_forward.1} parent=1 // loop_header
      %s19 = sphi 0, %s23
      %p20 = scmp.ge.s32.totalorder %s19, 4
      %s29 = sphi 0, %s31
      %s32 = sphi 0, %s29
      %s33 = sphi 0, %s32
      %s49 = sphi 0, %s33
      %s55 = sphi 0, %s57
      %s58 = sphi 0, %s55
      %s59 = sphi 0, %s58
      %s75 = sphi 0, %s59
      %s79 = sphi 0, %s79
      %s81 = sphi 0, %s79
      %s82 = sphi 0, %s81
      %s96 = sphi 0, %s82
      %s100 = sphi 0, %s100
      %s102 = sphi 0, %s100
      %s103 = sphi 0, %s102
      %s117 = sphi 0, %s103
      %s121 = sphi 0, %s121
      %s123 = sphi 0, %s121
      %s124 = sphi 0, %s123
      %s138 = sphi 0, %s124
      %s142 = sphi 0, %s142
      %s144 = sphi 0, %s142
      %s145 = sphi 0, %s144
      %s159 = sphi 0, %s145
      %s163 = sphi 0, %s163
      %s165 = sphi 0, %s163
      %s166 = sphi 0, %s165
      %s180 = sphi 0, %s166
      %s184 = sphi 0, %s184
      %s186 = sphi 0, %s184
      %s187 = sphi 0, %s186
      %s201 = sphi 0, %s187
      %s205 = sphi 0, %s205
      %s207 = sphi 0, %s205
      %s208 = sphi 0, %s207
      %s222 = sphi 0, %s208
      %s226 = sphi 0, %s226
      %s228 = sphi 0, %s226
      %s229 = sphi 0, %s228
      %s243 = sphi 0, %s229
      %s249 = sphi 0, %s251
      %s252 = sphi 0, %s249
      %s253 = sphi 0, %s252
      %s269 = sphi 0, %s253
    $region4: #{nickname_encoder_forward.1} parent=1 // loop_header_branch
      %22 = sbr.rel (%p20) target = $region8
    $region5: #{nickname_encoder_forward.1} parent=1 // loop_body
      %s24 = ssub.s32 %s19, 1
      %s25 = ssub.s32 %s19, 2
      %s26 = sadd.s32 %s19, 1
      %s27 = ssub.s32 %s19, %s26
      %p28 = scmp.eq.s32.totalorder %s27, 0
      %s30 = sadd.s32 %s29, 1
      %s31 = scalar_select %p28, %s29, %s30
      %p34 = pneg %p28
      %p35 = scmp.eq.s32.totalorder %s19, 1
      %p36 = por %p34, %p35
      %p37 = scmp.ne.s32.totalorder %s29, %s32
      %p38 = scmp.eq.s32.totalorder %s19, 0
      %p39 = por %p37, %p38
      %p40 = scmp.ne.s32.totalorder %s29, %s32
      %p41 = scmp.eq.s32.totalorder %s24, 1
      %p42 = por %p40, %p41
      %p43 = scmp.ne.s32.totalorder %s32, %s33
      %p44 = scmp.eq.s32.totalorder %s24, 0
      %p45 = por %p43, %p44
      %p46 = scmp.ne.s32.totalorder %s32, %s33
      %p47 = scmp.eq.s32.totalorder %s25, 1
      %p48 = por %p46, %p47
      %p50 = scmp.ne.s32.totalorder %s33, %s49
      %p51 = scmp.eq.s32.totalorder %s25, 0
      %p52 = por %p50, %p51
      %s53 = ssub.s32 %s19, %s26
      %p54 = scmp.eq.s32.totalorder %s53, 0
      %s56 = sadd.s32 %s55, 1
      %s57 = scalar_select %p54, %s55, %s56
      %p60 = pneg %p54
      %p61 = scmp.eq.s32.totalorder %s19, 1
      %p62 = por %p60, %p61
      %p63 = scmp.ne.s32.totalorder %s55, %s58
      %p64 = scmp.eq.s32.totalorder %s19, 0
      %p65 = por %p63, %p64
      %p66 = scmp.ne.s32.totalorder %s55, %s58
      %p67 = scmp.eq.s32.totalorder %s24, 1
      %p68 = por %p66, %p67
      %p69 = scmp.ne.s32.totalorder %s58, %s59
      %p70 = scmp.eq.s32.totalorder %s24, 0
      %p71 = por %p69, %p70
      %p72 = scmp.ne.s32.totalorder %s58, %s59
      %p73 = scmp.eq.s32.totalorder %s25, 1
      %p74 = por %p72, %p73
      %p76 = scmp.ne.s32.totalorder %s59, %s75
      %p77 = scmp.eq.s32.totalorder %s25, 0
      %p78 = por %p76, %p77
      %s80 = sadd.s32 %s79, 1
      %p83 = scmp.eq.s32.totalorder %s19, 1
      %p84 = scmp.ne.s32.totalorder %s79, %s81
      %p85 = scmp.eq.s32.totalorder %s19, 0
      %p86 = por %p84, %p85
      %p87 = scmp.ne.s32.totalorder %s79, %s81
      %p88 = scmp.eq.s32.totalorder %s24, 1
      %p89 = por %p87, %p88
      %p90 = scmp.ne.s32.totalorder %s81, %s82
      %p91 = scmp.eq.s32.totalorder %s24, 0
      %p92 = por %p90, %p91
      %p93 = scmp.ne.s32.totalorder %s81, %s82
      %p94 = scmp.eq.s32.totalorder %s25, 1
      %p95 = por %p93, %p94
      %p97 = scmp.ne.s32.totalorder %s82, %s96
      %p98 = scmp.eq.s32.totalorder %s25, 0
      %p99 = por %p97, %p98
      %s101 = sadd.s32 %s100, 1
      %p104 = scmp.eq.s32.totalorder %s19, 1
      %p105 = scmp.ne.s32.totalorder %s100, %s102
      %p106 = scmp.eq.s32.totalorder %s19, 0
      %p107 = por %p105, %p106
      %p108 = scmp.ne.s32.totalorder %s100, %s102
      %p109 = scmp.eq.s32.totalorder %s24, 1
      %p110 = por %p108, %p109
      %p111 = scmp.ne.s32.totalorder %s102, %s103
      %p112 = scmp.eq.s32.totalorder %s24, 0
      %p113 = por %p111, %p112
      %p114 = scmp.ne.s32.totalorder %s102, %s103
      %p115 = scmp.eq.s32.totalorder %s25, 1
      %p116 = por %p114, %p115
      %p118 = scmp.ne.s32.totalorder %s103, %s117
      %p119 = scmp.eq.s32.totalorder %s25, 0
      %p120 = por %p118, %p119
      %s122 = sadd.s32 %s121, 1
      %p125 = scmp.eq.s32.totalorder %s19, 1
      %p126 = scmp.ne.s32.totalorder %s121, %s123
      %p127 = scmp.eq.s32.totalorder %s19, 0
      %p128 = por %p126, %p127
      %p129 = scmp.ne.s32.totalorder %s121, %s123
      %p130 = scmp.eq.s32.totalorder %s24, 1
      %p131 = por %p129, %p130
      %p132 = scmp.ne.s32.totalorder %s123, %s124
      %p133 = scmp.eq.s32.totalorder %s24, 0
      %p134 = por %p132, %p133
      %p135 = scmp.ne.s32.totalorder %s123, %s124
      %p136 = scmp.eq.s32.totalorder %s25, 1
      %p137 = por %p135, %p136
      %p139 = scmp.ne.s32.totalorder %s124, %s138
      %p140 = scmp.eq.s32.totalorder %s25, 0
      %p141 = por %p139, %p140
      %s143 = sadd.s32 %s142, 1
      %p146 = scmp.eq.s32.totalorder %s19, 1
      %p147 = scmp.ne.s32.totalorder %s142, %s144
      %p148 = scmp.eq.s32.totalorder %s19, 0
      %p149 = por %p147, %p148
      %p150 = scmp.ne.s32.totalorder %s142, %s144
      %p151 = scmp.eq.s32.totalorder %s24, 1
      %p152 = por %p150, %p151
      %p153 = scmp.ne.s32.totalorder %s144, %s145
      %p154 = scmp.eq.s32.totalorder %s24, 0
      %p155 = por %p153, %p154
      %p156 = scmp.ne.s32.totalorder %s144, %s145
      %p157 = scmp.eq.s32.totalorder %s25, 1
      %p158 = por %p156, %p157
      %p160 = scmp.ne.s32.totalorder %s145, %s159
      %p161 = scmp.eq.s32.totalorder %s25, 0
      %p162 = por %p160, %p161
      %s164 = sadd.s32 %s163, 1
      %p167 = scmp.eq.s32.totalorder %s19, 1
      %p168 = scmp.ne.s32.totalorder %s163, %s165
      %p169 = scmp.eq.s32.totalorder %s19, 0
      %p170 = por %p168, %p169
      %p171 = scmp.ne.s32.totalorder %s163, %s165
      %p172 = scmp.eq.s32.totalorder %s24, 1
      %p173 = por %p171, %p172
      %p174 = scmp.ne.s32.totalorder %s165, %s166
      %p175 = scmp.eq.s32.totalorder %s24, 0
      %p176 = por %p174, %p175
      %p177 = scmp.ne.s32.totalorder %s165, %s166
      %p178 = scmp.eq.s32.totalorder %s25, 1
      %p179 = por %p177, %p178
      %p181 = scmp.ne.s32.totalorder %s166, %s180
      %p182 = scmp.eq.s32.totalorder %s25, 0
      %p183 = por %p181, %p182
      %s185 = sadd.s32 %s184, 1
      %p188 = scmp.eq.s32.totalorder %s19, 1
      %p189 = scmp.ne.s32.totalorder %s184, %s186
      %p190 = scmp.eq.s32.totalorder %s19, 0
      %p191 = por %p189, %p190
      %p192 = scmp.ne.s32.totalorder %s184, %s186
      %p193 = scmp.eq.s32.totalorder %s24, 1
      %p194 = por %p192, %p193
      %p195 = scmp.ne.s32.totalorder %s186, %s187
      %p196 = scmp.eq.s32.totalorder %s24, 0
      %p197 = por %p195, %p196
      %p198 = scmp.ne.s32.totalorder %s186, %s187
      %p199 = scmp.eq.s32.totalorder %s25, 1
      %p200 = por %p198, %p199
      %p202 = scmp.ne.s32.totalorder %s187, %s201
      %p203 = scmp.eq.s32.totalorder %s25, 0
      %p204 = por %p202, %p203
      %s206 = sadd.s32 %s205, 1
      %p209 = scmp.eq.s32.totalorder %s19, 1
      %p210 = scmp.ne.s32.totalorder %s205, %s207
      %p211 = scmp.eq.s32.totalorder %s19, 0
      %p212 = por %p210, %p211
      %p213 = scmp.ne.s32.totalorder %s205, %s207
      %p214 = scmp.eq.s32.totalorder %s24, 1
      %p215 = por %p213, %p214
      %p216 = scmp.ne.s32.totalorder %s207, %s208
      %p217 = scmp.eq.s32.totalorder %s24, 0
      %p218 = por %p216, %p217
      %p219 = scmp.ne.s32.totalorder %s207, %s208
      %p220 = scmp.eq.s32.totalorder %s25, 1
      %p221 = por %p219, %p220
      %p223 = scmp.ne.s32.totalorder %s208, %s222
      %p224 = scmp.eq.s32.totalorder %s25, 0
      %p225 = por %p223, %p224
      %s227 = sadd.s32 %s226, 1
      %p230 = scmp.eq.s32.totalorder %s19, 1
      %p231 = scmp.ne.s32.totalorder %s226, %s228
      %p232 = scmp.eq.s32.totalorder %s19, 0
      %p233 = por %p231, %p232
      %p234 = scmp.ne.s32.totalorder %s226, %s228
      %p235 = scmp.eq.s32.totalorder %s24, 1
      %p236 = por %p234, %p235
      %p237 = scmp.ne.s32.totalorder %s228, %s229
      %p238 = scmp.eq.s32.totalorder %s24, 0
      %p239 = por %p237, %p238
      %p240 = scmp.ne.s32.totalorder %s228, %s229
      %p241 = scmp.eq.s32.totalorder %s25, 1
      %p242 = por %p240, %p241
      %p244 = scmp.ne.s32.totalorder %s229, %s243
      %p245 = scmp.eq.s32.totalorder %s25, 0
      %p246 = por %p244, %p245
      %s247 = ssub.s32 %s19, %s26
      %p248 = scmp.eq.s32.totalorder %s247, 0
      %s250 = sadd.s32 %s249, 1
      %s251 = scalar_select %p248, %s249, %s250
      %p254 = pneg %p248
      %p255 = scmp.eq.s32.totalorder %s19, 1
      %p256 = por %p254, %p255
      %p257 = scmp.ne.s32.totalorder %s249, %s252
      %p258 = scmp.eq.s32.totalorder %s19, 0
      %p259 = por %p257, %p258
      %p260 = scmp.ne.s32.totalorder %s249, %s252
      %p261 = scmp.eq.s32.totalorder %s24, 1
      %p262 = por %p260, %p261
      %p263 = scmp.ne.s32.totalorder %s252, %s253
      %p264 = scmp.eq.s32.totalorder %s24, 0
      %p265 = por %p263, %p264
      %p266 = scmp.ne.s32.totalorder %s252, %s253
      %p267 = scmp.eq.s32.totalorder %s25, 1
      %p268 = por %p266, %p267
      %p270 = scmp.ne.s32.totalorder %s253, %s269
      %p271 = scmp.eq.s32.totalorder %s25, 0
      %p272 = por %p270, %p271
      %p273 = scmp.le.s32.totalorder 1, %s19
      %p274 = scmp.lt.s32.totalorder %s19, 3
      %p275 = pnand %p273, %p274
      %p276 = pneg %p275
      // Predicated region
      $region9: #{nickname_encoder_forward.1} parent=5 // pred_check
        _
      $region10: #{nickname_encoder_forward.1} parent=5 // pred_check_branch
        %278 = sbr.rel (%p275) target = $region12
      $region11: #{nickname_encoder_forward.1} parent=5 // pred_region
        %s279 = ssub.s32 %s19, 1
        // Predicated region
        $region13: #{nickname_encoder_forward.1} parent=11 // pred_check
          %p280 = pneg %p92
        $region14: #{nickname_encoder_forward.1} parent=11 // pred_check_branch
          %282 = sbr.rel (%p280) target = $region16
        $region15: #{nickname_encoder_forward.1} parent=11 // pred_region
          _
        $region16: #{nickname_encoder_forward.1} parent=11 // pred_fallthru
          _
        // Predicated region
        $region17: #{nickname_encoder_forward.1} parent=11 // pred_check
          %p283 = pneg %p113
        $region18: #{nickname_encoder_forward.1} parent=11 // pred_check_branch
          %285 = sbr.rel (%p283) target = $region20
        $region19: #{nickname_encoder_forward.1} parent=11 // pred_region
          _
        $region20: #{nickname_encoder_forward.1} parent=11 // pred_fallthru
          _
        // Predicated region
        $region21: #{nickname_encoder_forward.1} parent=11 // pred_check
          %p286 = pneg %p134
        $region22: #{nickname_encoder_forward.1} parent=11 // pred_check_branch
          %288 = sbr.rel (%p286) target = $region24
        $region23: #{nickname_encoder_forward.1} parent=11 // pred_region
          _
        $region24: #{nickname_encoder_forward.1} parent=11 // pred_fallthru
          _
        // Predicated region
        $region25: #{nickname_encoder_forward.1} parent=11 // pred_check
          %p289 = pneg %p155
        $region26: #{nickname_encoder_forward.1} parent=11 // pred_check_branch
          %291 = sbr.rel (%p289) target = $region28
        $region27: #{nickname_encoder_forward.1} parent=11 // pred_region
          _
        $region28: #{nickname_encoder_forward.1} parent=11 // pred_fallthru
          _
        // Predicated region
        $region29: #{nickname_encoder_forward.1} parent=11 // pred_check
          %p292 = pneg %p176
        $region30: #{nickname_encoder_forward.1} parent=11 // pred_check_branch
          %294 = sbr.rel (%p292) target = $region32
        $region31: #{nickname_encoder_forward.1} parent=11 // pred_region
          _
        $region32: #{nickname_encoder_forward.1} parent=11 // pred_fallthru
          _
        // Predicated region
        $region33: #{nickname_encoder_forward.1} parent=11 // pred_check
          %p295 = pneg %p197
        $region34: #{nickname_encoder_forward.1} parent=11 // pred_check_branch
          %297 = sbr.rel (%p295) target = $region36
        $region35: #{nickname_encoder_forward.1} parent=11 // pred_region
          _
        $region36: #{nickname_encoder_forward.1} parent=11 // pred_fallthru
          _
        // Predicated region
        $region37: #{nickname_encoder_forward.1} parent=11 // pred_check
          %p298 = pneg %p218
        $region38: #{nickname_encoder_forward.1} parent=11 // pred_check_branch
          %300 = sbr.rel (%p298) target = $region40
        $region39: #{nickname_encoder_forward.1} parent=11 // pred_region
          _
        $region40: #{nickname_encoder_forward.1} parent=11 // pred_fallthru
          _
        // Predicated region
        $region41: #{nickname_encoder_forward.1} parent=11 // pred_check
          %p301 = pneg %p239
        $region42: #{nickname_encoder_forward.1} parent=11 // pred_check_branch
          %303 = sbr.rel (%p301) target = $region44
        $region43: #{nickname_encoder_forward.1} parent=11 // pred_region
          _
        $region44: #{nickname_encoder_forward.1} parent=11 // pred_fallthru
          _
      $region12: #{nickname_encoder_forward.1} parent=5 // pred_fallthru
        _
      %p304 = scmp.lt.s32.totalorder %s19, 2
      // Predicated region
      $region45: #{nickname_encoder_forward.1} parent=5 // pred_check
        %p305 = pneg %p304
      $region46: #{nickname_encoder_forward.1} parent=5 // pred_check_branch
        %307 = sbr.rel (%p305) target = $region48
      $region47: #{nickname_encoder_forward.1} parent=5 // pred_region
        // Predicated region
        $region49: #{nickname_encoder_forward.1} parent=47 // pred_check
          %p308 = pneg %p39
        $region50: #{nickname_encoder_forward.1} parent=47 // pred_check_branch
          %310 = sbr.rel (%p308) target = $region52
        $region51: #{nickname_encoder_forward.1} parent=47 // pred_region
          %s311 = smul.u32 2, %s19
          %p312 = scmp.lt.s32.totalorder %s311, 3
          %s313 = scalar_select %p312, %s311, 3
          %s314 = smul.addr %s313, 8
          %s315 = scalar_lea.vmem %s0, %s314
          %s316 = smul.u32 2, %s19
        $region52: #{nickname_encoder_forward.1} parent=47 // pred_fallthru
          _
        // Predicated region
        $region53: #{nickname_encoder_forward.1} parent=47 // pred_check
          %p317 = pneg %p65
        $region54: #{nickname_encoder_forward.1} parent=47 // pred_check_branch
          %319 = sbr.rel (%p317) target = $region56
        $region55: #{nickname_encoder_forward.1} parent=47 // pred_region
          %s320 = sand.u32 %s55, 1
          %s321 = sand.u32 %s55, 1
          %s322 = smul.addr %s321, 160
          %s323 = scalar_lea.vmem [#allocation5], %s322
          %s324 = smul.u32 2, %s19
          %s325 = smul.addr %s324, 8
          %s326 = scalar_lea.vmem %s1, %s325
          // Predicated region
          $region57: #{nickname_encoder_forward.1} parent=55 // pred_check
            _
          $region58: #{nickname_encoder_forward.1} parent=55 // pred_check_branch
            %328 = sbr.rel (0) target = $region60
          $region59: #{nickname_encoder_forward.1} parent=55 // pred_region
            // Predicated region
            $region61: #{nickname_encoder_forward.1} parent=59 // pred_check
              _
            $region62: #{nickname_encoder_forward.1} parent=59 // pred_check_branch
              %330 = sbr.rel (0) target = $region64
            $region63: #{nickname_encoder_forward.1} parent=59 // pred_region
              // Predicated region
              $region76: #{nickname_encoder_forward.1} parent=63 // pred_check
                _
              $region77: #{nickname_encoder_forward.1} parent=63 // pred_check_branch
                %384 = sbr.rel (0) target = $region79
              $region78: #{nickname_encoder_forward.1} parent=63 // pred_region
                loop: start=0, step=1, limit=1
                $region80: #{nickname_encoder_forward.1} parent=78 // loop_pre_header
                  _
                $region81: #{nickname_encoder_forward.1} parent=78 // loop_header
                  %s386 = sphi 0, %s390
                  %p387 = scmp.ge.s32.totalorder %s386, 1
                  %s391 = sphi %s326, %s326
                  %s392 = sphi %s323, %s323
                $region82: #{nickname_encoder_forward.1} parent=78 // loop_header_branch
                  %389 = sbr.rel (%p387) target = $region86
                $region83: #{nickname_encoder_forward.1} parent=78 // loop_body
                  %v393 = vld [vmem:[%s391] sm:$0xff]
                  %394 = vst [vmem:[%s392] sm:$0xff] %v393
                  %v395 = vld [vmem:[%s391 + $0x8] sm:$0xff]
                  %396 = vst [vmem:[%s392 + $0x8] sm:$0xff] %v395
                  %v397 = vld [vmem:[%s391 + $0x20] sm:$0xff]
                  %398 = vst [vmem:[%s392 + $0x10] sm:$0xff] %v397
                  %v399 = vld [vmem:[%s391 + $0x28] sm:$0xff]
                  %400 = vst [vmem:[%s392 + $0x18] sm:$0xff] %v399
                  %v401 = vld [vmem:[%s391 + $0x40] sm:$0xff]
                  %402 = vst [vmem:[%s392 + $0x20] sm:$0xff] %v401
                  %v403 = vld [vmem:[%s391 + $0x48] sm:$0xff]
                  %404 = vst [vmem:[%s392 + $0x28] sm:$0xff] %v403
                  %v405 = vld [vmem:[%s391 + $0x60] sm:$0xff]
                  %406 = vst [vmem:[%s392 + $0x30] sm:$0xff] %v405
                  %v407 = vld [vmem:[%s391 + $0x68] sm:$0xff]
                  %408 = vst [vmem:[%s392 + $0x38] sm:$0xff] %v407
                  %v409 = vld [vmem:[%s391 + $0x80] sm:$0xff]
                  %410 = vst [vmem:[%s392 + $0x40] sm:$0xff] %v409
                  %v411 = vld [vmem:[%s391 + $0x88] sm:$0xff]
                  %412 = vst [vmem:[%s392 + $0x48] sm:$0xff] %v411
                  %v413 = vld [vmem:[%s391 + $0xa0] sm:$0xff]
                  %414 = vst [vmem:[%s392 + $0x50] sm:$0xff] %v413
                  %v415 = vld [vmem:[%s391 + $0xa8] sm:$0xff]
                  %416 = vst [vmem:[%s392 + $0x58] sm:$0xff] %v415
                  %v417 = vld [vmem:[%s391 + $0xc0] sm:$0xff]
                  %418 = vst [vmem:[%s392 + $0x60] sm:$0xff] %v417
                  %v419 = vld [vmem:[%s391 + $0xc8] sm:$0xff]
                  %420 = vst [vmem:[%s392 + $0x68] sm:$0xff] %v419
                  %v421 = vld [vmem:[%s391 + $0xe0] sm:$0xff]
                  %422 = vst [vmem:[%s392 + $0x70] sm:$0xff] %v421
                  %v423 = vld [vmem:[%s391 + $0xe8] sm:$0xff]
                  %424 = vst [vmem:[%s392 + $0x78] sm:$0xff] %v423
                  %v425 = vld [vmem:[%s391 + $0x100] sm:$0xff]
                  %426 = vst [vmem:[%s392 + $0x80] sm:$0xff] %v425
                  %v427 = vld [vmem:[%s391 + $0x108] sm:$0xff]
                  %428 = vst [vmem:[%s392 + $0x88] sm:$0xff] %v427
                  %v429 = vld [vmem:[%s391 + $0x120] sm:$0xff]
                  %430 = vst [vmem:[%s392 + $0x90] sm:$0xff] %v429
                  %v431 = vld [vmem:[%s391 + $0x128] sm:$0xff]
                  %432 = vst [vmem:[%s392 + $0x98] sm:$0xff] %v431
                $region84: #{nickname_encoder_forward.1} parent=78 // loop_footer
                  %s390 = sadd.s32 1, %s386
                $region85: #{nickname_encoder_forward.1} parent=78 // loop_footer_branch
                  %385 = sbr.rel target = $region81
                $region86: #{nickname_encoder_forward.1} parent=78 // loop_exit
                  _
              $region79: #{nickname_encoder_forward.1} parent=63 // pred_fallthru
                _
              // Predicated region
              $region87: #{nickname_encoder_forward.1} parent=63 // pred_check
                _
              $region88: #{nickname_encoder_forward.1} parent=63 // pred_check_branch
                %434 = sbr.rel target = $region90
              $region89: #{nickname_encoder_forward.1} parent=63 // pred_region
                _
              $region90: #{nickname_encoder_forward.1} parent=63 // pred_fallthru
                _
            $region64: #{nickname_encoder_forward.1} parent=59 // pred_fallthru
              _
            // Predicated region
            $region65: #{nickname_encoder_forward.1} parent=59 // pred_check
              _
            $region66: #{nickname_encoder_forward.1} parent=59 // pred_check_branch
              %332 = sbr.rel target = $region68
            $region67: #{nickname_encoder_forward.1} parent=59 // pred_region
              %s334 = ssub.s32 256, 1
              loop: start=0, step=1, limit=1
              $region69: #{nickname_encoder_forward.1} parent=67 // loop_pre_header
                _
              $region70: #{nickname_encoder_forward.1} parent=67 // loop_header
                %s336 = sphi 0, %s340
                %p337 = scmp.ge.s32.totalorder %s336, 1
                %s341 = sphi %s326, %s326
                %s342 = sphi %s323, %s323
              $region71: #{nickname_encoder_forward.1} parent=67 // loop_header_branch
                %339 = sbr.rel (%p337) target = $region75
              $region72: #{nickname_encoder_forward.1} parent=67 // loop_body
                %v343 = vld [vmem:[%s341] sm:%s334]
                %344 = vst [vmem:[%s342] sm:%s334] %v343
                %v345 = vld [vmem:[%s341 + $0x8] sm:%s334]
                %346 = vst [vmem:[%s342 + $0x8] sm:%s334] %v345
                %v347 = vld [vmem:[%s341 + $0x20] sm:%s334]
                %348 = vst [vmem:[%s342 + $0x10] sm:%s334] %v347
                %v349 = vld [vmem:[%s341 + $0x28] sm:%s334]
                %350 = vst [vmem:[%s342 + $0x18] sm:%s334] %v349
                %v351 = vld [vmem:[%s341 + $0x40] sm:%s334]
                %352 = vst [vmem:[%s342 + $0x20] sm:%s334] %v351
                %v353 = vld [vmem:[%s341 + $0x48] sm:%s334]
                %354 = vst [vmem:[%s342 + $0x28] sm:%s334] %v353
                %v355 = vld [vmem:[%s341 + $0x60] sm:%s334]
                %356 = vst [vmem:[%s342 + $0x30] sm:%s334] %v355
                %v357 = vld [vmem:[%s341 + $0x68] sm:%s334]
                %358 = vst [vmem:[%s342 + $0x38] sm:%s334] %v357
                %v359 = vld [vmem:[%s341 + $0x80] sm:%s334]
                %360 = vst [vmem:[%s342 + $0x40] sm:%s334] %v359
                %v361 = vld [vmem:[%s341 + $0x88] sm:%s334]
                %362 = vst [vmem:[%s342 + $0x48] sm:%s334] %v361
                %v363 = vld [vmem:[%s341 + $0xa0] sm:%s334]
                %364 = vst [vmem:[%s342 + $0x50] sm:%s334] %v363
                %v365 = vld [vmem:[%s341 + $0xa8] sm:%s334]
                %366 = vst [vmem:[%s342 + $0x58] sm:%s334] %v365
                %v367 = vld [vmem:[%s341 + $0xc0] sm:%s334]
                %368 = vst [vmem:[%s342 + $0x60] sm:%s334] %v367
                %v369 = vld [vmem:[%s341 + $0xc8] sm:%s334]
                %370 = vst [vmem:[%s342 + $0x68] sm:%s334] %v369
                %v371 = vld [vmem:[%s341 + $0xe0] sm:%s334]
                %372 = vst [vmem:[%s342 + $0x70] sm:%s334] %v371
                %v373 = vld [vmem:[%s341 + $0xe8] sm:%s334]
                %374 = vst [vmem:[%s342 + $0x78] sm:%s334] %v373
                %v375 = vld [vmem:[%s341 + $0x100] sm:%s334]
                %376 = vst [vmem:[%s342 + $0x80] sm:%s334] %v375
                %v377 = vld [vmem:[%s341 + $0x108] sm:%s334]
                %378 = vst [vmem:[%s342 + $0x88] sm:%s334] %v377
                %v379 = vld [vmem:[%s341 + $0x120] sm:%s334]
                %380 = vst [vmem:[%s342 + $0x90] sm:%s334] %v379
                %v381 = vld [vmem:[%s341 + $0x128] sm:%s334]
                %382 = vst [vmem:[%s342 + $0x98] sm:%s334] %v381
              $region73: #{nickname_encoder_forward.1} parent=67 // loop_footer
                %s340 = sadd.s32 1, %s336
              $region74: #{nickname_encoder_forward.1} parent=67 // loop_footer_branch
                %335 = sbr.rel target = $region70
              $region75: #{nickname_encoder_forward.1} parent=67 // loop_exit
                _
            $region68: #{nickname_encoder_forward.1} parent=59 // pred_fallthru
              _
          $region60: #{nickname_encoder_forward.1} parent=55 // pred_fallthru
            _
          %435 = vnop
        $region56: #{nickname_encoder_forward.1} parent=47 // pred_fallthru
          _
      $region48: #{nickname_encoder_forward.1} parent=5 // pred_fallthru
        _
      %p436 = scmp.le.s32.totalorder 1, %s19
      %p437 = scmp.lt.s32.totalorder %s19, 3
      %p438 = pnand %p436, %p437
      %p439 = pneg %p438
      // Predicated region
      $region91: #{nickname_encoder_forward.1} parent=5 // pred_check
        _
      $region92: #{nickname_encoder_forward.1} parent=5 // pred_check_branch
        %441 = sbr.rel (%p438) target = $region94
      $region93: #{nickname_encoder_forward.1} parent=5 // pred_region
        %s442 = ssub.s32 %s19, 1
        %s443 = sand.u32 %s58, 1
        %s444 = sand.u32 %s58, 1
        %s445 = smul.addr %s444, 160
        %s446 = scalar_lea.vmem [#allocation5], %s445
        // Predicated region
        $region95: #{nickname_encoder_forward.1} parent=93 // pred_check
          %p447 = pneg %p71
        $region96: #{nickname_encoder_forward.1} parent=93 // pred_check_branch
          %449 = sbr.rel (%p447) target = $region98
        $region97: #{nickname_encoder_forward.1} parent=93 // pred_region
          _
        $region98: #{nickname_encoder_forward.1} parent=93 // pred_fallthru
          _
        %s450 = smul.u32 2, %s24
        %p451 = scmp.lt.s32.totalorder %s450, 3
        %s452 = scalar_select %p451, %s450, 3
        %s453 = smul.addr %s452, 8
        %s454 = scalar_lea.vmem %s0, %s453
        %p455 = pneg %p45
        %p456 = pneg %p42
        %s457 = sand.u32 %s58, 1
        %s458 = sand.u32 %s58, 1
        %s459 = smul.addr %s458, 160
        %s460 = scalar_lea.vmem [#allocation5], %s459
        %p461 = pneg %p71
        %p462 = pneg %p68
        %p463 = pneg %p92
        %p464 = pneg %p89
        %p465 = pneg %p113
        %p466 = pneg %p110
        %p467 = pneg %p134
        %p468 = pneg %p131
        %p469 = pneg %p155
        %p470 = pneg %p152
        %p471 = pneg %p176
        %p472 = pneg %p173
        %p473 = pneg %p197
        %p474 = pneg %p194
        %p475 = pneg %p218
        %p476 = pneg %p215
        %p477 = pneg %p239
        %p478 = pneg %p236
        %p479 = pneg %p265
        %p480 = pneg %p262
        %s481 = sand.u32 %s252, 1
        %s482 = scalar_lea.sflag [#allocation7], %s481
        %s483 = sand.u32 %s252, 1
        %s484 = smul.addr %s483, 16
        %s485 = scalar_lea.vmem [#allocation6], %s484
        %s486 = smul.u32 2, %s24
        %p487 = scmp.lt.s32.totalorder %s486, 3
        %s488 = scalar_select %p487, %s486, 3
        %s489 = smul.addr %s488, 8
        %s490 = scalar_lea.vmem %s0, %s489
        %s491 = smul.u32 2, %s24
        %s492 = smul.u32 2, %s24
        %s493 = smul.u32 2, %s24
        %v494 = vld [vmem:[%s490] sm:$0xff]
        %v495 = vld [vmem:[%s490 + $0x8] sm:$0xff]
        %v496 = vld [vmem:[%s446] sm:$0xff]
        %v497 = vld [vmem:[%s446 + $0x8] sm:$0xff]
        %v498 = vld [vmem:[%s446 + $0x10] sm:$0xff]
        %v499 = vld [vmem:[%s446 + $0x18] sm:$0xff]
        %v500 = vld [vmem:[%s446 + $0x20] sm:$0xff]
        %v501 = vld [vmem:[%s446 + $0x28] sm:$0xff]
        %v502 = vld [vmem:[%s446 + $0x30] sm:$0xff]
        %v503 = vld [vmem:[%s446 + $0x38] sm:$0xff]
        %v504 = vld [vmem:[%s446 + $0x40] sm:$0xff]
        %v505 = vld [vmem:[%s446 + $0x48] sm:$0xff]
        %v506 = vld [vmem:[%s446 + $0x50] sm:$0xff]
        %v507 = vld [vmem:[%s446 + $0x58] sm:$0xff]
        %v508 = vld [vmem:[%s446 + $0x60] sm:$0xff]
        %v509 = vld [vmem:[%s446 + $0x68] sm:$0xff]
        %v510 = vld [vmem:[%s446 + $0x70] sm:$0xff]
        %v511 = vld [vmem:[%s446 + $0x78] sm:$0xff]
        %v512 = vld [vmem:[%s446 + $0x80] sm:$0xff]
        %v513 = vld [vmem:[%s446 + $0x88] sm:$0xff]
        %v514 = vld [vmem:[%s446 + $0x90] sm:$0xff]
        %v515 = vld [vmem:[%s446 + $0x98] sm:$0xff]
        %v516 = vld [vmem:[%s2] sm:$0xff]
        %v517 = vld [vmem:[%s2 + $0x8] sm:$0xff]
        %v518 = vld [vmem:[%s2 + $0x10] sm:$0xff]
        %v519 = vld [vmem:[%s2 + $0x18] sm:$0xff]
        %v520 = vld [vmem:[%s4] sm:$0x3]
        %v522 = vlaneseq
        %v523 = vshrl.u32 %v522, 7
        %v524 = vsub.s32 0, %v523
        %v525 = vrot.slane %v520, %v524
        %v526 = vlaneseq
        %v527 = vshrl.u32 %v526, 7
        %v528 = vsub.s32 1, %v527
        %v529 = vrot.slane %v520, %v528
        %vm532 = vcmask 130048
        %v534 = vsel %vm532, %v496, 0
        %v537 = vsel %vm532, %v497, 0
        %v540 = vsel %vm532, %v498, 0
        %v543 = vsel %vm532, %v499, 0
        %v546 = vsel %vm532, %v500, 0
        %v549 = vsel %vm532, %v501, 0
        %v552 = vsel %vm532, %v502, 0
        %v555 = vsel %vm532, %v503, 0
        %v558 = vsel %vm532, %v504, 0
        %v561 = vsel %vm532, %v505, 0
        %v564 = vsel %vm532, %v506, 0
        %v567 = vsel %vm532, %v507, 0
        %v570 = vsel %vm532, %v508, 0
        %v573 = vsel %vm532, %v509, 0
        %v576 = vsel %vm532, %v510, 0
        %v579 = vsel %vm532, %v511, 0
        %v582 = vsel %vm532, %v512, 0
        %v585 = vsel %vm532, %v513, 0
        %v588 = vsel %vm532, %v514, 0
        %v591 = vsel %vm532, %v515, 0
        %593 = vmatprep.subr.mxu0 0.0
        %594 = vmatpush1.msra.mxu0 0.0
        %595 = vmatprep.subr.mxu0 0.0
        %596 = vmatpush1.msra.mxu0 0.0
        %597 = vmatprep.subr.mxu0 0.0
        %598 = vmatpush1.msra.mxu0 0.0
        %599 = vmatprep.subr.mxu0 0.0
        %600 = vmatpush1.msra.mxu0 0.0
        %601 = vmatprep.subr.mxu0 0.0
        %602 = vmatpush1.msra.mxu0 0.0
        %603 = vmatprep.subr.mxu0 0.0
        %604 = vmatpush1.msra.mxu0 0.0
        %605 = vmatprep.subr.mxu0 0.0
        %606 = vmatpush1.msra.mxu0 0.0
        %607 = vmatprep.subr.mxu0 0.0
        %608 = vmatpush1.msra.mxu0 0.0
        %609 = vmatprep.subr.mxu0 0.0
        %610 = vmatpush1.msra.mxu0 0.0
        %611 = vmatprep.subr.mxu0 0.0
        %612 = vmatpush1.msra.mxu0 0.0
        %613 = vmatprep.subr.mxu0 0.0
        %614 = vmatpush1.msra.mxu0 0.0
        %615 = vmatprep.subr.mxu0 0.0
        %616 = vmatpush1.msra.mxu0 0.0
        %617 = vmatprep.subr.mxu0 0.0
        %618 = vmatpush1.msra.mxu0 0.0
        %619 = vmatprep.subr.mxu0 0.0
        %620 = vmatpush1.msra.mxu0 0.0
        %621 = vmatprep.subr.mxu0 %v519
        %622 = vmatpush1.msra.mxu0 %v518
        %623 = vmatprep.subr.mxu0 %v517
        %624 = vmatpush1.msra.mxu0 %v516
        %625 = vmatprep.subr.mxu0 0.0
        %626 = vmatpush2.msra.mxu0 0.0
        %627 = vmatprep.subr.mxu0 0.0
        %628 = vmatpush2.msra.mxu0 0.0
        %629 = vmatprep.subr.mxu0 0.0
        %630 = vmatpush2.msra.mxu0 0.0
        %631 = vmatprep.subr.mxu0 0.0
        %632 = vmatpush2.msra.mxu0 0.0
        %633 = vmatprep.subr.mxu0 0.0
        %634 = vmatpush2.msra.mxu0 0.0
        %635 = vmatprep.subr.mxu0 0.0
        %636 = vmatpush2.msra.mxu0 0.0
        %637 = vmatprep.subr.mxu0 0.0
        %638 = vmatpush2.msra.mxu0 0.0
        %639 = vmatprep.subr.mxu0 0.0
        %640 = vmatpush2.msra.mxu0 0.0
        %641 = vmatprep.subr.mxu0 0.0
        %642 = vmatpush2.msra.mxu0 0.0
        %643 = vmatprep.subr.mxu0 0.0
        %644 = vmatpush2.msra.mxu0 0.0
        %645 = vmatprep.subr.mxu0 0.0
        %646 = vmatpush2.msra.mxu0 0.0
        %647 = vmatprep.subr.mxu0 0.0
        %648 = vmatpush2.msra.mxu0 0.0
        %649 = vmatprep.subr.mxu0 0.0
        %650 = vmatpush2.msra.mxu0 0.0
        %651 = vmatprep.subr.mxu0 0.0
        %652 = vmatpush2.msra.mxu0 0.0
        %653 = vmatprep.subr.mxu0 0.0
        %654 = vmatpush2.msra.mxu0 0.0
        %655 = vmatprep.subr.mxu0 0.0
        %656 = vmatpush2.msra.mxu0 0.0
        %657 = vmatprep.mubr.f32.mxu0 0.0
        %658 = vmatmul.mubr.f32.gmra.mxu0 %v534
        %v659 = vpop.f32.mrf.mxu0
        %v660 = vadd.f32 %v525, %v659
        %v661 = vpop.f32.mrf.mxu0
        %v662 = vadd.f32 %v529, %v661
        %663 = vmatprep.mubr.f32.mxu0 0.0
        %664 = vmatmul.mubr.f32.gmra.mxu0 %v537
        %v665 = vpop.f32.mrf.mxu0
        %v666 = vadd.f32 %v525, %v665
        %v667 = vpop.f32.mrf.mxu0
        %v668 = vadd.f32 %v529, %v667
        %669 = vmatprep.mubr.f32.mxu0 0.0
        %670 = vmatmul.mubr.f32.gmra.mxu0 %v540
        %v671 = vpop.f32.mrf.mxu0
        %v672 = vadd.f32 %v525, %v671
        %v673 = vpop.f32.mrf.mxu0
        %v674 = vadd.f32 %v529, %v673
        %675 = vmatprep.mubr.f32.mxu0 0.0
        %676 = vmatmul.mubr.f32.gmra.mxu0 %v543
        %v677 = vpop.f32.mrf.mxu0
        %v678 = vadd.f32 %v525, %v677
        %v679 = vpop.f32.mrf.mxu0
        %v680 = vadd.f32 %v529, %v679
        %681 = vmatprep.mubr.f32.mxu0 0.0
        %682 = vmatmul.mubr.f32.gmra.mxu0 %v546
        %v683 = vpop.f32.mrf.mxu0
        %v684 = vadd.f32 %v525, %v683
        %v685 = vpop.f32.mrf.mxu0
        %v686 = vadd.f32 %v529, %v685
        %687 = vmatprep.mubr.f32.mxu0 0.0
        %688 = vmatmul.mubr.f32.gmra.mxu0 %v549
        %v689 = vpop.f32.mrf.mxu0
        %v690 = vadd.f32 %v525, %v689
        %v691 = vpop.f32.mrf.mxu0
        %v692 = vadd.f32 %v529, %v691
        %693 = vmatprep.mubr.f32.mxu0 0.0
        %694 = vmatmul.mubr.f32.gmra.mxu0 %v552
        %v695 = vpop.f32.mrf.mxu0
        %v696 = vadd.f32 %v525, %v695
        %v697 = vpop.f32.mrf.mxu0
        %v698 = vadd.f32 %v529, %v697
        %699 = vmatprep.mubr.f32.mxu0 0.0
        %700 = vmatmul.mubr.f32.gmra.mxu0 %v555
        %v701 = vpop.f32.mrf.mxu0
        %v702 = vadd.f32 %v525, %v701
        %v703 = vpop.f32.mrf.mxu0
        %v704 = vadd.f32 %v529, %v703
        %705 = vmatprep.mubr.f32.mxu0 0.0
        %706 = vmatmul.mubr.f32.gmra.mxu0 %v558
        %v707 = vpop.f32.mrf.mxu0
        %v708 = vadd.f32 %v525, %v707
        %v709 = vpop.f32.mrf.mxu0
        %v710 = vadd.f32 %v529, %v709
        %711 = vmatprep.mubr.f32.mxu0 0.0
        %712 = vmatmul.mubr.f32.gmra.mxu0 %v561
        %v713 = vpop.f32.mrf.mxu0
        %v714 = vadd.f32 %v525, %v713
        %v715 = vpop.f32.mrf.mxu0
        %v716 = vadd.f32 %v529, %v715
        %717 = vmatprep.mubr.f32.mxu0 0.0
        %718 = vmatmul.mubr.f32.gmra.mxu0 %v564
        %v719 = vpop.f32.mrf.mxu0
        %v720 = vadd.f32 %v525, %v719
        %v721 = vpop.f32.mrf.mxu0
        %v722 = vadd.f32 %v529, %v721
        %723 = vmatprep.mubr.f32.mxu0 0.0
        %724 = vmatmul.mubr.f32.gmra.mxu0 %v567
        %v725 = vpop.f32.mrf.mxu0
        %v726 = vadd.f32 %v525, %v725
        %v727 = vpop.f32.mrf.mxu0
        %v728 = vadd.f32 %v529, %v727
        %729 = vmatprep.mubr.f32.mxu0 0.0
        %730 = vmatmul.mubr.f32.gmra.mxu0 %v570
        %v731 = vpop.f32.mrf.mxu0
        %v732 = vadd.f32 %v525, %v731
        %v733 = vpop.f32.mrf.mxu0
        %v734 = vadd.f32 %v529, %v733
        %735 = vmatprep.mubr.f32.mxu0 0.0
        %736 = vmatmul.mubr.f32.gmra.mxu0 %v573
        %v737 = vpop.f32.mrf.mxu0
        %v738 = vadd.f32 %v525, %v737
        %v739 = vpop.f32.mrf.mxu0
        %v740 = vadd.f32 %v529, %v739
        %741 = vmatprep.mubr.f32.mxu0 0.0
        %742 = vmatmul.mubr.f32.gmra.mxu0 %v576
        %v743 = vpop.f32.mrf.mxu0
        %v744 = vadd.f32 %v525, %v743
        %v745 = vpop.f32.mrf.mxu0
        %v746 = vadd.f32 %v529, %v745
        %747 = vmatprep.mubr.f32.mxu0 0.0
        %748 = vmatmul.mubr.f32.gmra.mxu0 %v579
        %v749 = vpop.f32.mrf.mxu0
        %v750 = vadd.f32 %v525, %v749
        %v751 = vpop.f32.mrf.mxu0
        %v752 = vadd.f32 %v529, %v751
        %753 = vmatprep.mubr.f32.mxu0 0.0
        %754 = vmatmul.mubr.f32.gmra.mxu0 %v582
        %v755 = vpop.f32.mrf.mxu0
        %v756 = vadd.f32 %v525, %v755
        %v757 = vpop.f32.mrf.mxu0
        %v758 = vadd.f32 %v529, %v757
        %759 = vmatprep.mubr.f32.mxu0 0.0
        %760 = vmatmul.mubr.f32.gmra.mxu0 %v585
        %v761 = vpop.f32.mrf.mxu0
        %v762 = vadd.f32 %v525, %v761
        %v763 = vpop.f32.mrf.mxu0
        %v764 = vadd.f32 %v529, %v763
        %765 = vmatprep.mubr.f32.mxu0 0.0
        %766 = vmatmul.mubr.f32.gmra.mxu0 %v588
        %v767 = vpop.f32.mrf.mxu0
        %v768 = vadd.f32 %v525, %v767
        %v769 = vpop.f32.mrf.mxu0
        %v770 = vadd.f32 %v529, %v769
        %771 = vmatprep.mubr.f32.mxu0 0.0
        %772 = vmatmul.mubr.f32.gmra.mxu0 %v591
        %v773 = vpop.f32.mrf.mxu0
        %v774 = vadd.f32 %v525, %v773
        %v775 = vpop.f32.mrf.mxu0
        %v776 = vadd.f32 %v529, %v775
        %777 = vdwg.mxu0
        %778 = vst [vmem:[#allocation2] sm:$0xff] %v660
        %vm779 = vcmask 523264
        %780 = vst.msk [vmem:[#allocation2 + $0x8] sm:$0xff] %vm779, %v662
        %781 = vst [vmem:[#allocation2 + $0x10] sm:$0xff] %v666
        %782 = vst.msk [vmem:[#allocation2 + $0x18] sm:$0xff] %vm779, %v668
        %783 = vst [vmem:[#allocation2 + $0x20] sm:$0xff] %v672
        %784 = vst.msk [vmem:[#allocation2 + $0x28] sm:$0xff] %vm779, %v674
        %785 = vst [vmem:[#allocation2 + $0x30] sm:$0xff] %v678
        %786 = vst.msk [vmem:[#allocation2 + $0x38] sm:$0xff] %vm779, %v680
        %787 = vst [vmem:[#allocation2 + $0x40] sm:$0xff] %v684
        %788 = vst.msk [vmem:[#allocation2 + $0x48] sm:$0xff] %vm779, %v686
        %789 = vst [vmem:[#allocation2 + $0x50] sm:$0xff] %v690
        %790 = vst.msk [vmem:[#allocation2 + $0x58] sm:$0xff] %vm779, %v692
        %791 = vst [vmem:[#allocation2 + $0x60] sm:$0xff] %v696
        %792 = vst.msk [vmem:[#allocation2 + $0x68] sm:$0xff] %vm779, %v698
        %793 = vst [vmem:[#allocation2 + $0x70] sm:$0xff] %v702
        %794 = vst.msk [vmem:[#allocation2 + $0x78] sm:$0xff] %vm779, %v704
        %795 = vst [vmem:[#allocation2 + $0x80] sm:$0xff] %v708
        %796 = vst.msk [vmem:[#allocation2 + $0x88] sm:$0xff] %vm779, %v710
        %797 = vst [vmem:[#allocation2 + $0x90] sm:$0xff] %v714
        %798 = vst.msk [vmem:[#allocation2 + $0x98] sm:$0xff] %vm779, %v716
        %799 = vst [vmem:[#allocation2 + $0xa0] sm:$0xff] %v720
        %800 = vst.msk [vmem:[#allocation2 + $0xa8] sm:$0xff] %vm779, %v722
        %801 = vst [vmem:[#allocation2 + $0xb0] sm:$0xff] %v726
        %802 = vst.msk [vmem:[#allocation2 + $0xb8] sm:$0xff] %vm779, %v728
        %803 = vst [vmem:[#allocation2 + $0xc0] sm:$0xff] %v732
        %804 = vst.msk [vmem:[#allocation2 + $0xc8] sm:$0xff] %vm779, %v734
        %805 = vst [vmem:[#allocation2 + $0xd0] sm:$0xff] %v738
        %806 = vst.msk [vmem:[#allocation2 + $0xd8] sm:$0xff] %vm779, %v740
        %807 = vst [vmem:[#allocation2 + $0xe0] sm:$0xff] %v744
        %808 = vst.msk [vmem:[#allocation2 + $0xe8] sm:$0xff] %vm779, %v746
        %809 = vst [vmem:[#allocation2 + $0xf0] sm:$0xff] %v750
        %810 = vst.msk [vmem:[#allocation2 + $0xf8] sm:$0xff] %vm779, %v752
        %811 = vst [vmem:[#allocation2 + $0x100] sm:$0xff] %v756
        %812 = vst.msk [vmem:[#allocation2 + $0x108] sm:$0xff] %vm779, %v758
        %813 = vst [vmem:[#allocation2 + $0x110] sm:$0xff] %v762
        %814 = vst.msk [vmem:[#allocation2 + $0x118] sm:$0xff] %vm779, %v764
        %815 = vst [vmem:[#allocation2 + $0x120] sm:$0xff] %v768
        %816 = vst.msk [vmem:[#allocation2 + $0x128] sm:$0xff] %vm779, %v770
        %817 = vst [vmem:[#allocation2 + $0x130] sm:$0xff] %v774
        %818 = vst.msk [vmem:[#allocation2 + $0x138] sm:$0xff] %vm779, %v776
        %v819 = vld [vmem:[%s3] sm:$0xff]
        %v820 = vld [vmem:[%s3 + $0x8] sm:$0xff]
        %v821 = vld [vmem:[%s3 + $0x10] sm:$0xff]
        %v822 = vld [vmem:[%s3 + $0x18] sm:$0xff]
        %v823 = vld [vmem:[%s3 + $0x20] sm:$0xff]
        %v824 = vld [vmem:[%s3 + $0x28] sm:$0xff]
        %v825 = vld [vmem:[%s3 + $0x30] sm:$0xff]
        %v826 = vld [vmem:[%s3 + $0x38] sm:$0xff]
        %v827 = vld [vmem:[%s3 + $0x40] sm:$0xff]
        %v828 = vld [vmem:[%s3 + $0x48] sm:$0xff]
        %v829 = vld [vmem:[%s3 + $0x50] sm:$0xff]
        %v830 = vld [vmem:[%s3 + $0x58] sm:$0xff]
        %v831 = vld [vmem:[%s3 + $0x60] sm:$0xff]
        %v832 = vld [vmem:[%s3 + $0x68] sm:$0xff]
        %v833 = vld [vmem:[%s3 + $0x70] sm:$0xff]
        %v834 = vld [vmem:[%s3 + $0x78] sm:$0xff]
        %v835 = vld [vmem:[%s5] sm:$0x3]
        %s836 = smul.u32 0, 2
        %s837 = smul.addr %s836, 8
        %s838 = scalar_lea.vmem [#allocation2], %s837
        %v839 = vld [vmem:[%s838] sm:$0xff]
        %v840 = vld [vmem:[%s838 + $0x10] sm:$0xff]
        %s841 = smul.u32 18, 2
        %s842 = smul.addr %s841, 8
        %s843 = scalar_lea.vmem [#allocation2], %s842
        %v844 = vld [vmem:[%s843] sm:$0xff]
        %v845 = vld [vmem:[%s843 + $0x8] sm:$0xff]
        %v846 = vld [vmem:[%s843 + $0x10] sm:$0xff]
        %v847 = vld [vmem:[%s843 + $0x18] sm:$0xff]
        %v849 = vlaneseq
        %v850 = vshrl.u32 %v849, 7
        %v851 = vsub.s32 0, %v850
        %v852 = vrot.slane %v835, %v851
        %v853 = vlaneseq
        %v854 = vshrl.u32 %v853, 7
        %v855 = vsub.s32 1, %v854
        %v856 = vrot.slane %v835, %v855
        %v860 = vsel %vm779, 0.0, 0
        %862 = vmatprep.subr.mxu0 0.0
        %863 = vmatpush1.msra.mxu0 0.0
        %864 = vmatprep.subr.mxu0 0.0
        %865 = vmatpush1.msra.mxu0 0.0
        %866 = vmatprep.subr.mxu0 0.0
        %867 = vmatpush1.msra.mxu0 0.0
        %868 = vmatprep.subr.mxu0 0.0
        %869 = vmatpush1.msra.mxu0 0.0
        %870 = vmatprep.subr.mxu0 0.0
        %871 = vmatpush1.msra.mxu0 0.0
        %872 = vmatprep.subr.mxu0 0.0
        %873 = vmatpush1.msra.mxu0 0.0
        %874 = vmatprep.subr.mxu0 0.0
        %875 = vmatpush1.msra.mxu0 0.0
        %876 = vmatprep.subr.mxu0 0.0
        %877 = vmatpush1.msra.mxu0 0.0
        %878 = vmatprep.subr.mxu0 %v834
        %879 = vmatpush1.msra.mxu0 %v833
        %880 = vmatprep.subr.mxu0 %v832
        %881 = vmatpush1.msra.mxu0 %v831
        %882 = vmatprep.subr.mxu0 %v830
        %883 = vmatpush1.msra.mxu0 %v829
        %884 = vmatprep.subr.mxu0 %v828
        %885 = vmatpush1.msra.mxu0 %v827
        %886 = vmatprep.subr.mxu0 %v826
        %887 = vmatpush1.msra.mxu0 %v825
        %888 = vmatprep.subr.mxu0 %v824
        %889 = vmatpush1.msra.mxu0 %v823
        %890 = vmatprep.subr.mxu0 %v822
        %891 = vmatpush1.msra.mxu0 %v821
        %892 = vmatprep.subr.mxu0 %v820
        %893 = vmatpush1.msra.mxu0 %v819
        %894 = vmatprep.subr.mxu0 0.0
        %895 = vmatpush2.msra.mxu0 0.0
        %896 = vmatprep.subr.mxu0 0.0
        %897 = vmatpush2.msra.mxu0 0.0
        %898 = vmatprep.subr.mxu0 0.0
        %899 = vmatpush2.msra.mxu0 0.0
        %900 = vmatprep.subr.mxu0 0.0
        %901 = vmatpush2.msra.mxu0 0.0
        %902 = vmatprep.subr.mxu0 0.0
        %903 = vmatpush2.msra.mxu0 0.0
        %904 = vmatprep.subr.mxu0 0.0
        %905 = vmatpush2.msra.mxu0 0.0
        %906 = vmatprep.subr.mxu0 0.0
        %907 = vmatpush2.msra.mxu0 0.0
        %908 = vmatprep.subr.mxu0 0.0
        %909 = vmatpush2.msra.mxu0 0.0
        %910 = vmatprep.subr.mxu0 0.0
        %911 = vmatpush2.msra.mxu0 0.0
        %912 = vmatprep.subr.mxu0 0.0
        %913 = vmatpush2.msra.mxu0 0.0
        %914 = vmatprep.subr.mxu0 0.0
        %915 = vmatpush2.msra.mxu0 0.0
        %916 = vmatprep.subr.mxu0 0.0
        %917 = vmatpush2.msra.mxu0 0.0
        %918 = vmatprep.subr.mxu0 0.0
        %919 = vmatpush2.msra.mxu0 0.0
        %920 = vmatprep.subr.mxu0 0.0
        %921 = vmatpush2.msra.mxu0 0.0
        %922 = vmatprep.subr.mxu0 0.0
        %923 = vmatpush2.msra.mxu0 0.0
        %924 = vmatprep.subr.mxu0 0.0
        %925 = vmatpush2.msra.mxu0 0.0
        %926 = vmatprep.mubr.f32.mxu0 0.0
        %927 = vmatmul.mubr.f32.gmra.mxu0 %v860
        %v928 = vpop.f32.mrf.mxu0
        %v929 = vadd.f32 %v852, %v928
        %v930 = vpop.f32.mrf.mxu0
        %v931 = vadd.f32 %v856, %v930
        %932 = vmatprep.mubr.f32.mxu0 0.0
        %933 = vmatmul.mubr.f32.gmra.mxu0 %v860
        %v934 = vpop.f32.mrf.mxu0
        %v935 = vadd.f32 %v852, %v934
        %v936 = vpop.f32.mrf.mxu0
        %v937 = vadd.f32 %v856, %v936
        %938 = vdwg.mxu0
        %v939 = vadd.f32 %v839, %v929
        %v940 = vadd.f32 %v840, %v935
        %v941 = vmul.f32 %v939, 0.5
        %v942 = vmul.f32 %v940, 0.5
        %v943 = vtanh.pop %v941
        %v944 = vtanh.pop %v942
        %v945 = vadd.f32 %v943, 1.0
        %v946 = vadd.f32 %v944, 1.0
        %v947 = vmul.f32 %v945, 0.5
        %v948 = vmul.f32 %v946, 0.5
        %951 = vrot.lane.b32.xlu0 %v929, 64
        %v952 = vpop.permute.xlu0 %951
        %953 = vrot.lane.b32.xlu0 %v935, 64
        %v954 = vpop.permute.xlu0 %953
        %v957 = vmul.f32 %v947, %v952
        %v958 = vmul.f32 %v948, %v954
        %961 = vrot.lane.b32.xlu0 %v957, 64
        %v962 = vpop.permute.xlu0 %961
        %963 = vrot.lane.b32.xlu0 %v958, 64
        %v964 = vpop.permute.xlu0 %963
        %v967 = vadd.f32 %v839, %v962
        %v968 = vadd.f32 %v840, %v964
        %v969 = vtanh.pop %v967
        %v970 = vtanh.pop %v968
        %v971 = vsub.f32 1.0, %v947
        %v972 = vsub.f32 1.0, %v948
        %975 = vrot.lane.b32.xlu0 %v969, 96
        %v976 = vpop.permute.xlu0 %975
        %977 = vrot.lane.b32.xlu0 %v970, 96
        %v978 = vpop.permute.xlu0 %977
        %v981 = vmul.f32 %v971, %v976
        %v982 = vmul.f32 %v972, %v978
        %v983 = vmul.f32 %v947, 0.0
        %v984 = vmul.f32 %v948, 0.0
        %v985 = vadd.f32 %v981, %v983
        %v986 = vadd.f32 %v982, %v984
        %v987 = vadd.f32 %v844, %v929
        %v988 = vadd.f32 %v845, %v931
        %v989 = vadd.f32 %v846, %v935
        %v990 = vadd.f32 %v847, %v937
        %v991 = vmul.f32 %v987, 0.5
        %v992 = vmul.f32 %v988, 0.5
        %v993 = vmul.f32 %v989, 0.5
        %v994 = vmul.f32 %v990, 0.5
        %v995 = vtanh.pop %v991
        %v996 = vtanh.pop %v992
        %v997 = vtanh.pop %v993
        %v998 = vtanh.pop %v994
        %v999 = vadd.f32 %v995, 1.0
        %v1000 = vadd.f32 %v996, 1.0
        %v1001 = vadd.f32 %v997, 1.0
        %v1002 = vadd.f32 %v998, 1.0
        %v1003 = vmul.f32 %v999, 0.5
        %v1004 = vmul.f32 %v1000, 0.5
        %v1005 = vmul.f32 %v1001, 0.5
        %v1006 = vmul.f32 %v1002, 0.5
        %1009 = vrot.lane.b32.xlu0 %v931, 64
        %v1010 = vpop.permute.xlu0 %1009
        %1011 = vrot.lane.b32.xlu0 %v937, 64
        %v1012 = vpop.permute.xlu0 %1011
        %v1015 = vmul.f32 %v1003, %v1010
        %v1016 = vmul.f32 %v1005, %v1012
        %1019 = vrot.lane.b32.xlu0 %v1015, 64
        %v1020 = vpop.permute.xlu0 %1019
        %1021 = vrot.lane.b32.xlu0 %v1016, 64
        %v1022 = vpop.permute.xlu0 %1021
        %v1025 = vadd.f32 %v845, %v1020
        %v1026 = vadd.f32 %v847, %v1022
        %v1027 = vtanh.pop %v1025
        %v1028 = vtanh.pop %v1026
        %v1029 = vsub.f32 1.0, %v1004
        %v1030 = vsub.f32 1.0, %v1006
        %1033 = vrot.lane.b32.xlu0 %v1027, 96
        %v1034 = vpop.permute.xlu0 %1033
        %1035 = vrot.lane.b32.xlu0 %v1028, 96
        %v1036 = vpop.permute.xlu0 %1035
        %v1039 = vmul.f32 %v1029, %v1034
        %v1040 = vmul.f32 %v1030, %v1036
        %v1041 = vmul.f32 %v1004, 0.0
        %v1042 = vmul.f32 %v1006, 0.0
        %v1043 = vadd.f32 %v1039, %v1041
        %v1044 = vadd.f32 %v1040, %v1042
        %vm1045 = vcmp.gt.s32.totalorder %v494, 0
        %vm1046 = vcmp.gt.s32.totalorder %v495, 0
        %vm1047 = vcmp.gt.s32.totalorder %v494, 9
        %vm1048 = vcmp.gt.s32.totalorder %v495, 9
        %v1049 = vsel %vm1045, 1, 0
        %v1050 = vsel %vm1046, 1, 0
        %1051 = vset.pattern.permute.xlu0 0
        %1052 = vperm.xlu0 %1051, %v1049
        %v1053 = vpop.permute.xlu0 %1052
        %1054 = vset.pattern.permute.xlu0 0
        %1055 = vperm.xlu0 %1054, %v1050
        %v1056 = vpop.permute.xlu0 %1055
        %vm1057 = vcmp.eq.s32.totalorder %v1053, 1
        %vm1058 = vcmp.eq.s32.totalorder %v1056, 1
        %v1059 = vsel %vm1057, %v985, 0.0
        %v1060 = vsel %vm1058, %v986, 0.0
        %v1061 = vsel %vm1047, 1, 0
        %v1062 = vsel %vm1048, 1, 0
        %1063 = vset.pattern.permute.xlu0 0
        %1064 = vperm.xlu0 %1063, %v1061
        %v1065 = vpop.permute.xlu0 %1064
        %1066 = vset.pattern.permute.xlu0 0
        %1067 = vperm.xlu0 %1066, %v1062
        %v1068 = vpop.permute.xlu0 %1067
        %vm1069 = vcmp.eq.s32.totalorder %v1065, 1
        %vm1070 = vcmp.eq.s32.totalorder %v1068, 1
        %v1071 = vsel %vm1069, %v1043, 0.0
        %v1072 = vsel %vm1070, %v1044, 0.0
        %1075 = vrot.lane.b32.xlu0 %v1059, 96
        %v1076 = vpop.permute.xlu0 %1075
        %1077 = vrot.lane.b32.xlu0 %v1060, 96
        %v1078 = vpop.permute.xlu0 %1077
        %vm1081 = vcmask 261120
        %1082 = vst.msk [vmem:[#allocation3] sm:$0xff] %vm1081, %v1076
        %1083 = vst.msk [vmem:[#allocation3 + $0x8] sm:$0xff] %vm1081, %v1078
        %s1084 = scalar_lea.vmem [#allocation4], 144
        %1085 = vst.msk [vmem:[%s1084] sm:$0xff] %vm1081, %v1071
        %1086 = vst.msk [vmem:[%s1084 + $0x8] sm:$0xff] %vm1081, %v1072
        %s1087 = smul.u32 2, 2
        %s1088 = smul.addr %s1087, 8
        %s1089 = scalar_lea.vmem [#allocation2], %s1088
        %v1090 = vld [vmem:[%s1089] sm:$0xff]
        %v1091 = vld [vmem:[%s1089 + $0x10] sm:$0xff]
        %s1092 = smul.u32 16, 2
        %s1093 = smul.addr %s1092, 8
        %s1094 = scalar_lea.vmem [#allocation2], %s1093
        %v1095 = vld [vmem:[%s1094] sm:$0xff]
        %v1096 = vld [vmem:[%s1094 + $0x8] sm:$0xff]
        %v1097 = vld [vmem:[%s1094 + $0x10] sm:$0xff]
        %v1098 = vld [vmem:[%s1094 + $0x18] sm:$0xff]
        %1101 = vrot.lane.b32.xlu0 %v1071, 32
        %v1102 = vpop.permute.xlu0 %1101
        %1103 = vrot.lane.b32.xlu0 %v1072, 32
        %v1104 = vpop.permute.xlu0 %1103
        %v1107 = vsel %vm1081, %v1076, %v1102
        %v1108 = vsel %vm1081, %v1078, %v1104
        %v1110 = vsel %vm779, %v1107, 0
        %v1113 = vsel %vm779, %v1108, 0
        %1115 = vmatprep.subr.mxu0 0.0
        %1116 = vmatpush1.msra.mxu0 0.0
        %1117 = vmatprep.subr.mxu0 0.0
        %1118 = vmatpush1.msra.mxu0 0.0
        %1119 = vmatprep.subr.mxu0 0.0
        %1120 = vmatpush1.msra.mxu0 0.0
        %1121 = vmatprep.subr.mxu0 0.0
        %1122 = vmatpush1.msra.mxu0 0.0
        %1123 = vmatprep.subr.mxu0 0.0
        %1124 = vmatpush1.msra.mxu0 0.0
        %1125 = vmatprep.subr.mxu0 0.0
        %1126 = vmatpush1.msra.mxu0 0.0
        %1127 = vmatprep.subr.mxu0 0.0
        %1128 = vmatpush1.msra.mxu0 0.0
        %1129 = vmatprep.subr.mxu0 0.0
        %1130 = vmatpush1.msra.mxu0 0.0
        %1131 = vmatprep.subr.mxu0 %v834
        %1132 = vmatpush1.msra.mxu0 %v833
        %1133 = vmatprep.subr.mxu0 %v832
        %1134 = vmatpush1.msra.mxu0 %v831
        %1135 = vmatprep.subr.mxu0 %v830
        %1136 = vmatpush1.msra.mxu0 %v829
        %1137 = vmatprep.subr.mxu0 %v828
        %1138 = vmatpush1.msra.mxu0 %v827
        %1139 = vmatprep.subr.mxu0 %v826
        %1140 = vmatpush1.msra.mxu0 %v825
        %1141 = vmatprep.subr.mxu0 %v824
        %1142 = vmatpush1.msra.mxu0 %v823
        %1143 = vmatprep.subr.mxu0 %v822
        %1144 = vmatpush1.msra.mxu0 %v821
        %1145 = vmatprep.subr.mxu0 %v820
        %1146 = vmatpush1.msra.mxu0 %v819
        %1147 = vmatprep.subr.mxu0 0.0
        %1148 = vmatpush2.msra.mxu0 0.0
        %1149 = vmatprep.subr.mxu0 0.0
        %1150 = vmatpush2.msra.mxu0 0.0
        %1151 = vmatprep.subr.mxu0 0.0
        %1152 = vmatpush2.msra.mxu0 0.0
        %1153 = vmatprep.subr.mxu0 0.0
        %1154 = vmatpush2.msra.mxu0 0.0
        %1155 = vmatprep.subr.mxu0 0.0
        %1156 = vmatpush2.msra.mxu0 0.0
        %1157 = vmatprep.subr.mxu0 0.0
        %1158 = vmatpush2.msra.mxu0 0.0
        %1159 = vmatprep.subr.mxu0 0.0
        %1160 = vmatpush2.msra.mxu0 0.0
        %1161 = vmatprep.subr.mxu0 0.0
        %1162 = vmatpush2.msra.mxu0 0.0
        %1163 = vmatprep.subr.mxu0 0.0
        %1164 = vmatpush2.msra.mxu0 0.0
        %1165 = vmatprep.subr.mxu0 0.0
        %1166 = vmatpush2.msra.mxu0 0.0
        %1167 = vmatprep.subr.mxu0 0.0
        %1168 = vmatpush2.msra.mxu0 0.0
        %1169 = vmatprep.subr.mxu0 0.0
        %1170 = vmatpush2.msra.mxu0 0.0
        %1171 = vmatprep.subr.mxu0 0.0
        %1172 = vmatpush2.msra.mxu0 0.0
        %1173 = vmatprep.subr.mxu0 0.0
        %1174 = vmatpush2.msra.mxu0 0.0
        %1175 = vmatprep.subr.mxu0 0.0
        %1176 = vmatpush2.msra.mxu0 0.0
        %1177 = vmatprep.subr.mxu0 0.0
        %1178 = vmatpush2.msra.mxu0 0.0
        %1179 = vmatprep.mubr.f32.mxu0 0.0
        %1180 = vmatmul.mubr.f32.gmra.mxu0 %v1110
        %v1181 = vpop.f32.mrf.mxu0
        %v1182 = vadd.f32 %v852, %v1181
        %v1183 = vpop.f32.mrf.mxu0
        %v1184 = vadd.f32 %v856, %v1183
        %1185 = vmatprep.mubr.f32.mxu0 0.0
        %1186 = vmatmul.mubr.f32.gmra.mxu0 %v1113
        %v1187 = vpop.f32.mrf.mxu0
        %v1188 = vadd.f32 %v852, %v1187
        %v1189 = vpop.f32.mrf.mxu0
        %v1190 = vadd.f32 %v856, %v1189
        %1191 = vdwg.mxu0
        %v1192 = vadd.f32 %v1090, %v1182
        %v1193 = vadd.f32 %v1091, %v1188
        %v1194 = vmul.f32 %v1192, 0.5
        %v1195 = vmul.f32 %v1193, 0.5
        %v1196 = vtanh.pop %v1194
        %v1197 = vtanh.pop %v1195
        %v1198 = vadd.f32 %v1196, 1.0
        %v1199 = vadd.f32 %v1197, 1.0
        %v1200 = vmul.f32 %v1198, 0.5
        %v1201 = vmul.f32 %v1199, 0.5
        %1204 = vrot.lane.b32.xlu0 %v1182, 64
        %v1205 = vpop.permute.xlu0 %1204
        %1206 = vrot.lane.b32.xlu0 %v1188, 64
        %v1207 = vpop.permute.xlu0 %1206
        %v1210 = vmul.f32 %v1200, %v1205
        %v1211 = vmul.f32 %v1201, %v1207
        %1214 = vrot.lane.b32.xlu0 %v1210, 64
        %v1215 = vpop.permute.xlu0 %1214
        %1216 = vrot.lane.b32.xlu0 %v1211, 64
        %v1217 = vpop.permute.xlu0 %1216
        %v1220 = vadd.f32 %v1090, %v1215
        %v1221 = vadd.f32 %v1091, %v1217
        %v1222 = vtanh.pop %v1220
        %v1223 = vtanh.pop %v1221
        %v1224 = vsub.f32 1.0, %v1200
        %v1225 = vsub.f32 1.0, %v1201
        %1228 = vrot.lane.b32.xlu0 %v1222, 96
        %v1229 = vpop.permute.xlu0 %1228
        %1230 = vrot.lane.b32.xlu0 %v1223, 96
        %v1231 = vpop.permute.xlu0 %1230
        %v1234 = vmul.f32 %v1224, %v1229
        %v1235 = vmul.f32 %v1225, %v1231
        %v1236 = vmul.f32 %v1200, %v1059
        %v1237 = vmul.f32 %v1201, %v1060
        %v1238 = vadd.f32 %v1234, %v1236
        %v1239 = vadd.f32 %v1235, %v1237
        %v1240 = vadd.f32 %v1095, %v1182
        %v1241 = vadd.f32 %v1096, %v1184
        %v1242 = vadd.f32 %v1097, %v1188
        %v1243 = vadd.f32 %v1098, %v1190
        %v1244 = vmul.f32 %v1240, 0.5
        %v1245 = vmul.f32 %v1241, 0.5
        %v1246 = vmul.f32 %v1242, 0.5
        %v1247 = vmul.f32 %v1243, 0.5
        %v1248 = vtanh.pop %v1244
        %v1249 = vtanh.pop %v1245
        %v1250 = vtanh.pop %v1246
        %v1251 = vtanh.pop %v1247
        %v1252 = vadd.f32 %v1248, 1.0
        %v1253 = vadd.f32 %v1249, 1.0
        %v1254 = vadd.f32 %v1250, 1.0
        %v1255 = vadd.f32 %v1251, 1.0
        %v1256 = vmul.f32 %v1252, 0.5
        %v1257 = vmul.f32 %v1253, 0.5
        %v1258 = vmul.f32 %v1254, 0.5
        %v1259 = vmul.f32 %v1255, 0.5
        %1262 = vrot.lane.b32.xlu0 %v1184, 64
        %v1263 = vpop.permute.xlu0 %1262
        %1264 = vrot.lane.b32.xlu0 %v1190, 64
        %v1265 = vpop.permute.xlu0 %1264
        %v1268 = vmul.f32 %v1256, %v1263
        %v1269 = vmul.f32 %v1258, %v1265
        %1272 = vrot.lane.b32.xlu0 %v1268, 64
        %v1273 = vpop.permute.xlu0 %1272
        %1274 = vrot.lane.b32.xlu0 %v1269, 64
        %v1275 = vpop.permute.xlu0 %1274
        %v1278 = vadd.f32 %v1096, %v1273
        %v1279 = vadd.f32 %v1098, %v1275
        %v1280 = vtanh.pop %v1278
        %v1281 = vtanh.pop %v1279
        %v1282 = vsub.f32 1.0, %v1257
        %v1283 = vsub.f32 1.0, %v1259
        %1286 = vrot.lane.b32.xlu0 %v1280, 96
        %v1287 = vpop.permute.xlu0 %1286
        %1288 = vrot.lane.b32.xlu0 %v1281, 96
        %v1289 = vpop.permute.xlu0 %1288
        %v1292 = vmul.f32 %v1282, %v1287
        %v1293 = vmul.f32 %v1283, %v1289
        %v1294 = vmul.f32 %v1257, %v1071
        %v1295 = vmul.f32 %v1259, %v1072
        %v1296 = vadd.f32 %v1292, %v1294
        %v1297 = vadd.f32 %v1293, %v1295
        %vm1298 = vcmp.gt.s32.totalorder %v494, 1
        %vm1299 = vcmp.gt.s32.totalorder %v495, 1
        %vm1300 = vcmp.gt.s32.totalorder %v494, 8
        %vm1301 = vcmp.gt.s32.totalorder %v495, 8
        %v1302 = vsel %vm1298, 1, 0
        %v1303 = vsel %vm1299, 1, 0
        %1304 = vset.pattern.permute.xlu0 0
        %1305 = vperm.xlu0 %1304, %v1302
        %v1306 = vpop.permute.xlu0 %1305
        %1307 = vset.pattern.permute.xlu0 0
        %1308 = vperm.xlu0 %1307, %v1303
        %v1309 = vpop.permute.xlu0 %1308
        %vm1310 = vcmp.eq.s32.totalorder %v1306, 1
        %vm1311 = vcmp.eq.s32.totalorder %v1309, 1
        %v1312 = vsel %vm1310, %v1238, %v1059
        %v1313 = vsel %vm1311, %v1239, %v1060
        %v1314 = vsel %vm1300, 1, 0
        %v1315 = vsel %vm1301, 1, 0
        %1316 = vset.pattern.permute.xlu0 0
        %1317 = vperm.xlu0 %1316, %v1314
        %v1318 = vpop.permute.xlu0 %1317
        %1319 = vset.pattern.permute.xlu0 0
        %1320 = vperm.xlu0 %1319, %v1315
        %v1321 = vpop.permute.xlu0 %1320
        %vm1322 = vcmp.eq.s32.totalorder %v1318, 1
        %vm1323 = vcmp.eq.s32.totalorder %v1321, 1
        %v1324 = vsel %vm1322, %v1296, %v1071
        %v1325 = vsel %vm1323, %v1297, %v1072
        %v1326 = vsel %vm1310, %v1238, 0.0
        %v1327 = vsel %vm1311, %v1239, 0.0
        %v1328 = vsel %vm1322, %v1296, 0.0
        %v1329 = vsel %vm1323, %v1297, 0.0
        %1332 = vrot.lane.b32.xlu0 %v1326, 96
        %v1333 = vpop.permute.xlu0 %1332
        %1334 = vrot.lane.b32.xlu0 %v1327, 96
        %v1335 = vpop.permute.xlu0 %1334
        %s1338 = scalar_lea.vmem [#allocation3], 16
        %1339 = vst.msk [vmem:[%s1338] sm:$0xff] %vm1081, %v1333
        %1340 = vst.msk [vmem:[%s1338 + $0x8] sm:$0xff] %vm1081, %v1335
        %s1341 = scalar_lea.vmem [#allocation4], 128
        %1342 = vst.msk [vmem:[%s1341] sm:$0xff] %vm1081, %v1328
        %1343 = vst.msk [vmem:[%s1341 + $0x8] sm:$0xff] %vm1081, %v1329
        %s1344 = smul.u32 4, 2
        %s1345 = smul.addr %s1344, 8
        %s1346 = scalar_lea.vmem [#allocation2], %s1345
        %v1347 = vld [vmem:[%s1346] sm:$0xff]
        %v1348 = vld [vmem:[%s1346 + $0x10] sm:$0xff]
        %s1349 = smul.u32 14, 2
        %s1350 = smul.addr %s1349, 8
        %s1351 = scalar_lea.vmem [#allocation2], %s1350
        %v1352 = vld [vmem:[%s1351] sm:$0xff]
        %v1353 = vld [vmem:[%s1351 + $0x8] sm:$0xff]
        %v1354 = vld [vmem:[%s1351 + $0x10] sm:$0xff]
        %v1355 = vld [vmem:[%s1351 + $0x18] sm:$0xff]
        %1358 = vrot.lane.b32.xlu0 %v1312, 96
        %v1359 = vpop.permute.xlu0 %1358
        %1360 = vrot.lane.b32.xlu0 %v1313, 96
        %v1361 = vpop.permute.xlu0 %1360
        %1366 = vrot.lane.b32.xlu0 %v1324, 32
        %v1367 = vpop.permute.xlu0 %1366
        %1368 = vrot.lane.b32.xlu0 %v1325, 32
        %v1369 = vpop.permute.xlu0 %1368
        %v1372 = vsel %vm1081, %v1359, %v1367
        %v1373 = vsel %vm1081, %v1361, %v1369
        %v1375 = vsel %vm779, %v1372, 0
        %v1378 = vsel %vm779, %v1373, 0
        %1380 = vmatprep.subr.mxu0 0.0
        %1381 = vmatpush1.msra.mxu0 0.0
        %1382 = vmatprep.subr.mxu0 0.0
        %1383 = vmatpush1.msra.mxu0 0.0
        %1384 = vmatprep.subr.mxu0 0.0
        %1385 = vmatpush1.msra.mxu0 0.0
        %1386 = vmatprep.subr.mxu0 0.0
        %1387 = vmatpush1.msra.mxu0 0.0
        %1388 = vmatprep.subr.mxu0 0.0
        %1389 = vmatpush1.msra.mxu0 0.0
        %1390 = vmatprep.subr.mxu0 0.0
        %1391 = vmatpush1.msra.mxu0 0.0
        %1392 = vmatprep.subr.mxu0 0.0
        %1393 = vmatpush1.msra.mxu0 0.0
        %1394 = vmatprep.subr.mxu0 0.0
        %1395 = vmatpush1.msra.mxu0 0.0
        %1396 = vmatprep.subr.mxu0 %v834
        %1397 = vmatpush1.msra.mxu0 %v833
        %1398 = vmatprep.subr.mxu0 %v832
        %1399 = vmatpush1.msra.mxu0 %v831
        %1400 = vmatprep.subr.mxu0 %v830
        %1401 = vmatpush1.msra.mxu0 %v829
        %1402 = vmatprep.subr.mxu0 %v828
        %1403 = vmatpush1.msra.mxu0 %v827
        %1404 = vmatprep.subr.mxu0 %v826
        %1405 = vmatpush1.msra.mxu0 %v825
        %1406 = vmatprep.subr.mxu0 %v824
        %1407 = vmatpush1.msra.mxu0 %v823
        %1408 = vmatprep.subr.mxu0 %v822
        %1409 = vmatpush1.msra.mxu0 %v821
        %1410 = vmatprep.subr.mxu0 %v820
        %1411 = vmatpush1.msra.mxu0 %v819
        %1412 = vmatprep.subr.mxu0 0.0
        %1413 = vmatpush2.msra.mxu0 0.0
        %1414 = vmatprep.subr.mxu0 0.0
        %1415 = vmatpush2.msra.mxu0 0.0
        %1416 = vmatprep.subr.mxu0 0.0
        %1417 = vmatpush2.msra.mxu0 0.0
        %1418 = vmatprep.subr.mxu0 0.0
        %1419 = vmatpush2.msra.mxu0 0.0
        %1420 = vmatprep.subr.mxu0 0.0
        %1421 = vmatpush2.msra.mxu0 0.0
        %1422 = vmatprep.subr.mxu0 0.0
        %1423 = vmatpush2.msra.mxu0 0.0
        %1424 = vmatprep.subr.mxu0 0.0
        %1425 = vmatpush2.msra.mxu0 0.0
        %1426 = vmatprep.subr.mxu0 0.0
        %1427 = vmatpush2.msra.mxu0 0.0
        %1428 = vmatprep.subr.mxu0 0.0
        %1429 = vmatpush2.msra.mxu0 0.0
        %1430 = vmatprep.subr.mxu0 0.0
        %1431 = vmatpush2.msra.mxu0 0.0
        %1432 = vmatprep.subr.mxu0 0.0
        %1433 = vmatpush2.msra.mxu0 0.0
        %1434 = vmatprep.subr.mxu0 0.0
        %1435 = vmatpush2.msra.mxu0 0.0
        %1436 = vmatprep.subr.mxu0 0.0
        %1437 = vmatpush2.msra.mxu0 0.0
        %1438 = vmatprep.subr.mxu0 0.0
        %1439 = vmatpush2.msra.mxu0 0.0
        %1440 = vmatprep.subr.mxu0 0.0
        %1441 = vmatpush2.msra.mxu0 0.0
        %1442 = vmatprep.subr.mxu0 0.0
        %1443 = vmatpush2.msra.mxu0 0.0
        %1444 = vmatprep.mubr.f32.mxu0 0.0
        %1445 = vmatmul.mubr.f32.gmra.mxu0 %v1375
        %v1446 = vpop.f32.mrf.mxu0
        %v1447 = vadd.f32 %v852, %v1446
        %v1448 = vpop.f32.mrf.mxu0
        %v1449 = vadd.f32 %v856, %v1448
        %1450 = vmatprep.mubr.f32.mxu0 0.0
        %1451 = vmatmul.mubr.f32.gmra.mxu0 %v1378
        %v1452 = vpop.f32.mrf.mxu0
        %v1453 = vadd.f32 %v852, %v1452
        %v1454 = vpop.f32.mrf.mxu0
        %v1455 = vadd.f32 %v856, %v1454
        %1456 = vdwg.mxu0
        %v1457 = vadd.f32 %v1347, %v1447
        %v1458 = vadd.f32 %v1348, %v1453
        %v1459 = vmul.f32 %v1457, 0.5
        %v1460 = vmul.f32 %v1458, 0.5
        %v1461 = vtanh.pop %v1459
        %v1462 = vtanh.pop %v1460
        %v1463 = vadd.f32 %v1461, 1.0
        %v1464 = vadd.f32 %v1462, 1.0
        %v1465 = vmul.f32 %v1463, 0.5
        %v1466 = vmul.f32 %v1464, 0.5
        %1469 = vrot.lane.b32.xlu0 %v1447, 64
        %v1470 = vpop.permute.xlu0 %1469
        %1471 = vrot.lane.b32.xlu0 %v1453, 64
        %v1472 = vpop.permute.xlu0 %1471
        %v1475 = vmul.f32 %v1465, %v1470
        %v1476 = vmul.f32 %v1466, %v1472
        %1479 = vrot.lane.b32.xlu0 %v1475, 64
        %v1480 = vpop.permute.xlu0 %1479
        %1481 = vrot.lane.b32.xlu0 %v1476, 64
        %v1482 = vpop.permute.xlu0 %1481
        %v1485 = vadd.f32 %v1347, %v1480
        %v1486 = vadd.f32 %v1348, %v1482
        %v1487 = vtanh.pop %v1485
        %v1488 = vtanh.pop %v1486
        %v1489 = vsub.f32 1.0, %v1465
        %v1490 = vsub.f32 1.0, %v1466
        %1493 = vrot.lane.b32.xlu0 %v1487, 96
        %v1494 = vpop.permute.xlu0 %1493
        %1495 = vrot.lane.b32.xlu0 %v1488, 96
        %v1496 = vpop.permute.xlu0 %1495
        %v1499 = vmul.f32 %v1489, %v1494
        %v1500 = vmul.f32 %v1490, %v1496
        %v1501 = vmul.f32 %v1465, %v1312
        %v1502 = vmul.f32 %v1466, %v1313
        %v1503 = vadd.f32 %v1499, %v1501
        %v1504 = vadd.f32 %v1500, %v1502
        %v1505 = vadd.f32 %v1352, %v1447
        %v1506 = vadd.f32 %v1353, %v1449
        %v1507 = vadd.f32 %v1354, %v1453
        %v1508 = vadd.f32 %v1355, %v1455
        %v1509 = vmul.f32 %v1505, 0.5
        %v1510 = vmul.f32 %v1506, 0.5
        %v1511 = vmul.f32 %v1507, 0.5
        %v1512 = vmul.f32 %v1508, 0.5
        %v1513 = vtanh.pop %v1509
        %v1514 = vtanh.pop %v1510
        %v1515 = vtanh.pop %v1511
        %v1516 = vtanh.pop %v1512
        %v1517 = vadd.f32 %v1513, 1.0
        %v1518 = vadd.f32 %v1514, 1.0
        %v1519 = vadd.f32 %v1515, 1.0
        %v1520 = vadd.f32 %v1516, 1.0
        %v1521 = vmul.f32 %v1517, 0.5
        %v1522 = vmul.f32 %v1518, 0.5
        %v1523 = vmul.f32 %v1519, 0.5
        %v1524 = vmul.f32 %v1520, 0.5
        %1527 = vrot.lane.b32.xlu0 %v1449, 64
        %v1528 = vpop.permute.xlu0 %1527
        %1529 = vrot.lane.b32.xlu0 %v1455, 64
        %v1530 = vpop.permute.xlu0 %1529
        %v1533 = vmul.f32 %v1521, %v1528
        %v1534 = vmul.f32 %v1523, %v1530
        %1537 = vrot.lane.b32.xlu0 %v1533, 64
        %v1538 = vpop.permute.xlu0 %1537
        %1539 = vrot.lane.b32.xlu0 %v1534, 64
        %v1540 = vpop.permute.xlu0 %1539
        %v1543 = vadd.f32 %v1353, %v1538
        %v1544 = vadd.f32 %v1355, %v1540
        %v1545 = vtanh.pop %v1543
        %v1546 = vtanh.pop %v1544
        %v1547 = vsub.f32 1.0, %v1522
        %v1548 = vsub.f32 1.0, %v1524
        %1551 = vrot.lane.b32.xlu0 %v1545, 96
        %v1552 = vpop.permute.xlu0 %1551
        %1553 = vrot.lane.b32.xlu0 %v1546, 96
        %v1554 = vpop.permute.xlu0 %1553
        %v1557 = vmul.f32 %v1547, %v1552
        %v1558 = vmul.f32 %v1548, %v1554
        %v1559 = vmul.f32 %v1522, %v1324
        %v1560 = vmul.f32 %v1524, %v1325
        %v1561 = vadd.f32 %v1557, %v1559
        %v1562 = vadd.f32 %v1558, %v1560
        %vm1563 = vcmp.gt.s32.totalorder %v494, 2
        %vm1564 = vcmp.gt.s32.totalorder %v495, 2
        %vm1565 = vcmp.gt.s32.totalorder %v494, 7
        %vm1566 = vcmp.gt.s32.totalorder %v495, 7
        %v1567 = vsel %vm1563, 1, 0
        %v1568 = vsel %vm1564, 1, 0
        %1569 = vset.pattern.permute.xlu0 0
        %1570 = vperm.xlu0 %1569, %v1567
        %v1571 = vpop.permute.xlu0 %1570
        %1572 = vset.pattern.permute.xlu0 0
        %1573 = vperm.xlu0 %1572, %v1568
        %v1574 = vpop.permute.xlu0 %1573
        %vm1575 = vcmp.eq.s32.totalorder %v1571, 1
        %vm1576 = vcmp.eq.s32.totalorder %v1574, 1
        %v1577 = vsel %vm1575, %v1503, %v1312
        %v1578 = vsel %vm1576, %v1504, %v1313
        %v1579 = vsel %vm1565, 1, 0
        %v1580 = vsel %vm1566, 1, 0
        %1581 = vset.pattern.permute.xlu0 0
        %1582 = vperm.xlu0 %1581, %v1579
        %v1583 = vpop.permute.xlu0 %1582
        %1584 = vset.pattern.permute.xlu0 0
        %1585 = vperm.xlu0 %1584, %v1580
        %v1586 = vpop.permute.xlu0 %1585
        %vm1587 = vcmp.eq.s32.totalorder %v1583, 1
        %vm1588 = vcmp.eq.s32.totalorder %v1586, 1
        %v1589 = vsel %vm1587, %v1561, %v1324
        %v1590 = vsel %vm1588, %v1562, %v1325
        %v1591 = vsel %vm1575, %v1503, 0.0
        %v1592 = vsel %vm1576, %v1504, 0.0
        %v1593 = vsel %vm1587, %v1561, 0.0
        %v1594 = vsel %vm1588, %v1562, 0.0
        %1597 = vrot.lane.b32.xlu0 %v1591, 96
        %v1598 = vpop.permute.xlu0 %1597
        %1599 = vrot.lane.b32.xlu0 %v1592, 96
        %v1600 = vpop.permute.xlu0 %1599
        %s1603 = scalar_lea.vmem [#allocation3], 32
        %1604 = vst.msk [vmem:[%s1603] sm:$0xff] %vm1081, %v1598
        %1605 = vst.msk [vmem:[%s1603 + $0x8] sm:$0xff] %vm1081, %v1600
        %s1606 = scalar_lea.vmem [#allocation4], 112
        %1607 = vst.msk [vmem:[%s1606] sm:$0xff] %vm1081, %v1593
        %1608 = vst.msk [vmem:[%s1606 + $0x8] sm:$0xff] %vm1081, %v1594
        %s1609 = smul.u32 6, 2
        %s1610 = smul.addr %s1609, 8
        %s1611 = scalar_lea.vmem [#allocation2], %s1610
        %v1612 = vld [vmem:[%s1611] sm:$0xff]
        %v1613 = vld [vmem:[%s1611 + $0x10] sm:$0xff]
        %s1614 = smul.u32 12, 2
        %s1615 = smul.addr %s1614, 8
        %s1616 = scalar_lea.vmem [#allocation2], %s1615
        %v1617 = vld [vmem:[%s1616] sm:$0xff]
        %v1618 = vld [vmem:[%s1616 + $0x8] sm:$0xff]
        %v1619 = vld [vmem:[%s1616 + $0x10] sm:$0xff]
        %v1620 = vld [vmem:[%s1616 + $0x18] sm:$0xff]
        %1623 = vrot.lane.b32.xlu0 %v1577, 96
        %v1624 = vpop.permute.xlu0 %1623
        %1625 = vrot.lane.b32.xlu0 %v1578, 96
        %v1626 = vpop.permute.xlu0 %1625
        %1631 = vrot.lane.b32.xlu0 %v1589, 32
        %v1632 = vpop.permute.xlu0 %1631
        %1633 = vrot.lane.b32.xlu0 %v1590, 32
        %v1634 = vpop.permute.xlu0 %1633
        %v1637 = vsel %vm1081, %v1624, %v1632
        %v1638 = vsel %vm1081, %v1626, %v1634
        %v1640 = vsel %vm779, %v1637, 0
        %v1643 = vsel %vm779, %v1638, 0
        %1645 = vmatprep.subr.mxu0 0.0
        %1646 = vmatpush1.msra.mxu0 0.0
        %1647 = vmatprep.subr.mxu0 0.0
        %1648 = vmatpush1.msra.mxu0 0.0
        %1649 = vmatprep.subr.mxu0 0.0
        %1650 = vmatpush1.msra.mxu0 0.0
        %1651 = vmatprep.subr.mxu0 0.0
        %1652 = vmatpush1.msra.mxu0 0.0
        %1653 = vmatprep.subr.mxu0 0.0
        %1654 = vmatpush1.msra.mxu0 0.0
        %1655 = vmatprep.subr.mxu0 0.0
        %1656 = vmatpush1.msra.mxu0 0.0
        %1657 = vmatprep.subr.mxu0 0.0
        %1658 = vmatpush1.msra.mxu0 0.0
        %1659 = vmatprep.subr.mxu0 0.0
        %1660 = vmatpush1.msra.mxu0 0.0
        %1661 = vmatprep.subr.mxu0 %v834
        %1662 = vmatpush1.msra.mxu0 %v833
        %1663 = vmatprep.subr.mxu0 %v832
        %1664 = vmatpush1.msra.mxu0 %v831
        %1665 = vmatprep.subr.mxu0 %v830
        %1666 = vmatpush1.msra.mxu0 %v829
        %1667 = vmatprep.subr.mxu0 %v828
        %1668 = vmatpush1.msra.mxu0 %v827
        %1669 = vmatprep.subr.mxu0 %v826
        %1670 = vmatpush1.msra.mxu0 %v825
        %1671 = vmatprep.subr.mxu0 %v824
        %1672 = vmatpush1.msra.mxu0 %v823
        %1673 = vmatprep.subr.mxu0 %v822
        %1674 = vmatpush1.msra.mxu0 %v821
        %1675 = vmatprep.subr.mxu0 %v820
        %1676 = vmatpush1.msra.mxu0 %v819
        %1677 = vmatprep.subr.mxu0 0.0
        %1678 = vmatpush2.msra.mxu0 0.0
        %1679 = vmatprep.subr.mxu0 0.0
        %1680 = vmatpush2.msra.mxu0 0.0
        %1681 = vmatprep.subr.mxu0 0.0
        %1682 = vmatpush2.msra.mxu0 0.0
        %1683 = vmatprep.subr.mxu0 0.0
        %1684 = vmatpush2.msra.mxu0 0.0
        %1685 = vmatprep.subr.mxu0 0.0
        %1686 = vmatpush2.msra.mxu0 0.0
        %1687 = vmatprep.subr.mxu0 0.0
        %1688 = vmatpush2.msra.mxu0 0.0
        %1689 = vmatprep.subr.mxu0 0.0
        %1690 = vmatpush2.msra.mxu0 0.0
        %1691 = vmatprep.subr.mxu0 0.0
        %1692 = vmatpush2.msra.mxu0 0.0
        %1693 = vmatprep.subr.mxu0 0.0
        %1694 = vmatpush2.msra.mxu0 0.0
        %1695 = vmatprep.subr.mxu0 0.0
        %1696 = vmatpush2.msra.mxu0 0.0
        %1697 = vmatprep.subr.mxu0 0.0
        %1698 = vmatpush2.msra.mxu0 0.0
        %1699 = vmatprep.subr.mxu0 0.0
        %1700 = vmatpush2.msra.mxu0 0.0
        %1701 = vmatprep.subr.mxu0 0.0
        %1702 = vmatpush2.msra.mxu0 0.0
        %1703 = vmatprep.subr.mxu0 0.0
        %1704 = vmatpush2.msra.mxu0 0.0
        %1705 = vmatprep.subr.mxu0 0.0
        %1706 = vmatpush2.msra.mxu0 0.0
        %1707 = vmatprep.subr.mxu0 0.0
        %1708 = vmatpush2.msra.mxu0 0.0
        %1709 = vmatprep.mubr.f32.mxu0 0.0
        %1710 = vmatmul.mubr.f32.gmra.mxu0 %v1640
        %v1711 = vpop.f32.mrf.mxu0
        %v1712 = vadd.f32 %v852, %v1711
        %v1713 = vpop.f32.mrf.mxu0
        %v1714 = vadd.f32 %v856, %v1713
        %1715 = vmatprep.mubr.f32.mxu0 0.0
        %1716 = vmatmul.mubr.f32.gmra.mxu0 %v1643
        %v1717 = vpop.f32.mrf.mxu0
        %v1718 = vadd.f32 %v852, %v1717
        %v1719 = vpop.f32.mrf.mxu0
        %v1720 = vadd.f32 %v856, %v1719
        %1721 = vdwg.mxu0
        %v1722 = vadd.f32 %v1612, %v1712
        %v1723 = vadd.f32 %v1613, %v1718
        %v1724 = vmul.f32 %v1722, 0.5
        %v1725 = vmul.f32 %v1723, 0.5
        %v1726 = vtanh.pop %v1724
        %v1727 = vtanh.pop %v1725
        %v1728 = vadd.f32 %v1726, 1.0
        %v1729 = vadd.f32 %v1727, 1.0
        %v1730 = vmul.f32 %v1728, 0.5
        %v1731 = vmul.f32 %v1729, 0.5
        %1734 = vrot.lane.b32.xlu0 %v1712, 64
        %v1735 = vpop.permute.xlu0 %1734
        %1736 = vrot.lane.b32.xlu0 %v1718, 64
        %v1737 = vpop.permute.xlu0 %1736
        %v1740 = vmul.f32 %v1730, %v1735
        %v1741 = vmul.f32 %v1731, %v1737
        %1744 = vrot.lane.b32.xlu0 %v1740, 64
        %v1745 = vpop.permute.xlu0 %1744
        %1746 = vrot.lane.b32.xlu0 %v1741, 64
        %v1747 = vpop.permute.xlu0 %1746
        %v1750 = vadd.f32 %v1612, %v1745
        %v1751 = vadd.f32 %v1613, %v1747
        %v1752 = vtanh.pop %v1750
        %v1753 = vtanh.pop %v1751
        %v1754 = vsub.f32 1.0, %v1730
        %v1755 = vsub.f32 1.0, %v1731
        %1758 = vrot.lane.b32.xlu0 %v1752, 96
        %v1759 = vpop.permute.xlu0 %1758
        %1760 = vrot.lane.b32.xlu0 %v1753, 96
        %v1761 = vpop.permute.xlu0 %1760
        %v1764 = vmul.f32 %v1754, %v1759
        %v1765 = vmul.f32 %v1755, %v1761
        %v1766 = vmul.f32 %v1730, %v1577
        %v1767 = vmul.f32 %v1731, %v1578
        %v1768 = vadd.f32 %v1764, %v1766
        %v1769 = vadd.f32 %v1765, %v1767
        %v1770 = vadd.f32 %v1617, %v1712
        %v1771 = vadd.f32 %v1618, %v1714
        %v1772 = vadd.f32 %v1619, %v1718
        %v1773 = vadd.f32 %v1620, %v1720
        %v1774 = vmul.f32 %v1770, 0.5
        %v1775 = vmul.f32 %v1771, 0.5
        %v1776 = vmul.f32 %v1772, 0.5
        %v1777 = vmul.f32 %v1773, 0.5
        %v1778 = vtanh.pop %v1774
        %v1779 = vtanh.pop %v1775
        %v1780 = vtanh.pop %v1776
        %v1781 = vtanh.pop %v1777
        %v1782 = vadd.f32 %v1778, 1.0
        %v1783 = vadd.f32 %v1779, 1.0
        %v1784 = vadd.f32 %v1780, 1.0
        %v1785 = vadd.f32 %v1781, 1.0
        %v1786 = vmul.f32 %v1782, 0.5
        %v1787 = vmul.f32 %v1783, 0.5
        %v1788 = vmul.f32 %v1784, 0.5
        %v1789 = vmul.f32 %v1785, 0.5
        %1792 = vrot.lane.b32.xlu0 %v1714, 64
        %v1793 = vpop.permute.xlu0 %1792
        %1794 = vrot.lane.b32.xlu0 %v1720, 64
        %v1795 = vpop.permute.xlu0 %1794
        %v1798 = vmul.f32 %v1786, %v1793
        %v1799 = vmul.f32 %v1788, %v1795
        %1802 = vrot.lane.b32.xlu0 %v1798, 64
        %v1803 = vpop.permute.xlu0 %1802
        %1804 = vrot.lane.b32.xlu0 %v1799, 64
        %v1805 = vpop.permute.xlu0 %1804
        %v1808 = vadd.f32 %v1618, %v1803
        %v1809 = vadd.f32 %v1620, %v1805
        %v1810 = vtanh.pop %v1808
        %v1811 = vtanh.pop %v1809
        %v1812 = vsub.f32 1.0, %v1787
        %v1813 = vsub.f32 1.0, %v1789
        %1816 = vrot.lane.b32.xlu0 %v1810, 96
        %v1817 = vpop.permute.xlu0 %1816
        %1818 = vrot.lane.b32.xlu0 %v1811, 96
        %v1819 = vpop.permute.xlu0 %1818
        %v1822 = vmul.f32 %v1812, %v1817
        %v1823 = vmul.f32 %v1813, %v1819
        %v1824 = vmul.f32 %v1787, %v1589
        %v1825 = vmul.f32 %v1789, %v1590
        %v1826 = vadd.f32 %v1822, %v1824
        %v1827 = vadd.f32 %v1823, %v1825
        %vm1828 = vcmp.gt.s32.totalorder %v494, 3
        %vm1829 = vcmp.gt.s32.totalorder %v495, 3
        %vm1830 = vcmp.gt.s32.totalorder %v494, 6
        %vm1831 = vcmp.gt.s32.totalorder %v495, 6
        %v1832 = vsel %vm1828, 1, 0
        %v1833 = vsel %vm1829, 1, 0
        %1834 = vset.pattern.permute.xlu0 0
        %1835 = vperm.xlu0 %1834, %v1832
        %v1836 = vpop.permute.xlu0 %1835
        %1837 = vset.pattern.permute.xlu0 0
        %1838 = vperm.xlu0 %1837, %v1833
        %v1839 = vpop.permute.xlu0 %1838
        %vm1840 = vcmp.eq.s32.totalorder %v1836, 1
        %vm1841 = vcmp.eq.s32.totalorder %v1839, 1
        %v1842 = vsel %vm1840, %v1768, %v1577
        %v1843 = vsel %vm1841, %v1769, %v1578
        %v1844 = vsel %vm1830, 1, 0
        %v1845 = vsel %vm1831, 1, 0
        %1846 = vset.pattern.permute.xlu0 0
        %1847 = vperm.xlu0 %1846, %v1844
        %v1848 = vpop.permute.xlu0 %1847
        %1849 = vset.pattern.permute.xlu0 0
        %1850 = vperm.xlu0 %1849, %v1845
        %v1851 = vpop.permute.xlu0 %1850
        %vm1852 = vcmp.eq.s32.totalorder %v1848, 1
        %vm1853 = vcmp.eq.s32.totalorder %v1851, 1
        %v1854 = vsel %vm1852, %v1826, %v1589
        %v1855 = vsel %vm1853, %v1827, %v1590
        %v1856 = vsel %vm1840, %v1768, 0.0
        %v1857 = vsel %vm1841, %v1769, 0.0
        %v1858 = vsel %vm1852, %v1826, 0.0
        %v1859 = vsel %vm1853, %v1827, 0.0
        %1862 = vrot.lane.b32.xlu0 %v1856, 96
        %v1863 = vpop.permute.xlu0 %1862
        %1864 = vrot.lane.b32.xlu0 %v1857, 96
        %v1865 = vpop.permute.xlu0 %1864
        %s1868 = scalar_lea.vmem [#allocation3], 48
        %1869 = vst.msk [vmem:[%s1868] sm:$0xff] %vm1081, %v1863
        %1870 = vst.msk [vmem:[%s1868 + $0x8] sm:$0xff] %vm1081, %v1865
        %s1871 = scalar_lea.vmem [#allocation4], 96
        %1872 = vst.msk [vmem:[%s1871] sm:$0xff] %vm1081, %v1858
        %1873 = vst.msk [vmem:[%s1871 + $0x8] sm:$0xff] %vm1081, %v1859
        %s1874 = smul.u32 8, 2
        %s1875 = smul.addr %s1874, 8
        %s1876 = scalar_lea.vmem [#allocation2], %s1875
        %v1877 = vld [vmem:[%s1876] sm:$0xff]
        %v1878 = vld [vmem:[%s1876 + $0x10] sm:$0xff]
        %s1879 = smul.u32 10, 2
        %s1880 = smul.addr %s1879, 8
        %s1881 = scalar_lea.vmem [#allocation2], %s1880
        %v1882 = vld [vmem:[%s1881] sm:$0xff]
        %v1883 = vld [vmem:[%s1881 + $0x8] sm:$0xff]
        %v1884 = vld [vmem:[%s1881 + $0x10] sm:$0xff]
        %v1885 = vld [vmem:[%s1881 + $0x18] sm:$0xff]
        %1888 = vrot.lane.b32.xlu0 %v1842, 96
        %v1889 = vpop.permute.xlu0 %1888
        %1890 = vrot.lane.b32.xlu0 %v1843, 96
        %v1891 = vpop.permute.xlu0 %1890
        %1896 = vrot.lane.b32.xlu0 %v1854, 32
        %v1897 = vpop.permute.xlu0 %1896
        %1898 = vrot.lane.b32.xlu0 %v1855, 32
        %v1899 = vpop.permute.xlu0 %1898
        %v1902 = vsel %vm1081, %v1889, %v1897
        %v1903 = vsel %vm1081, %v1891, %v1899
        %v1905 = vsel %vm779, %v1902, 0
        %v1908 = vsel %vm779, %v1903, 0
        %1910 = vmatprep.subr.mxu0 0.0
        %1911 = vmatpush1.msra.mxu0 0.0
        %1912 = vmatprep.subr.mxu0 0.0
        %1913 = vmatpush1.msra.mxu0 0.0
        %1914 = vmatprep.subr.mxu0 0.0
        %1915 = vmatpush1.msra.mxu0 0.0
        %1916 = vmatprep.subr.mxu0 0.0
        %1917 = vmatpush1.msra.mxu0 0.0
        %1918 = vmatprep.subr.mxu0 0.0
        %1919 = vmatpush1.msra.mxu0 0.0
        %1920 = vmatprep.subr.mxu0 0.0
        %1921 = vmatpush1.msra.mxu0 0.0
        %1922 = vmatprep.subr.mxu0 0.0
        %1923 = vmatpush1.msra.mxu0 0.0
        %1924 = vmatprep.subr.mxu0 0.0
        %1925 = vmatpush1.msra.mxu0 0.0
        %1926 = vmatprep.subr.mxu0 %v834
        %1927 = vmatpush1.msra.mxu0 %v833
        %1928 = vmatprep.subr.mxu0 %v832
        %1929 = vmatpush1.msra.mxu0 %v831
        %1930 = vmatprep.subr.mxu0 %v830
        %1931 = vmatpush1.msra.mxu0 %v829
        %1932 = vmatprep.subr.mxu0 %v828
        %1933 = vmatpush1.msra.mxu0 %v827
        %1934 = vmatprep.subr.mxu0 %v826
        %1935 = vmatpush1.msra.mxu0 %v825
        %1936 = vmatprep.subr.mxu0 %v824
        %1937 = vmatpush1.msra.mxu0 %v823
        %1938 = vmatprep.subr.mxu0 %v822
        %1939 = vmatpush1.msra.mxu0 %v821
        %1940 = vmatprep.subr.mxu0 %v820
        %1941 = vmatpush1.msra.mxu0 %v819
        %1942 = vmatprep.subr.mxu0 0.0
        %1943 = vmatpush2.msra.mxu0 0.0
        %1944 = vmatprep.subr.mxu0 0.0
        %1945 = vmatpush2.msra.mxu0 0.0
        %1946 = vmatprep.subr.mxu0 0.0
        %1947 = vmatpush2.msra.mxu0 0.0
        %1948 = vmatprep.subr.mxu0 0.0
        %1949 = vmatpush2.msra.mxu0 0.0
        %1950 = vmatprep.subr.mxu0 0.0
        %1951 = vmatpush2.msra.mxu0 0.0
        %1952 = vmatprep.subr.mxu0 0.0
        %1953 = vmatpush2.msra.mxu0 0.0
        %1954 = vmatprep.subr.mxu0 0.0
        %1955 = vmatpush2.msra.mxu0 0.0
        %1956 = vmatprep.subr.mxu0 0.0
        %1957 = vmatpush2.msra.mxu0 0.0
        %1958 = vmatprep.subr.mxu0 0.0
        %1959 = vmatpush2.msra.mxu0 0.0
        %1960 = vmatprep.subr.mxu0 0.0
        %1961 = vmatpush2.msra.mxu0 0.0
        %1962 = vmatprep.subr.mxu0 0.0
        %1963 = vmatpush2.msra.mxu0 0.0
        %1964 = vmatprep.subr.mxu0 0.0
        %1965 = vmatpush2.msra.mxu0 0.0
        %1966 = vmatprep.subr.mxu0 0.0
        %1967 = vmatpush2.msra.mxu0 0.0
        %1968 = vmatprep.subr.mxu0 0.0
        %1969 = vmatpush2.msra.mxu0 0.0
        %1970 = vmatprep.subr.mxu0 0.0
        %1971 = vmatpush2.msra.mxu0 0.0
        %1972 = vmatprep.subr.mxu0 0.0
        %1973 = vmatpush2.msra.mxu0 0.0
        %1974 = vmatprep.mubr.f32.mxu0 0.0
        %1975 = vmatmul.mubr.f32.gmra.mxu0 %v1905
        %v1976 = vpop.f32.mrf.mxu0
        %v1977 = vadd.f32 %v852, %v1976
        %v1978 = vpop.f32.mrf.mxu0
        %v1979 = vadd.f32 %v856, %v1978
        %1980 = vmatprep.mubr.f32.mxu0 0.0
        %1981 = vmatmul.mubr.f32.gmra.mxu0 %v1908
        %v1982 = vpop.f32.mrf.mxu0
        %v1983 = vadd.f32 %v852, %v1982
        %v1984 = vpop.f32.mrf.mxu0
        %v1985 = vadd.f32 %v856, %v1984
        %1986 = vdwg.mxu0
        %v1987 = vadd.f32 %v1877, %v1977
        %v1988 = vadd.f32 %v1878, %v1983
        %v1989 = vmul.f32 %v1987, 0.5
        %v1990 = vmul.f32 %v1988, 0.5
        %v1991 = vtanh.pop %v1989
        %v1992 = vtanh.pop %v1990
        %v1993 = vadd.f32 %v1991, 1.0
        %v1994 = vadd.f32 %v1992, 1.0
        %v1995 = vmul.f32 %v1993, 0.5
        %v1996 = vmul.f32 %v1994, 0.5
        %1999 = vrot.lane.b32.xlu0 %v1977, 64
        %v2000 = vpop.permute.xlu0 %1999
        %2001 = vrot.lane.b32.xlu0 %v1983, 64
        %v2002 = vpop.permute.xlu0 %2001
        %v2005 = vmul.f32 %v1995, %v2000
        %v2006 = vmul.f32 %v1996, %v2002
        %2009 = vrot.lane.b32.xlu0 %v2005, 64
        %v2010 = vpop.permute.xlu0 %2009
        %2011 = vrot.lane.b32.xlu0 %v2006, 64
        %v2012 = vpop.permute.xlu0 %2011
        %v2015 = vadd.f32 %v1877, %v2010
        %v2016 = vadd.f32 %v1878, %v2012
        %v2017 = vtanh.pop %v2015
        %v2018 = vtanh.pop %v2016
        %v2019 = vsub.f32 1.0, %v1995
        %v2020 = vsub.f32 1.0, %v1996
        %2023 = vrot.lane.b32.xlu0 %v2017, 96
        %v2024 = vpop.permute.xlu0 %2023
        %2025 = vrot.lane.b32.xlu0 %v2018, 96
        %v2026 = vpop.permute.xlu0 %2025
        %v2029 = vmul.f32 %v2019, %v2024
        %v2030 = vmul.f32 %v2020, %v2026
        %v2031 = vmul.f32 %v1995, %v1842
        %v2032 = vmul.f32 %v1996, %v1843
        %v2033 = vadd.f32 %v2029, %v2031
        %v2034 = vadd.f32 %v2030, %v2032
        %v2035 = vadd.f32 %v1882, %v1977
        %v2036 = vadd.f32 %v1883, %v1979
        %v2037 = vadd.f32 %v1884, %v1983
        %v2038 = vadd.f32 %v1885, %v1985
        %v2039 = vmul.f32 %v2035, 0.5
        %v2040 = vmul.f32 %v2036, 0.5
        %v2041 = vmul.f32 %v2037, 0.5
        %v2042 = vmul.f32 %v2038, 0.5
        %v2043 = vtanh.pop %v2039
        %v2044 = vtanh.pop %v2040
        %v2045 = vtanh.pop %v2041
        %v2046 = vtanh.pop %v2042
        %v2047 = vadd.f32 %v2043, 1.0
        %v2048 = vadd.f32 %v2044, 1.0
        %v2049 = vadd.f32 %v2045, 1.0
        %v2050 = vadd.f32 %v2046, 1.0
        %v2051 = vmul.f32 %v2047, 0.5
        %v2052 = vmul.f32 %v2048, 0.5
        %v2053 = vmul.f32 %v2049, 0.5
        %v2054 = vmul.f32 %v2050, 0.5
        %2057 = vrot.lane.b32.xlu0 %v1979, 64
        %v2058 = vpop.permute.xlu0 %2057
        %2059 = vrot.lane.b32.xlu0 %v1985, 64
        %v2060 = vpop.permute.xlu0 %2059
        %v2063 = vmul.f32 %v2051, %v2058
        %v2064 = vmul.f32 %v2053, %v2060
        %2067 = vrot.lane.b32.xlu0 %v2063, 64
        %v2068 = vpop.permute.xlu0 %2067
        %2069 = vrot.lane.b32.xlu0 %v2064, 64
        %v2070 = vpop.permute.xlu0 %2069
        %v2073 = vadd.f32 %v1883, %v2068
        %v2074 = vadd.f32 %v1885, %v2070
        %v2075 = vtanh.pop %v2073
        %v2076 = vtanh.pop %v2074
        %v2077 = vsub.f32 1.0, %v2052
        %v2078 = vsub.f32 1.0, %v2054
        %2081 = vrot.lane.b32.xlu0 %v2075, 96
        %v2082 = vpop.permute.xlu0 %2081
        %2083 = vrot.lane.b32.xlu0 %v2076, 96
        %v2084 = vpop.permute.xlu0 %2083
        %v2087 = vmul.f32 %v2077, %v2082
        %v2088 = vmul.f32 %v2078, %v2084
        %v2089 = vmul.f32 %v2052, %v1854
        %v2090 = vmul.f32 %v2054, %v1855
        %v2091 = vadd.f32 %v2087, %v2089
        %v2092 = vadd.f32 %v2088, %v2090
        %vm2093 = vcmp.gt.s32.totalorder %v494, 4
        %vm2094 = vcmp.gt.s32.totalorder %v495, 4
        %vm2095 = vcmp.gt.s32.totalorder %v494, 5
        %vm2096 = vcmp.gt.s32.totalorder %v495, 5
        %v2097 = vsel %vm2093, 1, 0
        %v2098 = vsel %vm2094, 1, 0
        %2099 = vset.pattern.permute.xlu0 0
        %2100 = vperm.xlu0 %2099, %v2097
        %v2101 = vpop.permute.xlu0 %2100
        %2102 = vset.pattern.permute.xlu0 0
        %2103 = vperm.xlu0 %2102, %v2098
        %v2104 = vpop.permute.xlu0 %2103
        %vm2105 = vcmp.eq.s32.totalorder %v2101, 1
        %vm2106 = vcmp.eq.s32.totalorder %v2104, 1
        %v2107 = vsel %vm2105, %v2033, %v1842
        %v2108 = vsel %vm2106, %v2034, %v1843
        %v2109 = vsel %vm2095, 1, 0
        %v2110 = vsel %vm2096, 1, 0
        %2111 = vset.pattern.permute.xlu0 0
        %2112 = vperm.xlu0 %2111, %v2109
        %v2113 = vpop.permute.xlu0 %2112
        %2114 = vset.pattern.permute.xlu0 0
        %2115 = vperm.xlu0 %2114, %v2110
        %v2116 = vpop.permute.xlu0 %2115
        %vm2117 = vcmp.eq.s32.totalorder %v2113, 1
        %vm2118 = vcmp.eq.s32.totalorder %v2116, 1
        %v2119 = vsel %vm2117, %v2091, %v1854
        %v2120 = vsel %vm2118, %v2092, %v1855
        %v2121 = vsel %vm2105, %v2033, 0.0
        %v2122 = vsel %vm2106, %v2034, 0.0
        %v2123 = vsel %vm2117, %v2091, 0.0
        %v2124 = vsel %vm2118, %v2092, 0.0
        %2127 = vrot.lane.b32.xlu0 %v2121, 96
        %v2128 = vpop.permute.xlu0 %2127
        %2129 = vrot.lane.b32.xlu0 %v2122, 96
        %v2130 = vpop.permute.xlu0 %2129
        %s2133 = scalar_lea.vmem [#allocation3], 64
        %2134 = vst.msk [vmem:[%s2133] sm:$0xff] %vm1081, %v2128
        %2135 = vst.msk [vmem:[%s2133 + $0x8] sm:$0xff] %vm1081, %v2130
        %s2136 = scalar_lea.vmem [#allocation4], 80
        %2137 = vst.msk [vmem:[%s2136] sm:$0xff] %vm1081, %v2123
        %2138 = vst.msk [vmem:[%s2136 + $0x8] sm:$0xff] %vm1081, %v2124
        %v2139 = vld [vmem:[%s1881] sm:$0xff]
        %v2140 = vld [vmem:[%s1881 + $0x10] sm:$0xff]
        %v2141 = vld [vmem:[%s1876] sm:$0xff]
        %v2142 = vld [vmem:[%s1876 + $0x8] sm:$0xff]
        %v2143 = vld [vmem:[%s1876 + $0x10] sm:$0xff]
        %v2144 = vld [vmem:[%s1876 + $0x18] sm:$0xff]
        %2147 = vrot.lane.b32.xlu0 %v2107, 96
        %v2148 = vpop.permute.xlu0 %2147
        %2149 = vrot.lane.b32.xlu0 %v2108, 96
        %v2150 = vpop.permute.xlu0 %2149
        %2155 = vrot.lane.b32.xlu0 %v2119, 32
        %v2156 = vpop.permute.xlu0 %2155
        %2157 = vrot.lane.b32.xlu0 %v2120, 32
        %v2158 = vpop.permute.xlu0 %2157
        %v2161 = vsel %vm1081, %v2148, %v2156
        %v2162 = vsel %vm1081, %v2150, %v2158
        %v2164 = vsel %vm779, %v2161, 0
        %v2167 = vsel %vm779, %v2162, 0
        %2169 = vmatprep.subr.mxu0 0.0
        %2170 = vmatpush1.msra.mxu0 0.0
        %2171 = vmatprep.subr.mxu0 0.0
        %2172 = vmatpush1.msra.mxu0 0.0
        %2173 = vmatprep.subr.mxu0 0.0
        %2174 = vmatpush1.msra.mxu0 0.0
        %2175 = vmatprep.subr.mxu0 0.0
        %2176 = vmatpush1.msra.mxu0 0.0
        %2177 = vmatprep.subr.mxu0 0.0
        %2178 = vmatpush1.msra.mxu0 0.0
        %2179 = vmatprep.subr.mxu0 0.0
        %2180 = vmatpush1.msra.mxu0 0.0
        %2181 = vmatprep.subr.mxu0 0.0
        %2182 = vmatpush1.msra.mxu0 0.0
        %2183 = vmatprep.subr.mxu0 0.0
        %2184 = vmatpush1.msra.mxu0 0.0
        %2185 = vmatprep.subr.mxu0 %v834
        %2186 = vmatpush1.msra.mxu0 %v833
        %2187 = vmatprep.subr.mxu0 %v832
        %2188 = vmatpush1.msra.mxu0 %v831
        %2189 = vmatprep.subr.mxu0 %v830
        %2190 = vmatpush1.msra.mxu0 %v829
        %2191 = vmatprep.subr.mxu0 %v828
        %2192 = vmatpush1.msra.mxu0 %v827
        %2193 = vmatprep.subr.mxu0 %v826
        %2194 = vmatpush1.msra.mxu0 %v825
        %2195 = vmatprep.subr.mxu0 %v824
        %2196 = vmatpush1.msra.mxu0 %v823
        %2197 = vmatprep.subr.mxu0 %v822
        %2198 = vmatpush1.msra.mxu0 %v821
        %2199 = vmatprep.subr.mxu0 %v820
        %2200 = vmatpush1.msra.mxu0 %v819
        %2201 = vmatprep.subr.mxu0 0.0
        %2202 = vmatpush2.msra.mxu0 0.0
        %2203 = vmatprep.subr.mxu0 0.0
        %2204 = vmatpush2.msra.mxu0 0.0
        %2205 = vmatprep.subr.mxu0 0.0
        %2206 = vmatpush2.msra.mxu0 0.0
        %2207 = vmatprep.subr.mxu0 0.0
        %2208 = vmatpush2.msra.mxu0 0.0
        %2209 = vmatprep.subr.mxu0 0.0
        %2210 = vmatpush2.msra.mxu0 0.0
        %2211 = vmatprep.subr.mxu0 0.0
        %2212 = vmatpush2.msra.mxu0 0.0
        %2213 = vmatprep.subr.mxu0 0.0
        %2214 = vmatpush2.msra.mxu0 0.0
        %2215 = vmatprep.subr.mxu0 0.0
        %2216 = vmatpush2.msra.mxu0 0.0
        %2217 = vmatprep.subr.mxu0 0.0
        %2218 = vmatpush2.msra.mxu0 0.0
        %2219 = vmatprep.subr.mxu0 0.0
        %2220 = vmatpush2.msra.mxu0 0.0
        %2221 = vmatprep.subr.mxu0 0.0
        %2222 = vmatpush2.msra.mxu0 0.0
        %2223 = vmatprep.subr.mxu0 0.0
        %2224 = vmatpush2.msra.mxu0 0.0
        %2225 = vmatprep.subr.mxu0 0.0
        %2226 = vmatpush2.msra.mxu0 0.0
        %2227 = vmatprep.subr.mxu0 0.0
        %2228 = vmatpush2.msra.mxu0 0.0
        %2229 = vmatprep.subr.mxu0 0.0
        %2230 = vmatpush2.msra.mxu0 0.0
        %2231 = vmatprep.subr.mxu0 0.0
        %2232 = vmatpush2.msra.mxu0 0.0
        %2233 = vmatprep.mubr.f32.mxu0 0.0
        %2234 = vmatmul.mubr.f32.gmra.mxu0 %v2164
        %v2235 = vpop.f32.mrf.mxu0
        %v2236 = vadd.f32 %v852, %v2235
        %v2237 = vpop.f32.mrf.mxu0
        %v2238 = vadd.f32 %v856, %v2237
        %2239 = vmatprep.mubr.f32.mxu0 0.0
        %2240 = vmatmul.mubr.f32.gmra.mxu0 %v2167
        %v2241 = vpop.f32.mrf.mxu0
        %v2242 = vadd.f32 %v852, %v2241
        %v2243 = vpop.f32.mrf.mxu0
        %v2244 = vadd.f32 %v856, %v2243
        %2245 = vdwg.mxu0
        %v2246 = vadd.f32 %v2139, %v2236
        %v2247 = vadd.f32 %v2140, %v2242
        %v2248 = vmul.f32 %v2246, 0.5
        %v2249 = vmul.f32 %v2247, 0.5
        %v2250 = vtanh.pop %v2248
        %v2251 = vtanh.pop %v2249
        %v2252 = vadd.f32 %v2250, 1.0
        %v2253 = vadd.f32 %v2251, 1.0
        %v2254 = vmul.f32 %v2252, 0.5
        %v2255 = vmul.f32 %v2253, 0.5
        %2258 = vrot.lane.b32.xlu0 %v2236, 64
        %v2259 = vpop.permute.xlu0 %2258
        %2260 = vrot.lane.b32.xlu0 %v2242, 64
        %v2261 = vpop.permute.xlu0 %2260
        %v2264 = vmul.f32 %v2254, %v2259
        %v2265 = vmul.f32 %v2255, %v2261
        %2268 = vrot.lane.b32.xlu0 %v2264, 64
        %v2269 = vpop.permute.xlu0 %2268
        %2270 = vrot.lane.b32.xlu0 %v2265, 64
        %v2271 = vpop.permute.xlu0 %2270
        %v2274 = vadd.f32 %v2139, %v2269
        %v2275 = vadd.f32 %v2140, %v2271
        %v2276 = vtanh.pop %v2274
        %v2277 = vtanh.pop %v2275
        %v2278 = vsub.f32 1.0, %v2254
        %v2279 = vsub.f32 1.0, %v2255
        %2282 = vrot.lane.b32.xlu0 %v2276, 96
        %v2283 = vpop.permute.xlu0 %2282
        %2284 = vrot.lane.b32.xlu0 %v2277, 96
        %v2285 = vpop.permute.xlu0 %2284
        %v2288 = vmul.f32 %v2278, %v2283
        %v2289 = vmul.f32 %v2279, %v2285
        %v2290 = vmul.f32 %v2254, %v2107
        %v2291 = vmul.f32 %v2255, %v2108
        %v2292 = vadd.f32 %v2288, %v2290
        %v2293 = vadd.f32 %v2289, %v2291
        %v2294 = vadd.f32 %v2141, %v2236
        %v2295 = vadd.f32 %v2142, %v2238
        %v2296 = vadd.f32 %v2143, %v2242
        %v2297 = vadd.f32 %v2144, %v2244
        %v2298 = vmul.f32 %v2294, 0.5
        %v2299 = vmul.f32 %v2295, 0.5
        %v2300 = vmul.f32 %v2296, 0.5
        %v2301 = vmul.f32 %v2297, 0.5
        %v2302 = vtanh.pop %v2298
        %v2303 = vtanh.pop %v2299
        %v2304 = vtanh.pop %v2300
        %v2305 = vtanh.pop %v2301
        %v2306 = vadd.f32 %v2302, 1.0
        %v2307 = vadd.f32 %v2303, 1.0
        %v2308 = vadd.f32 %v2304, 1.0
        %v2309 = vadd.f32 %v2305, 1.0
        %v2310 = vmul.f32 %v2306, 0.5
        %v2311 = vmul.f32 %v2307, 0.5
        %v2312 = vmul.f32 %v2308, 0.5
        %v2313 = vmul.f32 %v2309, 0.5
        %2316 = vrot.lane.b32.xlu0 %v2238, 64
        %v2317 = vpop.permute.xlu0 %2316
        %2318 = vrot.lane.b32.xlu0 %v2244, 64
        %v2319 = vpop.permute.xlu0 %2318
        %v2322 = vmul.f32 %v2310, %v2317
        %v2323 = vmul.f32 %v2312, %v2319
        %2326 = vrot.lane.b32.xlu0 %v2322, 64
        %v2327 = vpop.permute.xlu0 %2326
        %2328 = vrot.lane.b32.xlu0 %v2323, 64
        %v2329 = vpop.permute.xlu0 %2328
        %v2332 = vadd.f32 %v2142, %v2327
        %v2333 = vadd.f32 %v2144, %v2329
        %v2334 = vtanh.pop %v2332
        %v2335 = vtanh.pop %v2333
        %v2336 = vsub.f32 1.0, %v2311
        %v2337 = vsub.f32 1.0, %v2313
        %2340 = vrot.lane.b32.xlu0 %v2334, 96
        %v2341 = vpop.permute.xlu0 %2340
        %2342 = vrot.lane.b32.xlu0 %v2335, 96
        %v2343 = vpop.permute.xlu0 %2342
        %v2346 = vmul.f32 %v2336, %v2341
        %v2347 = vmul.f32 %v2337, %v2343
        %v2348 = vmul.f32 %v2311, %v2119
        %v2349 = vmul.f32 %v2313, %v2120
        %v2350 = vadd.f32 %v2346, %v2348
        %v2351 = vadd.f32 %v2347, %v2349
        %v2352 = vsel %vm2117, %v2292, %v2107
        %v2353 = vsel %vm2118, %v2293, %v2108
        %v2354 = vsel %vm2105, %v2350, %v2119
        %v2355 = vsel %vm2106, %v2351, %v2120
        %v2356 = vsel %vm2117, %v2292, 0.0
        %v2357 = vsel %vm2118, %v2293, 0.0
        %v2358 = vsel %vm2105, %v2350, 0.0
        %v2359 = vsel %vm2106, %v2351, 0.0
        %2362 = vrot.lane.b32.xlu0 %v2356, 96
        %v2363 = vpop.permute.xlu0 %2362
        %2364 = vrot.lane.b32.xlu0 %v2357, 96
        %v2365 = vpop.permute.xlu0 %2364
        %s2368 = scalar_lea.vmem [#allocation3], 80
        %2369 = vst.msk [vmem:[%s2368] sm:$0xff] %vm1081, %v2363
        %2370 = vst.msk [vmem:[%s2368 + $0x8] sm:$0xff] %vm1081, %v2365
        %s2371 = scalar_lea.vmem [#allocation4], 64
        %2372 = vst.msk [vmem:[%s2371] sm:$0xff] %vm1081, %v2358
        %2373 = vst.msk [vmem:[%s2371 + $0x8] sm:$0xff] %vm1081, %v2359
        %v2374 = vld [vmem:[%s1616] sm:$0xff]
        %v2375 = vld [vmem:[%s1616 + $0x10] sm:$0xff]
        %v2376 = vld [vmem:[%s1611] sm:$0xff]
        %v2377 = vld [vmem:[%s1611 + $0x8] sm:$0xff]
        %v2378 = vld [vmem:[%s1611 + $0x10] sm:$0xff]
        %v2379 = vld [vmem:[%s1611 + $0x18] sm:$0xff]
        %2382 = vrot.lane.b32.xlu0 %v2352, 96
        %v2383 = vpop.permute.xlu0 %2382
        %2384 = vrot.lane.b32.xlu0 %v2353, 96
        %v2385 = vpop.permute.xlu0 %2384
        %2390 = vrot.lane.b32.xlu0 %v2354, 32
        %v2391 = vpop.permute.xlu0 %2390
        %2392 = vrot.lane.b32.xlu0 %v2355, 32
        %v2393 = vpop.permute.xlu0 %2392
        %v2396 = vsel %vm1081, %v2383, %v2391
        %v2397 = vsel %vm1081, %v2385, %v2393
        %v2399 = vsel %vm779, %v2396, 0
        %v2402 = vsel %vm779, %v2397, 0
        %2404 = vmatprep.subr.mxu0 0.0
        %2405 = vmatpush1.msra.mxu0 0.0
        %2406 = vmatprep.subr.mxu0 0.0
        %2407 = vmatpush1.msra.mxu0 0.0
        %2408 = vmatprep.subr.mxu0 0.0
        %2409 = vmatpush1.msra.mxu0 0.0
        %2410 = vmatprep.subr.mxu0 0.0
        %2411 = vmatpush1.msra.mxu0 0.0
        %2412 = vmatprep.subr.mxu0 0.0
        %2413 = vmatpush1.msra.mxu0 0.0
        %2414 = vmatprep.subr.mxu0 0.0
        %2415 = vmatpush1.msra.mxu0 0.0
        %2416 = vmatprep.subr.mxu0 0.0
        %2417 = vmatpush1.msra.mxu0 0.0
        %2418 = vmatprep.subr.mxu0 0.0
        %2419 = vmatpush1.msra.mxu0 0.0
        %2420 = vmatprep.subr.mxu0 %v834
        %2421 = vmatpush1.msra.mxu0 %v833
        %2422 = vmatprep.subr.mxu0 %v832
        %2423 = vmatpush1.msra.mxu0 %v831
        %2424 = vmatprep.subr.mxu0 %v830
        %2425 = vmatpush1.msra.mxu0 %v829
        %2426 = vmatprep.subr.mxu0 %v828
        %2427 = vmatpush1.msra.mxu0 %v827
        %2428 = vmatprep.subr.mxu0 %v826
        %2429 = vmatpush1.msra.mxu0 %v825
        %2430 = vmatprep.subr.mxu0 %v824
        %2431 = vmatpush1.msra.mxu0 %v823
        %2432 = vmatprep.subr.mxu0 %v822
        %2433 = vmatpush1.msra.mxu0 %v821
        %2434 = vmatprep.subr.mxu0 %v820
        %2435 = vmatpush1.msra.mxu0 %v819
        %2436 = vmatprep.subr.mxu0 0.0
        %2437 = vmatpush2.msra.mxu0 0.0
        %2438 = vmatprep.subr.mxu0 0.0
        %2439 = vmatpush2.msra.mxu0 0.0
        %2440 = vmatprep.subr.mxu0 0.0
        %2441 = vmatpush2.msra.mxu0 0.0
        %2442 = vmatprep.subr.mxu0 0.0
        %2443 = vmatpush2.msra.mxu0 0.0
        %2444 = vmatprep.subr.mxu0 0.0
        %2445 = vmatpush2.msra.mxu0 0.0
        %2446 = vmatprep.subr.mxu0 0.0
        %2447 = vmatpush2.msra.mxu0 0.0
        %2448 = vmatprep.subr.mxu0 0.0
        %2449 = vmatpush2.msra.mxu0 0.0
        %2450 = vmatprep.subr.mxu0 0.0
        %2451 = vmatpush2.msra.mxu0 0.0
        %2452 = vmatprep.subr.mxu0 0.0
        %2453 = vmatpush2.msra.mxu0 0.0
        %2454 = vmatprep.subr.mxu0 0.0
        %2455 = vmatpush2.msra.mxu0 0.0
        %2456 = vmatprep.subr.mxu0 0.0
        %2457 = vmatpush2.msra.mxu0 0.0
        %2458 = vmatprep.subr.mxu0 0.0
        %2459 = vmatpush2.msra.mxu0 0.0
        %2460 = vmatprep.subr.mxu0 0.0
        %2461 = vmatpush2.msra.mxu0 0.0
        %2462 = vmatprep.subr.mxu0 0.0
        %2463 = vmatpush2.msra.mxu0 0.0
        %2464 = vmatprep.subr.mxu0 0.0
        %2465 = vmatpush2.msra.mxu0 0.0
        %2466 = vmatprep.subr.mxu0 0.0
        %2467 = vmatpush2.msra.mxu0 0.0
        %2468 = vmatprep.mubr.f32.mxu0 0.0
        %2469 = vmatmul.mubr.f32.gmra.mxu0 %v2399
        %v2470 = vpop.f32.mrf.mxu0
        %v2471 = vadd.f32 %v852, %v2470
        %v2472 = vpop.f32.mrf.mxu0
        %v2473 = vadd.f32 %v856, %v2472
        %2474 = vmatprep.mubr.f32.mxu0 0.0
        %2475 = vmatmul.mubr.f32.gmra.mxu0 %v2402
        %v2476 = vpop.f32.mrf.mxu0
        %v2477 = vadd.f32 %v852, %v2476
        %v2478 = vpop.f32.mrf.mxu0
        %v2479 = vadd.f32 %v856, %v2478
        %2480 = vdwg.mxu0
        %v2481 = vadd.f32 %v2374, %v2471
        %v2482 = vadd.f32 %v2375, %v2477
        %v2483 = vmul.f32 %v2481, 0.5
        %v2484 = vmul.f32 %v2482, 0.5
        %v2485 = vtanh.pop %v2483
        %v2486 = vtanh.pop %v2484
        %v2487 = vadd.f32 %v2485, 1.0
        %v2488 = vadd.f32 %v2486, 1.0
        %v2489 = vmul.f32 %v2487, 0.5
        %v2490 = vmul.f32 %v2488, 0.5
        %2493 = vrot.lane.b32.xlu0 %v2471, 64
        %v2494 = vpop.permute.xlu0 %2493
        %2495 = vrot.lane.b32.xlu0 %v2477, 64
        %v2496 = vpop.permute.xlu0 %2495
        %v2499 = vmul.f32 %v2489, %v2494
        %v2500 = vmul.f32 %v2490, %v2496
        %2503 = vrot.lane.b32.xlu0 %v2499, 64
        %v2504 = vpop.permute.xlu0 %2503
        %2505 = vrot.lane.b32.xlu0 %v2500, 64
        %v2506 = vpop.permute.xlu0 %2505
        %v2509 = vadd.f32 %v2374, %v2504
        %v2510 = vadd.f32 %v2375, %v2506
        %v2511 = vtanh.pop %v2509
        %v2512 = vtanh.pop %v2510
        %v2513 = vsub.f32 1.0, %v2489
        %v2514 = vsub.f32 1.0, %v2490
        %2517 = vrot.lane.b32.xlu0 %v2511, 96
        %v2518 = vpop.permute.xlu0 %2517
        %2519 = vrot.lane.b32.xlu0 %v2512, 96
        %v2520 = vpop.permute.xlu0 %2519
        %v2523 = vmul.f32 %v2513, %v2518
        %v2524 = vmul.f32 %v2514, %v2520
        %v2525 = vmul.f32 %v2489, %v2352
        %v2526 = vmul.f32 %v2490, %v2353
        %v2527 = vadd.f32 %v2523, %v2525
        %v2528 = vadd.f32 %v2524, %v2526
        %v2529 = vadd.f32 %v2376, %v2471
        %v2530 = vadd.f32 %v2377, %v2473
        %v2531 = vadd.f32 %v2378, %v2477
        %v2532 = vadd.f32 %v2379, %v2479
        %v2533 = vmul.f32 %v2529, 0.5
        %v2534 = vmul.f32 %v2530, 0.5
        %v2535 = vmul.f32 %v2531, 0.5
        %v2536 = vmul.f32 %v2532, 0.5
        %v2537 = vtanh.pop %v2533
        %v2538 = vtanh.pop %v2534
        %v2539 = vtanh.pop %v2535
        %v2540 = vtanh.pop %v2536
        %v2541 = vadd.f32 %v2537, 1.0
        %v2542 = vadd.f32 %v2538, 1.0
        %v2543 = vadd.f32 %v2539, 1.0
        %v2544 = vadd.f32 %v2540, 1.0
        %v2545 = vmul.f32 %v2541, 0.5
        %v2546 = vmul.f32 %v2542, 0.5
        %v2547 = vmul.f32 %v2543, 0.5
        %v2548 = vmul.f32 %v2544, 0.5
        %2551 = vrot.lane.b32.xlu0 %v2473, 64
        %v2552 = vpop.permute.xlu0 %2551
        %2553 = vrot.lane.b32.xlu0 %v2479, 64
        %v2554 = vpop.permute.xlu0 %2553
        %v2557 = vmul.f32 %v2545, %v2552
        %v2558 = vmul.f32 %v2547, %v2554
        %2561 = vrot.lane.b32.xlu0 %v2557, 64
        %v2562 = vpop.permute.xlu0 %2561
        %2563 = vrot.lane.b32.xlu0 %v2558, 64
        %v2564 = vpop.permute.xlu0 %2563
        %v2567 = vadd.f32 %v2377, %v2562
        %v2568 = vadd.f32 %v2379, %v2564
        %v2569 = vtanh.pop %v2567
        %v2570 = vtanh.pop %v2568
        %v2571 = vsub.f32 1.0, %v2546
        %v2572 = vsub.f32 1.0, %v2548
        %2575 = vrot.lane.b32.xlu0 %v2569, 96
        %v2576 = vpop.permute.xlu0 %2575
        %2577 = vrot.lane.b32.xlu0 %v2570, 96
        %v2578 = vpop.permute.xlu0 %2577
        %v2581 = vmul.f32 %v2571, %v2576
        %v2582 = vmul.f32 %v2572, %v2578
        %v2583 = vmul.f32 %v2546, %v2354
        %v2584 = vmul.f32 %v2548, %v2355
        %v2585 = vadd.f32 %v2581, %v2583
        %v2586 = vadd.f32 %v2582, %v2584
        %v2587 = vsel %vm1852, %v2527, %v2352
        %v2588 = vsel %vm1853, %v2528, %v2353
        %v2589 = vsel %vm1840, %v2585, %v2354
        %v2590 = vsel %vm1841, %v2586, %v2355
        %v2591 = vsel %vm1852, %v2527, 0.0
        %v2592 = vsel %vm1853, %v2528, 0.0
        %v2593 = vsel %vm1840, %v2585, 0.0
        %v2594 = vsel %vm1841, %v2586, 0.0
        %2597 = vrot.lane.b32.xlu0 %v2591, 96
        %v2598 = vpop.permute.xlu0 %2597
        %2599 = vrot.lane.b32.xlu0 %v2592, 96
        %v2600 = vpop.permute.xlu0 %2599
        %s2603 = scalar_lea.vmem [#allocation3], 96
        %2604 = vst.msk [vmem:[%s2603] sm:$0xff] %vm1081, %v2598
        %2605 = vst.msk [vmem:[%s2603 + $0x8] sm:$0xff] %vm1081, %v2600
        %s2606 = scalar_lea.vmem [#allocation4], 48
        %2607 = vst.msk [vmem:[%s2606] sm:$0xff] %vm1081, %v2593
        %2608 = vst.msk [vmem:[%s2606 + $0x8] sm:$0xff] %vm1081, %v2594
        %v2609 = vld [vmem:[%s1351] sm:$0xff]
        %v2610 = vld [vmem:[%s1351 + $0x10] sm:$0xff]
        %v2611 = vld [vmem:[%s1346] sm:$0xff]
        %v2612 = vld [vmem:[%s1346 + $0x8] sm:$0xff]
        %v2613 = vld [vmem:[%s1346 + $0x10] sm:$0xff]
        %v2614 = vld [vmem:[%s1346 + $0x18] sm:$0xff]
        %2617 = vrot.lane.b32.xlu0 %v2587, 96
        %v2618 = vpop.permute.xlu0 %2617
        %2619 = vrot.lane.b32.xlu0 %v2588, 96
        %v2620 = vpop.permute.xlu0 %2619
        %2625 = vrot.lane.b32.xlu0 %v2589, 32
        %v2626 = vpop.permute.xlu0 %2625
        %2627 = vrot.lane.b32.xlu0 %v2590, 32
        %v2628 = vpop.permute.xlu0 %2627
        %v2631 = vsel %vm1081, %v2618, %v2626
        %v2632 = vsel %vm1081, %v2620, %v2628
        %v2634 = vsel %vm779, %v2631, 0
        %v2637 = vsel %vm779, %v2632, 0
        %2639 = vmatprep.subr.mxu0 0.0
        %2640 = vmatpush1.msra.mxu0 0.0
        %2641 = vmatprep.subr.mxu0 0.0
        %2642 = vmatpush1.msra.mxu0 0.0
        %2643 = vmatprep.subr.mxu0 0.0
        %2644 = vmatpush1.msra.mxu0 0.0
        %2645 = vmatprep.subr.mxu0 0.0
        %2646 = vmatpush1.msra.mxu0 0.0
        %2647 = vmatprep.subr.mxu0 0.0
        %2648 = vmatpush1.msra.mxu0 0.0
        %2649 = vmatprep.subr.mxu0 0.0
        %2650 = vmatpush1.msra.mxu0 0.0
        %2651 = vmatprep.subr.mxu0 0.0
        %2652 = vmatpush1.msra.mxu0 0.0
        %2653 = vmatprep.subr.mxu0 0.0
        %2654 = vmatpush1.msra.mxu0 0.0
        %2655 = vmatprep.subr.mxu0 %v834
        %2656 = vmatpush1.msra.mxu0 %v833
        %2657 = vmatprep.subr.mxu0 %v832
        %2658 = vmatpush1.msra.mxu0 %v831
        %2659 = vmatprep.subr.mxu0 %v830
        %2660 = vmatpush1.msra.mxu0 %v829
        %2661 = vmatprep.subr.mxu0 %v828
        %2662 = vmatpush1.msra.mxu0 %v827
        %2663 = vmatprep.subr.mxu0 %v826
        %2664 = vmatpush1.msra.mxu0 %v825
        %2665 = vmatprep.subr.mxu0 %v824
        %2666 = vmatpush1.msra.mxu0 %v823
        %2667 = vmatprep.subr.mxu0 %v822
        %2668 = vmatpush1.msra.mxu0 %v821
        %2669 = vmatprep.subr.mxu0 %v820
        %2670 = vmatpush1.msra.mxu0 %v819
        %2671 = vmatprep.subr.mxu0 0.0
        %2672 = vmatpush2.msra.mxu0 0.0
        %2673 = vmatprep.subr.mxu0 0.0
        %2674 = vmatpush2.msra.mxu0 0.0
        %2675 = vmatprep.subr.mxu0 0.0
        %2676 = vmatpush2.msra.mxu0 0.0
        %2677 = vmatprep.subr.mxu0 0.0
        %2678 = vmatpush2.msra.mxu0 0.0
        %2679 = vmatprep.subr.mxu0 0.0
        %2680 = vmatpush2.msra.mxu0 0.0
        %2681 = vmatprep.subr.mxu0 0.0
        %2682 = vmatpush2.msra.mxu0 0.0
        %2683 = vmatprep.subr.mxu0 0.0
        %2684 = vmatpush2.msra.mxu0 0.0
        %2685 = vmatprep.subr.mxu0 0.0
        %2686 = vmatpush2.msra.mxu0 0.0
        %2687 = vmatprep.subr.mxu0 0.0
        %2688 = vmatpush2.msra.mxu0 0.0
        %2689 = vmatprep.subr.mxu0 0.0
        %2690 = vmatpush2.msra.mxu0 0.0
        %2691 = vmatprep.subr.mxu0 0.0
        %2692 = vmatpush2.msra.mxu0 0.0
        %2693 = vmatprep.subr.mxu0 0.0
        %2694 = vmatpush2.msra.mxu0 0.0
        %2695 = vmatprep.subr.mxu0 0.0
        %2696 = vmatpush2.msra.mxu0 0.0
        %2697 = vmatprep.subr.mxu0 0.0
        %2698 = vmatpush2.msra.mxu0 0.0
        %2699 = vmatprep.subr.mxu0 0.0
        %2700 = vmatpush2.msra.mxu0 0.0
        %2701 = vmatprep.subr.mxu0 0.0
        %2702 = vmatpush2.msra.mxu0 0.0
        %2703 = vmatprep.mubr.f32.mxu0 0.0
        %2704 = vmatmul.mubr.f32.gmra.mxu0 %v2634
        %v2705 = vpop.f32.mrf.mxu0
        %v2706 = vadd.f32 %v852, %v2705
        %v2707 = vpop.f32.mrf.mxu0
        %v2708 = vadd.f32 %v856, %v2707
        %2709 = vmatprep.mubr.f32.mxu0 0.0
        %2710 = vmatmul.mubr.f32.gmra.mxu0 %v2637
        %v2711 = vpop.f32.mrf.mxu0
        %v2712 = vadd.f32 %v852, %v2711
        %v2713 = vpop.f32.mrf.mxu0
        %v2714 = vadd.f32 %v856, %v2713
        %2715 = vdwg.mxu0
        %v2716 = vadd.f32 %v2609, %v2706
        %v2717 = vadd.f32 %v2610, %v2712
        %v2718 = vmul.f32 %v2716, 0.5
        %v2719 = vmul.f32 %v2717, 0.5
        %v2720 = vtanh.pop %v2718
        %v2721 = vtanh.pop %v2719
        %v2722 = vadd.f32 %v2720, 1.0
        %v2723 = vadd.f32 %v2721, 1.0
        %v2724 = vmul.f32 %v2722, 0.5
        %v2725 = vmul.f32 %v2723, 0.5
        %2728 = vrot.lane.b32.xlu0 %v2706, 64
        %v2729 = vpop.permute.xlu0 %2728
        %2730 = vrot.lane.b32.xlu0 %v2712, 64
        %v2731 = vpop.permute.xlu0 %2730
        %v2734 = vmul.f32 %v2724, %v2729
        %v2735 = vmul.f32 %v2725, %v2731
        %2738 = vrot.lane.b32.xlu0 %v2734, 64
        %v2739 = vpop.permute.xlu0 %2738
        %2740 = vrot.lane.b32.xlu0 %v2735, 64
        %v2741 = vpop.permute.xlu0 %2740
        %v2744 = vadd.f32 %v2609, %v2739
        %v2745 = vadd.f32 %v2610, %v2741
        %v2746 = vtanh.pop %v2744
        %v2747 = vtanh.pop %v2745
        %v2748 = vsub.f32 1.0, %v2724
        %v2749 = vsub.f32 1.0, %v2725
        %2752 = vrot.lane.b32.xlu0 %v2746, 96
        %v2753 = vpop.permute.xlu0 %2752
        %2754 = vrot.lane.b32.xlu0 %v2747, 96
        %v2755 = vpop.permute.xlu0 %2754
        %v2758 = vmul.f32 %v2748, %v2753
        %v2759 = vmul.f32 %v2749, %v2755
        %v2760 = vmul.f32 %v2724, %v2587
        %v2761 = vmul.f32 %v2725, %v2588
        %v2762 = vadd.f32 %v2758, %v2760
        %v2763 = vadd.f32 %v2759, %v2761
        %v2764 = vadd.f32 %v2611, %v2706
        %v2765 = vadd.f32 %v2612, %v2708
        %v2766 = vadd.f32 %v2613, %v2712
        %v2767 = vadd.f32 %v2614, %v2714
        %v2768 = vmul.f32 %v2764, 0.5
        %v2769 = vmul.f32 %v2765, 0.5
        %v2770 = vmul.f32 %v2766, 0.5
        %v2771 = vmul.f32 %v2767, 0.5
        %v2772 = vtanh.pop %v2768
        %v2773 = vtanh.pop %v2769
        %v2774 = vtanh.pop %v2770
        %v2775 = vtanh.pop %v2771
        %v2776 = vadd.f32 %v2772, 1.0
        %v2777 = vadd.f32 %v2773, 1.0
        %v2778 = vadd.f32 %v2774, 1.0
        %v2779 = vadd.f32 %v2775, 1.0
        %v2780 = vmul.f32 %v2776, 0.5
        %v2781 = vmul.f32 %v2777, 0.5
        %v2782 = vmul.f32 %v2778, 0.5
        %v2783 = vmul.f32 %v2779, 0.5
        %2786 = vrot.lane.b32.xlu0 %v2708, 64
        %v2787 = vpop.permute.xlu0 %2786
        %2788 = vrot.lane.b32.xlu0 %v2714, 64
        %v2789 = vpop.permute.xlu0 %2788
        %v2792 = vmul.f32 %v2780, %v2787
        %v2793 = vmul.f32 %v2782, %v2789
        %2796 = vrot.lane.b32.xlu0 %v2792, 64
        %v2797 = vpop.permute.xlu0 %2796
        %2798 = vrot.lane.b32.xlu0 %v2793, 64
        %v2799 = vpop.permute.xlu0 %2798
        %v2802 = vadd.f32 %v2612, %v2797
        %v2803 = vadd.f32 %v2614, %v2799
        %v2804 = vtanh.pop %v2802
        %v2805 = vtanh.pop %v2803
        %v2806 = vsub.f32 1.0, %v2781
        %v2807 = vsub.f32 1.0, %v2783
        %2810 = vrot.lane.b32.xlu0 %v2804, 96
        %v2811 = vpop.permute.xlu0 %2810
        %2812 = vrot.lane.b32.xlu0 %v2805, 96
        %v2813 = vpop.permute.xlu0 %2812
        %v2816 = vmul.f32 %v2806, %v2811
        %v2817 = vmul.f32 %v2807, %v2813
        %v2818 = vmul.f32 %v2781, %v2589
        %v2819 = vmul.f32 %v2783, %v2590
        %v2820 = vadd.f32 %v2816, %v2818
        %v2821 = vadd.f32 %v2817, %v2819
        %v2822 = vsel %vm1587, %v2762, %v2587
        %v2823 = vsel %vm1588, %v2763, %v2588
        %v2824 = vsel %vm1575, %v2820, %v2589
        %v2825 = vsel %vm1576, %v2821, %v2590
        %v2826 = vsel %vm1587, %v2762, 0.0
        %v2827 = vsel %vm1588, %v2763, 0.0
        %v2828 = vsel %vm1575, %v2820, 0.0
        %v2829 = vsel %vm1576, %v2821, 0.0
        %2832 = vrot.lane.b32.xlu0 %v2826, 96
        %v2833 = vpop.permute.xlu0 %2832
        %2834 = vrot.lane.b32.xlu0 %v2827, 96
        %v2835 = vpop.permute.xlu0 %2834
        %s2838 = scalar_lea.vmem [#allocation3], 112
        %2839 = vst.msk [vmem:[%s2838] sm:$0xff] %vm1081, %v2833
        %2840 = vst.msk [vmem:[%s2838 + $0x8] sm:$0xff] %vm1081, %v2835
        %s2841 = scalar_lea.vmem [#allocation4], 32
        %2842 = vst.msk [vmem:[%s2841] sm:$0xff] %vm1081, %v2828
        %2843 = vst.msk [vmem:[%s2841 + $0x8] sm:$0xff] %vm1081, %v2829
        %v2844 = vld [vmem:[%s1094] sm:$0xff]
        %v2845 = vld [vmem:[%s1094 + $0x10] sm:$0xff]
        %v2846 = vld [vmem:[%s1089] sm:$0xff]
        %v2847 = vld [vmem:[%s1089 + $0x8] sm:$0xff]
        %v2848 = vld [vmem:[%s1089 + $0x10] sm:$0xff]
        %v2849 = vld [vmem:[%s1089 + $0x18] sm:$0xff]
        %2852 = vrot.lane.b32.xlu0 %v2822, 96
        %v2853 = vpop.permute.xlu0 %2852
        %2854 = vrot.lane.b32.xlu0 %v2823, 96
        %v2855 = vpop.permute.xlu0 %2854
        %2860 = vrot.lane.b32.xlu0 %v2824, 32
        %v2861 = vpop.permute.xlu0 %2860
        %2862 = vrot.lane.b32.xlu0 %v2825, 32
        %v2863 = vpop.permute.xlu0 %2862
        %v2866 = vsel %vm1081, %v2853, %v2861
        %v2867 = vsel %vm1081, %v2855, %v2863
        %v2869 = vsel %vm779, %v2866, 0
        %v2872 = vsel %vm779, %v2867, 0
        %2874 = vmatprep.subr.mxu0 0.0
        %2875 = vmatpush1.msra.mxu0 0.0
        %2876 = vmatprep.subr.mxu0 0.0
        %2877 = vmatpush1.msra.mxu0 0.0
        %2878 = vmatprep.subr.mxu0 0.0
        %2879 = vmatpush1.msra.mxu0 0.0
        %2880 = vmatprep.subr.mxu0 0.0
        %2881 = vmatpush1.msra.mxu0 0.0
        %2882 = vmatprep.subr.mxu0 0.0
        %2883 = vmatpush1.msra.mxu0 0.0
        %2884 = vmatprep.subr.mxu0 0.0
        %2885 = vmatpush1.msra.mxu0 0.0
        %2886 = vmatprep.subr.mxu0 0.0
        %2887 = vmatpush1.msra.mxu0 0.0
        %2888 = vmatprep.subr.mxu0 0.0
        %2889 = vmatpush1.msra.mxu0 0.0
        %2890 = vmatprep.subr.mxu0 %v834
        %2891 = vmatpush1.msra.mxu0 %v833
        %2892 = vmatprep.subr.mxu0 %v832
        %2893 = vmatpush1.msra.mxu0 %v831
        %2894 = vmatprep.subr.mxu0 %v830
        %2895 = vmatpush1.msra.mxu0 %v829
        %2896 = vmatprep.subr.mxu0 %v828
        %2897 = vmatpush1.msra.mxu0 %v827
        %2898 = vmatprep.subr.mxu0 %v826
        %2899 = vmatpush1.msra.mxu0 %v825
        %2900 = vmatprep.subr.mxu0 %v824
        %2901 = vmatpush1.msra.mxu0 %v823
        %2902 = vmatprep.subr.mxu0 %v822
        %2903 = vmatpush1.msra.mxu0 %v821
        %2904 = vmatprep.subr.mxu0 %v820
        %2905 = vmatpush1.msra.mxu0 %v819
        %2906 = vmatprep.subr.mxu0 0.0
        %2907 = vmatpush2.msra.mxu0 0.0
        %2908 = vmatprep.subr.mxu0 0.0
        %2909 = vmatpush2.msra.mxu0 0.0
        %2910 = vmatprep.subr.mxu0 0.0
        %2911 = vmatpush2.msra.mxu0 0.0
        %2912 = vmatprep.subr.mxu0 0.0
        %2913 = vmatpush2.msra.mxu0 0.0
        %2914 = vmatprep.subr.mxu0 0.0
        %2915 = vmatpush2.msra.mxu0 0.0
        %2916 = vmatprep.subr.mxu0 0.0
        %2917 = vmatpush2.msra.mxu0 0.0
        %2918 = vmatprep.subr.mxu0 0.0
        %2919 = vmatpush2.msra.mxu0 0.0
        %2920 = vmatprep.subr.mxu0 0.0
        %2921 = vmatpush2.msra.mxu0 0.0
        %2922 = vmatprep.subr.mxu0 0.0
        %2923 = vmatpush2.msra.mxu0 0.0
        %2924 = vmatprep.subr.mxu0 0.0
        %2925 = vmatpush2.msra.mxu0 0.0
        %2926 = vmatprep.subr.mxu0 0.0
        %2927 = vmatpush2.msra.mxu0 0.0
        %2928 = vmatprep.subr.mxu0 0.0
        %2929 = vmatpush2.msra.mxu0 0.0
        %2930 = vmatprep.subr.mxu0 0.0
        %2931 = vmatpush2.msra.mxu0 0.0
        %2932 = vmatprep.subr.mxu0 0.0
        %2933 = vmatpush2.msra.mxu0 0.0
        %2934 = vmatprep.subr.mxu0 0.0
        %2935 = vmatpush2.msra.mxu0 0.0
        %2936 = vmatprep.subr.mxu0 0.0
        %2937 = vmatpush2.msra.mxu0 0.0
        %2938 = vmatprep.mubr.f32.mxu0 0.0
        %2939 = vmatmul.mubr.f32.gmra.mxu0 %v2869
        %v2940 = vpop.f32.mrf.mxu0
        %v2941 = vadd.f32 %v852, %v2940
        %v2942 = vpop.f32.mrf.mxu0
        %v2943 = vadd.f32 %v856, %v2942
        %2944 = vmatprep.mubr.f32.mxu0 0.0
        %2945 = vmatmul.mubr.f32.gmra.mxu0 %v2872
        %v2946 = vpop.f32.mrf.mxu0
        %v2947 = vadd.f32 %v852, %v2946
        %v2948 = vpop.f32.mrf.mxu0
        %v2949 = vadd.f32 %v856, %v2948
        %2950 = vdwg.mxu0
        %v2951 = vadd.f32 %v2844, %v2941
        %v2952 = vadd.f32 %v2845, %v2947
        %v2953 = vmul.f32 %v2951, 0.5
        %v2954 = vmul.f32 %v2952, 0.5
        %v2955 = vtanh.pop %v2953
        %v2956 = vtanh.pop %v2954
        %v2957 = vadd.f32 %v2955, 1.0
        %v2958 = vadd.f32 %v2956, 1.0
        %v2959 = vmul.f32 %v2957, 0.5
        %v2960 = vmul.f32 %v2958, 0.5
        %2963 = vrot.lane.b32.xlu0 %v2941, 64
        %v2964 = vpop.permute.xlu0 %2963
        %2965 = vrot.lane.b32.xlu0 %v2947, 64
        %v2966 = vpop.permute.xlu0 %2965
        %v2969 = vmul.f32 %v2959, %v2964
        %v2970 = vmul.f32 %v2960, %v2966
        %2973 = vrot.lane.b32.xlu0 %v2969, 64
        %v2974 = vpop.permute.xlu0 %2973
        %2975 = vrot.lane.b32.xlu0 %v2970, 64
        %v2976 = vpop.permute.xlu0 %2975
        %v2979 = vadd.f32 %v2844, %v2974
        %v2980 = vadd.f32 %v2845, %v2976
        %v2981 = vtanh.pop %v2979
        %v2982 = vtanh.pop %v2980
        %v2983 = vsub.f32 1.0, %v2959
        %v2984 = vsub.f32 1.0, %v2960
        %2987 = vrot.lane.b32.xlu0 %v2981, 96
        %v2988 = vpop.permute.xlu0 %2987
        %2989 = vrot.lane.b32.xlu0 %v2982, 96
        %v2990 = vpop.permute.xlu0 %2989
        %v2993 = vmul.f32 %v2983, %v2988
        %v2994 = vmul.f32 %v2984, %v2990
        %v2995 = vmul.f32 %v2959, %v2822
        %v2996 = vmul.f32 %v2960, %v2823
        %v2997 = vadd.f32 %v2993, %v2995
        %v2998 = vadd.f32 %v2994, %v2996
        %v2999 = vadd.f32 %v2846, %v2941
        %v3000 = vadd.f32 %v2847, %v2943
        %v3001 = vadd.f32 %v2848, %v2947
        %v3002 = vadd.f32 %v2849, %v2949
        %v3003 = vmul.f32 %v2999, 0.5
        %v3004 = vmul.f32 %v3000, 0.5
        %v3005 = vmul.f32 %v3001, 0.5
        %v3006 = vmul.f32 %v3002, 0.5
        %v3007 = vtanh.pop %v3003
        %v3008 = vtanh.pop %v3004
        %v3009 = vtanh.pop %v3005
        %v3010 = vtanh.pop %v3006
        %v3011 = vadd.f32 %v3007, 1.0
        %v3012 = vadd.f32 %v3008, 1.0
        %v3013 = vadd.f32 %v3009, 1.0
        %v3014 = vadd.f32 %v3010, 1.0
        %v3015 = vmul.f32 %v3011, 0.5
        %v3016 = vmul.f32 %v3012, 0.5
        %v3017 = vmul.f32 %v3013, 0.5
        %v3018 = vmul.f32 %v3014, 0.5
        %3021 = vrot.lane.b32.xlu0 %v2943, 64
        %v3022 = vpop.permute.xlu0 %3021
        %3023 = vrot.lane.b32.xlu0 %v2949, 64
        %v3024 = vpop.permute.xlu0 %3023
        %v3027 = vmul.f32 %v3015, %v3022
        %v3028 = vmul.f32 %v3017, %v3024
        %3031 = vrot.lane.b32.xlu0 %v3027, 64
        %v3032 = vpop.permute.xlu0 %3031
        %3033 = vrot.lane.b32.xlu0 %v3028, 64
        %v3034 = vpop.permute.xlu0 %3033
        %v3037 = vadd.f32 %v2847, %v3032
        %v3038 = vadd.f32 %v2849, %v3034
        %v3039 = vtanh.pop %v3037
        %v3040 = vtanh.pop %v3038
        %v3041 = vsub.f32 1.0, %v3016
        %v3042 = vsub.f32 1.0, %v3018
        %3045 = vrot.lane.b32.xlu0 %v3039, 96
        %v3046 = vpop.permute.xlu0 %3045
        %3047 = vrot.lane.b32.xlu0 %v3040, 96
        %v3048 = vpop.permute.xlu0 %3047
        %v3051 = vmul.f32 %v3041, %v3046
        %v3052 = vmul.f32 %v3042, %v3048
        %v3053 = vmul.f32 %v3016, %v2824
        %v3054 = vmul.f32 %v3018, %v2825
        %v3055 = vadd.f32 %v3051, %v3053
        %v3056 = vadd.f32 %v3052, %v3054
        %v3057 = vsel %vm1322, %v2997, %v2822
        %v3058 = vsel %vm1323, %v2998, %v2823
        %v3059 = vsel %vm1310, %v3055, %v2824
        %v3060 = vsel %vm1311, %v3056, %v2825
        %v3061 = vsel %vm1322, %v2997, 0.0
        %v3062 = vsel %vm1323, %v2998, 0.0
        %v3063 = vsel %vm1310, %v3055, 0.0
        %v3064 = vsel %vm1311, %v3056, 0.0
        %3067 = vrot.lane.b32.xlu0 %v3061, 96
        %v3068 = vpop.permute.xlu0 %3067
        %3069 = vrot.lane.b32.xlu0 %v3062, 96
        %v3070 = vpop.permute.xlu0 %3069
        %s3073 = scalar_lea.vmem [#allocation3], 128
        %3074 = vst.msk [vmem:[%s3073] sm:$0xff] %vm1081, %v3068
        %3075 = vst.msk [vmem:[%s3073 + $0x8] sm:$0xff] %vm1081, %v3070
        %s3076 = scalar_lea.vmem [#allocation4], 16
        %3077 = vst.msk [vmem:[%s3076] sm:$0xff] %vm1081, %v3063
        %3078 = vst.msk [vmem:[%s3076 + $0x8] sm:$0xff] %vm1081, %v3064
        %v3079 = vld [vmem:[%s843] sm:$0xff]
        %v3080 = vld [vmem:[%s843 + $0x10] sm:$0xff]
        %v3081 = vld [vmem:[%s838] sm:$0xff]
        %v3082 = vld [vmem:[%s838 + $0x8] sm:$0xff]
        %v3083 = vld [vmem:[%s838 + $0x10] sm:$0xff]
        %v3084 = vld [vmem:[%s838 + $0x18] sm:$0xff]
        %3087 = vrot.lane.b32.xlu0 %v3057, 96
        %v3088 = vpop.permute.xlu0 %3087
        %3089 = vrot.lane.b32.xlu0 %v3058, 96
        %v3090 = vpop.permute.xlu0 %3089
        %3095 = vrot.lane.b32.xlu0 %v3059, 32
        %v3096 = vpop.permute.xlu0 %3095
        %3097 = vrot.lane.b32.xlu0 %v3060, 32
        %v3098 = vpop.permute.xlu0 %3097
        %v3101 = vsel %vm1081, %v3088, %v3096
        %v3102 = vsel %vm1081, %v3090, %v3098
        %v3104 = vsel %vm779, %v3101, 0
        %v3107 = vsel %vm779, %v3102, 0
        %3109 = vmatprep.subr.mxu0 0.0
        %3110 = vmatpush1.msra.mxu0 0.0
        %3111 = vmatprep.subr.mxu0 0.0
        %3112 = vmatpush1.msra.mxu0 0.0
        %3113 = vmatprep.subr.mxu0 0.0
        %3114 = vmatpush1.msra.mxu0 0.0
        %3115 = vmatprep.subr.mxu0 0.0
        %3116 = vmatpush1.msra.mxu0 0.0
        %3117 = vmatprep.subr.mxu0 0.0
        %3118 = vmatpush1.msra.mxu0 0.0
        %3119 = vmatprep.subr.mxu0 0.0
        %3120 = vmatpush1.msra.mxu0 0.0
        %3121 = vmatprep.subr.mxu0 0.0
        %3122 = vmatpush1.msra.mxu0 0.0
        %3123 = vmatprep.subr.mxu0 0.0
        %3124 = vmatpush1.msra.mxu0 0.0
        %3125 = vmatprep.subr.mxu0 %v834
        %3126 = vmatpush1.msra.mxu0 %v833
        %3127 = vmatprep.subr.mxu0 %v832
        %3128 = vmatpush1.msra.mxu0 %v831
        %3129 = vmatprep.subr.mxu0 %v830
        %3130 = vmatpush1.msra.mxu0 %v829
        %3131 = vmatprep.subr.mxu0 %v828
        %3132 = vmatpush1.msra.mxu0 %v827
        %3133 = vmatprep.subr.mxu0 %v826
        %3134 = vmatpush1.msra.mxu0 %v825
        %3135 = vmatprep.subr.mxu0 %v824
        %3136 = vmatpush1.msra.mxu0 %v823
        %3137 = vmatprep.subr.mxu0 %v822
        %3138 = vmatpush1.msra.mxu0 %v821
        %3139 = vmatprep.subr.mxu0 %v820
        %3140 = vmatpush1.msra.mxu0 %v819
        %3141 = vmatprep.subr.mxu0 0.0
        %3142 = vmatpush2.msra.mxu0 0.0
        %3143 = vmatprep.subr.mxu0 0.0
        %3144 = vmatpush2.msra.mxu0 0.0
        %3145 = vmatprep.subr.mxu0 0.0
        %3146 = vmatpush2.msra.mxu0 0.0
        %3147 = vmatprep.subr.mxu0 0.0
        %3148 = vmatpush2.msra.mxu0 0.0
        %3149 = vmatprep.subr.mxu0 0.0
        %3150 = vmatpush2.msra.mxu0 0.0
        %3151 = vmatprep.subr.mxu0 0.0
        %3152 = vmatpush2.msra.mxu0 0.0
        %3153 = vmatprep.subr.mxu0 0.0
        %3154 = vmatpush2.msra.mxu0 0.0
        %3155 = vmatprep.subr.mxu0 0.0
        %3156 = vmatpush2.msra.mxu0 0.0
        %3157 = vmatprep.subr.mxu0 0.0
        %3158 = vmatpush2.msra.mxu0 0.0
        %3159 = vmatprep.subr.mxu0 0.0
        %3160 = vmatpush2.msra.mxu0 0.0
        %3161 = vmatprep.subr.mxu0 0.0
        %3162 = vmatpush2.msra.mxu0 0.0
        %3163 = vmatprep.subr.mxu0 0.0
        %3164 = vmatpush2.msra.mxu0 0.0
        %3165 = vmatprep.subr.mxu0 0.0
        %3166 = vmatpush2.msra.mxu0 0.0
        %3167 = vmatprep.subr.mxu0 0.0
        %3168 = vmatpush2.msra.mxu0 0.0
        %3169 = vmatprep.subr.mxu0 0.0
        %3170 = vmatpush2.msra.mxu0 0.0
        %3171 = vmatprep.subr.mxu0 0.0
        %3172 = vmatpush2.msra.mxu0 0.0
        %3173 = vmatprep.mubr.f32.mxu0 0.0
        %3174 = vmatmul.mubr.f32.gmra.mxu0 %v3104
        %v3175 = vpop.f32.mrf.mxu0
        %v3176 = vadd.f32 %v852, %v3175
        %v3177 = vpop.f32.mrf.mxu0
        %v3178 = vadd.f32 %v856, %v3177
        %3179 = vmatprep.mubr.f32.mxu0 0.0
        %3180 = vmatmul.mubr.f32.gmra.mxu0 %v3107
        %v3181 = vpop.f32.mrf.mxu0
        %v3182 = vadd.f32 %v852, %v3181
        %v3183 = vpop.f32.mrf.mxu0
        %v3184 = vadd.f32 %v856, %v3183
        %3185 = vdwg.mxu0
        %v3186 = vadd.f32 %v3079, %v3176
        %v3187 = vadd.f32 %v3080, %v3182
        %v3188 = vmul.f32 %v3186, 0.5
        %v3189 = vmul.f32 %v3187, 0.5
        %v3190 = vtanh.pop %v3188
        %v3191 = vtanh.pop %v3189
        %v3192 = vadd.f32 %v3190, 1.0
        %v3193 = vadd.f32 %v3191, 1.0
        %v3194 = vmul.f32 %v3192, 0.5
        %v3195 = vmul.f32 %v3193, 0.5
        %3198 = vrot.lane.b32.xlu0 %v3176, 64
        %v3199 = vpop.permute.xlu0 %3198
        %3200 = vrot.lane.b32.xlu0 %v3182, 64
        %v3201 = vpop.permute.xlu0 %3200
        %v3204 = vmul.f32 %v3194, %v3199
        %v3205 = vmul.f32 %v3195, %v3201
        %3208 = vrot.lane.b32.xlu0 %v3204, 64
        %v3209 = vpop.permute.xlu0 %3208
        %3210 = vrot.lane.b32.xlu0 %v3205, 64
        %v3211 = vpop.permute.xlu0 %3210
        %v3214 = vadd.f32 %v3079, %v3209
        %v3215 = vadd.f32 %v3080, %v3211
        %v3216 = vtanh.pop %v3214
        %v3217 = vtanh.pop %v3215
        %v3218 = vsub.f32 1.0, %v3194
        %v3219 = vsub.f32 1.0, %v3195
        %3222 = vrot.lane.b32.xlu0 %v3216, 96
        %v3223 = vpop.permute.xlu0 %3222
        %3224 = vrot.lane.b32.xlu0 %v3217, 96
        %v3225 = vpop.permute.xlu0 %3224
        %v3228 = vmul.f32 %v3218, %v3223
        %v3229 = vmul.f32 %v3219, %v3225
        %v3230 = vmul.f32 %v3194, %v3057
        %v3231 = vmul.f32 %v3195, %v3058
        %v3232 = vadd.f32 %v3228, %v3230
        %v3233 = vadd.f32 %v3229, %v3231
        %v3234 = vadd.f32 %v3081, %v3176
        %v3235 = vadd.f32 %v3082, %v3178
        %v3236 = vadd.f32 %v3083, %v3182
        %v3237 = vadd.f32 %v3084, %v3184
        %v3238 = vmul.f32 %v3234, 0.5
        %v3239 = vmul.f32 %v3235, 0.5
        %v3240 = vmul.f32 %v3236, 0.5
        %v3241 = vmul.f32 %v3237, 0.5
        %v3242 = vtanh.pop %v3238
        %v3243 = vtanh.pop %v3239
        %v3244 = vtanh.pop %v3240
        %v3245 = vtanh.pop %v3241
        %v3246 = vadd.f32 %v3242, 1.0
        %v3247 = vadd.f32 %v3243, 1.0
        %v3248 = vadd.f32 %v3244, 1.0
        %v3249 = vadd.f32 %v3245, 1.0
        %v3250 = vmul.f32 %v3246, 0.5
        %v3251 = vmul.f32 %v3247, 0.5
        %v3252 = vmul.f32 %v3248, 0.5
        %v3253 = vmul.f32 %v3249, 0.5
        %3256 = vrot.lane.b32.xlu0 %v3178, 64
        %v3257 = vpop.permute.xlu0 %3256
        %3258 = vrot.lane.b32.xlu0 %v3184, 64
        %v3259 = vpop.permute.xlu0 %3258
        %v3262 = vmul.f32 %v3250, %v3257
        %v3263 = vmul.f32 %v3252, %v3259
        %3266 = vrot.lane.b32.xlu0 %v3262, 64
        %v3267 = vpop.permute.xlu0 %3266
        %3268 = vrot.lane.b32.xlu0 %v3263, 64
        %v3269 = vpop.permute.xlu0 %3268
        %v3272 = vadd.f32 %v3082, %v3267
        %v3273 = vadd.f32 %v3084, %v3269
        %v3274 = vtanh.pop %v3272
        %v3275 = vtanh.pop %v3273
        %v3276 = vsub.f32 1.0, %v3251
        %v3277 = vsub.f32 1.0, %v3253
        %3280 = vrot.lane.b32.xlu0 %v3274, 96
        %v3281 = vpop.permute.xlu0 %3280
        %3282 = vrot.lane.b32.xlu0 %v3275, 96
        %v3283 = vpop.permute.xlu0 %3282
        %v3286 = vmul.f32 %v3276, %v3281
        %v3287 = vmul.f32 %v3277, %v3283
        %v3288 = vmul.f32 %v3251, %v3059
        %v3289 = vmul.f32 %v3253, %v3060
        %v3290 = vadd.f32 %v3286, %v3288
        %v3291 = vadd.f32 %v3287, %v3289
        %v3292 = vsel %vm1069, %v3232, 0.0
        %v3293 = vsel %vm1070, %v3233, 0.0
        %v3294 = vsel %vm1057, %v3290, 0.0
        %v3295 = vsel %vm1058, %v3291, 0.0
        %3298 = vrot.lane.b32.xlu0 %v3292, 96
        %v3299 = vpop.permute.xlu0 %3298
        %3300 = vrot.lane.b32.xlu0 %v3293, 96
        %v3301 = vpop.permute.xlu0 %3300
        %s3304 = scalar_lea.vmem [#allocation3], 144
        %3305 = vst.msk [vmem:[%s3304] sm:$0xff] %vm1081, %v3299
        %3306 = vst.msk [vmem:[%s3304 + $0x8] sm:$0xff] %vm1081, %v3301
        %3307 = vst.msk [vmem:[#allocation4] sm:$0xff] %vm1081, %v3294
        %3308 = vst.msk [vmem:[#allocation4 + $0x8] sm:$0xff] %vm1081, %v3295
        %v3309 = vld [vmem:[#allocation3] sm:$0xff]
        %v3310 = vld [vmem:[#allocation3 + $0x8] sm:$0xff]
        %v3311 = vld [vmem:[#allocation3 + $0x10] sm:$0xff]
        %v3312 = vld [vmem:[#allocation3 + $0x18] sm:$0xff]
        %v3313 = vld [vmem:[#allocation3 + $0x20] sm:$0xff]
        %v3314 = vld [vmem:[#allocation3 + $0x28] sm:$0xff]
        %v3315 = vld [vmem:[#allocation3 + $0x30] sm:$0xff]
        %v3316 = vld [vmem:[#allocation3 + $0x38] sm:$0xff]
        %v3317 = vld [vmem:[#allocation3 + $0x40] sm:$0xff]
        %v3318 = vld [vmem:[#allocation3 + $0x48] sm:$0xff]
        %v3319 = vld [vmem:[#allocation3 + $0x50] sm:$0xff]
        %v3320 = vld [vmem:[#allocation3 + $0x58] sm:$0xff]
        %v3321 = vld [vmem:[#allocation3 + $0x60] sm:$0xff]
        %v3322 = vld [vmem:[#allocation3 + $0x68] sm:$0xff]
        %v3323 = vld [vmem:[#allocation3 + $0x70] sm:$0xff]
        %v3324 = vld [vmem:[#allocation3 + $0x78] sm:$0xff]
        %v3325 = vld [vmem:[#allocation3 + $0x80] sm:$0xff]
        %v3326 = vld [vmem:[#allocation3 + $0x88] sm:$0xff]
        %v3327 = vld [vmem:[#allocation3 + $0x90] sm:$0xff]
        %v3328 = vld [vmem:[#allocation3 + $0x98] sm:$0xff]
        %v3329 = vld [vmem:[#allocation4] sm:$0xff]
        %v3330 = vld [vmem:[#allocation4 + $0x8] sm:$0xff]
        %v3331 = vld [vmem:[#allocation4 + $0x10] sm:$0xff]
        %v3332 = vld [vmem:[#allocation4 + $0x18] sm:$0xff]
        %v3333 = vld [vmem:[#allocation4 + $0x20] sm:$0xff]
        %v3334 = vld [vmem:[#allocation4 + $0x28] sm:$0xff]
        %v3335 = vld [vmem:[#allocation4 + $0x30] sm:$0xff]
        %v3336 = vld [vmem:[#allocation4 + $0x38] sm:$0xff]
        %v3337 = vld [vmem:[#allocation4 + $0x40] sm:$0xff]
        %v3338 = vld [vmem:[#allocation4 + $0x48] sm:$0xff]
        %v3339 = vld [vmem:[#allocation4 + $0x50] sm:$0xff]
        %v3340 = vld [vmem:[#allocation4 + $0x58] sm:$0xff]
        %v3341 = vld [vmem:[#allocation4 + $0x60] sm:$0xff]
        %v3342 = vld [vmem:[#allocation4 + $0x68] sm:$0xff]
        %v3343 = vld [vmem:[#allocation4 + $0x70] sm:$0xff]
        %v3344 = vld [vmem:[#allocation4 + $0x78] sm:$0xff]
        %v3345 = vld [vmem:[#allocation4 + $0x80] sm:$0xff]
        %v3346 = vld [vmem:[#allocation4 + $0x88] sm:$0xff]
        %v3347 = vld [vmem:[#allocation4 + $0x90] sm:$0xff]
        %v3348 = vld [vmem:[#allocation4 + $0x98] sm:$0xff]
        %3369 = vrot.lane.b32.xlu0 %v3329, 32
        %v3370 = vpop.permute.xlu0 %3369
        %3371 = vrot.lane.b32.xlu0 %v3330, 32
        %v3372 = vpop.permute.xlu0 %3371
        %3373 = vrot.lane.b32.xlu0 %v3331, 32
        %v3374 = vpop.permute.xlu0 %3373
        %3375 = vrot.lane.b32.xlu0 %v3332, 32
        %v3376 = vpop.permute.xlu0 %3375
        %3377 = vrot.lane.b32.xlu0 %v3333, 32
        %v3378 = vpop.permute.xlu0 %3377
        %3379 = vrot.lane.b32.xlu0 %v3334, 32
        %v3380 = vpop.permute.xlu0 %3379
        %3381 = vrot.lane.b32.xlu0 %v3335, 32
        %v3382 = vpop.permute.xlu0 %3381
        %3383 = vrot.lane.b32.xlu0 %v3336, 32
        %v3384 = vpop.permute.xlu0 %3383
        %3385 = vrot.lane.b32.xlu0 %v3337, 32
        %v3386 = vpop.permute.xlu0 %3385
        %3387 = vrot.lane.b32.xlu0 %v3338, 32
        %v3388 = vpop.permute.xlu0 %3387
        %3389 = vrot.lane.b32.xlu0 %v3339, 32
        %v3390 = vpop.permute.xlu0 %3389
        %3391 = vrot.lane.b32.xlu0 %v3340, 32
        %v3392 = vpop.permute.xlu0 %3391
        %3393 = vrot.lane.b32.xlu0 %v3341, 32
        %v3394 = vpop.permute.xlu0 %3393
        %3395 = vrot.lane.b32.xlu0 %v3342, 32
        %v3396 = vpop.permute.xlu0 %3395
        %3397 = vrot.lane.b32.xlu0 %v3343, 32
        %v3398 = vpop.permute.xlu0 %3397
        %3399 = vrot.lane.b32.xlu0 %v3344, 32
        %v3400 = vpop.permute.xlu0 %3399
        %3401 = vrot.lane.b32.xlu0 %v3345, 32
        %v3402 = vpop.permute.xlu0 %3401
        %3403 = vrot.lane.b32.xlu0 %v3346, 32
        %v3404 = vpop.permute.xlu0 %3403
        %3405 = vrot.lane.b32.xlu0 %v3347, 32
        %v3406 = vpop.permute.xlu0 %3405
        %3407 = vrot.lane.b32.xlu0 %v3348, 32
        %v3408 = vpop.permute.xlu0 %3407
        %v3429 = vsel %vm1081, %v3309, %v3370
        %v3430 = vsel %vm1081, %v3310, %v3372
        %v3431 = vsel %vm1081, %v3311, %v3374
        %v3432 = vsel %vm1081, %v3312, %v3376
        %v3433 = vsel %vm1081, %v3313, %v3378
        %v3434 = vsel %vm1081, %v3314, %v3380
        %v3435 = vsel %vm1081, %v3315, %v3382
        %v3436 = vsel %vm1081, %v3316, %v3384
        %v3437 = vsel %vm1081, %v3317, %v3386
        %v3438 = vsel %vm1081, %v3318, %v3388
        %v3439 = vsel %vm1081, %v3319, %v3390
        %v3440 = vsel %vm1081, %v3320, %v3392
        %v3441 = vsel %vm1081, %v3321, %v3394
        %v3442 = vsel %vm1081, %v3322, %v3396
        %v3443 = vsel %vm1081, %v3323, %v3398
        %v3444 = vsel %vm1081, %v3324, %v3400
        %v3445 = vsel %vm1081, %v3325, %v3402
        %v3446 = vsel %vm1081, %v3326, %v3404
        %v3447 = vsel %vm1081, %v3327, %v3406
        %v3448 = vsel %vm1081, %v3328, %v3408
        %v3449 = vld [vmem:[%s6] sm:$0xff]
        %v3450 = vld [vmem:[%s6 + $0x8] sm:$0xff]
        %v3451 = vld [vmem:[%s6 + $0x10] sm:$0xff]
        %v3452 = vld [vmem:[%s6 + $0x18] sm:$0xff]
        %v3453 = vld [vmem:[%s6 + $0x20] sm:$0xff]
        %v3454 = vld [vmem:[%s6 + $0x28] sm:$0xff]
        %v3455 = vld [vmem:[%s6 + $0x30] sm:$0xff]
        %v3456 = vld [vmem:[%s6 + $0x38] sm:$0xff]
        %v3457 = vld [vmem:[%s6 + $0x40] sm:$0xff]
        %v3458 = vld [vmem:[%s6 + $0x48] sm:$0xff]
        %v3459 = vld [vmem:[%s6 + $0x50] sm:$0xff]
        %v3460 = vld [vmem:[%s6 + $0x58] sm:$0xff]
        %v3461 = vld [vmem:[%s6 + $0x60] sm:$0xff]
        %v3462 = vld [vmem:[%s6 + $0x68] sm:$0xff]
        %v3463 = vld [vmem:[%s6 + $0x70] sm:$0xff]
        %v3464 = vld [vmem:[%s6 + $0x78] sm:$0xff]
        %v3465 = vld [vmem:[%s8] sm:$0x3]
        %v3467 = vlaneseq
        %v3468 = vshrl.u32 %v3467, 7
        %v3469 = vsub.s32 0, %v3468
        %v3470 = vrot.slane %v3465, %v3469
        %v3471 = vlaneseq
        %v3472 = vshrl.u32 %v3471, 7
        %v3473 = vsub.s32 1, %v3472
        %v3474 = vrot.slane %v3465, %v3473
        %v3478 = vsel %vm779, %v3429, 0
        %v3481 = vsel %vm779, %v3430, 0
        %v3484 = vsel %vm779, %v3431, 0
        %v3487 = vsel %vm779, %v3432, 0
        %v3490 = vsel %vm779, %v3433, 0
        %v3493 = vsel %vm779, %v3434, 0
        %v3496 = vsel %vm779, %v3435, 0
        %v3499 = vsel %vm779, %v3436, 0
        %v3502 = vsel %vm779, %v3437, 0
        %v3505 = vsel %vm779, %v3438, 0
        %v3508 = vsel %vm779, %v3439, 0
        %v3511 = vsel %vm779, %v3440, 0
        %v3514 = vsel %vm779, %v3441, 0
        %v3517 = vsel %vm779, %v3442, 0
        %v3520 = vsel %vm779, %v3443, 0
        %v3523 = vsel %vm779, %v3444, 0
        %v3526 = vsel %vm779, %v3445, 0
        %v3529 = vsel %vm779, %v3446, 0
        %v3532 = vsel %vm779, %v3447, 0
        %v3535 = vsel %vm779, %v3448, 0
        %3537 = vmatprep.subr.mxu0 0.0
        %3538 = vmatpush1.msra.mxu0 0.0
        %3539 = vmatprep.subr.mxu0 0.0
        %3540 = vmatpush1.msra.mxu0 0.0
        %3541 = vmatprep.subr.mxu0 0.0
        %3542 = vmatpush1.msra.mxu0 0.0
        %3543 = vmatprep.subr.mxu0 0.0
        %3544 = vmatpush1.msra.mxu0 0.0
        %3545 = vmatprep.subr.mxu0 0.0
        %3546 = vmatpush1.msra.mxu0 0.0
        %3547 = vmatprep.subr.mxu0 0.0
        %3548 = vmatpush1.msra.mxu0 0.0
        %3549 = vmatprep.subr.mxu0 0.0
        %3550 = vmatpush1.msra.mxu0 0.0
        %3551 = vmatprep.subr.mxu0 0.0
        %3552 = vmatpush1.msra.mxu0 0.0
        %3553 = vmatprep.subr.mxu0 %v3464
        %3554 = vmatpush1.msra.mxu0 %v3463
        %3555 = vmatprep.subr.mxu0 %v3462
        %3556 = vmatpush1.msra.mxu0 %v3461
        %3557 = vmatprep.subr.mxu0 %v3460
        %3558 = vmatpush1.msra.mxu0 %v3459
        %3559 = vmatprep.subr.mxu0 %v3458
        %3560 = vmatpush1.msra.mxu0 %v3457
        %3561 = vmatprep.subr.mxu0 %v3456
        %3562 = vmatpush1.msra.mxu0 %v3455
        %3563 = vmatprep.subr.mxu0 %v3454
        %3564 = vmatpush1.msra.mxu0 %v3453
        %3565 = vmatprep.subr.mxu0 %v3452
        %3566 = vmatpush1.msra.mxu0 %v3451
        %3567 = vmatprep.subr.mxu0 %v3450
        %3568 = vmatpush1.msra.mxu0 %v3449
        %3569 = vmatprep.subr.mxu0 0.0
        %3570 = vmatpush2.msra.mxu0 0.0
        %3571 = vmatprep.subr.mxu0 0.0
        %3572 = vmatpush2.msra.mxu0 0.0
        %3573 = vmatprep.subr.mxu0 0.0
        %3574 = vmatpush2.msra.mxu0 0.0
        %3575 = vmatprep.subr.mxu0 0.0
        %3576 = vmatpush2.msra.mxu0 0.0
        %3577 = vmatprep.subr.mxu0 0.0
        %3578 = vmatpush2.msra.mxu0 0.0
        %3579 = vmatprep.subr.mxu0 0.0
        %3580 = vmatpush2.msra.mxu0 0.0
        %3581 = vmatprep.subr.mxu0 0.0
        %3582 = vmatpush2.msra.mxu0 0.0
        %3583 = vmatprep.subr.mxu0 0.0
        %3584 = vmatpush2.msra.mxu0 0.0
        %3585 = vmatprep.subr.mxu0 0.0
        %3586 = vmatpush2.msra.mxu0 0.0
        %3587 = vmatprep.subr.mxu0 0.0
        %3588 = vmatpush2.msra.mxu0 0.0
        %3589 = vmatprep.subr.mxu0 0.0
        %3590 = vmatpush2.msra.mxu0 0.0
        %3591 = vmatprep.subr.mxu0 0.0
        %3592 = vmatpush2.msra.mxu0 0.0
        %3593 = vmatprep.subr.mxu0 0.0
        %3594 = vmatpush2.msra.mxu0 0.0
        %3595 = vmatprep.subr.mxu0 0.0
        %3596 = vmatpush2.msra.mxu0 0.0
        %3597 = vmatprep.subr.mxu0 0.0
        %3598 = vmatpush2.msra.mxu0 0.0
        %3599 = vmatprep.subr.mxu0 0.0
        %3600 = vmatpush2.msra.mxu0 0.0
        %3601 = vmatprep.mubr.f32.mxu0 0.0
        %3602 = vmatmul.mubr.f32.gmra.mxu0 %v3478
        %v3603 = vpop.f32.mrf.mxu0
        %v3604 = vadd.f32 %v3470, %v3603
        %v3605 = vpop.f32.mrf.mxu0
        %v3606 = vadd.f32 %v3474, %v3605
        %3607 = vmatprep.mubr.f32.mxu0 0.0
        %3608 = vmatmul.mubr.f32.gmra.mxu0 %v3481
        %v3609 = vpop.f32.mrf.mxu0
        %v3610 = vadd.f32 %v3470, %v3609
        %v3611 = vpop.f32.mrf.mxu0
        %v3612 = vadd.f32 %v3474, %v3611
        %3613 = vmatprep.mubr.f32.mxu0 0.0
        %3614 = vmatmul.mubr.f32.gmra.mxu0 %v3484
        %v3615 = vpop.f32.mrf.mxu0
        %v3616 = vadd.f32 %v3470, %v3615
        %v3617 = vpop.f32.mrf.mxu0
        %v3618 = vadd.f32 %v3474, %v3617
        %3619 = vmatprep.mubr.f32.mxu0 0.0
        %3620 = vmatmul.mubr.f32.gmra.mxu0 %v3487
        %v3621 = vpop.f32.mrf.mxu0
        %v3622 = vadd.f32 %v3470, %v3621
        %v3623 = vpop.f32.mrf.mxu0
        %v3624 = vadd.f32 %v3474, %v3623
        %3625 = vmatprep.mubr.f32.mxu0 0.0
        %3626 = vmatmul.mubr.f32.gmra.mxu0 %v3490
        %v3627 = vpop.f32.mrf.mxu0
        %v3628 = vadd.f32 %v3470, %v3627
        %v3629 = vpop.f32.mrf.mxu0
        %v3630 = vadd.f32 %v3474, %v3629
        %3631 = vmatprep.mubr.f32.mxu0 0.0
        %3632 = vmatmul.mubr.f32.gmra.mxu0 %v3493
        %v3633 = vpop.f32.mrf.mxu0
        %v3634 = vadd.f32 %v3470, %v3633
        %v3635 = vpop.f32.mrf.mxu0
        %v3636 = vadd.f32 %v3474, %v3635
        %3637 = vmatprep.mubr.f32.mxu0 0.0
        %3638 = vmatmul.mubr.f32.gmra.mxu0 %v3496
        %v3639 = vpop.f32.mrf.mxu0
        %v3640 = vadd.f32 %v3470, %v3639
        %v3641 = vpop.f32.mrf.mxu0
        %v3642 = vadd.f32 %v3474, %v3641
        %3643 = vmatprep.mubr.f32.mxu0 0.0
        %3644 = vmatmul.mubr.f32.gmra.mxu0 %v3499
        %v3645 = vpop.f32.mrf.mxu0
        %v3646 = vadd.f32 %v3470, %v3645
        %v3647 = vpop.f32.mrf.mxu0
        %v3648 = vadd.f32 %v3474, %v3647
        %3649 = vmatprep.mubr.f32.mxu0 0.0
        %3650 = vmatmul.mubr.f32.gmra.mxu0 %v3502
        %v3651 = vpop.f32.mrf.mxu0
        %v3652 = vadd.f32 %v3470, %v3651
        %v3653 = vpop.f32.mrf.mxu0
        %v3654 = vadd.f32 %v3474, %v3653
        %3655 = vmatprep.mubr.f32.mxu0 0.0
        %3656 = vmatmul.mubr.f32.gmra.mxu0 %v3505
        %v3657 = vpop.f32.mrf.mxu0
        %v3658 = vadd.f32 %v3470, %v3657
        %v3659 = vpop.f32.mrf.mxu0
        %v3660 = vadd.f32 %v3474, %v3659
        %3661 = vmatprep.mubr.f32.mxu0 0.0
        %3662 = vmatmul.mubr.f32.gmra.mxu0 %v3508
        %v3663 = vpop.f32.mrf.mxu0
        %v3664 = vadd.f32 %v3470, %v3663
        %v3665 = vpop.f32.mrf.mxu0
        %v3666 = vadd.f32 %v3474, %v3665
        %3667 = vmatprep.mubr.f32.mxu0 0.0
        %3668 = vmatmul.mubr.f32.gmra.mxu0 %v3511
        %v3669 = vpop.f32.mrf.mxu0
        %v3670 = vadd.f32 %v3470, %v3669
        %v3671 = vpop.f32.mrf.mxu0
        %v3672 = vadd.f32 %v3474, %v3671
        %3673 = vmatprep.mubr.f32.mxu0 0.0
        %3674 = vmatmul.mubr.f32.gmra.mxu0 %v3514
        %v3675 = vpop.f32.mrf.mxu0
        %v3676 = vadd.f32 %v3470, %v3675
        %v3677 = vpop.f32.mrf.mxu0
        %v3678 = vadd.f32 %v3474, %v3677
        %3679 = vmatprep.mubr.f32.mxu0 0.0
        %3680 = vmatmul.mubr.f32.gmra.mxu0 %v3517
        %v3681 = vpop.f32.mrf.mxu0
        %v3682 = vadd.f32 %v3470, %v3681
        %v3683 = vpop.f32.mrf.mxu0
        %v3684 = vadd.f32 %v3474, %v3683
        %3685 = vmatprep.mubr.f32.mxu0 0.0
        %3686 = vmatmul.mubr.f32.gmra.mxu0 %v3520
        %v3687 = vpop.f32.mrf.mxu0
        %v3688 = vadd.f32 %v3470, %v3687
        %v3689 = vpop.f32.mrf.mxu0
        %v3690 = vadd.f32 %v3474, %v3689
        %3691 = vmatprep.mubr.f32.mxu0 0.0
        %3692 = vmatmul.mubr.f32.gmra.mxu0 %v3523
        %v3693 = vpop.f32.mrf.mxu0
        %v3694 = vadd.f32 %v3470, %v3693
        %v3695 = vpop.f32.mrf.mxu0
        %v3696 = vadd.f32 %v3474, %v3695
        %3697 = vmatprep.mubr.f32.mxu0 0.0
        %3698 = vmatmul.mubr.f32.gmra.mxu0 %v3526
        %v3699 = vpop.f32.mrf.mxu0
        %v3700 = vadd.f32 %v3470, %v3699
        %v3701 = vpop.f32.mrf.mxu0
        %v3702 = vadd.f32 %v3474, %v3701
        %3703 = vmatprep.mubr.f32.mxu0 0.0
        %3704 = vmatmul.mubr.f32.gmra.mxu0 %v3529
        %v3705 = vpop.f32.mrf.mxu0
        %v3706 = vadd.f32 %v3470, %v3705
        %v3707 = vpop.f32.mrf.mxu0
        %v3708 = vadd.f32 %v3474, %v3707
        %3709 = vmatprep.mubr.f32.mxu0 0.0
        %3710 = vmatmul.mubr.f32.gmra.mxu0 %v3532
        %v3711 = vpop.f32.mrf.mxu0
        %v3712 = vadd.f32 %v3470, %v3711
        %v3713 = vpop.f32.mrf.mxu0
        %v3714 = vadd.f32 %v3474, %v3713
        %3715 = vmatprep.mubr.f32.mxu0 0.0
        %3716 = vmatmul.mubr.f32.gmra.mxu0 %v3535
        %v3717 = vpop.f32.mrf.mxu0
        %v3718 = vadd.f32 %v3470, %v3717
        %v3719 = vpop.f32.mrf.mxu0
        %v3720 = vadd.f32 %v3474, %v3719
        %3721 = vdwg.mxu0
        %3722 = vst [vmem:[#allocation2] sm:$0xff] %v3604
        %3723 = vst.msk [vmem:[#allocation2 + $0x8] sm:$0xff] %vm779, %v3606
        %3724 = vst [vmem:[#allocation2 + $0x10] sm:$0xff] %v3610
        %3725 = vst.msk [vmem:[#allocation2 + $0x18] sm:$0xff] %vm779, %v3612
        %3726 = vst [vmem:[#allocation2 + $0x20] sm:$0xff] %v3616
        %3727 = vst.msk [vmem:[#allocation2 + $0x28] sm:$0xff] %vm779, %v3618
        %3728 = vst [vmem:[#allocation2 + $0x30] sm:$0xff] %v3622
        %3729 = vst.msk [vmem:[#allocation2 + $0x38] sm:$0xff] %vm779, %v3624
        %3730 = vst [vmem:[#allocation2 + $0x40] sm:$0xff] %v3628
        %3731 = vst.msk [vmem:[#allocation2 + $0x48] sm:$0xff] %vm779, %v3630
        %3732 = vst [vmem:[#allocation2 + $0x50] sm:$0xff] %v3634
        %3733 = vst.msk [vmem:[#allocation2 + $0x58] sm:$0xff] %vm779, %v3636
        %3734 = vst [vmem:[#allocation2 + $0x60] sm:$0xff] %v3640
        %3735 = vst.msk [vmem:[#allocation2 + $0x68] sm:$0xff] %vm779, %v3642
        %3736 = vst [vmem:[#allocation2 + $0x70] sm:$0xff] %v3646
        %3737 = vst.msk [vmem:[#allocation2 + $0x78] sm:$0xff] %vm779, %v3648
        %3738 = vst [vmem:[#allocation2 + $0x80] sm:$0xff] %v3652
        %3739 = vst.msk [vmem:[#allocation2 + $0x88] sm:$0xff] %vm779, %v3654
        %3740 = vst [vmem:[#allocation2 + $0x90] sm:$0xff] %v3658
        %3741 = vst.msk [vmem:[#allocation2 + $0x98] sm:$0xff] %vm779, %v3660
        %3742 = vst [vmem:[#allocation2 + $0xa0] sm:$0xff] %v3664
        %3743 = vst.msk [vmem:[#allocation2 + $0xa8] sm:$0xff] %vm779, %v3666
        %3744 = vst [vmem:[#allocation2 + $0xb0] sm:$0xff] %v3670
        %3745 = vst.msk [vmem:[#allocation2 + $0xb8] sm:$0xff] %vm779, %v3672
        %3746 = vst [vmem:[#allocation2 + $0xc0] sm:$0xff] %v3676
        %3747 = vst.msk [vmem:[#allocation2 + $0xc8] sm:$0xff] %vm779, %v3678
        %3748 = vst [vmem:[#allocation2 + $0xd0] sm:$0xff] %v3682
        %3749 = vst.msk [vmem:[#allocation2 + $0xd8] sm:$0xff] %vm779, %v3684
        %3750 = vst [vmem:[#allocation2 + $0xe0] sm:$0xff] %v3688
        %3751 = vst.msk [vmem:[#allocation2 + $0xe8] sm:$0xff] %vm779, %v3690
        %3752 = vst [vmem:[#allocation2 + $0xf0] sm:$0xff] %v3694
        %3753 = vst.msk [vmem:[#allocation2 + $0xf8] sm:$0xff] %vm779, %v3696
        %3754 = vst [vmem:[#allocation2 + $0x100] sm:$0xff] %v3700
        %3755 = vst.msk [vmem:[#allocation2 + $0x108] sm:$0xff] %vm779, %v3702
        %3756 = vst [vmem:[#allocation2 + $0x110] sm:$0xff] %v3706
        %3757 = vst.msk [vmem:[#allocation2 + $0x118] sm:$0xff] %vm779, %v3708
        %3758 = vst [vmem:[#allocation2 + $0x120] sm:$0xff] %v3712
        %3759 = vst.msk [vmem:[#allocation2 + $0x128] sm:$0xff] %vm779, %v3714
        %3760 = vst [vmem:[#allocation2 + $0x130] sm:$0xff] %v3718
        %3761 = vst.msk [vmem:[#allocation2 + $0x138] sm:$0xff] %vm779, %v3720
        %v3762 = vld [vmem:[%s7] sm:$0xff]
        %v3763 = vld [vmem:[%s7 + $0x8] sm:$0xff]
        %v3764 = vld [vmem:[%s7 + $0x10] sm:$0xff]
        %v3765 = vld [vmem:[%s7 + $0x18] sm:$0xff]
        %v3766 = vld [vmem:[%s7 + $0x20] sm:$0xff]
        %v3767 = vld [vmem:[%s7 + $0x28] sm:$0xff]
        %v3768 = vld [vmem:[%s7 + $0x30] sm:$0xff]
        %v3769 = vld [vmem:[%s7 + $0x38] sm:$0xff]
        %v3770 = vld [vmem:[%s7 + $0x40] sm:$0xff]
        %v3771 = vld [vmem:[%s7 + $0x48] sm:$0xff]
        %v3772 = vld [vmem:[%s7 + $0x50] sm:$0xff]
        %v3773 = vld [vmem:[%s7 + $0x58] sm:$0xff]
        %v3774 = vld [vmem:[%s7 + $0x60] sm:$0xff]
        %v3775 = vld [vmem:[%s7 + $0x68] sm:$0xff]
        %v3776 = vld [vmem:[%s7 + $0x70] sm:$0xff]
        %v3777 = vld [vmem:[%s7 + $0x78] sm:$0xff]
        %v3778 = vld [vmem:[%s9] sm:$0x3]
        %v3779 = vld [vmem:[%s838] sm:$0xff]
        %v3780 = vld [vmem:[%s838 + $0x8] sm:$0xff]
        %v3781 = vld [vmem:[%s838 + $0x10] sm:$0xff]
        %v3782 = vld [vmem:[%s838 + $0x18] sm:$0xff]
        %v3783 = vld [vmem:[%s843] sm:$0xff]
        %v3784 = vld [vmem:[%s843 + $0x8] sm:$0xff]
        %v3785 = vld [vmem:[%s843 + $0x10] sm:$0xff]
        %v3786 = vld [vmem:[%s843 + $0x18] sm:$0xff]
        %v3788 = vlaneseq
        %v3789 = vshrl.u32 %v3788, 7
        %v3790 = vsub.s32 0, %v3789
        %v3791 = vrot.slane %v3778, %v3790
        %v3792 = vlaneseq
        %v3793 = vshrl.u32 %v3792, 7
        %v3794 = vsub.s32 1, %v3793
        %v3795 = vrot.slane %v3778, %v3794
        %3798 = vmatprep.subr.mxu0 0.0
        %3799 = vmatpush1.msra.mxu0 0.0
        %3800 = vmatprep.subr.mxu0 0.0
        %3801 = vmatpush1.msra.mxu0 0.0
        %3802 = vmatprep.subr.mxu0 0.0
        %3803 = vmatpush1.msra.mxu0 0.0
        %3804 = vmatprep.subr.mxu0 0.0
        %3805 = vmatpush1.msra.mxu0 0.0
        %3806 = vmatprep.subr.mxu0 0.0
        %3807 = vmatpush1.msra.mxu0 0.0
        %3808 = vmatprep.subr.mxu0 0.0
        %3809 = vmatpush1.msra.mxu0 0.0
        %3810 = vmatprep.subr.mxu0 0.0
        %3811 = vmatpush1.msra.mxu0 0.0
        %3812 = vmatprep.subr.mxu0 0.0
        %3813 = vmatpush1.msra.mxu0 0.0
        %3814 = vmatprep.subr.mxu0 %v3777
        %3815 = vmatpush1.msra.mxu0 %v3776
        %3816 = vmatprep.subr.mxu0 %v3775
        %3817 = vmatpush1.msra.mxu0 %v3774
        %3818 = vmatprep.subr.mxu0 %v3773
        %3819 = vmatpush1.msra.mxu0 %v3772
        %3820 = vmatprep.subr.mxu0 %v3771
        %3821 = vmatpush1.msra.mxu0 %v3770
        %3822 = vmatprep.subr.mxu0 %v3769
        %3823 = vmatpush1.msra.mxu0 %v3768
        %3824 = vmatprep.subr.mxu0 %v3767
        %3825 = vmatpush1.msra.mxu0 %v3766
        %3826 = vmatprep.subr.mxu0 %v3765
        %3827 = vmatpush1.msra.mxu0 %v3764
        %3828 = vmatprep.subr.mxu0 %v3763
        %3829 = vmatpush1.msra.mxu0 %v3762
        %3830 = vmatprep.subr.mxu0 0.0
        %3831 = vmatpush2.msra.mxu0 0.0
        %3832 = vmatprep.subr.mxu0 0.0
        %3833 = vmatpush2.msra.mxu0 0.0
        %3834 = vmatprep.subr.mxu0 0.0
        %3835 = vmatpush2.msra.mxu0 0.0
        %3836 = vmatprep.subr.mxu0 0.0
        %3837 = vmatpush2.msra.mxu0 0.0
        %3838 = vmatprep.subr.mxu0 0.0
        %3839 = vmatpush2.msra.mxu0 0.0
        %3840 = vmatprep.subr.mxu0 0.0
        %3841 = vmatpush2.msra.mxu0 0.0
        %3842 = vmatprep.subr.mxu0 0.0
        %3843 = vmatpush2.msra.mxu0 0.0
        %3844 = vmatprep.subr.mxu0 0.0
        %3845 = vmatpush2.msra.mxu0 0.0
        %3846 = vmatprep.subr.mxu0 0.0
        %3847 = vmatpush2.msra.mxu0 0.0
        %3848 = vmatprep.subr.mxu0 0.0
        %3849 = vmatpush2.msra.mxu0 0.0
        %3850 = vmatprep.subr.mxu0 0.0
        %3851 = vmatpush2.msra.mxu0 0.0
        %3852 = vmatprep.subr.mxu0 0.0
        %3853 = vmatpush2.msra.mxu0 0.0
        %3854 = vmatprep.subr.mxu0 0.0
        %3855 = vmatpush2.msra.mxu0 0.0
        %3856 = vmatprep.subr.mxu0 0.0
        %3857 = vmatpush2.msra.mxu0 0.0
        %3858 = vmatprep.subr.mxu0 0.0
        %3859 = vmatpush2.msra.mxu0 0.0
        %3860 = vmatprep.subr.mxu0 0.0
        %3861 = vmatpush2.msra.mxu0 0.0
        %3862 = vmatprep.mubr.f32.mxu0 0.0
        %3863 = vmatmul.mubr.f32.gmra.mxu0 %v860
        %v3864 = vpop.f32.mrf.mxu0
        %v3865 = vadd.f32 %v3791, %v3864
        %v3866 = vpop.f32.mrf.mxu0
        %v3867 = vadd.f32 %v3795, %v3866
        %3868 = vmatprep.mubr.f32.mxu0 0.0
        %3869 = vmatmul.mubr.f32.gmra.mxu0 %v860
        %v3870 = vpop.f32.mrf.mxu0
        %v3871 = vadd.f32 %v3791, %v3870
        %v3872 = vpop.f32.mrf.mxu0
        %v3873 = vadd.f32 %v3795, %v3872
        %3874 = vdwg.mxu0
        %v3875 = vadd.f32 %v3779, %v3865
        %v3876 = vadd.f32 %v3781, %v3871
        %v3877 = vmul.f32 %v3875, 0.5
        %v3878 = vmul.f32 %v3876, 0.5
        %v3879 = vtanh.pop %v3877
        %v3880 = vtanh.pop %v3878
        %v3881 = vadd.f32 %v3879, 1.0
        %v3882 = vadd.f32 %v3880, 1.0
        %v3883 = vmul.f32 %v3881, 0.5
        %v3884 = vmul.f32 %v3882, 0.5
        %3887 = vrot.lane.b32.xlu0 %v3865, 64
        %v3888 = vpop.permute.xlu0 %3887
        %3889 = vrot.lane.b32.xlu0 %v3871, 64
        %v3890 = vpop.permute.xlu0 %3889
        %v3893 = vmul.f32 %v3883, %v3888
        %v3894 = vmul.f32 %v3884, %v3890
        %3897 = vrot.lane.b32.xlu0 %v3893, 64
        %v3898 = vpop.permute.xlu0 %3897
        %3899 = vrot.lane.b32.xlu0 %v3894, 64
        %v3900 = vpop.permute.xlu0 %3899
        %v3903 = vadd.f32 %v3779, %v3898
        %v3904 = vadd.f32 %v3781, %v3900
        %v3905 = vtanh.pop %v3903
        %v3906 = vtanh.pop %v3904
        %v3907 = vsub.f32 1.0, %v3883
        %v3908 = vsub.f32 1.0, %v3884
        %3911 = vrot.lane.b32.xlu0 %v3905, 96
        %v3912 = vpop.permute.xlu0 %3911
        %3913 = vrot.lane.b32.xlu0 %v3906, 96
        %v3914 = vpop.permute.xlu0 %3913
        %v3917 = vmul.f32 %v3907, %v3912
        %v3918 = vmul.f32 %v3908, %v3914
        %v3919 = vmul.f32 %v3883, 0.0
        %v3920 = vmul.f32 %v3884, 0.0
        %v3921 = vadd.f32 %v3917, %v3919
        %v3922 = vadd.f32 %v3918, %v3920
        %v3923 = vadd.f32 %v3783, %v3865
        %v3924 = vadd.f32 %v3784, %v3867
        %v3925 = vadd.f32 %v3785, %v3871
        %v3926 = vadd.f32 %v3786, %v3873
        %v3927 = vmul.f32 %v3923, 0.5
        %v3928 = vmul.f32 %v3924, 0.5
        %v3929 = vmul.f32 %v3925, 0.5
        %v3930 = vmul.f32 %v3926, 0.5
        %v3931 = vtanh.pop %v3927
        %v3932 = vtanh.pop %v3928
        %v3933 = vtanh.pop %v3929
        %v3934 = vtanh.pop %v3930
        %v3935 = vadd.f32 %v3931, 1.0
        %v3936 = vadd.f32 %v3932, 1.0
        %v3937 = vadd.f32 %v3933, 1.0
        %v3938 = vadd.f32 %v3934, 1.0
        %v3939 = vmul.f32 %v3935, 0.5
        %v3940 = vmul.f32 %v3936, 0.5
        %v3941 = vmul.f32 %v3937, 0.5
        %v3942 = vmul.f32 %v3938, 0.5
        %3945 = vrot.lane.b32.xlu0 %v3867, 64
        %v3946 = vpop.permute.xlu0 %3945
        %3947 = vrot.lane.b32.xlu0 %v3873, 64
        %v3948 = vpop.permute.xlu0 %3947
        %v3951 = vmul.f32 %v3939, %v3946
        %v3952 = vmul.f32 %v3941, %v3948
        %3955 = vrot.lane.b32.xlu0 %v3951, 64
        %v3956 = vpop.permute.xlu0 %3955
        %3957 = vrot.lane.b32.xlu0 %v3952, 64
        %v3958 = vpop.permute.xlu0 %3957
        %v3961 = vadd.f32 %v3784, %v3956
        %v3962 = vadd.f32 %v3786, %v3958
        %v3963 = vtanh.pop %v3961
        %v3964 = vtanh.pop %v3962
        %v3965 = vsub.f32 1.0, %v3940
        %v3966 = vsub.f32 1.0, %v3942
        %3969 = vrot.lane.b32.xlu0 %v3963, 96
        %v3970 = vpop.permute.xlu0 %3969
        %3971 = vrot.lane.b32.xlu0 %v3964, 96
        %v3972 = vpop.permute.xlu0 %3971
        %v3975 = vmul.f32 %v3965, %v3970
        %v3976 = vmul.f32 %v3966, %v3972
        %v3977 = vmul.f32 %v3940, 0.0
        %v3978 = vmul.f32 %v3942, 0.0
        %v3979 = vadd.f32 %v3975, %v3977
        %v3980 = vadd.f32 %v3976, %v3978
        %v3981 = vsel %vm1057, %v3921, 0.0
        %v3982 = vsel %vm1058, %v3922, 0.0
        %v3983 = vsel %vm1069, %v3979, 0.0
        %v3984 = vsel %vm1070, %v3980, 0.0
        %v3985 = vadd.f32 %v3981, 0.0
        %v3986 = vadd.f32 %v3982, 0.0
        %v3987 = vadd.f32 %v3983, 0.0
        %v3988 = vadd.f32 %v3984, 0.0
        %v3989 = vld [vmem:[%s1089] sm:$0xff]
        %v3990 = vld [vmem:[%s1089 + $0x8] sm:$0xff]
        %v3991 = vld [vmem:[%s1089 + $0x10] sm:$0xff]
        %v3992 = vld [vmem:[%s1089 + $0x18] sm:$0xff]
        %v3993 = vld [vmem:[%s1094] sm:$0xff]
        %v3994 = vld [vmem:[%s1094 + $0x8] sm:$0xff]
        %v3995 = vld [vmem:[%s1094 + $0x10] sm:$0xff]
        %v3996 = vld [vmem:[%s1094 + $0x18] sm:$0xff]
        %3999 = vrot.lane.b32.xlu0 %v3981, 96
        %v4000 = vpop.permute.xlu0 %3999
        %4001 = vrot.lane.b32.xlu0 %v3982, 96
        %v4002 = vpop.permute.xlu0 %4001
        %4007 = vrot.lane.b32.xlu0 %v3983, 32
        %v4008 = vpop.permute.xlu0 %4007
        %4009 = vrot.lane.b32.xlu0 %v3984, 32
        %v4010 = vpop.permute.xlu0 %4009
        %v4013 = vsel %vm1081, %v4000, %v4008
        %v4014 = vsel %vm1081, %v4002, %v4010
        %v4016 = vsel %vm779, %v4013, 0
        %v4019 = vsel %vm779, %v4014, 0
        %4021 = vmatprep.subr.mxu0 0.0
        %4022 = vmatpush1.msra.mxu0 0.0
        %4023 = vmatprep.subr.mxu0 0.0
        %4024 = vmatpush1.msra.mxu0 0.0
        %4025 = vmatprep.subr.mxu0 0.0
        %4026 = vmatpush1.msra.mxu0 0.0
        %4027 = vmatprep.subr.mxu0 0.0
        %4028 = vmatpush1.msra.mxu0 0.0
        %4029 = vmatprep.subr.mxu0 0.0
        %4030 = vmatpush1.msra.mxu0 0.0
        %4031 = vmatprep.subr.mxu0 0.0
        %4032 = vmatpush1.msra.mxu0 0.0
        %4033 = vmatprep.subr.mxu0 0.0
        %4034 = vmatpush1.msra.mxu0 0.0
        %4035 = vmatprep.subr.mxu0 0.0
        %4036 = vmatpush1.msra.mxu0 0.0
        %4037 = vmatprep.subr.mxu0 %v3777
        %4038 = vmatpush1.msra.mxu0 %v3776
        %4039 = vmatprep.subr.mxu0 %v3775
        %4040 = vmatpush1.msra.mxu0 %v3774
        %4041 = vmatprep.subr.mxu0 %v3773
        %4042 = vmatpush1.msra.mxu0 %v3772
        %4043 = vmatprep.subr.mxu0 %v3771
        %4044 = vmatpush1.msra.mxu0 %v3770
        %4045 = vmatprep.subr.mxu0 %v3769
        %4046 = vmatpush1.msra.mxu0 %v3768
        %4047 = vmatprep.subr.mxu0 %v3767
        %4048 = vmatpush1.msra.mxu0 %v3766
        %4049 = vmatprep.subr.mxu0 %v3765
        %4050 = vmatpush1.msra.mxu0 %v3764
        %4051 = vmatprep.subr.mxu0 %v3763
        %4052 = vmatpush1.msra.mxu0 %v3762
        %4053 = vmatprep.subr.mxu0 0.0
        %4054 = vmatpush2.msra.mxu0 0.0
        %4055 = vmatprep.subr.mxu0 0.0
        %4056 = vmatpush2.msra.mxu0 0.0
        %4057 = vmatprep.subr.mxu0 0.0
        %4058 = vmatpush2.msra.mxu0 0.0
        %4059 = vmatprep.subr.mxu0 0.0
        %4060 = vmatpush2.msra.mxu0 0.0
        %4061 = vmatprep.subr.mxu0 0.0
        %4062 = vmatpush2.msra.mxu0 0.0
        %4063 = vmatprep.subr.mxu0 0.0
        %4064 = vmatpush2.msra.mxu0 0.0
        %4065 = vmatprep.subr.mxu0 0.0
        %4066 = vmatpush2.msra.mxu0 0.0
        %4067 = vmatprep.subr.mxu0 0.0
        %4068 = vmatpush2.msra.mxu0 0.0
        %4069 = vmatprep.subr.mxu0 0.0
        %4070 = vmatpush2.msra.mxu0 0.0
        %4071 = vmatprep.subr.mxu0 0.0
        %4072 = vmatpush2.msra.mxu0 0.0
        %4073 = vmatprep.subr.mxu0 0.0
        %4074 = vmatpush2.msra.mxu0 0.0
        %4075 = vmatprep.subr.mxu0 0.0
        %4076 = vmatpush2.msra.mxu0 0.0
        %4077 = vmatprep.subr.mxu0 0.0
        %4078 = vmatpush2.msra.mxu0 0.0
        %4079 = vmatprep.subr.mxu0 0.0
        %4080 = vmatpush2.msra.mxu0 0.0
        %4081 = vmatprep.subr.mxu0 0.0
        %4082 = vmatpush2.msra.mxu0 0.0
        %4083 = vmatprep.subr.mxu0 0.0
        %4084 = vmatpush2.msra.mxu0 0.0
        %4085 = vmatprep.mubr.f32.mxu0 0.0
        %4086 = vmatmul.mubr.f32.gmra.mxu0 %v4016
        %v4087 = vpop.f32.mrf.mxu0
        %v4088 = vadd.f32 %v3791, %v4087
        %v4089 = vpop.f32.mrf.mxu0
        %v4090 = vadd.f32 %v3795, %v4089
        %4091 = vmatprep.mubr.f32.mxu0 0.0
        %4092 = vmatmul.mubr.f32.gmra.mxu0 %v4019
        %v4093 = vpop.f32.mrf.mxu0
        %v4094 = vadd.f32 %v3791, %v4093
        %v4095 = vpop.f32.mrf.mxu0
        %v4096 = vadd.f32 %v3795, %v4095
        %4097 = vdwg.mxu0
        %v4098 = vadd.f32 %v3989, %v4088
        %v4099 = vadd.f32 %v3991, %v4094
        %v4100 = vmul.f32 %v4098, 0.5
        %v4101 = vmul.f32 %v4099, 0.5
        %v4102 = vtanh.pop %v4100
        %v4103 = vtanh.pop %v4101
        %v4104 = vadd.f32 %v4102, 1.0
        %v4105 = vadd.f32 %v4103, 1.0
        %v4106 = vmul.f32 %v4104, 0.5
        %v4107 = vmul.f32 %v4105, 0.5
        %4110 = vrot.lane.b32.xlu0 %v4088, 64
        %v4111 = vpop.permute.xlu0 %4110
        %4112 = vrot.lane.b32.xlu0 %v4094, 64
        %v4113 = vpop.permute.xlu0 %4112
        %v4116 = vmul.f32 %v4106, %v4111
        %v4117 = vmul.f32 %v4107, %v4113
        %4120 = vrot.lane.b32.xlu0 %v4116, 64
        %v4121 = vpop.permute.xlu0 %4120
        %4122 = vrot.lane.b32.xlu0 %v4117, 64
        %v4123 = vpop.permute.xlu0 %4122
        %v4126 = vadd.f32 %v3989, %v4121
        %v4127 = vadd.f32 %v3991, %v4123
        %v4128 = vtanh.pop %v4126
        %v4129 = vtanh.pop %v4127
        %v4130 = vsub.f32 1.0, %v4106
        %v4131 = vsub.f32 1.0, %v4107
        %4134 = vrot.lane.b32.xlu0 %v4128, 96
        %v4135 = vpop.permute.xlu0 %4134
        %4136 = vrot.lane.b32.xlu0 %v4129, 96
        %v4137 = vpop.permute.xlu0 %4136
        %v4140 = vmul.f32 %v4130, %v4135
        %v4141 = vmul.f32 %v4131, %v4137
        %v4142 = vmul.f32 %v4106, %v3981
        %v4143 = vmul.f32 %v4107, %v3982
        %v4144 = vadd.f32 %v4140, %v4142
        %v4145 = vadd.f32 %v4141, %v4143
        %v4146 = vadd.f32 %v3993, %v4088
        %v4147 = vadd.f32 %v3994, %v4090
        %v4148 = vadd.f32 %v3995, %v4094
        %v4149 = vadd.f32 %v3996, %v4096
        %v4150 = vmul.f32 %v4146, 0.5
        %v4151 = vmul.f32 %v4147, 0.5
        %v4152 = vmul.f32 %v4148, 0.5
        %v4153 = vmul.f32 %v4149, 0.5
        %v4154 = vtanh.pop %v4150
        %v4155 = vtanh.pop %v4151
        %v4156 = vtanh.pop %v4152
        %v4157 = vtanh.pop %v4153
        %v4158 = vadd.f32 %v4154, 1.0
        %v4159 = vadd.f32 %v4155, 1.0
        %v4160 = vadd.f32 %v4156, 1.0
        %v4161 = vadd.f32 %v4157, 1.0
        %v4162 = vmul.f32 %v4158, 0.5
        %v4163 = vmul.f32 %v4159, 0.5
        %v4164 = vmul.f32 %v4160, 0.5
        %v4165 = vmul.f32 %v4161, 0.5
        %4168 = vrot.lane.b32.xlu0 %v4090, 64
        %v4169 = vpop.permute.xlu0 %4168
        %4170 = vrot.lane.b32.xlu0 %v4096, 64
        %v4171 = vpop.permute.xlu0 %4170
        %v4174 = vmul.f32 %v4162, %v4169
        %v4175 = vmul.f32 %v4164, %v4171
        %4178 = vrot.lane.b32.xlu0 %v4174, 64
        %v4179 = vpop.permute.xlu0 %4178
        %4180 = vrot.lane.b32.xlu0 %v4175, 64
        %v4181 = vpop.permute.xlu0 %4180
        %v4184 = vadd.f32 %v3994, %v4179
        %v4185 = vadd.f32 %v3996, %v4181
        %v4186 = vtanh.pop %v4184
        %v4187 = vtanh.pop %v4185
        %v4188 = vsub.f32 1.0, %v4163
        %v4189 = vsub.f32 1.0, %v4165
        %4192 = vrot.lane.b32.xlu0 %v4186, 96
        %v4193 = vpop.permute.xlu0 %4192
        %4194 = vrot.lane.b32.xlu0 %v4187, 96
        %v4195 = vpop.permute.xlu0 %4194
        %v4198 = vmul.f32 %v4188, %v4193
        %v4199 = vmul.f32 %v4189, %v4195
        %v4200 = vmul.f32 %v4163, %v3983
        %v4201 = vmul.f32 %v4165, %v3984
        %v4202 = vadd.f32 %v4198, %v4200
        %v4203 = vadd.f32 %v4199, %v4201
        %v4204 = vsel %vm1310, %v4144, %v3981
        %v4205 = vsel %vm1311, %v4145, %v3982
        %v4206 = vsel %vm1322, %v4202, %v3983
        %v4207 = vsel %vm1323, %v4203, %v3984
        %v4208 = vsel %vm1310, %v4144, 0.0
        %v4209 = vsel %vm1311, %v4145, 0.0
        %v4210 = vsel %vm1322, %v4202, 0.0
        %v4211 = vsel %vm1323, %v4203, 0.0
        %v4212 = vadd.f32 %v3985, %v4208
        %v4213 = vadd.f32 %v3986, %v4209
        %v4214 = vadd.f32 %v3987, %v4210
        %v4215 = vadd.f32 %v3988, %v4211
        %v4216 = vld [vmem:[%s1346] sm:$0xff]
        %v4217 = vld [vmem:[%s1346 + $0x8] sm:$0xff]
        %v4218 = vld [vmem:[%s1346 + $0x10] sm:$0xff]
        %v4219 = vld [vmem:[%s1346 + $0x18] sm:$0xff]
        %v4220 = vld [vmem:[%s1351] sm:$0xff]
        %v4221 = vld [vmem:[%s1351 + $0x8] sm:$0xff]
        %v4222 = vld [vmem:[%s1351 + $0x10] sm:$0xff]
        %v4223 = vld [vmem:[%s1351 + $0x18] sm:$0xff]
        %4226 = vrot.lane.b32.xlu0 %v4204, 96
        %v4227 = vpop.permute.xlu0 %4226
        %4228 = vrot.lane.b32.xlu0 %v4205, 96
        %v4229 = vpop.permute.xlu0 %4228
        %4234 = vrot.lane.b32.xlu0 %v4206, 32
        %v4235 = vpop.permute.xlu0 %4234
        %4236 = vrot.lane.b32.xlu0 %v4207, 32
        %v4237 = vpop.permute.xlu0 %4236
        %v4240 = vsel %vm1081, %v4227, %v4235
        %v4241 = vsel %vm1081, %v4229, %v4237
        %v4243 = vsel %vm779, %v4240, 0
        %v4246 = vsel %vm779, %v4241, 0
        %4248 = vmatprep.subr.mxu0 0.0
        %4249 = vmatpush1.msra.mxu0 0.0
        %4250 = vmatprep.subr.mxu0 0.0
        %4251 = vmatpush1.msra.mxu0 0.0
        %4252 = vmatprep.subr.mxu0 0.0
        %4253 = vmatpush1.msra.mxu0 0.0
        %4254 = vmatprep.subr.mxu0 0.0
        %4255 = vmatpush1.msra.mxu0 0.0
        %4256 = vmatprep.subr.mxu0 0.0
        %4257 = vmatpush1.msra.mxu0 0.0
        %4258 = vmatprep.subr.mxu0 0.0
        %4259 = vmatpush1.msra.mxu0 0.0
        %4260 = vmatprep.subr.mxu0 0.0
        %4261 = vmatpush1.msra.mxu0 0.0
        %4262 = vmatprep.subr.mxu0 0.0
        %4263 = vmatpush1.msra.mxu0 0.0
        %4264 = vmatprep.subr.mxu0 %v3777
        %4265 = vmatpush1.msra.mxu0 %v3776
        %4266 = vmatprep.subr.mxu0 %v3775
        %4267 = vmatpush1.msra.mxu0 %v3774
        %4268 = vmatprep.subr.mxu0 %v3773
        %4269 = vmatpush1.msra.mxu0 %v3772
        %4270 = vmatprep.subr.mxu0 %v3771
        %4271 = vmatpush1.msra.mxu0 %v3770
        %4272 = vmatprep.subr.mxu0 %v3769
        %4273 = vmatpush1.msra.mxu0 %v3768
        %4274 = vmatprep.subr.mxu0 %v3767
        %4275 = vmatpush1.msra.mxu0 %v3766
        %4276 = vmatprep.subr.mxu0 %v3765
        %4277 = vmatpush1.msra.mxu0 %v3764
        %4278 = vmatprep.subr.mxu0 %v3763
        %4279 = vmatpush1.msra.mxu0 %v3762
        %4280 = vmatprep.subr.mxu0 0.0
        %4281 = vmatpush2.msra.mxu0 0.0
        %4282 = vmatprep.subr.mxu0 0.0
        %4283 = vmatpush2.msra.mxu0 0.0
        %4284 = vmatprep.subr.mxu0 0.0
        %4285 = vmatpush2.msra.mxu0 0.0
        %4286 = vmatprep.subr.mxu0 0.0
        %4287 = vmatpush2.msra.mxu0 0.0
        %4288 = vmatprep.subr.mxu0 0.0
        %4289 = vmatpush2.msra.mxu0 0.0
        %4290 = vmatprep.subr.mxu0 0.0
        %4291 = vmatpush2.msra.mxu0 0.0
        %4292 = vmatprep.subr.mxu0 0.0
        %4293 = vmatpush2.msra.mxu0 0.0
        %4294 = vmatprep.subr.mxu0 0.0
        %4295 = vmatpush2.msra.mxu0 0.0
        %4296 = vmatprep.subr.mxu0 0.0
        %4297 = vmatpush2.msra.mxu0 0.0
        %4298 = vmatprep.subr.mxu0 0.0
        %4299 = vmatpush2.msra.mxu0 0.0
        %4300 = vmatprep.subr.mxu0 0.0
        %4301 = vmatpush2.msra.mxu0 0.0
        %4302 = vmatprep.subr.mxu0 0.0
        %4303 = vmatpush2.msra.mxu0 0.0
        %4304 = vmatprep.subr.mxu0 0.0
        %4305 = vmatpush2.msra.mxu0 0.0
        %4306 = vmatprep.subr.mxu0 0.0
        %4307 = vmatpush2.msra.mxu0 0.0
        %4308 = vmatprep.subr.mxu0 0.0
        %4309 = vmatpush2.msra.mxu0 0.0
        %4310 = vmatprep.subr.mxu0 0.0
        %4311 = vmatpush2.msra.mxu0 0.0
        %4312 = vmatprep.mubr.f32.mxu0 0.0
        %4313 = vmatmul.mubr.f32.gmra.mxu0 %v4243
        %v4314 = vpop.f32.mrf.mxu0
        %v4315 = vadd.f32 %v3791, %v4314
        %v4316 = vpop.f32.mrf.mxu0
        %v4317 = vadd.f32 %v3795, %v4316
        %4318 = vmatprep.mubr.f32.mxu0 0.0
        %4319 = vmatmul.mubr.f32.gmra.mxu0 %v4246
        %v4320 = vpop.f32.mrf.mxu0
        %v4321 = vadd.f32 %v3791, %v4320
        %v4322 = vpop.f32.mrf.mxu0
        %v4323 = vadd.f32 %v3795, %v4322
        %4324 = vdwg.mxu0
        %v4325 = vadd.f32 %v4216, %v4315
        %v4326 = vadd.f32 %v4218, %v4321
        %v4327 = vmul.f32 %v4325, 0.5
        %v4328 = vmul.f32 %v4326, 0.5
        %v4329 = vtanh.pop %v4327
        %v4330 = vtanh.pop %v4328
        %v4331 = vadd.f32 %v4329, 1.0
        %v4332 = vadd.f32 %v4330, 1.0
        %v4333 = vmul.f32 %v4331, 0.5
        %v4334 = vmul.f32 %v4332, 0.5
        %4337 = vrot.lane.b32.xlu0 %v4315, 64
        %v4338 = vpop.permute.xlu0 %4337
        %4339 = vrot.lane.b32.xlu0 %v4321, 64
        %v4340 = vpop.permute.xlu0 %4339
        %v4343 = vmul.f32 %v4333, %v4338
        %v4344 = vmul.f32 %v4334, %v4340
        %4347 = vrot.lane.b32.xlu0 %v4343, 64
        %v4348 = vpop.permute.xlu0 %4347
        %4349 = vrot.lane.b32.xlu0 %v4344, 64
        %v4350 = vpop.permute.xlu0 %4349
        %v4353 = vadd.f32 %v4216, %v4348
        %v4354 = vadd.f32 %v4218, %v4350
        %v4355 = vtanh.pop %v4353
        %v4356 = vtanh.pop %v4354
        %v4357 = vsub.f32 1.0, %v4333
        %v4358 = vsub.f32 1.0, %v4334
        %4361 = vrot.lane.b32.xlu0 %v4355, 96
        %v4362 = vpop.permute.xlu0 %4361
        %4363 = vrot.lane.b32.xlu0 %v4356, 96
        %v4364 = vpop.permute.xlu0 %4363
        %v4367 = vmul.f32 %v4357, %v4362
        %v4368 = vmul.f32 %v4358, %v4364
        %v4369 = vmul.f32 %v4333, %v4204
        %v4370 = vmul.f32 %v4334, %v4205
        %v4371 = vadd.f32 %v4367, %v4369
        %v4372 = vadd.f32 %v4368, %v4370
        %v4373 = vadd.f32 %v4220, %v4315
        %v4374 = vadd.f32 %v4221, %v4317
        %v4375 = vadd.f32 %v4222, %v4321
        %v4376 = vadd.f32 %v4223, %v4323
        %v4377 = vmul.f32 %v4373, 0.5
        %v4378 = vmul.f32 %v4374, 0.5
        %v4379 = vmul.f32 %v4375, 0.5
        %v4380 = vmul.f32 %v4376, 0.5
        %v4381 = vtanh.pop %v4377
        %v4382 = vtanh.pop %v4378
        %v4383 = vtanh.pop %v4379
        %v4384 = vtanh.pop %v4380
        %v4385 = vadd.f32 %v4381, 1.0
        %v4386 = vadd.f32 %v4382, 1.0
        %v4387 = vadd.f32 %v4383, 1.0
        %v4388 = vadd.f32 %v4384, 1.0
        %v4389 = vmul.f32 %v4385, 0.5
        %v4390 = vmul.f32 %v4386, 0.5
        %v4391 = vmul.f32 %v4387, 0.5
        %v4392 = vmul.f32 %v4388, 0.5
        %4395 = vrot.lane.b32.xlu0 %v4317, 64
        %v4396 = vpop.permute.xlu0 %4395
        %4397 = vrot.lane.b32.xlu0 %v4323, 64
        %v4398 = vpop.permute.xlu0 %4397
        %v4401 = vmul.f32 %v4389, %v4396
        %v4402 = vmul.f32 %v4391, %v4398
        %4405 = vrot.lane.b32.xlu0 %v4401, 64
        %v4406 = vpop.permute.xlu0 %4405
        %4407 = vrot.lane.b32.xlu0 %v4402, 64
        %v4408 = vpop.permute.xlu0 %4407
        %v4411 = vadd.f32 %v4221, %v4406
        %v4412 = vadd.f32 %v4223, %v4408
        %v4413 = vtanh.pop %v4411
        %v4414 = vtanh.pop %v4412
        %v4415 = vsub.f32 1.0, %v4390
        %v4416 = vsub.f32 1.0, %v4392
        %4419 = vrot.lane.b32.xlu0 %v4413, 96
        %v4420 = vpop.permute.xlu0 %4419
        %4421 = vrot.lane.b32.xlu0 %v4414, 96
        %v4422 = vpop.permute.xlu0 %4421
        %v4425 = vmul.f32 %v4415, %v4420
        %v4426 = vmul.f32 %v4416, %v4422
        %v4427 = vmul.f32 %v4390, %v4206
        %v4428 = vmul.f32 %v4392, %v4207
        %v4429 = vadd.f32 %v4425, %v4427
        %v4430 = vadd.f32 %v4426, %v4428
        %v4431 = vsel %vm1575, %v4371, %v4204
        %v4432 = vsel %vm1576, %v4372, %v4205
        %v4433 = vsel %vm1587, %v4429, %v4206
        %v4434 = vsel %vm1588, %v4430, %v4207
        %v4435 = vsel %vm1575, %v4371, 0.0
        %v4436 = vsel %vm1576, %v4372, 0.0
        %v4437 = vsel %vm1587, %v4429, 0.0
        %v4438 = vsel %vm1588, %v4430, 0.0
        %v4439 = vadd.f32 %v4212, %v4435
        %v4440 = vadd.f32 %v4213, %v4436
        %v4441 = vadd.f32 %v4214, %v4437
        %v4442 = vadd.f32 %v4215, %v4438
        %v4443 = vld [vmem:[%s1611] sm:$0xff]
        %v4444 = vld [vmem:[%s1611 + $0x8] sm:$0xff]
        %v4445 = vld [vmem:[%s1611 + $0x10] sm:$0xff]
        %v4446 = vld [vmem:[%s1611 + $0x18] sm:$0xff]
        %v4447 = vld [vmem:[%s1616] sm:$0xff]
        %v4448 = vld [vmem:[%s1616 + $0x8] sm:$0xff]
        %v4449 = vld [vmem:[%s1616 + $0x10] sm:$0xff]
        %v4450 = vld [vmem:[%s1616 + $0x18] sm:$0xff]
        %4453 = vrot.lane.b32.xlu0 %v4431, 96
        %v4454 = vpop.permute.xlu0 %4453
        %4455 = vrot.lane.b32.xlu0 %v4432, 96
        %v4456 = vpop.permute.xlu0 %4455
        %4461 = vrot.lane.b32.xlu0 %v4433, 32
        %v4462 = vpop.permute.xlu0 %4461
        %4463 = vrot.lane.b32.xlu0 %v4434, 32
        %v4464 = vpop.permute.xlu0 %4463
        %v4467 = vsel %vm1081, %v4454, %v4462
        %v4468 = vsel %vm1081, %v4456, %v4464
        %v4470 = vsel %vm779, %v4467, 0
        %v4473 = vsel %vm779, %v4468, 0
        %4475 = vmatprep.subr.mxu0 0.0
        %4476 = vmatpush1.msra.mxu0 0.0
        %4477 = vmatprep.subr.mxu0 0.0
        %4478 = vmatpush1.msra.mxu0 0.0
        %4479 = vmatprep.subr.mxu0 0.0
        %4480 = vmatpush1.msra.mxu0 0.0
        %4481 = vmatprep.subr.mxu0 0.0
        %4482 = vmatpush1.msra.mxu0 0.0
        %4483 = vmatprep.subr.mxu0 0.0
        %4484 = vmatpush1.msra.mxu0 0.0
        %4485 = vmatprep.subr.mxu0 0.0
        %4486 = vmatpush1.msra.mxu0 0.0
        %4487 = vmatprep.subr.mxu0 0.0
        %4488 = vmatpush1.msra.mxu0 0.0
        %4489 = vmatprep.subr.mxu0 0.0
        %4490 = vmatpush1.msra.mxu0 0.0
        %4491 = vmatprep.subr.mxu0 %v3777
        %4492 = vmatpush1.msra.mxu0 %v3776
        %4493 = vmatprep.subr.mxu0 %v3775
        %4494 = vmatpush1.msra.mxu0 %v3774
        %4495 = vmatprep.subr.mxu0 %v3773
        %4496 = vmatpush1.msra.mxu0 %v3772
        %4497 = vmatprep.subr.mxu0 %v3771
        %4498 = vmatpush1.msra.mxu0 %v3770
        %4499 = vmatprep.subr.mxu0 %v3769
        %4500 = vmatpush1.msra.mxu0 %v3768
        %4501 = vmatprep.subr.mxu0 %v3767
        %4502 = vmatpush1.msra.mxu0 %v3766
        %4503 = vmatprep.subr.mxu0 %v3765
        %4504 = vmatpush1.msra.mxu0 %v3764
        %4505 = vmatprep.subr.mxu0 %v3763
        %4506 = vmatpush1.msra.mxu0 %v3762
        %4507 = vmatprep.subr.mxu0 0.0
        %4508 = vmatpush2.msra.mxu0 0.0
        %4509 = vmatprep.subr.mxu0 0.0
        %4510 = vmatpush2.msra.mxu0 0.0
        %4511 = vmatprep.subr.mxu0 0.0
        %4512 = vmatpush2.msra.mxu0 0.0
        %4513 = vmatprep.subr.mxu0 0.0
        %4514 = vmatpush2.msra.mxu0 0.0
        %4515 = vmatprep.subr.mxu0 0.0
        %4516 = vmatpush2.msra.mxu0 0.0
        %4517 = vmatprep.subr.mxu0 0.0
        %4518 = vmatpush2.msra.mxu0 0.0
        %4519 = vmatprep.subr.mxu0 0.0
        %4520 = vmatpush2.msra.mxu0 0.0
        %4521 = vmatprep.subr.mxu0 0.0
        %4522 = vmatpush2.msra.mxu0 0.0
        %4523 = vmatprep.subr.mxu0 0.0
        %4524 = vmatpush2.msra.mxu0 0.0
        %4525 = vmatprep.subr.mxu0 0.0
        %4526 = vmatpush2.msra.mxu0 0.0
        %4527 = vmatprep.subr.mxu0 0.0
        %4528 = vmatpush2.msra.mxu0 0.0
        %4529 = vmatprep.subr.mxu0 0.0
        %4530 = vmatpush2.msra.mxu0 0.0
        %4531 = vmatprep.subr.mxu0 0.0
        %4532 = vmatpush2.msra.mxu0 0.0
        %4533 = vmatprep.subr.mxu0 0.0
        %4534 = vmatpush2.msra.mxu0 0.0
        %4535 = vmatprep.subr.mxu0 0.0
        %4536 = vmatpush2.msra.mxu0 0.0
        %4537 = vmatprep.subr.mxu0 0.0
        %4538 = vmatpush2.msra.mxu0 0.0
        %4539 = vmatprep.mubr.f32.mxu0 0.0
        %4540 = vmatmul.mubr.f32.gmra.mxu0 %v4470
        %v4541 = vpop.f32.mrf.mxu0
        %v4542 = vadd.f32 %v3791, %v4541
        %v4543 = vpop.f32.mrf.mxu0
        %v4544 = vadd.f32 %v3795, %v4543
        %4545 = vmatprep.mubr.f32.mxu0 0.0
        %4546 = vmatmul.mubr.f32.gmra.mxu0 %v4473
        %v4547 = vpop.f32.mrf.mxu0
        %v4548 = vadd.f32 %v3791, %v4547
        %v4549 = vpop.f32.mrf.mxu0
        %v4550 = vadd.f32 %v3795, %v4549
        %4551 = vdwg.mxu0
        %v4552 = vadd.f32 %v4443, %v4542
        %v4553 = vadd.f32 %v4445, %v4548
        %v4554 = vmul.f32 %v4552, 0.5
        %v4555 = vmul.f32 %v4553, 0.5
        %v4556 = vtanh.pop %v4554
        %v4557 = vtanh.pop %v4555
        %v4558 = vadd.f32 %v4556, 1.0
        %v4559 = vadd.f32 %v4557, 1.0
        %v4560 = vmul.f32 %v4558, 0.5
        %v4561 = vmul.f32 %v4559, 0.5
        %4564 = vrot.lane.b32.xlu0 %v4542, 64
        %v4565 = vpop.permute.xlu0 %4564
        %4566 = vrot.lane.b32.xlu0 %v4548, 64
        %v4567 = vpop.permute.xlu0 %4566
        %v4570 = vmul.f32 %v4560, %v4565
        %v4571 = vmul.f32 %v4561, %v4567
        %4574 = vrot.lane.b32.xlu0 %v4570, 64
        %v4575 = vpop.permute.xlu0 %4574
        %4576 = vrot.lane.b32.xlu0 %v4571, 64
        %v4577 = vpop.permute.xlu0 %4576
        %v4580 = vadd.f32 %v4443, %v4575
        %v4581 = vadd.f32 %v4445, %v4577
        %v4582 = vtanh.pop %v4580
        %v4583 = vtanh.pop %v4581
        %v4584 = vsub.f32 1.0, %v4560
        %v4585 = vsub.f32 1.0, %v4561
        %4588 = vrot.lane.b32.xlu0 %v4582, 96
        %v4589 = vpop.permute.xlu0 %4588
        %4590 = vrot.lane.b32.xlu0 %v4583, 96
        %v4591 = vpop.permute.xlu0 %4590
        %v4594 = vmul.f32 %v4584, %v4589
        %v4595 = vmul.f32 %v4585, %v4591
        %v4596 = vmul.f32 %v4560, %v4431
        %v4597 = vmul.f32 %v4561, %v4432
        %v4598 = vadd.f32 %v4594, %v4596
        %v4599 = vadd.f32 %v4595, %v4597
        %v4600 = vadd.f32 %v4447, %v4542
        %v4601 = vadd.f32 %v4448, %v4544
        %v4602 = vadd.f32 %v4449, %v4548
        %v4603 = vadd.f32 %v4450, %v4550
        %v4604 = vmul.f32 %v4600, 0.5
        %v4605 = vmul.f32 %v4601, 0.5
        %v4606 = vmul.f32 %v4602, 0.5
        %v4607 = vmul.f32 %v4603, 0.5
        %v4608 = vtanh.pop %v4604
        %v4609 = vtanh.pop %v4605
        %v4610 = vtanh.pop %v4606
        %v4611 = vtanh.pop %v4607
        %v4612 = vadd.f32 %v4608, 1.0
        %v4613 = vadd.f32 %v4609, 1.0
        %v4614 = vadd.f32 %v4610, 1.0
        %v4615 = vadd.f32 %v4611, 1.0
        %v4616 = vmul.f32 %v4612, 0.5
        %v4617 = vmul.f32 %v4613, 0.5
        %v4618 = vmul.f32 %v4614, 0.5
        %v4619 = vmul.f32 %v4615, 0.5
        %4622 = vrot.lane.b32.xlu0 %v4544, 64
        %v4623 = vpop.permute.xlu0 %4622
        %4624 = vrot.lane.b32.xlu0 %v4550, 64
        %v4625 = vpop.permute.xlu0 %4624
        %v4628 = vmul.f32 %v4616, %v4623
        %v4629 = vmul.f32 %v4618, %v4625
        %4632 = vrot.lane.b32.xlu0 %v4628, 64
        %v4633 = vpop.permute.xlu0 %4632
        %4634 = vrot.lane.b32.xlu0 %v4629, 64
        %v4635 = vpop.permute.xlu0 %4634
        %v4638 = vadd.f32 %v4448, %v4633
        %v4639 = vadd.f32 %v4450, %v4635
        %v4640 = vtanh.pop %v4638
        %v4641 = vtanh.pop %v4639
        %v4642 = vsub.f32 1.0, %v4617
        %v4643 = vsub.f32 1.0, %v4619
        %4646 = vrot.lane.b32.xlu0 %v4640, 96
        %v4647 = vpop.permute.xlu0 %4646
        %4648 = vrot.lane.b32.xlu0 %v4641, 96
        %v4649 = vpop.permute.xlu0 %4648
        %v4652 = vmul.f32 %v4642, %v4647
        %v4653 = vmul.f32 %v4643, %v4649
        %v4654 = vmul.f32 %v4617, %v4433
        %v4655 = vmul.f32 %v4619, %v4434
        %v4656 = vadd.f32 %v4652, %v4654
        %v4657 = vadd.f32 %v4653, %v4655
        %v4658 = vsel %vm1840, %v4598, %v4431
        %v4659 = vsel %vm1841, %v4599, %v4432
        %v4660 = vsel %vm1852, %v4656, %v4433
        %v4661 = vsel %vm1853, %v4657, %v4434
        %v4662 = vsel %vm1840, %v4598, 0.0
        %v4663 = vsel %vm1841, %v4599, 0.0
        %v4664 = vsel %vm1852, %v4656, 0.0
        %v4665 = vsel %vm1853, %v4657, 0.0
        %v4666 = vadd.f32 %v4439, %v4662
        %v4667 = vadd.f32 %v4440, %v4663
        %v4668 = vadd.f32 %v4441, %v4664
        %v4669 = vadd.f32 %v4442, %v4665
        %v4670 = vld [vmem:[%s1876] sm:$0xff]
        %v4671 = vld [vmem:[%s1876 + $0x8] sm:$0xff]
        %v4672 = vld [vmem:[%s1876 + $0x10] sm:$0xff]
        %v4673 = vld [vmem:[%s1876 + $0x18] sm:$0xff]
        %v4674 = vld [vmem:[%s1881] sm:$0xff]
        %v4675 = vld [vmem:[%s1881 + $0x8] sm:$0xff]
        %v4676 = vld [vmem:[%s1881 + $0x10] sm:$0xff]
        %v4677 = vld [vmem:[%s1881 + $0x18] sm:$0xff]
        %4680 = vrot.lane.b32.xlu0 %v4658, 96
        %v4681 = vpop.permute.xlu0 %4680
        %4682 = vrot.lane.b32.xlu0 %v4659, 96
        %v4683 = vpop.permute.xlu0 %4682
        %4688 = vrot.lane.b32.xlu0 %v4660, 32
        %v4689 = vpop.permute.xlu0 %4688
        %4690 = vrot.lane.b32.xlu0 %v4661, 32
        %v4691 = vpop.permute.xlu0 %4690
        %v4694 = vsel %vm1081, %v4681, %v4689
        %v4695 = vsel %vm1081, %v4683, %v4691
        %v4697 = vsel %vm779, %v4694, 0
        %v4700 = vsel %vm779, %v4695, 0
        %4702 = vmatprep.subr.mxu0 0.0
        %4703 = vmatpush1.msra.mxu0 0.0
        %4704 = vmatprep.subr.mxu0 0.0
        %4705 = vmatpush1.msra.mxu0 0.0
        %4706 = vmatprep.subr.mxu0 0.0
        %4707 = vmatpush1.msra.mxu0 0.0
        %4708 = vmatprep.subr.mxu0 0.0
        %4709 = vmatpush1.msra.mxu0 0.0
        %4710 = vmatprep.subr.mxu0 0.0
        %4711 = vmatpush1.msra.mxu0 0.0
        %4712 = vmatprep.subr.mxu0 0.0
        %4713 = vmatpush1.msra.mxu0 0.0
        %4714 = vmatprep.subr.mxu0 0.0
        %4715 = vmatpush1.msra.mxu0 0.0
        %4716 = vmatprep.subr.mxu0 0.0
        %4717 = vmatpush1.msra.mxu0 0.0
        %4718 = vmatprep.subr.mxu0 %v3777
        %4719 = vmatpush1.msra.mxu0 %v3776
        %4720 = vmatprep.subr.mxu0 %v3775
        %4721 = vmatpush1.msra.mxu0 %v3774
        %4722 = vmatprep.subr.mxu0 %v3773
        %4723 = vmatpush1.msra.mxu0 %v3772
        %4724 = vmatprep.subr.mxu0 %v3771
        %4725 = vmatpush1.msra.mxu0 %v3770
        %4726 = vmatprep.subr.mxu0 %v3769
        %4727 = vmatpush1.msra.mxu0 %v3768
        %4728 = vmatprep.subr.mxu0 %v3767
        %4729 = vmatpush1.msra.mxu0 %v3766
        %4730 = vmatprep.subr.mxu0 %v3765
        %4731 = vmatpush1.msra.mxu0 %v3764
        %4732 = vmatprep.subr.mxu0 %v3763
        %4733 = vmatpush1.msra.mxu0 %v3762
        %4734 = vmatprep.subr.mxu0 0.0
        %4735 = vmatpush2.msra.mxu0 0.0
        %4736 = vmatprep.subr.mxu0 0.0
        %4737 = vmatpush2.msra.mxu0 0.0
        %4738 = vmatprep.subr.mxu0 0.0
        %4739 = vmatpush2.msra.mxu0 0.0
        %4740 = vmatprep.subr.mxu0 0.0
        %4741 = vmatpush2.msra.mxu0 0.0
        %4742 = vmatprep.subr.mxu0 0.0
        %4743 = vmatpush2.msra.mxu0 0.0
        %4744 = vmatprep.subr.mxu0 0.0
        %4745 = vmatpush2.msra.mxu0 0.0
        %4746 = vmatprep.subr.mxu0 0.0
        %4747 = vmatpush2.msra.mxu0 0.0
        %4748 = vmatprep.subr.mxu0 0.0
        %4749 = vmatpush2.msra.mxu0 0.0
        %4750 = vmatprep.subr.mxu0 0.0
        %4751 = vmatpush2.msra.mxu0 0.0
        %4752 = vmatprep.subr.mxu0 0.0
        %4753 = vmatpush2.msra.mxu0 0.0
        %4754 = vmatprep.subr.mxu0 0.0
        %4755 = vmatpush2.msra.mxu0 0.0
        %4756 = vmatprep.subr.mxu0 0.0
        %4757 = vmatpush2.msra.mxu0 0.0
        %4758 = vmatprep.subr.mxu0 0.0
        %4759 = vmatpush2.msra.mxu0 0.0
        %4760 = vmatprep.subr.mxu0 0.0
        %4761 = vmatpush2.msra.mxu0 0.0
        %4762 = vmatprep.subr.mxu0 0.0
        %4763 = vmatpush2.msra.mxu0 0.0
        %4764 = vmatprep.subr.mxu0 0.0
        %4765 = vmatpush2.msra.mxu0 0.0
        %4766 = vmatprep.mubr.f32.mxu0 0.0
        %4767 = vmatmul.mubr.f32.gmra.mxu0 %v4697
        %v4768 = vpop.f32.mrf.mxu0
        %v4769 = vadd.f32 %v3791, %v4768
        %v4770 = vpop.f32.mrf.mxu0
        %v4771 = vadd.f32 %v3795, %v4770
        %4772 = vmatprep.mubr.f32.mxu0 0.0
        %4773 = vmatmul.mubr.f32.gmra.mxu0 %v4700
        %v4774 = vpop.f32.mrf.mxu0
        %v4775 = vadd.f32 %v3791, %v4774
        %v4776 = vpop.f32.mrf.mxu0
        %v4777 = vadd.f32 %v3795, %v4776
        %4778 = vdwg.mxu0
        %v4779 = vadd.f32 %v4670, %v4769
        %v4780 = vadd.f32 %v4672, %v4775
        %v4781 = vmul.f32 %v4779, 0.5
        %v4782 = vmul.f32 %v4780, 0.5
        %v4783 = vtanh.pop %v4781
        %v4784 = vtanh.pop %v4782
        %v4785 = vadd.f32 %v4783, 1.0
        %v4786 = vadd.f32 %v4784, 1.0
        %v4787 = vmul.f32 %v4785, 0.5
        %v4788 = vmul.f32 %v4786, 0.5
        %4791 = vrot.lane.b32.xlu0 %v4769, 64
        %v4792 = vpop.permute.xlu0 %4791
        %4793 = vrot.lane.b32.xlu0 %v4775, 64
        %v4794 = vpop.permute.xlu0 %4793
        %v4797 = vmul.f32 %v4787, %v4792
        %v4798 = vmul.f32 %v4788, %v4794
        %4801 = vrot.lane.b32.xlu0 %v4797, 64
        %v4802 = vpop.permute.xlu0 %4801
        %4803 = vrot.lane.b32.xlu0 %v4798, 64
        %v4804 = vpop.permute.xlu0 %4803
        %v4807 = vadd.f32 %v4670, %v4802
        %v4808 = vadd.f32 %v4672, %v4804
        %v4809 = vtanh.pop %v4807
        %v4810 = vtanh.pop %v4808
        %v4811 = vsub.f32 1.0, %v4787
        %v4812 = vsub.f32 1.0, %v4788
        %4815 = vrot.lane.b32.xlu0 %v4809, 96
        %v4816 = vpop.permute.xlu0 %4815
        %4817 = vrot.lane.b32.xlu0 %v4810, 96
        %v4818 = vpop.permute.xlu0 %4817
        %v4821 = vmul.f32 %v4811, %v4816
        %v4822 = vmul.f32 %v4812, %v4818
        %v4823 = vmul.f32 %v4787, %v4658
        %v4824 = vmul.f32 %v4788, %v4659
        %v4825 = vadd.f32 %v4821, %v4823
        %v4826 = vadd.f32 %v4822, %v4824
        %v4827 = vadd.f32 %v4674, %v4769
        %v4828 = vadd.f32 %v4675, %v4771
        %v4829 = vadd.f32 %v4676, %v4775
        %v4830 = vadd.f32 %v4677, %v4777
        %v4831 = vmul.f32 %v4827, 0.5
        %v4832 = vmul.f32 %v4828, 0.5
        %v4833 = vmul.f32 %v4829, 0.5
        %v4834 = vmul.f32 %v4830, 0.5
        %v4835 = vtanh.pop %v4831
        %v4836 = vtanh.pop %v4832
        %v4837 = vtanh.pop %v4833
        %v4838 = vtanh.pop %v4834
        %v4839 = vadd.f32 %v4835, 1.0
        %v4840 = vadd.f32 %v4836, 1.0
        %v4841 = vadd.f32 %v4837, 1.0
        %v4842 = vadd.f32 %v4838, 1.0
        %v4843 = vmul.f32 %v4839, 0.5
        %v4844 = vmul.f32 %v4840, 0.5
        %v4845 = vmul.f32 %v4841, 0.5
        %v4846 = vmul.f32 %v4842, 0.5
        %4849 = vrot.lane.b32.xlu0 %v4771, 64
        %v4850 = vpop.permute.xlu0 %4849
        %4851 = vrot.lane.b32.xlu0 %v4777, 64
        %v4852 = vpop.permute.xlu0 %4851
        %v4855 = vmul.f32 %v4843, %v4850
        %v4856 = vmul.f32 %v4845, %v4852
        %4859 = vrot.lane.b32.xlu0 %v4855, 64
        %v4860 = vpop.permute.xlu0 %4859
        %4861 = vrot.lane.b32.xlu0 %v4856, 64
        %v4862 = vpop.permute.xlu0 %4861
        %v4865 = vadd.f32 %v4675, %v4860
        %v4866 = vadd.f32 %v4677, %v4862
        %v4867 = vtanh.pop %v4865
        %v4868 = vtanh.pop %v4866
        %v4869 = vsub.f32 1.0, %v4844
        %v4870 = vsub.f32 1.0, %v4846
        %4873 = vrot.lane.b32.xlu0 %v4867, 96
        %v4874 = vpop.permute.xlu0 %4873
        %4875 = vrot.lane.b32.xlu0 %v4868, 96
        %v4876 = vpop.permute.xlu0 %4875
        %v4879 = vmul.f32 %v4869, %v4874
        %v4880 = vmul.f32 %v4870, %v4876
        %v4881 = vmul.f32 %v4844, %v4660
        %v4882 = vmul.f32 %v4846, %v4661
        %v4883 = vadd.f32 %v4879, %v4881
        %v4884 = vadd.f32 %v4880, %v4882
        %v4885 = vsel %vm2105, %v4825, %v4658
        %v4886 = vsel %vm2106, %v4826, %v4659
        %v4887 = vsel %vm2117, %v4883, %v4660
        %v4888 = vsel %vm2118, %v4884, %v4661
        %v4889 = vsel %vm2105, %v4825, 0.0
        %v4890 = vsel %vm2106, %v4826, 0.0
        %v4891 = vsel %vm2117, %v4883, 0.0
        %v4892 = vsel %vm2118, %v4884, 0.0
        %v4893 = vadd.f32 %v4666, %v4889
        %v4894 = vadd.f32 %v4667, %v4890
        %v4895 = vadd.f32 %v4668, %v4891
        %v4896 = vadd.f32 %v4669, %v4892
        %4899 = vrot.lane.b32.xlu0 %v4885, 96
        %v4900 = vpop.permute.xlu0 %4899
        %4901 = vrot.lane.b32.xlu0 %v4886, 96
        %v4902 = vpop.permute.xlu0 %4901
        %4907 = vrot.lane.b32.xlu0 %v4887, 32
        %v4908 = vpop.permute.xlu0 %4907
        %4909 = vrot.lane.b32.xlu0 %v4888, 32
        %v4910 = vpop.permute.xlu0 %4909
        %v4913 = vsel %vm1081, %v4900, %v4908
        %v4914 = vsel %vm1081, %v4902, %v4910
        %v4916 = vsel %vm779, %v4913, 0
        %v4919 = vsel %vm779, %v4914, 0
        %4921 = vmatprep.subr.mxu0 0.0
        %4922 = vmatpush1.msra.mxu0 0.0
        %4923 = vmatprep.subr.mxu0 0.0
        %4924 = vmatpush1.msra.mxu0 0.0
        %4925 = vmatprep.subr.mxu0 0.0
        %4926 = vmatpush1.msra.mxu0 0.0
        %4927 = vmatprep.subr.mxu0 0.0
        %4928 = vmatpush1.msra.mxu0 0.0
        %4929 = vmatprep.subr.mxu0 0.0
        %4930 = vmatpush1.msra.mxu0 0.0
        %4931 = vmatprep.subr.mxu0 0.0
        %4932 = vmatpush1.msra.mxu0 0.0
        %4933 = vmatprep.subr.mxu0 0.0
        %4934 = vmatpush1.msra.mxu0 0.0
        %4935 = vmatprep.subr.mxu0 0.0
        %4936 = vmatpush1.msra.mxu0 0.0
        %4937 = vmatprep.subr.mxu0 %v3777
        %4938 = vmatpush1.msra.mxu0 %v3776
        %4939 = vmatprep.subr.mxu0 %v3775
        %4940 = vmatpush1.msra.mxu0 %v3774
        %4941 = vmatprep.subr.mxu0 %v3773
        %4942 = vmatpush1.msra.mxu0 %v3772
        %4943 = vmatprep.subr.mxu0 %v3771
        %4944 = vmatpush1.msra.mxu0 %v3770
        %4945 = vmatprep.subr.mxu0 %v3769
        %4946 = vmatpush1.msra.mxu0 %v3768
        %4947 = vmatprep.subr.mxu0 %v3767
        %4948 = vmatpush1.msra.mxu0 %v3766
        %4949 = vmatprep.subr.mxu0 %v3765
        %4950 = vmatpush1.msra.mxu0 %v3764
        %4951 = vmatprep.subr.mxu0 %v3763
        %4952 = vmatpush1.msra.mxu0 %v3762
        %4953 = vmatprep.subr.mxu0 0.0
        %4954 = vmatpush2.msra.mxu0 0.0
        %4955 = vmatprep.subr.mxu0 0.0
        %4956 = vmatpush2.msra.mxu0 0.0
        %4957 = vmatprep.subr.mxu0 0.0
        %4958 = vmatpush2.msra.mxu0 0.0
        %4959 = vmatprep.subr.mxu0 0.0
        %4960 = vmatpush2.msra.mxu0 0.0
        %4961 = vmatprep.subr.mxu0 0.0
        %4962 = vmatpush2.msra.mxu0 0.0
        %4963 = vmatprep.subr.mxu0 0.0
        %4964 = vmatpush2.msra.mxu0 0.0
        %4965 = vmatprep.subr.mxu0 0.0
        %4966 = vmatpush2.msra.mxu0 0.0
        %4967 = vmatprep.subr.mxu0 0.0
        %4968 = vmatpush2.msra.mxu0 0.0
        %4969 = vmatprep.subr.mxu0 0.0
        %4970 = vmatpush2.msra.mxu0 0.0
        %4971 = vmatprep.subr.mxu0 0.0
        %4972 = vmatpush2.msra.mxu0 0.0
        %4973 = vmatprep.subr.mxu0 0.0
        %4974 = vmatpush2.msra.mxu0 0.0
        %4975 = vmatprep.subr.mxu0 0.0
        %4976 = vmatpush2.msra.mxu0 0.0
        %4977 = vmatprep.subr.mxu0 0.0
        %4978 = vmatpush2.msra.mxu0 0.0
        %4979 = vmatprep.subr.mxu0 0.0
        %4980 = vmatpush2.msra.mxu0 0.0
        %4981 = vmatprep.subr.mxu0 0.0
        %4982 = vmatpush2.msra.mxu0 0.0
        %4983 = vmatprep.subr.mxu0 0.0
        %4984 = vmatpush2.msra.mxu0 0.0
        %4985 = vmatprep.mubr.f32.mxu0 0.0
        %4986 = vmatmul.mubr.f32.gmra.mxu0 %v4916
        %v4987 = vpop.f32.mrf.mxu0
        %v4988 = vadd.f32 %v3791, %v4987
        %v4989 = vpop.f32.mrf.mxu0
        %v4990 = vadd.f32 %v3795, %v4989
        %4991 = vmatprep.mubr.f32.mxu0 0.0
        %4992 = vmatmul.mubr.f32.gmra.mxu0 %v4919
        %v4993 = vpop.f32.mrf.mxu0
        %v4994 = vadd.f32 %v3791, %v4993
        %v4995 = vpop.f32.mrf.mxu0
        %v4996 = vadd.f32 %v3795, %v4995
        %4997 = vdwg.mxu0
        %v4998 = vadd.f32 %v4674, %v4988
        %v4999 = vadd.f32 %v4676, %v4994
        %v5000 = vmul.f32 %v4998, 0.5
        %v5001 = vmul.f32 %v4999, 0.5
        %v5002 = vtanh.pop %v5000
        %v5003 = vtanh.pop %v5001
        %v5004 = vadd.f32 %v5002, 1.0
        %v5005 = vadd.f32 %v5003, 1.0
        %v5006 = vmul.f32 %v5004, 0.5
        %v5007 = vmul.f32 %v5005, 0.5
        %5010 = vrot.lane.b32.xlu0 %v4988, 64
        %v5011 = vpop.permute.xlu0 %5010
        %5012 = vrot.lane.b32.xlu0 %v4994, 64
        %v5013 = vpop.permute.xlu0 %5012
        %v5016 = vmul.f32 %v5006, %v5011
        %v5017 = vmul.f32 %v5007, %v5013
        %5020 = vrot.lane.b32.xlu0 %v5016, 64
        %v5021 = vpop.permute.xlu0 %5020
        %5022 = vrot.lane.b32.xlu0 %v5017, 64
        %v5023 = vpop.permute.xlu0 %5022
        %v5026 = vadd.f32 %v4674, %v5021
        %v5027 = vadd.f32 %v4676, %v5023
        %v5028 = vtanh.pop %v5026
        %v5029 = vtanh.pop %v5027
        %v5030 = vsub.f32 1.0, %v5006
        %v5031 = vsub.f32 1.0, %v5007
        %5034 = vrot.lane.b32.xlu0 %v5028, 96
        %v5035 = vpop.permute.xlu0 %5034
        %5036 = vrot.lane.b32.xlu0 %v5029, 96
        %v5037 = vpop.permute.xlu0 %5036
        %v5040 = vmul.f32 %v5030, %v5035
        %v5041 = vmul.f32 %v5031, %v5037
        %v5042 = vmul.f32 %v5006, %v4885
        %v5043 = vmul.f32 %v5007, %v4886
        %v5044 = vadd.f32 %v5040, %v5042
        %v5045 = vadd.f32 %v5041, %v5043
        %v5046 = vadd.f32 %v4670, %v4988
        %v5047 = vadd.f32 %v4671, %v4990
        %v5048 = vadd.f32 %v4672, %v4994
        %v5049 = vadd.f32 %v4673, %v4996
        %v5050 = vmul.f32 %v5046, 0.5
        %v5051 = vmul.f32 %v5047, 0.5
        %v5052 = vmul.f32 %v5048, 0.5
        %v5053 = vmul.f32 %v5049, 0.5
        %v5054 = vtanh.pop %v5050
        %v5055 = vtanh.pop %v5051
        %v5056 = vtanh.pop %v5052
        %v5057 = vtanh.pop %v5053
        %v5058 = vadd.f32 %v5054, 1.0
        %v5059 = vadd.f32 %v5055, 1.0
        %v5060 = vadd.f32 %v5056, 1.0
        %v5061 = vadd.f32 %v5057, 1.0
        %v5062 = vmul.f32 %v5058, 0.5
        %v5063 = vmul.f32 %v5059, 0.5
        %v5064 = vmul.f32 %v5060, 0.5
        %v5065 = vmul.f32 %v5061, 0.5
        %5068 = vrot.lane.b32.xlu0 %v4990, 64
        %v5069 = vpop.permute.xlu0 %5068
        %5070 = vrot.lane.b32.xlu0 %v4996, 64
        %v5071 = vpop.permute.xlu0 %5070
        %v5074 = vmul.f32 %v5062, %v5069
        %v5075 = vmul.f32 %v5064, %v5071
        %5078 = vrot.lane.b32.xlu0 %v5074, 64
        %v5079 = vpop.permute.xlu0 %5078
        %5080 = vrot.lane.b32.xlu0 %v5075, 64
        %v5081 = vpop.permute.xlu0 %5080
        %v5084 = vadd.f32 %v4671, %v5079
        %v5085 = vadd.f32 %v4673, %v5081
        %v5086 = vtanh.pop %v5084
        %v5087 = vtanh.pop %v5085
        %v5088 = vsub.f32 1.0, %v5063
        %v5089 = vsub.f32 1.0, %v5065
        %5092 = vrot.lane.b32.xlu0 %v5086, 96
        %v5093 = vpop.permute.xlu0 %5092
        %5094 = vrot.lane.b32.xlu0 %v5087, 96
        %v5095 = vpop.permute.xlu0 %5094
        %v5098 = vmul.f32 %v5088, %v5093
        %v5099 = vmul.f32 %v5089, %v5095
        %v5100 = vmul.f32 %v5063, %v4887
        %v5101 = vmul.f32 %v5065, %v4888
        %v5102 = vadd.f32 %v5098, %v5100
        %v5103 = vadd.f32 %v5099, %v5101
        %v5104 = vsel %vm2117, %v5044, %v4885
        %v5105 = vsel %vm2118, %v5045, %v4886
        %v5106 = vsel %vm2105, %v5102, %v4887
        %v5107 = vsel %vm2106, %v5103, %v4888
        %v5108 = vsel %vm2117, %v5044, 0.0
        %v5109 = vsel %vm2118, %v5045, 0.0
        %v5110 = vsel %vm2105, %v5102, 0.0
        %v5111 = vsel %vm2106, %v5103, 0.0
        %v5112 = vadd.f32 %v4893, %v5108
        %v5113 = vadd.f32 %v4894, %v5109
        %v5114 = vadd.f32 %v4895, %v5110
        %v5115 = vadd.f32 %v4896, %v5111
        %5118 = vrot.lane.b32.xlu0 %v5104, 96
        %v5119 = vpop.permute.xlu0 %5118
        %5120 = vrot.lane.b32.xlu0 %v5105, 96
        %v5121 = vpop.permute.xlu0 %5120
        %5126 = vrot.lane.b32.xlu0 %v5106, 32
        %v5127 = vpop.permute.xlu0 %5126
        %5128 = vrot.lane.b32.xlu0 %v5107, 32
        %v5129 = vpop.permute.xlu0 %5128
        %v5132 = vsel %vm1081, %v5119, %v5127
        %v5133 = vsel %vm1081, %v5121, %v5129
        %v5135 = vsel %vm779, %v5132, 0
        %v5138 = vsel %vm779, %v5133, 0
        %5140 = vmatprep.subr.mxu0 0.0
        %5141 = vmatpush1.msra.mxu0 0.0
        %5142 = vmatprep.subr.mxu0 0.0
        %5143 = vmatpush1.msra.mxu0 0.0
        %5144 = vmatprep.subr.mxu0 0.0
        %5145 = vmatpush1.msra.mxu0 0.0
        %5146 = vmatprep.subr.mxu0 0.0
        %5147 = vmatpush1.msra.mxu0 0.0
        %5148 = vmatprep.subr.mxu0 0.0
        %5149 = vmatpush1.msra.mxu0 0.0
        %5150 = vmatprep.subr.mxu0 0.0
        %5151 = vmatpush1.msra.mxu0 0.0
        %5152 = vmatprep.subr.mxu0 0.0
        %5153 = vmatpush1.msra.mxu0 0.0
        %5154 = vmatprep.subr.mxu0 0.0
        %5155 = vmatpush1.msra.mxu0 0.0
        %5156 = vmatprep.subr.mxu0 %v3777
        %5157 = vmatpush1.msra.mxu0 %v3776
        %5158 = vmatprep.subr.mxu0 %v3775
        %5159 = vmatpush1.msra.mxu0 %v3774
        %5160 = vmatprep.subr.mxu0 %v3773
        %5161 = vmatpush1.msra.mxu0 %v3772
        %5162 = vmatprep.subr.mxu0 %v3771
        %5163 = vmatpush1.msra.mxu0 %v3770
        %5164 = vmatprep.subr.mxu0 %v3769
        %5165 = vmatpush1.msra.mxu0 %v3768
        %5166 = vmatprep.subr.mxu0 %v3767
        %5167 = vmatpush1.msra.mxu0 %v3766
        %5168 = vmatprep.subr.mxu0 %v3765
        %5169 = vmatpush1.msra.mxu0 %v3764
        %5170 = vmatprep.subr.mxu0 %v3763
        %5171 = vmatpush1.msra.mxu0 %v3762
        %5172 = vmatprep.subr.mxu0 0.0
        %5173 = vmatpush2.msra.mxu0 0.0
        %5174 = vmatprep.subr.mxu0 0.0
        %5175 = vmatpush2.msra.mxu0 0.0
        %5176 = vmatprep.subr.mxu0 0.0
        %5177 = vmatpush2.msra.mxu0 0.0
        %5178 = vmatprep.subr.mxu0 0.0
        %5179 = vmatpush2.msra.mxu0 0.0
        %5180 = vmatprep.subr.mxu0 0.0
        %5181 = vmatpush2.msra.mxu0 0.0
        %5182 = vmatprep.subr.mxu0 0.0
        %5183 = vmatpush2.msra.mxu0 0.0
        %5184 = vmatprep.subr.mxu0 0.0
        %5185 = vmatpush2.msra.mxu0 0.0
        %5186 = vmatprep.subr.mxu0 0.0
        %5187 = vmatpush2.msra.mxu0 0.0
        %5188 = vmatprep.subr.mxu0 0.0
        %5189 = vmatpush2.msra.mxu0 0.0
        %5190 = vmatprep.subr.mxu0 0.0
        %5191 = vmatpush2.msra.mxu0 0.0
        %5192 = vmatprep.subr.mxu0 0.0
        %5193 = vmatpush2.msra.mxu0 0.0
        %5194 = vmatprep.subr.mxu0 0.0
        %5195 = vmatpush2.msra.mxu0 0.0
        %5196 = vmatprep.subr.mxu0 0.0
        %5197 = vmatpush2.msra.mxu0 0.0
        %5198 = vmatprep.subr.mxu0 0.0
        %5199 = vmatpush2.msra.mxu0 0.0
        %5200 = vmatprep.subr.mxu0 0.0
        %5201 = vmatpush2.msra.mxu0 0.0
        %5202 = vmatprep.subr.mxu0 0.0
        %5203 = vmatpush2.msra.mxu0 0.0
        %5204 = vmatprep.mubr.f32.mxu0 0.0
        %5205 = vmatmul.mubr.f32.gmra.mxu0 %v5135
        %v5206 = vpop.f32.mrf.mxu0
        %v5207 = vadd.f32 %v3791, %v5206
        %v5208 = vpop.f32.mrf.mxu0
        %v5209 = vadd.f32 %v3795, %v5208
        %5210 = vmatprep.mubr.f32.mxu0 0.0
        %5211 = vmatmul.mubr.f32.gmra.mxu0 %v5138
        %v5212 = vpop.f32.mrf.mxu0
        %v5213 = vadd.f32 %v3791, %v5212
        %v5214 = vpop.f32.mrf.mxu0
        %v5215 = vadd.f32 %v3795, %v5214
        %5216 = vdwg.mxu0
        %v5217 = vadd.f32 %v4447, %v5207
        %v5218 = vadd.f32 %v4449, %v5213
        %v5219 = vmul.f32 %v5217, 0.5
        %v5220 = vmul.f32 %v5218, 0.5
        %v5221 = vtanh.pop %v5219
        %v5222 = vtanh.pop %v5220
        %v5223 = vadd.f32 %v5221, 1.0
        %v5224 = vadd.f32 %v5222, 1.0
        %v5225 = vmul.f32 %v5223, 0.5
        %v5226 = vmul.f32 %v5224, 0.5
        %5229 = vrot.lane.b32.xlu0 %v5207, 64
        %v5230 = vpop.permute.xlu0 %5229
        %5231 = vrot.lane.b32.xlu0 %v5213, 64
        %v5232 = vpop.permute.xlu0 %5231
        %v5235 = vmul.f32 %v5225, %v5230
        %v5236 = vmul.f32 %v5226, %v5232
        %5239 = vrot.lane.b32.xlu0 %v5235, 64
        %v5240 = vpop.permute.xlu0 %5239
        %5241 = vrot.lane.b32.xlu0 %v5236, 64
        %v5242 = vpop.permute.xlu0 %5241
        %v5245 = vadd.f32 %v4447, %v5240
        %v5246 = vadd.f32 %v4449, %v5242
        %v5247 = vtanh.pop %v5245
        %v5248 = vtanh.pop %v5246
        %v5249 = vsub.f32 1.0, %v5225
        %v5250 = vsub.f32 1.0, %v5226
        %5253 = vrot.lane.b32.xlu0 %v5247, 96
        %v5254 = vpop.permute.xlu0 %5253
        %5255 = vrot.lane.b32.xlu0 %v5248, 96
        %v5256 = vpop.permute.xlu0 %5255
        %v5259 = vmul.f32 %v5249, %v5254
        %v5260 = vmul.f32 %v5250, %v5256
        %v5261 = vmul.f32 %v5225, %v5104
        %v5262 = vmul.f32 %v5226, %v5105
        %v5263 = vadd.f32 %v5259, %v5261
        %v5264 = vadd.f32 %v5260, %v5262
        %v5265 = vadd.f32 %v4443, %v5207
        %v5266 = vadd.f32 %v4444, %v5209
        %v5267 = vadd.f32 %v4445, %v5213
        %v5268 = vadd.f32 %v4446, %v5215
        %v5269 = vmul.f32 %v5265, 0.5
        %v5270 = vmul.f32 %v5266, 0.5
        %v5271 = vmul.f32 %v5267, 0.5
        %v5272 = vmul.f32 %v5268, 0.5
        %v5273 = vtanh.pop %v5269
        %v5274 = vtanh.pop %v5270
        %v5275 = vtanh.pop %v5271
        %v5276 = vtanh.pop %v5272
        %v5277 = vadd.f32 %v5273, 1.0
        %v5278 = vadd.f32 %v5274, 1.0
        %v5279 = vadd.f32 %v5275, 1.0
        %v5280 = vadd.f32 %v5276, 1.0
        %v5281 = vmul.f32 %v5277, 0.5
        %v5282 = vmul.f32 %v5278, 0.5
        %v5283 = vmul.f32 %v5279, 0.5
        %v5284 = vmul.f32 %v5280, 0.5
        %5287 = vrot.lane.b32.xlu0 %v5209, 64
        %v5288 = vpop.permute.xlu0 %5287
        %5289 = vrot.lane.b32.xlu0 %v5215, 64
        %v5290 = vpop.permute.xlu0 %5289
        %v5293 = vmul.f32 %v5281, %v5288
        %v5294 = vmul.f32 %v5283, %v5290
        %5297 = vrot.lane.b32.xlu0 %v5293, 64
        %v5298 = vpop.permute.xlu0 %5297
        %5299 = vrot.lane.b32.xlu0 %v5294, 64
        %v5300 = vpop.permute.xlu0 %5299
        %v5303 = vadd.f32 %v4444, %v5298
        %v5304 = vadd.f32 %v4446, %v5300
        %v5305 = vtanh.pop %v5303
        %v5306 = vtanh.pop %v5304
        %v5307 = vsub.f32 1.0, %v5282
        %v5308 = vsub.f32 1.0, %v5284
        %5311 = vrot.lane.b32.xlu0 %v5305, 96
        %v5312 = vpop.permute.xlu0 %5311
        %5313 = vrot.lane.b32.xlu0 %v5306, 96
        %v5314 = vpop.permute.xlu0 %5313
        %v5317 = vmul.f32 %v5307, %v5312
        %v5318 = vmul.f32 %v5308, %v5314
        %v5319 = vmul.f32 %v5282, %v5106
        %v5320 = vmul.f32 %v5284, %v5107
        %v5321 = vadd.f32 %v5317, %v5319
        %v5322 = vadd.f32 %v5318, %v5320
        %v5323 = vsel %vm1852, %v5263, %v5104
        %v5324 = vsel %vm1853, %v5264, %v5105
        %v5325 = vsel %vm1840, %v5321, %v5106
        %v5326 = vsel %vm1841, %v5322, %v5107
        %v5327 = vsel %vm1852, %v5263, 0.0
        %v5328 = vsel %vm1853, %v5264, 0.0
        %v5329 = vsel %vm1840, %v5321, 0.0
        %v5330 = vsel %vm1841, %v5322, 0.0
        %v5331 = vadd.f32 %v5112, %v5327
        %v5332 = vadd.f32 %v5113, %v5328
        %v5333 = vadd.f32 %v5114, %v5329
        %v5334 = vadd.f32 %v5115, %v5330
        %5337 = vrot.lane.b32.xlu0 %v5323, 96
        %v5338 = vpop.permute.xlu0 %5337
        %5339 = vrot.lane.b32.xlu0 %v5324, 96
        %v5340 = vpop.permute.xlu0 %5339
        %5345 = vrot.lane.b32.xlu0 %v5325, 32
        %v5346 = vpop.permute.xlu0 %5345
        %5347 = vrot.lane.b32.xlu0 %v5326, 32
        %v5348 = vpop.permute.xlu0 %5347
        %v5351 = vsel %vm1081, %v5338, %v5346
        %v5352 = vsel %vm1081, %v5340, %v5348
        %v5354 = vsel %vm779, %v5351, 0
        %v5357 = vsel %vm779, %v5352, 0
        %5359 = vmatprep.subr.mxu0 0.0
        %5360 = vmatpush1.msra.mxu0 0.0
        %5361 = vmatprep.subr.mxu0 0.0
        %5362 = vmatpush1.msra.mxu0 0.0
        %5363 = vmatprep.subr.mxu0 0.0
        %5364 = vmatpush1.msra.mxu0 0.0
        %5365 = vmatprep.subr.mxu0 0.0
        %5366 = vmatpush1.msra.mxu0 0.0
        %5367 = vmatprep.subr.mxu0 0.0
        %5368 = vmatpush1.msra.mxu0 0.0
        %5369 = vmatprep.subr.mxu0 0.0
        %5370 = vmatpush1.msra.mxu0 0.0
        %5371 = vmatprep.subr.mxu0 0.0
        %5372 = vmatpush1.msra.mxu0 0.0
        %5373 = vmatprep.subr.mxu0 0.0
        %5374 = vmatpush1.msra.mxu0 0.0
        %5375 = vmatprep.subr.mxu0 %v3777
        %5376 = vmatpush1.msra.mxu0 %v3776
        %5377 = vmatprep.subr.mxu0 %v3775
        %5378 = vmatpush1.msra.mxu0 %v3774
        %5379 = vmatprep.subr.mxu0 %v3773
        %5380 = vmatpush1.msra.mxu0 %v3772
        %5381 = vmatprep.subr.mxu0 %v3771
        %5382 = vmatpush1.msra.mxu0 %v3770
        %5383 = vmatprep.subr.mxu0 %v3769
        %5384 = vmatpush1.msra.mxu0 %v3768
        %5385 = vmatprep.subr.mxu0 %v3767
        %5386 = vmatpush1.msra.mxu0 %v3766
        %5387 = vmatprep.subr.mxu0 %v3765
        %5388 = vmatpush1.msra.mxu0 %v3764
        %5389 = vmatprep.subr.mxu0 %v3763
        %5390 = vmatpush1.msra.mxu0 %v3762
        %5391 = vmatprep.subr.mxu0 0.0
        %5392 = vmatpush2.msra.mxu0 0.0
        %5393 = vmatprep.subr.mxu0 0.0
        %5394 = vmatpush2.msra.mxu0 0.0
        %5395 = vmatprep.subr.mxu0 0.0
        %5396 = vmatpush2.msra.mxu0 0.0
        %5397 = vmatprep.subr.mxu0 0.0
        %5398 = vmatpush2.msra.mxu0 0.0
        %5399 = vmatprep.subr.mxu0 0.0
        %5400 = vmatpush2.msra.mxu0 0.0
        %5401 = vmatprep.subr.mxu0 0.0
        %5402 = vmatpush2.msra.mxu0 0.0
        %5403 = vmatprep.subr.mxu0 0.0
        %5404 = vmatpush2.msra.mxu0 0.0
        %5405 = vmatprep.subr.mxu0 0.0
        %5406 = vmatpush2.msra.mxu0 0.0
        %5407 = vmatprep.subr.mxu0 0.0
        %5408 = vmatpush2.msra.mxu0 0.0
        %5409 = vmatprep.subr.mxu0 0.0
        %5410 = vmatpush2.msra.mxu0 0.0
        %5411 = vmatprep.subr.mxu0 0.0
        %5412 = vmatpush2.msra.mxu0 0.0
        %5413 = vmatprep.subr.mxu0 0.0
        %5414 = vmatpush2.msra.mxu0 0.0
        %5415 = vmatprep.subr.mxu0 0.0
        %5416 = vmatpush2.msra.mxu0 0.0
        %5417 = vmatprep.subr.mxu0 0.0
        %5418 = vmatpush2.msra.mxu0 0.0
        %5419 = vmatprep.subr.mxu0 0.0
        %5420 = vmatpush2.msra.mxu0 0.0
        %5421 = vmatprep.subr.mxu0 0.0
        %5422 = vmatpush2.msra.mxu0 0.0
        %5423 = vmatprep.mubr.f32.mxu0 0.0
        %5424 = vmatmul.mubr.f32.gmra.mxu0 %v5354
        %v5425 = vpop.f32.mrf.mxu0
        %v5426 = vadd.f32 %v3791, %v5425
        %v5427 = vpop.f32.mrf.mxu0
        %v5428 = vadd.f32 %v3795, %v5427
        %5429 = vmatprep.mubr.f32.mxu0 0.0
        %5430 = vmatmul.mubr.f32.gmra.mxu0 %v5357
        %v5431 = vpop.f32.mrf.mxu0
        %v5432 = vadd.f32 %v3791, %v5431
        %v5433 = vpop.f32.mrf.mxu0
        %v5434 = vadd.f32 %v3795, %v5433
        %5435 = vdwg.mxu0
        %v5436 = vadd.f32 %v4220, %v5426
        %v5437 = vadd.f32 %v4222, %v5432
        %v5438 = vmul.f32 %v5436, 0.5
        %v5439 = vmul.f32 %v5437, 0.5
        %v5440 = vtanh.pop %v5438
        %v5441 = vtanh.pop %v5439
        %v5442 = vadd.f32 %v5440, 1.0
        %v5443 = vadd.f32 %v5441, 1.0
        %v5444 = vmul.f32 %v5442, 0.5
        %v5445 = vmul.f32 %v5443, 0.5
        %5448 = vrot.lane.b32.xlu0 %v5426, 64
        %v5449 = vpop.permute.xlu0 %5448
        %5450 = vrot.lane.b32.xlu0 %v5432, 64
        %v5451 = vpop.permute.xlu0 %5450
        %v5454 = vmul.f32 %v5444, %v5449
        %v5455 = vmul.f32 %v5445, %v5451
        %5458 = vrot.lane.b32.xlu0 %v5454, 64
        %v5459 = vpop.permute.xlu0 %5458
        %5460 = vrot.lane.b32.xlu0 %v5455, 64
        %v5461 = vpop.permute.xlu0 %5460
        %v5464 = vadd.f32 %v4220, %v5459
        %v5465 = vadd.f32 %v4222, %v5461
        %v5466 = vtanh.pop %v5464
        %v5467 = vtanh.pop %v5465
        %v5468 = vsub.f32 1.0, %v5444
        %v5469 = vsub.f32 1.0, %v5445
        %5472 = vrot.lane.b32.xlu0 %v5466, 96
        %v5473 = vpop.permute.xlu0 %5472
        %5474 = vrot.lane.b32.xlu0 %v5467, 96
        %v5475 = vpop.permute.xlu0 %5474
        %v5478 = vmul.f32 %v5468, %v5473
        %v5479 = vmul.f32 %v5469, %v5475
        %v5480 = vmul.f32 %v5444, %v5323
        %v5481 = vmul.f32 %v5445, %v5324
        %v5482 = vadd.f32 %v5478, %v5480
        %v5483 = vadd.f32 %v5479, %v5481
        %v5484 = vadd.f32 %v4216, %v5426
        %v5485 = vadd.f32 %v4217, %v5428
        %v5486 = vadd.f32 %v4218, %v5432
        %v5487 = vadd.f32 %v4219, %v5434
        %v5488 = vmul.f32 %v5484, 0.5
        %v5489 = vmul.f32 %v5485, 0.5
        %v5490 = vmul.f32 %v5486, 0.5
        %v5491 = vmul.f32 %v5487, 0.5
        %v5492 = vtanh.pop %v5488
        %v5493 = vtanh.pop %v5489
        %v5494 = vtanh.pop %v5490
        %v5495 = vtanh.pop %v5491
        %v5496 = vadd.f32 %v5492, 1.0
        %v5497 = vadd.f32 %v5493, 1.0
        %v5498 = vadd.f32 %v5494, 1.0
        %v5499 = vadd.f32 %v5495, 1.0
        %v5500 = vmul.f32 %v5496, 0.5
        %v5501 = vmul.f32 %v5497, 0.5
        %v5502 = vmul.f32 %v5498, 0.5
        %v5503 = vmul.f32 %v5499, 0.5
        %5506 = vrot.lane.b32.xlu0 %v5428, 64
        %v5507 = vpop.permute.xlu0 %5506
        %5508 = vrot.lane.b32.xlu0 %v5434, 64
        %v5509 = vpop.permute.xlu0 %5508
        %v5512 = vmul.f32 %v5500, %v5507
        %v5513 = vmul.f32 %v5502, %v5509
        %5516 = vrot.lane.b32.xlu0 %v5512, 64
        %v5517 = vpop.permute.xlu0 %5516
        %5518 = vrot.lane.b32.xlu0 %v5513, 64
        %v5519 = vpop.permute.xlu0 %5518
        %v5522 = vadd.f32 %v4217, %v5517
        %v5523 = vadd.f32 %v4219, %v5519
        %v5524 = vtanh.pop %v5522
        %v5525 = vtanh.pop %v5523
        %v5526 = vsub.f32 1.0, %v5501
        %v5527 = vsub.f32 1.0, %v5503
        %5530 = vrot.lane.b32.xlu0 %v5524, 96
        %v5531 = vpop.permute.xlu0 %5530
        %5532 = vrot.lane.b32.xlu0 %v5525, 96
        %v5533 = vpop.permute.xlu0 %5532
        %v5536 = vmul.f32 %v5526, %v5531
        %v5537 = vmul.f32 %v5527, %v5533
        %v5538 = vmul.f32 %v5501, %v5325
        %v5539 = vmul.f32 %v5503, %v5326
        %v5540 = vadd.f32 %v5536, %v5538
        %v5541 = vadd.f32 %v5537, %v5539
        %v5542 = vsel %vm1587, %v5482, %v5323
        %v5543 = vsel %vm1588, %v5483, %v5324
        %v5544 = vsel %vm1575, %v5540, %v5325
        %v5545 = vsel %vm1576, %v5541, %v5326
        %v5546 = vsel %vm1587, %v5482, 0.0
        %v5547 = vsel %vm1588, %v5483, 0.0
        %v5548 = vsel %vm1575, %v5540, 0.0
        %v5549 = vsel %vm1576, %v5541, 0.0
        %v5550 = vadd.f32 %v5331, %v5546
        %v5551 = vadd.f32 %v5332, %v5547
        %v5552 = vadd.f32 %v5333, %v5548
        %v5553 = vadd.f32 %v5334, %v5549
        %5556 = vrot.lane.b32.xlu0 %v5542, 96
        %v5557 = vpop.permute.xlu0 %5556
        %5558 = vrot.lane.b32.xlu0 %v5543, 96
        %v5559 = vpop.permute.xlu0 %5558
        %5564 = vrot.lane.b32.xlu0 %v5544, 32
        %v5565 = vpop.permute.xlu0 %5564
        %5566 = vrot.lane.b32.xlu0 %v5545, 32
        %v5567 = vpop.permute.xlu0 %5566
        %v5570 = vsel %vm1081, %v5557, %v5565
        %v5571 = vsel %vm1081, %v5559, %v5567
        %v5573 = vsel %vm779, %v5570, 0
        %v5576 = vsel %vm779, %v5571, 0
        %5578 = vmatprep.subr.mxu0 0.0
        %5579 = vmatpush1.msra.mxu0 0.0
        %5580 = vmatprep.subr.mxu0 0.0
        %5581 = vmatpush1.msra.mxu0 0.0
        %5582 = vmatprep.subr.mxu0 0.0
        %5583 = vmatpush1.msra.mxu0 0.0
        %5584 = vmatprep.subr.mxu0 0.0
        %5585 = vmatpush1.msra.mxu0 0.0
        %5586 = vmatprep.subr.mxu0 0.0
        %5587 = vmatpush1.msra.mxu0 0.0
        %5588 = vmatprep.subr.mxu0 0.0
        %5589 = vmatpush1.msra.mxu0 0.0
        %5590 = vmatprep.subr.mxu0 0.0
        %5591 = vmatpush1.msra.mxu0 0.0
        %5592 = vmatprep.subr.mxu0 0.0
        %5593 = vmatpush1.msra.mxu0 0.0
        %5594 = vmatprep.subr.mxu0 %v3777
        %5595 = vmatpush1.msra.mxu0 %v3776
        %5596 = vmatprep.subr.mxu0 %v3775
        %5597 = vmatpush1.msra.mxu0 %v3774
        %5598 = vmatprep.subr.mxu0 %v3773
        %5599 = vmatpush1.msra.mxu0 %v3772
        %5600 = vmatprep.subr.mxu0 %v3771
        %5601 = vmatpush1.msra.mxu0 %v3770
        %5602 = vmatprep.subr.mxu0 %v3769
        %5603 = vmatpush1.msra.mxu0 %v3768
        %5604 = vmatprep.subr.mxu0 %v3767
        %5605 = vmatpush1.msra.mxu0 %v3766
        %5606 = vmatprep.subr.mxu0 %v3765
        %5607 = vmatpush1.msra.mxu0 %v3764
        %5608 = vmatprep.subr.mxu0 %v3763
        %5609 = vmatpush1.msra.mxu0 %v3762
        %5610 = vmatprep.subr.mxu0 0.0
        %5611 = vmatpush2.msra.mxu0 0.0
        %5612 = vmatprep.subr.mxu0 0.0
        %5613 = vmatpush2.msra.mxu0 0.0
        %5614 = vmatprep.subr.mxu0 0.0
        %5615 = vmatpush2.msra.mxu0 0.0
        %5616 = vmatprep.subr.mxu0 0.0
        %5617 = vmatpush2.msra.mxu0 0.0
        %5618 = vmatprep.subr.mxu0 0.0
        %5619 = vmatpush2.msra.mxu0 0.0
        %5620 = vmatprep.subr.mxu0 0.0
        %5621 = vmatpush2.msra.mxu0 0.0
        %5622 = vmatprep.subr.mxu0 0.0
        %5623 = vmatpush2.msra.mxu0 0.0
        %5624 = vmatprep.subr.mxu0 0.0
        %5625 = vmatpush2.msra.mxu0 0.0
        %5626 = vmatprep.subr.mxu0 0.0
        %5627 = vmatpush2.msra.mxu0 0.0
        %5628 = vmatprep.subr.mxu0 0.0
        %5629 = vmatpush2.msra.mxu0 0.0
        %5630 = vmatprep.subr.mxu0 0.0
        %5631 = vmatpush2.msra.mxu0 0.0
        %5632 = vmatprep.subr.mxu0 0.0
        %5633 = vmatpush2.msra.mxu0 0.0
        %5634 = vmatprep.subr.mxu0 0.0
        %5635 = vmatpush2.msra.mxu0 0.0
        %5636 = vmatprep.subr.mxu0 0.0
        %5637 = vmatpush2.msra.mxu0 0.0
        %5638 = vmatprep.subr.mxu0 0.0
        %5639 = vmatpush2.msra.mxu0 0.0
        %5640 = vmatprep.subr.mxu0 0.0
        %5641 = vmatpush2.msra.mxu0 0.0
        %5642 = vmatprep.mubr.f32.mxu0 0.0
        %5643 = vmatmul.mubr.f32.gmra.mxu0 %v5573
        %v5644 = vpop.f32.mrf.mxu0
        %v5645 = vadd.f32 %v3791, %v5644
        %v5646 = vpop.f32.mrf.mxu0
        %v5647 = vadd.f32 %v3795, %v5646
        %5648 = vmatprep.mubr.f32.mxu0 0.0
        %5649 = vmatmul.mubr.f32.gmra.mxu0 %v5576
        %v5650 = vpop.f32.mrf.mxu0
        %v5651 = vadd.f32 %v3791, %v5650
        %v5652 = vpop.f32.mrf.mxu0
        %v5653 = vadd.f32 %v3795, %v5652
        %5654 = vdwg.mxu0
        %v5655 = vadd.f32 %v3993, %v5645
        %v5656 = vadd.f32 %v3995, %v5651
        %v5657 = vmul.f32 %v5655, 0.5
        %v5658 = vmul.f32 %v5656, 0.5
        %v5659 = vtanh.pop %v5657
        %v5660 = vtanh.pop %v5658
        %v5661 = vadd.f32 %v5659, 1.0
        %v5662 = vadd.f32 %v5660, 1.0
        %v5663 = vmul.f32 %v5661, 0.5
        %v5664 = vmul.f32 %v5662, 0.5
        %5667 = vrot.lane.b32.xlu0 %v5645, 64
        %v5668 = vpop.permute.xlu0 %5667
        %5669 = vrot.lane.b32.xlu0 %v5651, 64
        %v5670 = vpop.permute.xlu0 %5669
        %v5673 = vmul.f32 %v5663, %v5668
        %v5674 = vmul.f32 %v5664, %v5670
        %5677 = vrot.lane.b32.xlu0 %v5673, 64
        %v5678 = vpop.permute.xlu0 %5677
        %5679 = vrot.lane.b32.xlu0 %v5674, 64
        %v5680 = vpop.permute.xlu0 %5679
        %v5683 = vadd.f32 %v3993, %v5678
        %v5684 = vadd.f32 %v3995, %v5680
        %v5685 = vtanh.pop %v5683
        %v5686 = vtanh.pop %v5684
        %v5687 = vsub.f32 1.0, %v5663
        %v5688 = vsub.f32 1.0, %v5664
        %5691 = vrot.lane.b32.xlu0 %v5685, 96
        %v5692 = vpop.permute.xlu0 %5691
        %5693 = vrot.lane.b32.xlu0 %v5686, 96
        %v5694 = vpop.permute.xlu0 %5693
        %v5697 = vmul.f32 %v5687, %v5692
        %v5698 = vmul.f32 %v5688, %v5694
        %v5699 = vmul.f32 %v5663, %v5542
        %v5700 = vmul.f32 %v5664, %v5543
        %v5701 = vadd.f32 %v5697, %v5699
        %v5702 = vadd.f32 %v5698, %v5700
        %v5703 = vadd.f32 %v3989, %v5645
        %v5704 = vadd.f32 %v3990, %v5647
        %v5705 = vadd.f32 %v3991, %v5651
        %v5706 = vadd.f32 %v3992, %v5653
        %v5707 = vmul.f32 %v5703, 0.5
        %v5708 = vmul.f32 %v5704, 0.5
        %v5709 = vmul.f32 %v5705, 0.5
        %v5710 = vmul.f32 %v5706, 0.5
        %v5711 = vtanh.pop %v5707
        %v5712 = vtanh.pop %v5708
        %v5713 = vtanh.pop %v5709
        %v5714 = vtanh.pop %v5710
        %v5715 = vadd.f32 %v5711, 1.0
        %v5716 = vadd.f32 %v5712, 1.0
        %v5717 = vadd.f32 %v5713, 1.0
        %v5718 = vadd.f32 %v5714, 1.0
        %v5719 = vmul.f32 %v5715, 0.5
        %v5720 = vmul.f32 %v5716, 0.5
        %v5721 = vmul.f32 %v5717, 0.5
        %v5722 = vmul.f32 %v5718, 0.5
        %5725 = vrot.lane.b32.xlu0 %v5647, 64
        %v5726 = vpop.permute.xlu0 %5725
        %5727 = vrot.lane.b32.xlu0 %v5653, 64
        %v5728 = vpop.permute.xlu0 %5727
        %v5731 = vmul.f32 %v5719, %v5726
        %v5732 = vmul.f32 %v5721, %v5728
        %5735 = vrot.lane.b32.xlu0 %v5731, 64
        %v5736 = vpop.permute.xlu0 %5735
        %5737 = vrot.lane.b32.xlu0 %v5732, 64
        %v5738 = vpop.permute.xlu0 %5737
        %v5741 = vadd.f32 %v3990, %v5736
        %v5742 = vadd.f32 %v3992, %v5738
        %v5743 = vtanh.pop %v5741
        %v5744 = vtanh.pop %v5742
        %v5745 = vsub.f32 1.0, %v5720
        %v5746 = vsub.f32 1.0, %v5722
        %5749 = vrot.lane.b32.xlu0 %v5743, 96
        %v5750 = vpop.permute.xlu0 %5749
        %5751 = vrot.lane.b32.xlu0 %v5744, 96
        %v5752 = vpop.permute.xlu0 %5751
        %v5755 = vmul.f32 %v5745, %v5750
        %v5756 = vmul.f32 %v5746, %v5752
        %v5757 = vmul.f32 %v5720, %v5544
        %v5758 = vmul.f32 %v5722, %v5545
        %v5759 = vadd.f32 %v5755, %v5757
        %v5760 = vadd.f32 %v5756, %v5758
        %v5761 = vsel %vm1322, %v5701, %v5542
        %v5762 = vsel %vm1323, %v5702, %v5543
        %v5763 = vsel %vm1310, %v5759, %v5544
        %v5764 = vsel %vm1311, %v5760, %v5545
        %v5765 = vsel %vm1322, %v5701, 0.0
        %v5766 = vsel %vm1323, %v5702, 0.0
        %v5767 = vsel %vm1310, %v5759, 0.0
        %v5768 = vsel %vm1311, %v5760, 0.0
        %v5769 = vadd.f32 %v5550, %v5765
        %v5770 = vadd.f32 %v5551, %v5766
        %v5771 = vadd.f32 %v5552, %v5767
        %v5772 = vadd.f32 %v5553, %v5768
        %5775 = vrot.lane.b32.xlu0 %v5761, 96
        %v5776 = vpop.permute.xlu0 %5775
        %5777 = vrot.lane.b32.xlu0 %v5762, 96
        %v5778 = vpop.permute.xlu0 %5777
        %5783 = vrot.lane.b32.xlu0 %v5763, 32
        %v5784 = vpop.permute.xlu0 %5783
        %5785 = vrot.lane.b32.xlu0 %v5764, 32
        %v5786 = vpop.permute.xlu0 %5785
        %v5789 = vsel %vm1081, %v5776, %v5784
        %v5790 = vsel %vm1081, %v5778, %v5786
        %v5792 = vsel %vm779, %v5789, 0
        %v5795 = vsel %vm779, %v5790, 0
        %5797 = vmatprep.subr.mxu0 0.0
        %5798 = vmatpush1.msra.mxu0 0.0
        %5799 = vmatprep.subr.mxu0 0.0
        %5800 = vmatpush1.msra.mxu0 0.0
        %5801 = vmatprep.subr.mxu0 0.0
        %5802 = vmatpush1.msra.mxu0 0.0
        %5803 = vmatprep.subr.mxu0 0.0
        %5804 = vmatpush1.msra.mxu0 0.0
        %5805 = vmatprep.subr.mxu0 0.0
        %5806 = vmatpush1.msra.mxu0 0.0
        %5807 = vmatprep.subr.mxu0 0.0
        %5808 = vmatpush1.msra.mxu0 0.0
        %5809 = vmatprep.subr.mxu0 0.0
        %5810 = vmatpush1.msra.mxu0 0.0
        %5811 = vmatprep.subr.mxu0 0.0
        %5812 = vmatpush1.msra.mxu0 0.0
        %5813 = vmatprep.subr.mxu0 %v3777
        %5814 = vmatpush1.msra.mxu0 %v3776
        %5815 = vmatprep.subr.mxu0 %v3775
        %5816 = vmatpush1.msra.mxu0 %v3774
        %5817 = vmatprep.subr.mxu0 %v3773
        %5818 = vmatpush1.msra.mxu0 %v3772
        %5819 = vmatprep.subr.mxu0 %v3771
        %5820 = vmatpush1.msra.mxu0 %v3770
        %5821 = vmatprep.subr.mxu0 %v3769
        %5822 = vmatpush1.msra.mxu0 %v3768
        %5823 = vmatprep.subr.mxu0 %v3767
        %5824 = vmatpush1.msra.mxu0 %v3766
        %5825 = vmatprep.subr.mxu0 %v3765
        %5826 = vmatpush1.msra.mxu0 %v3764
        %5827 = vmatprep.subr.mxu0 %v3763
        %5828 = vmatpush1.msra.mxu0 %v3762
        %5829 = vmatprep.subr.mxu0 0.0
        %5830 = vmatpush2.msra.mxu0 0.0
        %5831 = vmatprep.subr.mxu0 0.0
        %5832 = vmatpush2.msra.mxu0 0.0
        %5833 = vmatprep.subr.mxu0 0.0
        %5834 = vmatpush2.msra.mxu0 0.0
        %5835 = vmatprep.subr.mxu0 0.0
        %5836 = vmatpush2.msra.mxu0 0.0
        %5837 = vmatprep.subr.mxu0 0.0
        %5838 = vmatpush2.msra.mxu0 0.0
        %5839 = vmatprep.subr.mxu0 0.0
        %5840 = vmatpush2.msra.mxu0 0.0
        %5841 = vmatprep.subr.mxu0 0.0
        %5842 = vmatpush2.msra.mxu0 0.0
        %5843 = vmatprep.subr.mxu0 0.0
        %5844 = vmatpush2.msra.mxu0 0.0
        %5845 = vmatprep.subr.mxu0 0.0
        %5846 = vmatpush2.msra.mxu0 0.0
        %5847 = vmatprep.subr.mxu0 0.0
        %5848 = vmatpush2.msra.mxu0 0.0
        %5849 = vmatprep.subr.mxu0 0.0
        %5850 = vmatpush2.msra.mxu0 0.0
        %5851 = vmatprep.subr.mxu0 0.0
        %5852 = vmatpush2.msra.mxu0 0.0
        %5853 = vmatprep.subr.mxu0 0.0
        %5854 = vmatpush2.msra.mxu0 0.0
        %5855 = vmatprep.subr.mxu0 0.0
        %5856 = vmatpush2.msra.mxu0 0.0
        %5857 = vmatprep.subr.mxu0 0.0
        %5858 = vmatpush2.msra.mxu0 0.0
        %5859 = vmatprep.subr.mxu0 0.0
        %5860 = vmatpush2.msra.mxu0 0.0
        %5861 = vmatprep.mubr.f32.mxu0 0.0
        %5862 = vmatmul.mubr.f32.gmra.mxu0 %v5792
        %v5863 = vpop.f32.mrf.mxu0
        %v5864 = vadd.f32 %v3791, %v5863
        %v5865 = vpop.f32.mrf.mxu0
        %v5866 = vadd.f32 %v3795, %v5865
        %5867 = vmatprep.mubr.f32.mxu0 0.0
        %5868 = vmatmul.mubr.f32.gmra.mxu0 %v5795
        %v5869 = vpop.f32.mrf.mxu0
        %v5870 = vadd.f32 %v3791, %v5869
        %v5871 = vpop.f32.mrf.mxu0
        %v5872 = vadd.f32 %v3795, %v5871
        %5873 = vdwg.mxu0
        %v5874 = vadd.f32 %v3783, %v5864
        %v5875 = vadd.f32 %v3785, %v5870
        %v5876 = vmul.f32 %v5874, 0.5
        %v5877 = vmul.f32 %v5875, 0.5
        %v5878 = vtanh.pop %v5876
        %v5879 = vtanh.pop %v5877
        %v5880 = vadd.f32 %v5878, 1.0
        %v5881 = vadd.f32 %v5879, 1.0
        %v5882 = vmul.f32 %v5880, 0.5
        %v5883 = vmul.f32 %v5881, 0.5
        %5886 = vrot.lane.b32.xlu0 %v5864, 64
        %v5887 = vpop.permute.xlu0 %5886
        %5888 = vrot.lane.b32.xlu0 %v5870, 64
        %v5889 = vpop.permute.xlu0 %5888
        %v5892 = vmul.f32 %v5882, %v5887
        %v5893 = vmul.f32 %v5883, %v5889
        %5896 = vrot.lane.b32.xlu0 %v5892, 64
        %v5897 = vpop.permute.xlu0 %5896
        %5898 = vrot.lane.b32.xlu0 %v5893, 64
        %v5899 = vpop.permute.xlu0 %5898
        %v5902 = vadd.f32 %v3783, %v5897
        %v5903 = vadd.f32 %v3785, %v5899
        %v5904 = vtanh.pop %v5902
        %v5905 = vtanh.pop %v5903
        %v5906 = vsub.f32 1.0, %v5882
        %v5907 = vsub.f32 1.0, %v5883
        %5910 = vrot.lane.b32.xlu0 %v5904, 96
        %v5911 = vpop.permute.xlu0 %5910
        %5912 = vrot.lane.b32.xlu0 %v5905, 96
        %v5913 = vpop.permute.xlu0 %5912
        %v5916 = vmul.f32 %v5906, %v5911
        %v5917 = vmul.f32 %v5907, %v5913
        %v5918 = vmul.f32 %v5882, %v5761
        %v5919 = vmul.f32 %v5883, %v5762
        %v5920 = vadd.f32 %v5916, %v5918
        %v5921 = vadd.f32 %v5917, %v5919
        %v5922 = vadd.f32 %v3779, %v5864
        %v5923 = vadd.f32 %v3780, %v5866
        %v5924 = vadd.f32 %v3781, %v5870
        %v5925 = vadd.f32 %v3782, %v5872
        %v5926 = vmul.f32 %v5922, 0.5
        %v5927 = vmul.f32 %v5923, 0.5
        %v5928 = vmul.f32 %v5924, 0.5
        %v5929 = vmul.f32 %v5925, 0.5
        %v5930 = vtanh.pop %v5926
        %v5931 = vtanh.pop %v5927
        %v5932 = vtanh.pop %v5928
        %v5933 = vtanh.pop %v5929
        %v5934 = vadd.f32 %v5930, 1.0
        %v5935 = vadd.f32 %v5931, 1.0
        %v5936 = vadd.f32 %v5932, 1.0
        %v5937 = vadd.f32 %v5933, 1.0
        %v5938 = vmul.f32 %v5934, 0.5
        %v5939 = vmul.f32 %v5935, 0.5
        %v5940 = vmul.f32 %v5936, 0.5
        %v5941 = vmul.f32 %v5937, 0.5
        %5944 = vrot.lane.b32.xlu0 %v5866, 64
        %v5945 = vpop.permute.xlu0 %5944
        %5946 = vrot.lane.b32.xlu0 %v5872, 64
        %v5947 = vpop.permute.xlu0 %5946
        %v5950 = vmul.f32 %v5938, %v5945
        %v5951 = vmul.f32 %v5940, %v5947
        %5954 = vrot.lane.b32.xlu0 %v5950, 64
        %v5955 = vpop.permute.xlu0 %5954
        %5956 = vrot.lane.b32.xlu0 %v5951, 64
        %v5957 = vpop.permute.xlu0 %5956
        %v5960 = vadd.f32 %v3780, %v5955
        %v5961 = vadd.f32 %v3782, %v5957
        %v5962 = vtanh.pop %v5960
        %v5963 = vtanh.pop %v5961
        %v5964 = vsub.f32 1.0, %v5939
        %v5965 = vsub.f32 1.0, %v5941
        %5968 = vrot.lane.b32.xlu0 %v5962, 96
        %v5969 = vpop.permute.xlu0 %5968
        %5970 = vrot.lane.b32.xlu0 %v5963, 96
        %v5971 = vpop.permute.xlu0 %5970
        %v5974 = vmul.f32 %v5964, %v5969
        %v5975 = vmul.f32 %v5965, %v5971
        %v5976 = vmul.f32 %v5939, %v5763
        %v5977 = vmul.f32 %v5941, %v5764
        %v5978 = vadd.f32 %v5974, %v5976
        %v5979 = vadd.f32 %v5975, %v5977
        %v5980 = vsel %vm1069, %v5920, 0.0
        %v5981 = vsel %vm1070, %v5921, 0.0
        %v5982 = vsel %vm1057, %v5978, 0.0
        %v5983 = vsel %vm1058, %v5979, 0.0
        %v5984 = vadd.f32 %v5769, %v5980
        %v5985 = vadd.f32 %v5770, %v5981
        %v5986 = vadd.f32 %v5771, %v5982
        %v5987 = vadd.f32 %v5772, %v5983
        %v5988 = vcvt.s32.f32 %v494
        %v5989 = vcvt.s32.f32 %v495
        %v5990 = vmax.f32 %v5988, 1.0
        %v5991 = vmax.f32 %v5989, 1.0
        %v5992 = vrcp.pop %v5990
        %v5993 = vrcp.pop %v5991
        %5995 = vset.pattern.permute.xlu0 0
        %5996 = vperm.xlu0 %5995, %v5992
        %v5997 = vpop.permute.xlu0 %5996
        %6000 = vset.pattern.permute.xlu0 0
        %6001 = vperm.xlu0 %6000, %v5993
        %v6002 = vpop.permute.xlu0 %6001
        %v6004 = vmul.f32 %v5984, %v5997
        %v6005 = vmul.f32 %v5985, %v6002
        %v6006 = vmul.f32 %v5986, %v5997
        %v6007 = vmul.f32 %v5987, %v6002
        %v6008 = vmul.f32 %v6004, %v6004
        %v6009 = vmul.f32 %v6005, %v6005
        %6012 = vrot.lane.b32.xlu0 %v6008, 96
        %v6013 = vpop.permute.xlu0 %6012
        %6014 = vrot.lane.b32.xlu0 %v6009, 96
        %v6015 = vpop.permute.xlu0 %6014
        %v6018 = vsel %vm1081, %v6013, 0.0
        %6019 = vadd.xlane.f32.xlu0 %v6018
        %v6020 = vpop.xlane.xlu0 %6019
        %v6021 = vsel %vm1081, %v6015, 0.0
        %6022 = vadd.xlane.f32.xlu0 %v6021
        %v6023 = vpop.xlane.xlu0 %6022
        %v6024 = vmul.f32 %v6006, %v6006
        %v6025 = vmul.f32 %v6007, %v6007
        %v6026 = vsel %vm1081, %v6024, 0.0
        %6027 = vadd.xlane.f32.xlu0 %v6026
        %v6028 = vpop.xlane.xlu0 %6027
        %v6029 = vsel %vm1081, %v6025, 0.0
        %6030 = vadd.xlane.f32.xlu0 %v6029
        %v6031 = vpop.xlane.xlu0 %6030
        %v6032 = vadd.f32 %v6020, %v6028
        %v6033 = vadd.f32 %v6023, %v6031
        %v6034 = vmax.f32 %v6032, 1e-24
        %v6035 = vmax.f32 %v6033, 1e-24
        %v6036 = vrsqrt.pop %v6034
        %v6037 = vrsqrt.pop %v6035
        %6040 = vrot.lane.b32.xlu0 %v6004, 96
        %v6041 = vpop.permute.xlu0 %6040
        %6042 = vrot.lane.b32.xlu0 %v6005, 96
        %v6043 = vpop.permute.xlu0 %6042
        %6048 = vrot.lane.b32.xlu0 %v6006, 32
        %v6049 = vpop.permute.xlu0 %6048
        %6050 = vrot.lane.b32.xlu0 %v6007, 32
        %v6051 = vpop.permute.xlu0 %6050
        %v6054 = vsel %vm1081, %v6041, %v6049
        %v6055 = vsel %vm1081, %v6043, %v6051
        %v6056 = vmul.f32 %v6054, %v6036
        %v6057 = vmul.f32 %v6055, %v6037
        %6058 = vst.msk [vmem:[%s485] sm:$0xff] %vm779, %v6056
        %6059 = vst.msk [vmem:[%s485 + $0x8] sm:$0xff] %vm779, %v6057
        %s6060 = sand.u32 %s252, 1
        %s6061 = scalar_lea.sflag [#allocation7], %s6060
        %s6062 = sand.u32 %s252, 1
        %s6063 = smul.addr %s6062, 16
        %s6064 = scalar_lea.vmem [#allocation6], %s6063
        // Predicated region
        $region99: #{nickname_encoder_forward.1} parent=93 // pred_check
          %p6065 = pneg %p262
        $region100: #{nickname_encoder_forward.1} parent=93 // pred_check_branch
          %6067 = sbr.rel (%p6065) target = $region102
        $region101: #{nickname_encoder_forward.1} parent=93 // pred_region
          %s6068 = smul.u32 2, %s24
          %s6070 = ssub.s32 256, 256
          %6071 = vsyncadd %s6061, %s6070
          %s6072 = smul.addr %s6068, 128
          %s6073 = scalar_lea.hbm %s10, %s6072
          %s6074 = sshll.u32 %s6064, 4
          %s6075 = int_to_ptr.vmem [resolvable:$true] %s6074
          %6080 = dma.vmem_to_hbm [thread:$0]  %s6075, 256, %s6073, %s6061, 128, 128, 8
        $region102: #{nickname_encoder_forward.1} parent=93 // pred_fallthru
          _
      $region94: #{nickname_encoder_forward.1} parent=5 // pred_fallthru
        _
      %p6081 = scmp.le.s32.totalorder 2, %s19
      // Predicated region
      $region103: #{nickname_encoder_forward.1} parent=5 // pred_check
        %p6082 = pneg %p6081
      $region104: #{nickname_encoder_forward.1} parent=5 // pred_check_branch
        %6084 = sbr.rel (%p6082) target = $region106
      $region105: #{nickname_encoder_forward.1} parent=5 // pred_region
        %s6085 = ssub.s32 %s19, 2
        // Predicated region
        $region107: #{nickname_encoder_forward.1} parent=105 // pred_check
          %p6086 = pneg %p268
        $region108: #{nickname_encoder_forward.1} parent=105 // pred_check_branch
          %6088 = sbr.rel (%p6086) target = $region110
        $region109: #{nickname_encoder_forward.1} parent=105 // pred_region
          %s6089 = sand.u32 %s253, 1
          %s6090 = scalar_lea.sflag [#allocation7], %s6089
          %s6091 = sand.u32 %s253, 1
          %s6092 = smul.addr %s6091, 16
          %s6093 = scalar_lea.vmem [#allocation6], %s6092
          %6094 = dma.done %s6090, 256
        $region110: #{nickname_encoder_forward.1} parent=105 // pred_fallthru
          _
      $region106: #{nickname_encoder_forward.1} parent=5 // pred_fallthru
        _
    $region6: #{nickname_encoder_forward.1} parent=1 // loop_footer
      %s23 = sadd.s32 1, %s19
    $region7: #{nickname_encoder_forward.1} parent=1 // loop_footer_branch
      %18 = sbr.rel target = $region3
    $region8: #{nickname_encoder_forward.1} parent=1 // loop_exit
      _
    %6095 = vsyncpa [#allocation7], 1
    %s6096 = scalar_lea.sflag [#allocation7], 1
    %6097 = vsyncpa %s6096, 1

</llo_original>
